<compile_context>
chip_gen: v5e
topology: v5e:2x2
jax: 0.10.0
libtpu: 0.0.40
codegen_flags: <defaults>
</compile_context>

<pallas_src>
import functools
import math

import jax
import jax.numpy as jnp
from jax.experimental import pallas as pl
from jax.experimental.pallas import tpu as pltpu

VECTOR_DIM = 128              # cat([f_vis, f_pos, f_seq]) == 3 * vector_dim
IMG_SIZE = 736                # PositionEncoder img_size (square)
POS_VDIM = (128 // 4) * 2     # = 64 : sin/cos half-dim inside PositionEncoder
BN_EPS = 1e-5
TARGET_ROWS = 2048            # target MXU M-rows per visual-encoder grid step


def _round_up(x, m):
    return ((x + m - 1) // m) * m


# ---------------------------------------------------------------------------
# Pallas kernels
# ---------------------------------------------------------------------------
def _visual_encoder_kernel(xp_ref, mask_ref, w1_ref, s1_ref, b1_ref,
                           w2_ref, s2_ref, b2_ref, out_ref, mid_ref,
                           *, H, Wp, Kb):
    """VisualEncoder: conv3x3->BN->ReLU->conv3x3->BN->ReLU->global max.

    xp_ref  : [Kb*(H+2)*Wp, Cin] bf16  zero-padded images, flattened row-major
    mask_ref: [RI, 1] f32              1 on valid (row,col) of interior frame
    w*_ref  : [3, Cin, 3*C] bf16       packed (dy, cin, dx*C) weights
    s*/b*   : [1, C] f32               folded BN scale / shift (incl. conv bias)
    out_ref : [1, Kb, C] f32           per-image global-max features
    mid_ref : VMEM [Kb*(H+2)*Wp, C] bf16 scratch (padded conv1 output)
    """
    Rfull, Cin = xp_ref.shape
    C = out_ref.shape[2]
    RI = Rfull - 2 * Wp                        # "interior" output rows
    rows_per_img = (H + 2) * Wp
    mask = mask_ref[...]                        # [RI, 1]

    def conv3x3(src_ref, w_ref):
        # Each dy slab is a contiguous, aligned ref view; one wide dot per dy
        # ([RI,Cin]@[Cin,3C]).  The +-1 column shift for dx != 1 is a sublane
        # roll of the f32 partial sum; wrapped values land only in masked
        # columns (c == 0 / c == Wp-1), and mid/input padding is zero.
        s = [None, None, None]
        for dy in range(3):
            y = jnp.dot(src_ref[dy * Wp: dy * Wp + RI, :], w_ref[dy],
                        preferred_element_type=jnp.float32)         # [RI, 3C]
            for dx in range(3):
                chunk = y[:, dx * C:(dx + 1) * C]
                s[dx] = chunk if s[dx] is None else s[dx] + chunk
        acc = s[1]
        acc = acc + pltpu.roll(s[0], 1, 0)
        acc = acc + pltpu.roll(s[2], RI - 1, 0)
        return acc

    # Zero the scratch's padded border rows every step.  Deliberately NOT gated
    # on program_id == 0: with "parallel" semantics a second TensorCore would
    # never run step 0 and read garbage.  Cost: two [Wp, C] bf16 stores.
    z = jnp.zeros((Wp, C), mid_ref.dtype)
    mid_ref[0:Wp, :] = z
    mid_ref[Rfull - Wp:Rfull, :] = z

    # --- conv1 (3x3, pad=1) + BN + ReLU; mask keeps padding rows/cols zero ---
    acc1 = conv3x3(xp_ref, w1_ref)
    h1 = jnp.maximum(acc1 * s1_ref[...] + b1_ref[...], 0.0) * mask   # [RI, C]
    mid_ref[Wp:Wp + RI, :] = h1.astype(mid_ref.dtype)

    # --- conv2 (3x3, pad=1) + BN + ReLU + per-image global max pool ---------
    acc2 = conv3x3(mid_ref, w2_ref)
    h2 = jnp.maximum(acc2 * s2_ref[...] + b2_ref[...], 0.0) * mask   # >= 0

    if Kb > 1:
        # first Kb-1 images: full rows_per_img-row spans (junk rows masked to 0)
        mx_a = jnp.max(
            h2[:(Kb - 1) * rows_per_img].reshape(Kb - 1, rows_per_img, C),
            axis=1)
        # last image: exactly its H*Wp valid rows remain at the end
        mx_b = jnp.max(h2[(Kb - 1) * rows_per_img:], axis=0, keepdims=True)
        out_ref[0] = jnp.concatenate([mx_a, mx_b], axis=0)
    else:
        out_ref[0] = jnp.max(h2, axis=0, keepdims=True)


def _branch_fuse_kernel(fvis_ref, xpos_ref, xseq_ref,
                        wp2_ref, sp2_ref, bp2_ref,
                        ws2_ref, ss2_ref, bs2_ref,
                        wf_ref, bf_ref, wc_ref, bc_ref,
                        out_ref, cat_ref):
    """Second pos/seq 1x1 convs + max pool + fuse/out 1x1 convs, one launch.

    fvis_ref: [KB, C] f32   xpos_ref: [KB*128, 64] bf16   xseq_ref: [KB*Lp, 64] bf16
    out_ref : [KB, C] f32   cat_ref : VMEM [KB, 3*C] bf16 scratch
    """
    KB, C = out_ref.shape

    def encode(x_ref, w_ref, s_ref, b_ref):
        h = jnp.dot(x_ref[...], w_ref[...], preferred_element_type=jnp.float32)
        h = jnp.maximum(h * s_ref[...] + b_ref[...], 0.0)            # [KB*P, C]
        P = x_ref.shape[0] // KB
        return jnp.max(h.reshape(KB, P, C), axis=1)                  # [KB, C]

    f_pos = encode(xpos_ref, wp2_ref, sp2_ref, bp2_ref)
    f_seq = encode(xseq_ref, ws2_ref, ss2_ref, bs2_ref)

    # cat([f_vis, f_pos, f_seq]) into a lane-dense bf16 operand, single 384-deep
    # fuse dot, ReLU, then the final 1x1 conv.
    cat_ref[:, 0:C] = fvis_ref[...].astype(cat_ref.dtype)
    cat_ref[:, C:2 * C] = f_pos.astype(cat_ref.dtype)
    cat_ref[:, 2 * C:3 * C] = f_seq.astype(cat_ref.dtype)

    h = jnp.dot(cat_ref[...], wf_ref[...],
                preferred_element_type=jnp.float32) + bf_ref[...]
    h = jnp.maximum(h, 0.0)
    out_ref[...] = (jnp.dot(h.astype(jnp.bfloat16), wc_ref[...],
                            preferred_element_type=jnp.float32) + bc_ref[...])


# ---------------------------------------------------------------------------
# pallas_call wrappers
# ---------------------------------------------------------------------------
def visual_encoder(x_flat, mask, w1, s1, b1, w2, s2, b2, *, H, Wp, Kb):
    Rtot, Cin = x_flat.shape
    rows_per_img = (H + 2) * Wp
    Rfull = Kb * rows_per_img
    G = Rtot // Rfull
    C = s1.shape[-1]
    RI = Rfull - 2 * Wp

    flops = 2 * 2 * 9 * Rtot * Cin * C
    bytes_accessed = (x_flat.size * 2 + mask.size * 4
                      + (w1.size + w2.size) * 2 + G * Kb * C * 4)

    kern = functools.partial(_visual_encoder_kernel, H=H, Wp=Wp, Kb=Kb)
    out = pl.pallas_call(
        kern,
        out_shape=jax.ShapeDtypeStruct((G, Kb, C), jnp.float32),
        grid=(G,),
        in_specs=[
            pl.BlockSpec((Rfull, Cin), lambda g: (g, 0)),
            pl.BlockSpec((RI, 1), lambda g: (0, 0)),
            pl.BlockSpec((3, Cin, 3 * C), lambda g: (0, 0, 0)),
            pl.BlockSpec((1, C), lambda g: (0, 0)),
            pl.BlockSpec((1, C), lambda g: (0, 0)),
            pl.BlockSpec((3, C, 3 * C), lambda g: (0, 0, 0)),
            pl.BlockSpec((1, C), lambda g: (0, 0)),
            pl.BlockSpec((1, C), lambda g: (0, 0)),
        ],
        out_specs=pl.BlockSpec((1, Kb, C), lambda g: (g, 0, 0)),
        scratch_shapes=[pltpu.VMEM((Rfull, C), jnp.bfloat16)],
        compiler_params=pltpu.CompilerParams(
            dimension_semantics=("parallel",),      # v7x: shard steps across TCs
            vmem_limit_bytes=48 * 1024 * 1024),
        cost_estimate=pl.CostEstimate(flops=int(flops), transcendentals=0,
                                      bytes_accessed=int(bytes_accessed)),
    )(x_flat, mask, w1, s1, b1, w2, s2, b2)
    return out.reshape(G * Kb, C)


def branch_fuse(f_vis, x_pos, x_seq, p, *, KB):
    Kp, C = f_vis.shape
    G = Kp // KB
    Ppos = x_pos.shape[0] // Kp
    Pseq = x_seq.shape[0] // Kp

    def const_spec(a):
        nd = a.ndim
        return pl.BlockSpec(a.shape, lambda i, nd=nd: (0,) * nd)

    weights = [p["pos2_w"], p["pos2_s"], p["pos2_b"],
               p["seq2_w"], p["seq2_s"], p["seq2_b"],
               p["fuse_w"], p["fuse_b"], p["out_w"], p["out_b"]]

    return pl.pallas_call(
        _branch_fuse_kernel,
        out_shape=jax.ShapeDtypeStruct((Kp, C), jnp.float32),
        grid=(G,),
        in_specs=[pl.BlockSpec((KB, C), lambda i: (i, 0)),
                  pl.BlockSpec((KB * Ppos, x_pos.shape[1]), lambda i: (i, 0)),
                  pl.BlockSpec((KB * Pseq, x_seq.shape[1]), lambda i: (i, 0))]
                 + [const_spec(a) for a in weights],
        out_specs=pl.BlockSpec((KB, C), lambda i: (i, 0)),
        scratch_shapes=[pltpu.VMEM((KB, 3 * C), jnp.bfloat16)],
        compiler_params=pltpu.CompilerParams(
            dimension_semantics=("parallel",)),
    )(f_vis, x_pos, x_seq, *weights)


# ---------------------------------------------------------------------------
# Plain-JAX glue
# ---------------------------------------------------------------------------
def coordinate_embeddings(boxes):
    """boxes: [K, 6] = [x1, y1, x2, y2, w_image, h_image] -> [K, 4, 2*POS_VDIM]."""
    width = float(IMG_SIZE)
    height = float(IMG_SIZE)
    cy = (boxes[:, 1] + boxes[:, 3]) / 2.0
    cx = (boxes[:, 0] + boxes[:, 2]) / 2.0
    h = boxes[:, 3] - boxes[:, 1]
    w = boxes[:, 2] - boxes[:, 0]
    pos = jnp.stack([cy / width * 100.0, cx / height * 100.0,
                     h / width * 100.0, w / height * 100.0], axis=1)        # [K, 4]
    dim_mat = 1000.0 ** (jnp.arange(POS_VDIM, dtype=jnp.float32) / POS_VDIM)
    angles = pos[:, :, None] / dim_mat[None, None, :]                       # [K, 4, 64]
    return jnp.concatenate([jnp.sin(angles), jnp.cos(angles)], axis=-1)     # [K, 4, 128]


def _conv_bn_params(key, cin, cout, ksize):
    """Conv weight (bf16) + folded eval-mode BN scale/shift (f32)."""
    kw, kb = jax.random.split(key)
    std = math.sqrt(2.0 / (ksize * ksize * cout))          # module's init
    if ksize == 1:
        w = jax.random.normal(kw, (cin, cout), jnp.float32) * std
    else:
        # 3x3 conv packed as [dy, cin, dx*cout] for wide-N MXU dots
        w = jax.random.normal(kw, (3, 3, cin, cout), jnp.float32) * std
        w = jnp.transpose(w, (0, 2, 1, 3)).reshape(3, cin, 3 * cout)
    b = jax.random.normal(kb, (cout,), jnp.float32) * 0.01
    gamma = jnp.ones((cout,), jnp.float32)                 # BN init: weight=1
    beta = jnp.zeros((cout,), jnp.float32)                 # BN init: bias=0
    mean = jnp.zeros((cout,), jnp.float32)
    var = jnp.ones((cout,), jnp.float32)
    scale = gamma / jnp.sqrt(var + BN_EPS)
    shift = beta + (b - mean) * scale
    return (w.astype(jnp.bfloat16),
            scale.reshape(1, cout), shift.reshape(1, cout))


def init_params(key):
    ks = jax.random.split(key, 8)
    p = {}
    p["vis1_w"], p["vis1_s"], p["vis1_b"] = _conv_bn_params(ks[0], 128, VECTOR_DIM, 3)
    p["vis2_w"], p["vis2_s"], p["vis2_b"] = _conv_bn_params(ks[1], VECTOR_DIM, VECTOR_DIM, 3)
    p["pos1_w"], p["pos1_s"], p["pos1_b"] = _conv_bn_params(ks[2], 4, 64, 1)
    p["pos2_w"], p["pos2_s"], p["pos2_b"] = _conv_bn_params(ks[3], 64, 128, 1)
    p["seq1_w"], p["seq1_s"], p["seq1_b"] = _conv_bn_params(ks[4], 32, 64, 1)
    p["seq2_w"], p["seq2_s"], p["seq2_b"] = _conv_bn_params(ks[5], 64, 128, 1)
    C3 = VECTOR_DIM * 3
    kf1, kf2 = jax.random.split(ks[6])
    p["fuse_w"] = (jax.random.normal(kf1, (C3, C3), jnp.float32)
                   * math.sqrt(2.0 / C3)).astype(jnp.bfloat16)
    p["fuse_b"] = (jax.random.normal(kf2, (C3,), jnp.float32) * 0.01).reshape(1, C3)
    ko1, ko2 = jax.random.split(ks[7])
    p["out_w"] = (jax.random.normal(ko1, (C3, VECTOR_DIM), jnp.float32)
                  * math.sqrt(2.0 / VECTOR_DIM)).astype(jnp.bfloat16)
    p["out_b"] = (jax.random.normal(ko2, (VECTOR_DIM,), jnp.float32) * 0.01).reshape(1, VECTOR_DIM)
    return p


def cotext_track_head_forward(p, x_visual, tlbrs, x_seq):
    """x_visual: [K, 128, H, W] (NCHW), tlbrs: [K, 6], x_seq: [K, 32, L] -> [K, 128]."""
    K, Cin, H, W = x_visual.shape
    L = x_seq.shape[2]

    # --- visual branch -------------------------------------------------------
    Wp = _round_up(W + 2, 16)                     # 16-sublane aligned padded width
    rows_per_img = (H + 2) * Wp
    Kb = max(1, min(K, TARGET_ROWS // rows_per_img))   # images per grid step
    if Kb >= K and K > 1:                         # keep >= 2 grid steps (v7x: 2 TCs)
        Kb = (K + 1) // 2
    Kpad = _round_up(K, Kb)
    Rfull = Kb * rows_per_img
    RI = Rfull - 2 * Wp

    x_nhwc = jnp.transpose(x_visual, (0, 2, 3, 1)).astype(jnp.bfloat16)     # [K,H,W,128]
    x_p = jnp.pad(x_nhwc, ((0, Kpad - K), (1, 1), (1, Wp - W - 1), (0, 0)))
    x_flat = x_p.reshape(Kpad * rows_per_img, Cin)

    # validity mask in the kernel's interior frame (rows p in [1,H], cols in [1,W])
    p_idx = jnp.arange(Kb * (H + 2), dtype=jnp.int32) % (H + 2)
    row_ok = (p_idx >= 1) & (p_idx <= H)
    c_idx = jnp.arange(Wp, dtype=jnp.int32)
    col_ok = (c_idx >= 1) & (c_idx <= W)
    mask = (row_ok[:, None] & col_ok[None, :]).astype(jnp.float32)
    mask = mask.reshape(Rfull)[Wp:Wp + RI].reshape(RI, 1)

    f_visual = visual_encoder(x_flat, mask,
                              p["vis1_w"], p["vis1_s"], p["vis1_b"],
                              p["vis2_w"], p["vis2_s"], p["vis2_b"],
                              H=H, Wp=Wp, Kb=Kb)[:K]                        # [K, 128]

    # --- position / sequence branch first 1x1 convs (lane-sparse, tiny) ------
    # done in plain JAX so the kernel only sees lane-dense >=64-deep operands.
    emb = coordinate_embeddings(tlbrs.astype(jnp.float32))                  # [K, 4, 128]
    P_pos = 2 * POS_VDIM                                                    # 128
    x_pos = jnp.transpose(emb, (0, 2, 1)).reshape(K * P_pos, 4)
    h_pos1 = jnp.maximum(
        jnp.dot(x_pos, p["pos1_w"].astype(jnp.float32)) * p["pos1_s"]
        + p["pos1_b"], 0.0)                                                 # [K*128, 64]

    x_s = jnp.transpose(x_seq, (0, 2, 1)).reshape(K * L, 32).astype(jnp.float32)
    h_seq1 = jnp.maximum(
        jnp.dot(x_s, p["seq1_w"].astype(jnp.float32)) * p["seq1_s"]
        + p["seq1_b"], 0.0)                                                 # [K*L, 64]

    # pad L -> multiple of 8 by replicating the last step (max-pool invariant)
    Lp = _round_up(L, 8)
    h_seq1 = h_seq1.reshape(K, L, 64)
    if Lp != L:
        h_seq1 = jnp.concatenate(
            [h_seq1, jnp.broadcast_to(h_seq1[:, -1:, :], (K, Lp - L, 64))],
            axis=1)

    # pad K -> multiple of the fuse block size (>= 8); padded tracks are discarded
    KB = min(_round_up(K, 8), 64)
    Kp = _round_up(K, KB)
    h_pos1 = jnp.pad(h_pos1.reshape(K, P_pos, 64), ((0, Kp - K), (0, 0), (0, 0)))
    h_seq1 = jnp.pad(h_seq1, ((0, Kp - K), (0, 0), (0, 0)))
    x_pos_k = h_pos1.reshape(Kp * P_pos, 64).astype(jnp.bfloat16)
    x_seq_k = h_seq1.reshape(Kp * Lp, 64).astype(jnp.bfloat16)
    f_vis_k = jnp.pad(f_visual, ((0, Kp - K), (0, 0)))

    # --- pos/seq second conv + fuse + out conv in a single pallas_call -------
    out = branch_fuse(f_vis_k, x_pos_k, x_seq_k, p, KB=KB)                  # [Kp, 128]
    return out[:K]


if __name__ == "__main__":
    key = jax.random.PRNGKey(0)
    kp, kx, kt1, kt2, ks = jax.random.split(key, 5)

    params = init_params(kp)

    K, H, W, L = 4, 8, 8, 8
    x_visual = jax.random.normal(kx, (K, 128, H, W), jnp.float32)           # NCHW
    xy1 = jax.random.uniform(kt1, (K, 2), minval=0.0, maxval=300.0)
    wh = jax.random.uniform(kt2, (K, 2), minval=10.0, maxval=200.0)
    tlbrs = jnp.concatenate([xy1, xy1 + wh,
                             jnp.full((K, 2), float(IMG_SIZE), jnp.float32)], axis=1)
    x_seq = jax.random.normal(ks, (K, 32, L), jnp.float32)

    fwd = jax.jit(cotext_track_head_forward)
    out = jax.block_until_ready(fwd(params, x_visual, tlbrs, x_seq))
    assert out.shape == (K, VECTOR_DIM), out.shape
    assert bool(jnp.all(jnp.isfinite(out)))
    print("KERNEL_OK")
</pallas_src>

<mosaic_0001>
module attributes {stable_mosaic.version = 11 : i64} {
  func.func @_visual_encoder_kernel(%arg0: i32, %arg1: memref<320x128xbf16, #tpu.memory_space<vmem>>, %arg2: memref<288x1xf32, #tpu.memory_space<vmem>>, %arg3: memref<3x128x384xbf16, #tpu.memory_space<vmem>>, %arg4: memref<1x128xf32, #tpu.memory_space<vmem>>, %arg5: memref<1x128xf32, #tpu.memory_space<vmem>>, %arg6: memref<3x128x384xbf16, #tpu.memory_space<vmem>>, %arg7: memref<1x128xf32, #tpu.memory_space<vmem>>, %arg8: memref<1x128xf32, #tpu.memory_space<vmem>>, %arg9: memref<1x2x128xf32, #tpu.memory_space<vmem>>, %arg10: memref<320x128xbf16, #tpu.memory_space<vmem>>) attributes {dimension_semantics = [#tpu.dimension_semantics<parallel>], iteration_bounds = array<i64: 2>, scalar_prefetch = 0 : i64, scratch_operands = 1 : i64, tpu.core_type = #tpu.core_type<tc>, window_params = [{transform_indices = @transform_0, window_bounds = array<i64: 320, 128>}, {pipeline_mode = #tpu.pipeline_mode<synchronous>, transform_indices = @transform_1, window_bounds = array<i64: 288, 1>}, {pipeline_mode = #tpu.pipeline_mode<synchronous>, transform_indices = @transform_2, window_bounds = array<i64: 3, 128, 384>}, {pipeline_mode = #tpu.pipeline_mode<synchronous>, transform_indices = @transform_3, window_bounds = array<i64: 1, 128>}, {pipeline_mode = #tpu.pipeline_mode<synchronous>, transform_indices = @transform_4, window_bounds = array<i64: 1, 128>}, {pipeline_mode = #tpu.pipeline_mode<synchronous>, transform_indices = @transform_5, window_bounds = array<i64: 3, 128, 384>}, {pipeline_mode = #tpu.pipeline_mode<synchronous>, transform_indices = @transform_6, window_bounds = array<i64: 1, 128>}, {pipeline_mode = #tpu.pipeline_mode<synchronous>, transform_indices = @transform_7, window_bounds = array<i64: 1, 128>}, {transform_indices = @transform_8, window_bounds = array<i64: 1, 2, 128>}]} {
    %c0 = arith.constant 0 : index
    %c0_0 = arith.constant 0 : index
    %0 = vector.load %arg2[%c0, %c0_0] : memref<288x1xf32, #tpu.memory_space<vmem>>, vector<288x1xf32>
    %cst = arith.constant 0.000000e+00 : bf16
    %1 = vector.broadcast %cst : bf16 to vector<16x128xbf16>
    %c0_1 = arith.constant 0 : index
    %c0_2 = arith.constant 0 : index
    %2 = vector.load %arg10[%c0_1, %c0_2] : memref<320x128xbf16, #tpu.memory_space<vmem>>, vector<16x128xbf16>
    tpu.vector_store %arg10[%c0_1, %c0_2], %1 {strides = array<i32>} : memref<320x128xbf16, #tpu.memory_space<vmem>>, vector<16x128xbf16>,
    %c304 = arith.constant 304 : index
    %c0_3 = arith.constant 0 : index
    %3 = vector.load %arg10[%c304, %c0_3] : memref<320x128xbf16, #tpu.memory_space<vmem>>, vector<16x128xbf16>
    tpu.vector_store %arg10[%c304, %c0_3], %1 {strides = array<i32>} : memref<320x128xbf16, #tpu.memory_space<vmem>>, vector<16x128xbf16>,
    %c0_4 = arith.constant 0 : index
    %c0_5 = arith.constant 0 : index
    %4 = vector.load %arg1[%c0_4, %c0_5] : memref<320x128xbf16, #tpu.memory_space<vmem>>, vector<288x128xbf16>
    %c0_6 = arith.constant 0 : index
    %c0_7 = arith.constant 0 : index
    %c0_8 = arith.constant 0 : index
    %5 = vector.load %arg3[%c0_6, %c0_7, %c0_8] : memref<3x128x384xbf16, #tpu.memory_space<vmem>>, vector<1x128x384xbf16>
    %6 = vector.shape_cast %5 : vector<1x128x384xbf16> to vector<128x384xbf16>
    %cst_9 = arith.constant dense<0.000000e+00> : vector<288x384xf32>
    %7 = tpu.matmul %4, %6, %cst_9 {dimension_numbers = #tpu.dot_dimension_numbers<[1], [0], [0], [1], [0, 0, 1, 1], [], []>} : vector<288x128xbf16>, vector<128x384xbf16>, vector<288x384xf32> -> vector<288x384xf32>
    %8 = vector.extract_strided_slice %7 {offsets = [0, 0], sizes = [288, 128], strides = [1, 1]} : vector<288x384xf32> to vector<288x128xf32>
    %9 = vector.extract_strided_slice %7 {offsets = [0, 128], sizes = [288, 128], strides = [1, 1]} : vector<288x384xf32> to vector<288x128xf32>
    %10 = vector.extract_strided_slice %7 {offsets = [0, 256], sizes = [288, 128], strides = [1, 1]} : vector<288x384xf32> to vector<288x128xf32>
    %c16 = arith.constant 16 : index
    %c0_10 = arith.constant 0 : index
    %11 = vector.load %arg1[%c16, %c0_10] : memref<320x128xbf16, #tpu.memory_space<vmem>>, vector<288x128xbf16>
    %c1 = arith.constant 1 : index
    %c0_11 = arith.constant 0 : index
    %c0_12 = arith.constant 0 : index
    %12 = vector.load %arg3[%c1, %c0_11, %c0_12] : memref<3x128x384xbf16, #tpu.memory_space<vmem>>, vector<1x128x384xbf16>
    %13 = vector.shape_cast %12 : vector<1x128x384xbf16> to vector<128x384xbf16>
    %cst_13 = arith.constant dense<0.000000e+00> : vector<288x384xf32>
    %14 = tpu.matmul %11, %13, %cst_13 {dimension_numbers = #tpu.dot_dimension_numbers<[1], [0], [0], [1], [0, 0, 1, 1], [], []>} : vector<288x128xbf16>, vector<128x384xbf16>, vector<288x384xf32> -> vector<288x384xf32>
    %15 = vector.extract_strided_slice %14 {offsets = [0, 0], sizes = [288, 128], strides = [1, 1]} : vector<288x384xf32> to vector<288x128xf32>
    %16 = arith.addf %8, %15 : vector<288x128xf32>
    %17 = vector.extract_strided_slice %14 {offsets = [0, 128], sizes = [288, 128], strides = [1, 1]} : vector<288x384xf32> to vector<288x128xf32>
    %18 = arith.addf %9, %17 : vector<288x128xf32>
    %19 = vector.extract_strided_slice %14 {offsets = [0, 256], sizes = [288, 128], strides = [1, 1]} : vector<288x384xf32> to vector<288x128xf32>
    %20 = arith.addf %10, %19 : vector<288x128xf32>
    %c32 = arith.constant 32 : index
    %c0_14 = arith.constant 0 : index
    %21 = vector.load %arg1[%c32, %c0_14] : memref<320x128xbf16, #tpu.memory_space<vmem>>, vector<288x128xbf16>
    %c2 = arith.constant 2 : index
    %c0_15 = arith.constant 0 : index
    %c0_16 = arith.constant 0 : index
    %22 = vector.load %arg3[%c2, %c0_15, %c0_16] : memref<3x128x384xbf16, #tpu.memory_space<vmem>>, vector<1x128x384xbf16>
    %23 = vector.shape_cast %22 : vector<1x128x384xbf16> to vector<128x384xbf16>
    %cst_17 = arith.constant dense<0.000000e+00> : vector<288x384xf32>
    %24 = tpu.matmul %21, %23, %cst_17 {dimension_numbers = #tpu.dot_dimension_numbers<[1], [0], [0], [1], [0, 0, 1, 1], [], []>} : vector<288x128xbf16>, vector<128x384xbf16>, vector<288x384xf32> -> vector<288x384xf32>
    %25 = vector.extract_strided_slice %24 {offsets = [0, 0], sizes = [288, 128], strides = [1, 1]} : vector<288x384xf32> to vector<288x128xf32>
    %26 = arith.addf %16, %25 : vector<288x128xf32>
    %27 = vector.extract_strided_slice %24 {offsets = [0, 128], sizes = [288, 128], strides = [1, 1]} : vector<288x384xf32> to vector<288x128xf32>
    %28 = arith.addf %18, %27 : vector<288x128xf32>
    %29 = vector.extract_strided_slice %24 {offsets = [0, 256], sizes = [288, 128], strides = [1, 1]} : vector<288x384xf32> to vector<288x128xf32>
    %30 = arith.addf %20, %29 : vector<288x128xf32>
    %c1_i32 = arith.constant 1 : i32
    %31 = tpu.dynamic_rotate %26 by %c1_i32 dim 0 : vector<288x128xf32>, i32 -> vector<288x128xf32>
    %32 = arith.addf %28, %31 : vector<288x128xf32>
    %c287_i32 = arith.constant 287 : i32
    %33 = tpu.dynamic_rotate %30 by %c287_i32 dim 0 : vector<288x128xf32>, i32 -> vector<288x128xf32>
    %34 = arith.addf %32, %33 : vector<288x128xf32>
    %c0_18 = arith.constant 0 : index
    %c0_19 = arith.constant 0 : index
    %35 = vector.load %arg4[%c0_18, %c0_19] : memref<1x128xf32, #tpu.memory_space<vmem>>, vector<1x128xf32>
    %36 = vector.broadcast %35 : vector<1x128xf32> to vector<288x128xf32>
    %37 = arith.mulf %34, %36 : vector<288x128xf32>
    %c0_20 = arith.constant 0 : index
    %c0_21 = arith.constant 0 : index
    %38 = vector.load %arg5[%c0_20, %c0_21] : memref<1x128xf32, #tpu.memory_space<vmem>>, vector<1x128xf32>
    %39 = vector.broadcast %38 : vector<1x128xf32> to vector<288x128xf32>
    %40 = arith.addf %37, %39 : vector<288x128xf32>
    %cst_22 = arith.constant 0.000000e+00 : f32
    %41 = vector.broadcast %cst_22 : f32 to vector<288x128xf32>
    %42 = arith.maximumf %40, %41 : vector<288x128xf32>
    %43 = vector.broadcast %0 : vector<288x1xf32> to vector<288x128xf32>
    %44 = arith.mulf %42, %43 : vector<288x128xf32>
    %45 = arith.truncf %44 : vector<288x128xf32> to vector<288x128xbf16>
    %c16_23 = arith.constant 16 : index
    %c0_24 = arith.constant 0 : index
    %46 = vector.load %arg10[%c16_23, %c0_24] : memref<320x128xbf16, #tpu.memory_space<vmem>>, vector<288x128xbf16>
    tpu.vector_store %arg10[%c16_23, %c0_24], %45 {strides = array<i32>} : memref<320x128xbf16, #tpu.memory_space<vmem>>, vector<288x128xbf16>,
    %c0_25 = arith.constant 0 : index
    %c0_26 = arith.constant 0 : index
    %47 = vector.load %arg10[%c0_25, %c0_26] : memref<320x128xbf16, #tpu.memory_space<vmem>>, vector<288x128xbf16>
    %c0_27 = arith.constant 0 : index
    %c0_28 = arith.constant 0 : index
    %c0_29 = arith.constant 0 : index
    %48 = vector.load %arg6[%c0_27, %c0_28, %c0_29] : memref<3x128x384xbf16, #tpu.memory_space<vmem>>, vector<1x128x384xbf16>
    %49 = vector.shape_cast %48 : vector<1x128x384xbf16> to vector<128x384xbf16>
    %cst_30 = arith.constant dense<0.000000e+00> : vector<288x384xf32>
    %50 = tpu.matmul %47, %49, %cst_30 {dimension_numbers = #tpu.dot_dimension_numbers<[1], [0], [0], [1], [0, 0, 1, 1], [], []>} : vector<288x128xbf16>, vector<128x384xbf16>, vector<288x384xf32> -> vector<288x384xf32>
    %51 = vector.extract_strided_slice %50 {offsets = [0, 0], sizes = [288, 128], strides = [1, 1]} : vector<288x384xf32> to vector<288x128xf32>
    %52 = vector.extract_strided_slice %50 {offsets = [0, 128], sizes = [288, 128], strides = [1, 1]} : vector<288x384xf32> to vector<288x128xf32>
    %53 = vector.extract_strided_slice %50 {offsets = [0, 256], sizes = [288, 128], strides = [1, 1]} : vector<288x384xf32> to vector<288x128xf32>
    %c16_31 = arith.constant 16 : index
    %c0_32 = arith.constant 0 : index
    %54 = vector.load %arg10[%c16_31, %c0_32] : memref<320x128xbf16, #tpu.memory_space<vmem>>, vector<288x128xbf16>
    %c1_33 = arith.constant 1 : index
    %c0_34 = arith.constant 0 : index
    %c0_35 = arith.constant 0 : index
    %55 = vector.load %arg6[%c1_33, %c0_34, %c0_35] : memref<3x128x384xbf16, #tpu.memory_space<vmem>>, vector<1x128x384xbf16>
    %56 = vector.shape_cast %55 : vector<1x128x384xbf16> to vector<128x384xbf16>
    %cst_36 = arith.constant dense<0.000000e+00> : vector<288x384xf32>
    %57 = tpu.matmul %54, %56, %cst_36 {dimension_numbers = #tpu.dot_dimension_numbers<[1], [0], [0], [1], [0, 0, 1, 1], [], []>} : vector<288x128xbf16>, vector<128x384xbf16>, vector<288x384xf32> -> vector<288x384xf32>
    %58 = vector.extract_strided_slice %57 {offsets = [0, 0], sizes = [288, 128], strides = [1, 1]} : vector<288x384xf32> to vector<288x128xf32>
    %59 = arith.addf %51, %58 : vector<288x128xf32>
    %60 = vector.extract_strided_slice %57 {offsets = [0, 128], sizes = [288, 128], strides = [1, 1]} : vector<288x384xf32> to vector<288x128xf32>
    %61 = arith.addf %52, %60 : vector<288x128xf32>
    %62 = vector.extract_strided_slice %57 {offsets = [0, 256], sizes = [288, 128], strides = [1, 1]} : vector<288x384xf32> to vector<288x128xf32>
    %63 = arith.addf %53, %62 : vector<288x128xf32>
    %c32_37 = arith.constant 32 : index
    %c0_38 = arith.constant 0 : index
    %64 = vector.load %arg10[%c32_37, %c0_38] : memref<320x128xbf16, #tpu.memory_space<vmem>>, vector<288x128xbf16>
    %c2_39 = arith.constant 2 : index
    %c0_40 = arith.constant 0 : index
    %c0_41 = arith.constant 0 : index
    %65 = vector.load %arg6[%c2_39, %c0_40, %c0_41] : memref<3x128x384xbf16, #tpu.memory_space<vmem>>, vector<1x128x384xbf16>
    %66 = vector.shape_cast %65 : vector<1x128x384xbf16> to vector<128x384xbf16>
    %cst_42 = arith.constant dense<0.000000e+00> : vector<288x384xf32>
    %67 = tpu.matmul %64, %66, %cst_42 {dimension_numbers = #tpu.dot_dimension_numbers<[1], [0], [0], [1], [0, 0, 1, 1], [], []>} : vector<288x128xbf16>, vector<128x384xbf16>, vector<288x384xf32> -> vector<288x384xf32>
    %68 = vector.extract_strided_slice %67 {offsets = [0, 0], sizes = [288, 128], strides = [1, 1]} : vector<288x384xf32> to vector<288x128xf32>
    %69 = arith.addf %59, %68 : vector<288x128xf32>
    %70 = vector.extract_strided_slice %67 {offsets = [0, 128], sizes = [288, 128], strides = [1, 1]} : vector<288x384xf32> to vector<288x128xf32>
    %71 = arith.addf %61, %70 : vector<288x128xf32>
    %72 = vector.extract_strided_slice %67 {offsets = [0, 256], sizes = [288, 128], strides = [1, 1]} : vector<288x384xf32> to vector<288x128xf32>
    %73 = arith.addf %63, %72 : vector<288x128xf32>
    %c1_i32_43 = arith.constant 1 : i32
    %74 = tpu.dynamic_rotate %69 by %c1_i32_43 dim 0 : vector<288x128xf32>, i32 -> vector<288x128xf32>
    %75 = arith.addf %71, %74 : vector<288x128xf32>
    %c287_i32_44 = arith.constant 287 : i32
    %76 = tpu.dynamic_rotate %73 by %c287_i32_44 dim 0 : vector<288x128xf32>, i32 -> vector<288x128xf32>
    %77 = arith.addf %75, %76 : vector<288x128xf32>
    %c0_45 = arith.constant 0 : index
    %c0_46 = arith.constant 0 : index
    %78 = vector.load %arg7[%c0_45, %c0_46] : memref<1x128xf32, #tpu.memory_space<vmem>>, vector<1x128xf32>
    %79 = vector.broadcast %78 : vector<1x128xf32> to vector<288x128xf32>
    %80 = arith.mulf %77, %79 : vector<288x128xf32>
    %c0_47 = arith.constant 0 : index
    %c0_48 = arith.constant 0 : index
    %81 = vector.load %arg8[%c0_47, %c0_48] : memref<1x128xf32, #tpu.memory_space<vmem>>, vector<1x128xf32>
    %82 = vector.broadcast %81 : vector<1x128xf32> to vector<288x128xf32>
    %83 = arith.addf %80, %82 : vector<288x128xf32>
    %cst_49 = arith.constant 0.000000e+00 : f32
    %84 = vector.broadcast %cst_49 : f32 to vector<288x128xf32>
    %85 = arith.maximumf %83, %84 : vector<288x128xf32>
    %86 = vector.broadcast %0 : vector<288x1xf32> to vector<288x128xf32>
    %87 = arith.mulf %85, %86 : vector<288x128xf32>
    %88 = vector.extract_strided_slice %87 {offsets = [0, 0], sizes = [160, 128], strides = [1, 1]} : vector<288x128xf32> to vector<160x128xf32>
    %89 = vector.shape_cast %88 : vector<160x128xf32> to vector<1x160x128xf32>
    %cst_50 = arith.constant dense<0xFF800000> : vector<1x128xf32>
    %90 = vector.multi_reduction <maximumf>, %89, %cst_50 [1] : vector<1x160x128xf32> to vector<1x128xf32>
    %91 = vector.extract_strided_slice %87 {offsets = [160, 0], sizes = [128, 128], strides = [1, 1]} : vector<288x128xf32> to vector<128x128xf32>
    %cst_51 = arith.constant dense<0xFF800000> : vector<128xf32>
    %92 = vector.multi_reduction <maximumf>, %91, %cst_51 [0] : vector<128x128xf32> to vector<128xf32>
    %93 = vector.shape_cast %92 : vector<128xf32> to vector<1x128xf32>
    %94 = tpu.concatenate %90, %93 in 0 : vector<1x128xf32>, vector<1x128xf32> -> vector<2x128xf32>
    %c0_52 = arith.constant 0 : index
    %c0_53 = arith.constant 0 : index
    %c0_54 = arith.constant 0 : index
    %95 = vector.load %arg9[%c0_52, %c0_53, %c0_54] : memref<1x2x128xf32, #tpu.memory_space<vmem>>, vector<1x2x128xf32>
    %96 = vector.shape_cast %95 : vector<1x2x128xf32> to vector<2x128xf32>
    %97 = vector.shape_cast %94 : vector<2x128xf32> to vector<1x2x128xf32>
    tpu.vector_store %arg9[%c0_52, %c0_53, %c0_54], %97 {strides = array<i32>} : memref<1x2x128xf32, #tpu.memory_space<vmem>>, vector<1x2x128xf32>,
    return
  }
  func.func @transform_0(%arg0: i32) -> (i32, i32) {
    %c0_i32 = arith.constant 0 : i32
    %c0_i32_0 = arith.constant 0 : i32
    return %arg0, %c0_i32 : i32, i32
  }
  func.func @transform_1(%arg0: i32) -> (i32, i32) {
    %c0_i32 = arith.constant 0 : i32
    %c0_i32_0 = arith.constant 0 : i32
    %c0_i32_1 = arith.constant 0 : i32
    return %c0_i32, %c0_i32_0 : i32, i32
  }
  func.func @transform_2(%arg0: i32) -> (i32, i32, i32) {
    %c0_i32 = arith.constant 0 : i32
    %c0_i32_0 = arith.constant 0 : i32
    %c0_i32_1 = arith.constant 0 : i32
    %c0_i32_2 = arith.constant 0 : i32
    return %c0_i32, %c0_i32_0, %c0_i32_1 : i32, i32, i32
  }
  func.func @transform_3(%arg0: i32) -> (i32, i32) {
    %c0_i32 = arith.constant 0 : i32
    %c0_i32_0 = arith.constant 0 : i32
    %c0_i32_1 = arith.constant 0 : i32
    return %c0_i32, %c0_i32_0 : i32, i32
  }
  func.func @transform_4(%arg0: i32) -> (i32, i32) {
    %c0_i32 = arith.constant 0 : i32
    %c0_i32_0 = arith.constant 0 : i32
    %c0_i32_1 = arith.constant 0 : i32
    return %c0_i32, %c0_i32_0 : i32, i32
  }
  func.func @transform_5(%arg0: i32) -> (i32, i32, i32) {
    %c0_i32 = arith.constant 0 : i32
    %c0_i32_0 = arith.constant 0 : i32
    %c0_i32_1 = arith.constant 0 : i32
    %c0_i32_2 = arith.constant 0 : i32
    return %c0_i32, %c0_i32_0, %c0_i32_1 : i32, i32, i32
  }
  func.func @transform_6(%arg0: i32) -> (i32, i32) {
    %c0_i32 = arith.constant 0 : i32
    %c0_i32_0 = arith.constant 0 : i32
    %c0_i32_1 = arith.constant 0 : i32
    return %c0_i32, %c0_i32_0 : i32, i32
  }
  func.func @transform_7(%arg0: i32) -> (i32, i32) {
    %c0_i32 = arith.constant 0 : i32
    %c0_i32_0 = arith.constant 0 : i32
    %c0_i32_1 = arith.constant 0 : i32
    return %c0_i32, %c0_i32_0 : i32, i32
  }
  func.func @transform_8(%arg0: i32) -> (i32, i32, i32) {
    %c0_i32 = arith.constant 0 : i32
    %c0_i32_0 = arith.constant 0 : i32
    %c0_i32_1 = arith.constant 0 : i32
    return %arg0, %c0_i32, %c0_i32_0 : i32, i32, i32
  }
}

module attributes {stable_mosaic.version = 11 : i64} {
  func.func @_branch_fuse_kernel(%arg0: i32, %arg1: memref<8x128xf32, #tpu.memory_space<vmem>>, %arg2: memref<1024x64xbf16, #tpu.memory_space<vmem>>, %arg3: memref<64x64xbf16, #tpu.memory_space<vmem>>, %arg4: memref<64x128xbf16, #tpu.memory_space<vmem>>, %arg5: memref<1x128xf32, #tpu.memory_space<vmem>>, %arg6: memref<1x128xf32, #tpu.memory_space<vmem>>, %arg7: memref<64x128xbf16, #tpu.memory_space<vmem>>, %arg8: memref<1x128xf32, #tpu.memory_space<vmem>>, %arg9: memref<1x128xf32, #tpu.memory_space<vmem>>, %arg10: memref<384x384xbf16, #tpu.memory_space<vmem>>, %arg11: memref<1x384xf32, #tpu.memory_space<vmem>>, %arg12: memref<384x128xbf16, #tpu.memory_space<vmem>>, %arg13: memref<1x128xf32, #tpu.memory_space<vmem>>, %arg14: memref<8x128xf32, #tpu.memory_space<vmem>>, %arg15: memref<8x384xbf16, #tpu.memory_space<vmem>>) attributes {dimension_semantics = [#tpu.dimension_semantics<parallel>], iteration_bounds = array<i64: 1>, scalar_prefetch = 0 : i64, scratch_operands = 1 : i64, tpu.core_type = #tpu.core_type<tc>, window_params = [{transform_indices = @transform_0, window_bounds = array<i64: 8, 128>}, {transform_indices = @transform_1, window_bounds = array<i64: 1024, 64>}, {transform_indices = @transform_2, window_bounds = array<i64: 64, 64>}, {pipeline_mode = #tpu.pipeline_mode<synchronous>, transform_indices = @transform_3, window_bounds = array<i64: 64, 128>}, {pipeline_mode = #tpu.pipeline_mode<synchronous>, transform_indices = @transform_4, window_bounds = array<i64: 1, 128>}, {pipeline_mode = #tpu.pipeline_mode<synchronous>, transform_indices = @transform_5, window_bounds = array<i64: 1, 128>}, {pipeline_mode = #tpu.pipeline_mode<synchronous>, transform_indices = @transform_6, window_bounds = array<i64: 64, 128>}, {pipeline_mode = #tpu.pipeline_mode<synchronous>, transform_indices = @transform_7, window_bounds = array<i64: 1, 128>}, {pipeline_mode = #tpu.pipeline_mode<synchronous>, transform_indices = @transform_8, window_bounds = array<i64: 1, 128>}, {pipeline_mode = #tpu.pipeline_mode<synchronous>, transform_indices = @transform_9, window_bounds = array<i64: 384, 384>}, {pipeline_mode = #tpu.pipeline_mode<synchronous>, transform_indices = @transform_10, window_bounds = array<i64: 1, 384>}, {pipeline_mode = #tpu.pipeline_mode<synchronous>, transform_indices = @transform_11, window_bounds = array<i64: 384, 128>}, {pipeline_mode = #tpu.pipeline_mode<synchronous>, transform_indices = @transform_12, window_bounds = array<i64: 1, 128>}, {transform_indices = @transform_13, window_bounds = array<i64: 8, 128>}]} {
    %c0 = arith.constant 0 : index
    %c0_0 = arith.constant 0 : index
    %0 = vector.load %arg2[%c0, %c0_0] : memref<1024x64xbf16, #tpu.memory_space<vmem>>, vector<1024x64xbf16>
    %c0_1 = arith.constant 0 : index
    %c0_2 = arith.constant 0 : index
    %1 = vector.load %arg4[%c0_1, %c0_2] : memref<64x128xbf16, #tpu.memory_space<vmem>>, vector<64x128xbf16>
    %cst = arith.constant dense<0.000000e+00> : vector<1024x128xf32>
    %2 = tpu.matmul %0, %1, %cst {dimension_numbers = #tpu.dot_dimension_numbers<[1], [0], [0], [1], [0, 0, 1, 1], [], []>} : vector<1024x64xbf16>, vector<64x128xbf16>, vector<1024x128xf32> -> vector<1024x128xf32>
    %c0_3 = arith.constant 0 : index
    %c0_4 = arith.constant 0 : index
    %3 = vector.load %arg5[%c0_3, %c0_4] : memref<1x128xf32, #tpu.memory_space<vmem>>, vector<1x128xf32>
    %4 = vector.broadcast %3 : vector<1x128xf32> to vector<1024x128xf32>
    %5 = arith.mulf %2, %4 : vector<1024x128xf32>
    %c0_5 = arith.constant 0 : index
    %c0_6 = arith.constant 0 : index
    %6 = vector.load %arg6[%c0_5, %c0_6] : memref<1x128xf32, #tpu.memory_space<vmem>>, vector<1x128xf32>
    %7 = vector.broadcast %6 : vector<1x128xf32> to vector<1024x128xf32>
    %8 = arith.addf %5, %7 : vector<1024x128xf32>
    %cst_7 = arith.constant 0.000000e+00 : f32
    %9 = vector.broadcast %cst_7 : f32 to vector<1024x128xf32>
    %10 = arith.maximumf %8, %9 : vector<1024x128xf32>
    %11 = vector.shape_cast %10 : vector<1024x128xf32> to vector<8x128x128xf32>
    %cst_8 = arith.constant dense<0xFF800000> : vector<8x128xf32>
    %12 = vector.multi_reduction <maximumf>, %11, %cst_8 [1] : vector<8x128x128xf32> to vector<8x128xf32>
    %c0_9 = arith.constant 0 : index
    %c0_10 = arith.constant 0 : index
    %13 = vector.load %arg3[%c0_9, %c0_10] : memref<64x64xbf16, #tpu.memory_space<vmem>>, vector<64x64xbf16>
    %c0_11 = arith.constant 0 : index
    %c0_12 = arith.constant 0 : index
    %14 = vector.load %arg7[%c0_11, %c0_12] : memref<64x128xbf16, #tpu.memory_space<vmem>>, vector<64x128xbf16>
    %cst_13 = arith.constant dense<0.000000e+00> : vector<64x128xf32>
    %15 = tpu.matmul %13, %14, %cst_13 {dimension_numbers = #tpu.dot_dimension_numbers<[1], [0], [0], [1], [0, 0, 1, 1], [], []>} : vector<64x64xbf16>, vector<64x128xbf16>, vector<64x128xf32> -> vector<64x128xf32>
    %c0_14 = arith.constant 0 : index
    %c0_15 = arith.constant 0 : index
    %16 = vector.load %arg8[%c0_14, %c0_15] : memref<1x128xf32, #tpu.memory_space<vmem>>, vector<1x128xf32>
    %17 = vector.broadcast %16 : vector<1x128xf32> to vector<64x128xf32>
    %18 = arith.mulf %15, %17 : vector<64x128xf32>
    %c0_16 = arith.constant 0 : index
    %c0_17 = arith.constant 0 : index
    %19 = vector.load %arg9[%c0_16, %c0_17] : memref<1x128xf32, #tpu.memory_space<vmem>>, vector<1x128xf32>
    %20 = vector.broadcast %19 : vector<1x128xf32> to vector<64x128xf32>
    %21 = arith.addf %18, %20 : vector<64x128xf32>
    %cst_18 = arith.constant 0.000000e+00 : f32
    %22 = vector.broadcast %cst_18 : f32 to vector<64x128xf32>
    %23 = arith.maximumf %21, %22 : vector<64x128xf32>
    %24 = vector.shape_cast %23 : vector<64x128xf32> to vector<8x8x128xf32>
    %cst_19 = arith.constant dense<0xFF800000> : vector<8x128xf32>
    %25 = vector.multi_reduction <maximumf>, %24, %cst_19 [1] : vector<8x8x128xf32> to vector<8x128xf32>
    %c0_20 = arith.constant 0 : index
    %c0_21 = arith.constant 0 : index
    %26 = vector.load %arg1[%c0_20, %c0_21] : memref<8x128xf32, #tpu.memory_space<vmem>>, vector<8x128xf32>
    %27 = arith.truncf %26 : vector<8x128xf32> to vector<8x128xbf16>
    %c0_22 = arith.constant 0 : index
    %c0_23 = arith.constant 0 : index
    %28 = vector.load %arg15[%c0_22, %c0_23] : memref<8x384xbf16, #tpu.memory_space<vmem>>, vector<8x128xbf16>
    tpu.vector_store %arg15[%c0_22, %c0_23], %27 {strides = array<i32>} : memref<8x384xbf16, #tpu.memory_space<vmem>>, vector<8x128xbf16>,
    %29 = arith.truncf %12 : vector<8x128xf32> to vector<8x128xbf16>
    %c0_24 = arith.constant 0 : index
    %c128 = arith.constant 128 : index
    %30 = vector.load %arg15[%c0_24, %c128] : memref<8x384xbf16, #tpu.memory_space<vmem>>, vector<8x128xbf16>
    tpu.vector_store %arg15[%c0_24, %c128], %29 {strides = array<i32>} : memref<8x384xbf16, #tpu.memory_space<vmem>>, vector<8x128xbf16>,
    %31 = arith.truncf %25 : vector<8x128xf32> to vector<8x128xbf16>
    %c0_25 = arith.constant 0 : index
    %c256 = arith.constant 256 : index
    %32 = vector.load %arg15[%c0_25, %c256] : memref<8x384xbf16, #tpu.memory_space<vmem>>, vector<8x128xbf16>
    tpu.vector_store %arg15[%c0_25, %c256], %31 {strides = array<i32>} : memref<8x384xbf16, #tpu.memory_space<vmem>>, vector<8x128xbf16>,
    %c0_26 = arith.constant 0 : index
    %c0_27 = arith.constant 0 : index
    %33 = vector.load %arg15[%c0_26, %c0_27] : memref<8x384xbf16, #tpu.memory_space<vmem>>, vector<8x384xbf16>
    %c0_28 = arith.constant 0 : index
    %c0_29 = arith.constant 0 : index
    %34 = vector.load %arg10[%c0_28, %c0_29] : memref<384x384xbf16, #tpu.memory_space<vmem>>, vector<384x384xbf16>
    %cst_30 = arith.constant dense<0.000000e+00> : vector<8x384xf32>
    %35 = tpu.matmul %33, %34, %cst_30 {dimension_numbers = #tpu.dot_dimension_numbers<[1], [0], [0], [1], [0, 0, 1, 1], [], []>} : vector<8x384xbf16>, vector<384x384xbf16>, vector<8x384xf32> -> vector<8x384xf32>
    %c0_31 = arith.constant 0 : index
    %c0_32 = arith.constant 0 : index
    %36 = vector.load %arg11[%c0_31, %c0_32] : memref<1x384xf32, #tpu.memory_space<vmem>>, vector<1x384xf32>
    %37 = vector.broadcast %36 : vector<1x384xf32> to vector<8x384xf32>
    %38 = arith.addf %35, %37 : vector<8x384xf32>
    %cst_33 = arith.constant 0.000000e+00 : f32
    %39 = vector.broadcast %cst_33 : f32 to vector<8x384xf32>
    %40 = arith.maximumf %38, %39 : vector<8x384xf32>
    %41 = arith.truncf %40 : vector<8x384xf32> to vector<8x384xbf16>
    %c0_34 = arith.constant 0 : index
    %c0_35 = arith.constant 0 : index
    %42 = vector.load %arg12[%c0_34, %c0_35] : memref<384x128xbf16, #tpu.memory_space<vmem>>, vector<384x128xbf16>
    %cst_36 = arith.constant dense<0.000000e+00> : vector<8x128xf32>
    %43 = tpu.matmul %41, %42, %cst_36 {dimension_numbers = #tpu.dot_dimension_numbers<[1], [0], [0], [1], [0, 0, 1, 1], [], []>} : vector<8x384xbf16>, vector<384x128xbf16>, vector<8x128xf32> -> vector<8x128xf32>
    %c0_37 = arith.constant 0 : index
    %c0_38 = arith.constant 0 : index
    %44 = vector.load %arg13[%c0_37, %c0_38] : memref<1x128xf32, #tpu.memory_space<vmem>>, vector<1x128xf32>
    %45 = vector.broadcast %44 : vector<1x128xf32> to vector<8x128xf32>
    %46 = arith.addf %43, %45 : vector<8x128xf32>
    %c0_39 = arith.constant 0 : index
    %c0_40 = arith.constant 0 : index
    %47 = vector.load %arg14[%c0_39, %c0_40] : memref<8x128xf32, #tpu.memory_space<vmem>>, vector<8x128xf32>
    tpu.vector_store %arg14[%c0_39, %c0_40], %46 {strides = array<i32>} : memref<8x128xf32, #tpu.memory_space<vmem>>, vector<8x128xf32>,
    return
  }
  func.func @transform_0(%arg0: i32) -> (i32, i32) {
    %c0_i32 = arith.constant 0 : i32
    %c0_i32_0 = arith.constant 0 : i32
    return %arg0, %c0_i32 : i32, i32
  }
  func.func @transform_1(%arg0: i32) -> (i32, i32) {
    %c0_i32 = arith.constant 0 : i32
    %c0_i32_0 = arith.constant 0 : i32
    return %arg0, %c0_i32 : i32, i32
  }
  func.func @transform_2(%arg0: i32) -> (i32, i32) {
    %c0_i32 = arith.constant 0 : i32
    %c0_i32_0 = arith.constant 0 : i32
    return %arg0, %c0_i32 : i32, i32
  }
  func.func @transform_3(%arg0: i32) -> (i32, i32) {
    %c0_i32 = arith.constant 0 : i32
    %c0_i32_0 = arith.constant 0 : i32
    %c0_i32_1 = arith.constant 0 : i32
    return %c0_i32, %c0_i32_0 : i32, i32
  }
  func.func @transform_4(%arg0: i32) -> (i32, i32) {
    %c0_i32 = arith.constant 0 : i32
    %c0_i32_0 = arith.constant 0 : i32
    %c0_i32_1 = arith.constant 0 : i32
    return %c0_i32, %c0_i32_0 : i32, i32
  }
  func.func @transform_5(%arg0: i32) -> (i32, i32) {
    %c0_i32 = arith.constant 0 : i32
    %c0_i32_0 = arith.constant 0 : i32
    %c0_i32_1 = arith.constant 0 : i32
    return %c0_i32, %c0_i32_0 : i32, i32
  }
  func.func @transform_6(%arg0: i32) -> (i32, i32) {
    %c0_i32 = arith.constant 0 : i32
    %c0_i32_0 = arith.constant 0 : i32
    %c0_i32_1 = arith.constant 0 : i32
    return %c0_i32, %c0_i32_0 : i32, i32
  }
  func.func @transform_7(%arg0: i32) -> (i32, i32) {
    %c0_i32 = arith.constant 0 : i32
    %c0_i32_0 = arith.constant 0 : i32
    %c0_i32_1 = arith.constant 0 : i32
    return %c0_i32, %c0_i32_0 : i32, i32
  }
  func.func @transform_8(%arg0: i32) -> (i32, i32) {
    %c0_i32 = arith.constant 0 : i32
    %c0_i32_0 = arith.constant 0 : i32
    %c0_i32_1 = arith.constant 0 : i32
    return %c0_i32, %c0_i32_0 : i32, i32
  }
  func.func @transform_9(%arg0: i32) -> (i32, i32) {
    %c0_i32 = arith.constant 0 : i32
    %c0_i32_0 = arith.constant 0 : i32
    %c0_i32_1 = arith.constant 0 : i32
    return %c0_i32, %c0_i32_0 : i32, i32
  }
  func.func @transform_10(%arg0: i32) -> (i32, i32) {
    %c0_i32 = arith.constant 0 : i32
    %c0_i32_0 = arith.constant 0 : i32
    %c0_i32_1 = arith.constant 0 : i32
    return %c0_i32, %c0_i32_0 : i32, i32
  }
  func.func @transform_11(%arg0: i32) -> (i32, i32) {
    %c0_i32 = arith.constant 0 : i32
    %c0_i32_0 = arith.constant 0 : i32
    %c0_i32_1 = arith.constant 0 : i32
    return %c0_i32, %c0_i32_0 : i32, i32
  }
  func.func @transform_12(%arg0: i32) -> (i32, i32) {
    %c0_i32 = arith.constant 0 : i32
    %c0_i32_0 = arith.constant 0 : i32
    %c0_i32_1 = arith.constant 0 : i32
    return %c0_i32, %c0_i32_0 : i32, i32
  }
  func.func @transform_13(%arg0: i32) -> (i32, i32) {
    %c0_i32 = arith.constant 0 : i32
    %c0_i32_0 = arith.constant 0 : i32
    return %arg0, %c0_i32 : i32, i32
  }
}

</mosaic_0001>

<llo_original>
// kernel: cotext_track_head_forward.3
$region0: #{cotext_track_head_forward.3}
  #allocation0 [shape = 'u32[]', space=smem, size = 0x4, offset = 0x4, fixed_abs, tag = 'smem constant byte address 0x4 - core index']
  #allocation1 [shape = 'u32[72,128]{1,0:T(1,128)}', space=vmem, size = 0x9000, scoped, tag = 'internal scratch']
  #allocation2 [shape = 'bf16[8,384]{1,0:T(8,128)(2,1)}', space=vmem, size = 0x1800, scoped, tag = 'scratch operand']
  %s0 = inlined_call_operand.vmem [shape: f32[8,128], index: 0, kind: input, shape index: {}]
  %s1 = inlined_call_operand.vmem [shape: bf16[1024,64], index: 1, kind: input, shape index: {}]
  %s2 = inlined_call_operand.vmem [shape: bf16[64,64], index: 2, kind: input, shape index: {}]
  %s3 = inlined_call_operand.vmem [shape: bf16[64,128], index: 3, kind: input, shape index: {}]
  %s4 = inlined_call_operand.vmem [shape: f32[1,128], index: 4, kind: input, shape index: {}]
  %s5 = inlined_call_operand.vmem [shape: f32[1,128], index: 5, kind: input, shape index: {}]
  %s6 = inlined_call_operand.vmem [shape: bf16[64,128], index: 6, kind: input, shape index: {}]
  %s7 = inlined_call_operand.vmem [shape: f32[1,128], index: 7, kind: input, shape index: {}]
  %s8 = inlined_call_operand.vmem [shape: f32[1,128], index: 8, kind: input, shape index: {}]
  %s9 = inlined_call_operand.vmem [shape: bf16[384,384], index: 9, kind: input, shape index: {}]
  %s10 = inlined_call_operand.vmem [shape: f32[1,384], index: 10, kind: input, shape index: {}]
  %s11 = inlined_call_operand.vmem [shape: bf16[384,128], index: 11, kind: input, shape index: {}]
  %s12 = inlined_call_operand.vmem [shape: f32[1,128], index: 12, kind: input, shape index: {}]
  %s13 = inlined_call_operand.vmem [shape: f32[8,128], index: 13, kind: output, shape index: {}]
  %s14 = sld [smem:[#allocation0]]
  $region62: #{cotext_track_head_forward.3} parent=0
    _
  %s16 = ssub.s32 1, %s14
  %s17 = scalar_select 0, %s16, %s14
  // Predicated region
  $region2: #{cotext_track_head_forward.3} parent=0 // pred_check
    _
  $region3: #{cotext_track_head_forward.3} parent=0 // pred_check_branch
    %19 = sbr.rel (0) target = $region5
  $region4: #{cotext_track_head_forward.3} parent=0 // pred_region
    _
  $region5: #{cotext_track_head_forward.3} parent=0 // pred_fallthru
    _
  // Predicated region
  $region6: #{cotext_track_head_forward.3} parent=0 // pred_check
    _
  $region7: #{cotext_track_head_forward.3} parent=0 // pred_check_branch
    %21 = sbr.rel (0) target = $region9
  $region8: #{cotext_track_head_forward.3} parent=0 // pred_region
    _
  $region9: #{cotext_track_head_forward.3} parent=0 // pred_fallthru
    _
  // Predicated region
  $region10: #{cotext_track_head_forward.3} parent=0 // pred_check
    _
  $region11: #{cotext_track_head_forward.3} parent=0 // pred_check_branch
    %23 = sbr.rel (0) target = $region13
  $region12: #{cotext_track_head_forward.3} parent=0 // pred_region
    _
  $region13: #{cotext_track_head_forward.3} parent=0 // pred_fallthru
    _
  // Predicated region
  $region14: #{cotext_track_head_forward.3} parent=0 // pred_check
    _
  $region15: #{cotext_track_head_forward.3} parent=0 // pred_check_branch
    %25 = sbr.rel (0) target = $region17
  $region16: #{cotext_track_head_forward.3} parent=0 // pred_region
    _
  $region17: #{cotext_track_head_forward.3} parent=0 // pred_fallthru
    _
  // Predicated region
  $region18: #{cotext_track_head_forward.3} parent=0 // pred_check
    _
  $region19: #{cotext_track_head_forward.3} parent=0 // pred_check_branch
    %27 = sbr.rel (0) target = $region21
  $region20: #{cotext_track_head_forward.3} parent=0 // pred_region
    _
  $region21: #{cotext_track_head_forward.3} parent=0 // pred_fallthru
    _
  // Predicated region
  $region22: #{cotext_track_head_forward.3} parent=0 // pred_check
    _
  $region23: #{cotext_track_head_forward.3} parent=0 // pred_check_branch
    %29 = sbr.rel (0) target = $region25
  $region24: #{cotext_track_head_forward.3} parent=0 // pred_region
    _
  $region25: #{cotext_track_head_forward.3} parent=0 // pred_fallthru
    _
  // Predicated region
  $region26: #{cotext_track_head_forward.3} parent=0 // pred_check
    _
  $region27: #{cotext_track_head_forward.3} parent=0 // pred_check_branch
    %31 = sbr.rel (0) target = $region29
  $region28: #{cotext_track_head_forward.3} parent=0 // pred_region
    _
  $region29: #{cotext_track_head_forward.3} parent=0 // pred_fallthru
    _
  // Predicated region
  $region30: #{cotext_track_head_forward.3} parent=0 // pred_check
    _
  $region31: #{cotext_track_head_forward.3} parent=0 // pred_check_branch
    %33 = sbr.rel (0) target = $region33
  $region32: #{cotext_track_head_forward.3} parent=0 // pred_region
    _
  $region33: #{cotext_track_head_forward.3} parent=0 // pred_fallthru
    _
  // Predicated region
  $region34: #{cotext_track_head_forward.3} parent=0 // pred_check
    _
  $region35: #{cotext_track_head_forward.3} parent=0 // pred_check_branch
    %35 = sbr.rel (0) target = $region37
  $region36: #{cotext_track_head_forward.3} parent=0 // pred_region
    _
  $region37: #{cotext_track_head_forward.3} parent=0 // pred_fallthru
    _
  // Predicated region
  $region38: #{cotext_track_head_forward.3} parent=0 // pred_check
    _
  $region39: #{cotext_track_head_forward.3} parent=0 // pred_check_branch
    %37 = sbr.rel (0) target = $region41
  $region40: #{cotext_track_head_forward.3} parent=0 // pred_region
    _
  $region41: #{cotext_track_head_forward.3} parent=0 // pred_fallthru
    _
  // Predicated region
  $region42: #{cotext_track_head_forward.3} parent=0 // pred_check
    _
  $region43: #{cotext_track_head_forward.3} parent=0 // pred_check_branch
    %39 = sbr.rel (0) target = $region45
  $region44: #{cotext_track_head_forward.3} parent=0 // pred_region
    _
  $region45: #{cotext_track_head_forward.3} parent=0 // pred_fallthru
    _
  // Predicated region
  $region46: #{cotext_track_head_forward.3} parent=0 // pred_check
    _
  $region47: #{cotext_track_head_forward.3} parent=0 // pred_check_branch
    %41 = sbr.rel (0) target = $region49
  $region48: #{cotext_track_head_forward.3} parent=0 // pred_region
    _
  $region49: #{cotext_track_head_forward.3} parent=0 // pred_fallthru
    _
  // Predicated region
  $region50: #{cotext_track_head_forward.3} parent=0 // pred_check
    _
  $region51: #{cotext_track_head_forward.3} parent=0 // pred_check_branch
    %43 = sbr.rel (0) target = $region53
  $region52: #{cotext_track_head_forward.3} parent=0 // pred_region
    _
  $region53: #{cotext_track_head_forward.3} parent=0 // pred_fallthru
    _
  %v45 = vld [vmem:[%s1] sm:$0xf]
  %v46 = vld [vmem:[%s1 + $0x4] sm:$0xf]
  %v47 = vld [vmem:[%s1 + $0x8] sm:$0xf]
  %v48 = vld [vmem:[%s1 + $0xc] sm:$0xf]
  %v49 = vld [vmem:[%s1 + $0x10] sm:$0xf]
  %v50 = vld [vmem:[%s1 + $0x14] sm:$0xf]
  %v51 = vld [vmem:[%s1 + $0x18] sm:$0xf]
  %v52 = vld [vmem:[%s1 + $0x1c] sm:$0xf]
  %v53 = vld [vmem:[%s1 + $0x20] sm:$0xf]
  %v54 = vld [vmem:[%s1 + $0x24] sm:$0xf]
  %v55 = vld [vmem:[%s1 + $0x28] sm:$0xf]
  %v56 = vld [vmem:[%s1 + $0x2c] sm:$0xf]
  %v57 = vld [vmem:[%s1 + $0x30] sm:$0xf]
  %v58 = vld [vmem:[%s1 + $0x34] sm:$0xf]
  %v59 = vld [vmem:[%s1 + $0x38] sm:$0xf]
  %v60 = vld [vmem:[%s1 + $0x3c] sm:$0xf]
  %v61 = vld [vmem:[%s1 + $0x40] sm:$0xf]
  %v62 = vld [vmem:[%s1 + $0x44] sm:$0xf]
  %v63 = vld [vmem:[%s1 + $0x48] sm:$0xf]
  %v64 = vld [vmem:[%s1 + $0x4c] sm:$0xf]
  %v65 = vld [vmem:[%s1 + $0x50] sm:$0xf]
  %v66 = vld [vmem:[%s1 + $0x54] sm:$0xf]
  %v67 = vld [vmem:[%s1 + $0x58] sm:$0xf]
  %v68 = vld [vmem:[%s1 + $0x5c] sm:$0xf]
  %v69 = vld [vmem:[%s1 + $0x60] sm:$0xf]
  %v70 = vld [vmem:[%s1 + $0x64] sm:$0xf]
  %v71 = vld [vmem:[%s1 + $0x68] sm:$0xf]
  %v72 = vld [vmem:[%s1 + $0x6c] sm:$0xf]
  %v73 = vld [vmem:[%s1 + $0x70] sm:$0xf]
  %v74 = vld [vmem:[%s1 + $0x74] sm:$0xf]
  %v75 = vld [vmem:[%s1 + $0x78] sm:$0xf]
  %v76 = vld [vmem:[%s1 + $0x7c] sm:$0xf]
  %v77 = vld [vmem:[%s1 + $0x80] sm:$0xf]
  %v78 = vld [vmem:[%s1 + $0x84] sm:$0xf]
  %v79 = vld [vmem:[%s1 + $0x88] sm:$0xf]
  %v80 = vld [vmem:[%s1 + $0x8c] sm:$0xf]
  %v81 = vld [vmem:[%s1 + $0x90] sm:$0xf]
  %v82 = vld [vmem:[%s1 + $0x94] sm:$0xf]
  %v83 = vld [vmem:[%s1 + $0x98] sm:$0xf]
  %v84 = vld [vmem:[%s1 + $0x9c] sm:$0xf]
  %v85 = vld [vmem:[%s1 + $0xa0] sm:$0xf]
  %v86 = vld [vmem:[%s1 + $0xa4] sm:$0xf]
  %v87 = vld [vmem:[%s1 + $0xa8] sm:$0xf]
  %v88 = vld [vmem:[%s1 + $0xac] sm:$0xf]
  %v89 = vld [vmem:[%s1 + $0xb0] sm:$0xf]
  %v90 = vld [vmem:[%s1 + $0xb4] sm:$0xf]
  %v91 = vld [vmem:[%s1 + $0xb8] sm:$0xf]
  %v92 = vld [vmem:[%s1 + $0xbc] sm:$0xf]
  %v93 = vld [vmem:[%s1 + $0xc0] sm:$0xf]
  %v94 = vld [vmem:[%s1 + $0xc4] sm:$0xf]
  %v95 = vld [vmem:[%s1 + $0xc8] sm:$0xf]
  %v96 = vld [vmem:[%s1 + $0xcc] sm:$0xf]
  %v97 = vld [vmem:[%s1 + $0xd0] sm:$0xf]
  %v98 = vld [vmem:[%s1 + $0xd4] sm:$0xf]
  %v99 = vld [vmem:[%s1 + $0xd8] sm:$0xf]
  %v100 = vld [vmem:[%s1 + $0xdc] sm:$0xf]
  %v101 = vld [vmem:[%s1 + $0xe0] sm:$0xf]
  %v102 = vld [vmem:[%s1 + $0xe4] sm:$0xf]
  %v103 = vld [vmem:[%s1 + $0xe8] sm:$0xf]
  %v104 = vld [vmem:[%s1 + $0xec] sm:$0xf]
  %v105 = vld [vmem:[%s1 + $0xf0] sm:$0xf]
  %v106 = vld [vmem:[%s1 + $0xf4] sm:$0xf]
  %v107 = vld [vmem:[%s1 + $0xf8] sm:$0xf]
  %v108 = vld [vmem:[%s1 + $0xfc] sm:$0xf]
  %v109 = vld [vmem:[%s1 + $0x100] sm:$0xf]
  %v110 = vld [vmem:[%s1 + $0x104] sm:$0xf]
  %v111 = vld [vmem:[%s1 + $0x108] sm:$0xf]
  %v112 = vld [vmem:[%s1 + $0x10c] sm:$0xf]
  %v113 = vld [vmem:[%s1 + $0x110] sm:$0xf]
  %v114 = vld [vmem:[%s1 + $0x114] sm:$0xf]
  %v115 = vld [vmem:[%s1 + $0x118] sm:$0xf]
  %v116 = vld [vmem:[%s1 + $0x11c] sm:$0xf]
  %v117 = vld [vmem:[%s1 + $0x120] sm:$0xf]
  %v118 = vld [vmem:[%s1 + $0x124] sm:$0xf]
  %v119 = vld [vmem:[%s1 + $0x128] sm:$0xf]
  %v120 = vld [vmem:[%s1 + $0x12c] sm:$0xf]
  %v121 = vld [vmem:[%s1 + $0x130] sm:$0xf]
  %v122 = vld [vmem:[%s1 + $0x134] sm:$0xf]
  %v123 = vld [vmem:[%s1 + $0x138] sm:$0xf]
  %v124 = vld [vmem:[%s1 + $0x13c] sm:$0xf]
  %v125 = vld [vmem:[%s1 + $0x140] sm:$0xf]
  %v126 = vld [vmem:[%s1 + $0x144] sm:$0xf]
  %v127 = vld [vmem:[%s1 + $0x148] sm:$0xf]
  %v128 = vld [vmem:[%s1 + $0x14c] sm:$0xf]
  %v129 = vld [vmem:[%s1 + $0x150] sm:$0xf]
  %v130 = vld [vmem:[%s1 + $0x154] sm:$0xf]
  %v131 = vld [vmem:[%s1 + $0x158] sm:$0xf]
  %v132 = vld [vmem:[%s1 + $0x15c] sm:$0xf]
  %v133 = vld [vmem:[%s1 + $0x160] sm:$0xf]
  %v134 = vld [vmem:[%s1 + $0x164] sm:$0xf]
  %v135 = vld [vmem:[%s1 + $0x168] sm:$0xf]
  %v136 = vld [vmem:[%s1 + $0x16c] sm:$0xf]
  %v137 = vld [vmem:[%s1 + $0x170] sm:$0xf]
  %v138 = vld [vmem:[%s1 + $0x174] sm:$0xf]
  %v139 = vld [vmem:[%s1 + $0x178] sm:$0xf]
  %v140 = vld [vmem:[%s1 + $0x17c] sm:$0xf]
  %v141 = vld [vmem:[%s1 + $0x180] sm:$0xf]
  %v142 = vld [vmem:[%s1 + $0x184] sm:$0xf]
  %v143 = vld [vmem:[%s1 + $0x188] sm:$0xf]
  %v144 = vld [vmem:[%s1 + $0x18c] sm:$0xf]
  %v145 = vld [vmem:[%s1 + $0x190] sm:$0xf]
  %v146 = vld [vmem:[%s1 + $0x194] sm:$0xf]
  %v147 = vld [vmem:[%s1 + $0x198] sm:$0xf]
  %v148 = vld [vmem:[%s1 + $0x19c] sm:$0xf]
  %v149 = vld [vmem:[%s1 + $0x1a0] sm:$0xf]
  %v150 = vld [vmem:[%s1 + $0x1a4] sm:$0xf]
  %v151 = vld [vmem:[%s1 + $0x1a8] sm:$0xf]
  %v152 = vld [vmem:[%s1 + $0x1ac] sm:$0xf]
  %v153 = vld [vmem:[%s1 + $0x1b0] sm:$0xf]
  %v154 = vld [vmem:[%s1 + $0x1b4] sm:$0xf]
  %v155 = vld [vmem:[%s1 + $0x1b8] sm:$0xf]
  %v156 = vld [vmem:[%s1 + $0x1bc] sm:$0xf]
  %v157 = vld [vmem:[%s1 + $0x1c0] sm:$0xf]
  %v158 = vld [vmem:[%s1 + $0x1c4] sm:$0xf]
  %v159 = vld [vmem:[%s1 + $0x1c8] sm:$0xf]
  %v160 = vld [vmem:[%s1 + $0x1cc] sm:$0xf]
  %v161 = vld [vmem:[%s1 + $0x1d0] sm:$0xf]
  %v162 = vld [vmem:[%s1 + $0x1d4] sm:$0xf]
  %v163 = vld [vmem:[%s1 + $0x1d8] sm:$0xf]
  %v164 = vld [vmem:[%s1 + $0x1dc] sm:$0xf]
  %v165 = vld [vmem:[%s1 + $0x1e0] sm:$0xf]
  %v166 = vld [vmem:[%s1 + $0x1e4] sm:$0xf]
  %v167 = vld [vmem:[%s1 + $0x1e8] sm:$0xf]
  %v168 = vld [vmem:[%s1 + $0x1ec] sm:$0xf]
  %v169 = vld [vmem:[%s1 + $0x1f0] sm:$0xf]
  %v170 = vld [vmem:[%s1 + $0x1f4] sm:$0xf]
  %v171 = vld [vmem:[%s1 + $0x1f8] sm:$0xf]
  %v172 = vld [vmem:[%s1 + $0x1fc] sm:$0xf]
  %v173 = vld [vmem:[%s3] sm:$0xf]
  %v174 = vld [vmem:[%s3 + $0x4] sm:$0xf]
  %v175 = vld [vmem:[%s3 + $0x8] sm:$0xf]
  %v176 = vld [vmem:[%s3 + $0xc] sm:$0xf]
  %v177 = vld [vmem:[%s3 + $0x10] sm:$0xf]
  %v178 = vld [vmem:[%s3 + $0x14] sm:$0xf]
  %v179 = vld [vmem:[%s3 + $0x18] sm:$0xf]
  %v180 = vld [vmem:[%s3 + $0x1c] sm:$0xf]
  %v309 = vunpack.c.l.b16 %v45
  %v310 = vunpack.c.l.b16 %v46
  %v311 = vunpack.c.l.b16 %v47
  %v312 = vunpack.c.l.b16 %v48
  %v313 = vunpack.c.l.b16 %v49
  %v314 = vunpack.c.l.b16 %v50
  %v315 = vunpack.c.l.b16 %v51
  %v316 = vunpack.c.l.b16 %v52
  %v317 = vunpack.c.l.b16 %v53
  %v318 = vunpack.c.l.b16 %v54
  %v319 = vunpack.c.l.b16 %v55
  %v320 = vunpack.c.l.b16 %v56
  %v321 = vunpack.c.l.b16 %v57
  %v322 = vunpack.c.l.b16 %v58
  %v323 = vunpack.c.l.b16 %v59
  %v324 = vunpack.c.l.b16 %v60
  %v325 = vunpack.c.l.b16 %v61
  %v326 = vunpack.c.l.b16 %v62
  %v327 = vunpack.c.l.b16 %v63
  %v328 = vunpack.c.l.b16 %v64
  %v329 = vunpack.c.l.b16 %v65
  %v330 = vunpack.c.l.b16 %v66
  %v331 = vunpack.c.l.b16 %v67
  %v332 = vunpack.c.l.b16 %v68
  %v333 = vunpack.c.l.b16 %v69
  %v334 = vunpack.c.l.b16 %v70
  %v335 = vunpack.c.l.b16 %v71
  %v336 = vunpack.c.l.b16 %v72
  %v337 = vunpack.c.l.b16 %v73
  %v338 = vunpack.c.l.b16 %v74
  %v339 = vunpack.c.l.b16 %v75
  %v340 = vunpack.c.l.b16 %v76
  %v341 = vunpack.c.l.b16 %v77
  %v342 = vunpack.c.l.b16 %v78
  %v343 = vunpack.c.l.b16 %v79
  %v344 = vunpack.c.l.b16 %v80
  %v345 = vunpack.c.l.b16 %v81
  %v346 = vunpack.c.l.b16 %v82
  %v347 = vunpack.c.l.b16 %v83
  %v348 = vunpack.c.l.b16 %v84
  %v349 = vunpack.c.l.b16 %v85
  %v350 = vunpack.c.l.b16 %v86
  %v351 = vunpack.c.l.b16 %v87
  %v352 = vunpack.c.l.b16 %v88
  %v353 = vunpack.c.l.b16 %v89
  %v354 = vunpack.c.l.b16 %v90
  %v355 = vunpack.c.l.b16 %v91
  %v356 = vunpack.c.l.b16 %v92
  %v357 = vunpack.c.l.b16 %v93
  %v358 = vunpack.c.l.b16 %v94
  %v359 = vunpack.c.l.b16 %v95
  %v360 = vunpack.c.l.b16 %v96
  %v361 = vunpack.c.l.b16 %v97
  %v362 = vunpack.c.l.b16 %v98
  %v363 = vunpack.c.l.b16 %v99
  %v364 = vunpack.c.l.b16 %v100
  %v365 = vunpack.c.l.b16 %v101
  %v366 = vunpack.c.l.b16 %v102
  %v367 = vunpack.c.l.b16 %v103
  %v368 = vunpack.c.l.b16 %v104
  %v369 = vunpack.c.l.b16 %v105
  %v370 = vunpack.c.l.b16 %v106
  %v371 = vunpack.c.l.b16 %v107
  %v372 = vunpack.c.l.b16 %v108
  %v373 = vunpack.c.l.b16 %v109
  %v374 = vunpack.c.l.b16 %v110
  %v375 = vunpack.c.l.b16 %v111
  %v376 = vunpack.c.l.b16 %v112
  %v377 = vunpack.c.l.b16 %v113
  %v378 = vunpack.c.l.b16 %v114
  %v379 = vunpack.c.l.b16 %v115
  %v380 = vunpack.c.l.b16 %v116
  %v381 = vunpack.c.l.b16 %v117
  %v382 = vunpack.c.l.b16 %v118
  %v383 = vunpack.c.l.b16 %v119
  %v384 = vunpack.c.l.b16 %v120
  %v385 = vunpack.c.l.b16 %v121
  %v386 = vunpack.c.l.b16 %v122
  %v387 = vunpack.c.l.b16 %v123
  %v388 = vunpack.c.l.b16 %v124
  %v389 = vunpack.c.l.b16 %v125
  %v390 = vunpack.c.l.b16 %v126
  %v391 = vunpack.c.l.b16 %v127
  %v392 = vunpack.c.l.b16 %v128
  %v393 = vunpack.c.l.b16 %v129
  %v394 = vunpack.c.l.b16 %v130
  %v395 = vunpack.c.l.b16 %v131
  %v396 = vunpack.c.l.b16 %v132
  %v397 = vunpack.c.l.b16 %v133
  %v398 = vunpack.c.l.b16 %v134
  %v399 = vunpack.c.l.b16 %v135
  %v400 = vunpack.c.l.b16 %v136
  %v401 = vunpack.c.l.b16 %v137
  %v402 = vunpack.c.l.b16 %v138
  %v403 = vunpack.c.l.b16 %v139
  %v404 = vunpack.c.l.b16 %v140
  %v405 = vunpack.c.l.b16 %v141
  %v406 = vunpack.c.l.b16 %v142
  %v407 = vunpack.c.l.b16 %v143
  %v408 = vunpack.c.l.b16 %v144
  %v409 = vunpack.c.l.b16 %v145
  %v410 = vunpack.c.l.b16 %v146
  %v411 = vunpack.c.l.b16 %v147
  %v412 = vunpack.c.l.b16 %v148
  %v413 = vunpack.c.l.b16 %v149
  %v414 = vunpack.c.l.b16 %v150
  %v415 = vunpack.c.l.b16 %v151
  %v416 = vunpack.c.l.b16 %v152
  %v417 = vunpack.c.l.b16 %v153
  %v418 = vunpack.c.l.b16 %v154
  %v419 = vunpack.c.l.b16 %v155
  %v420 = vunpack.c.l.b16 %v156
  %v421 = vunpack.c.l.b16 %v157
  %v422 = vunpack.c.l.b16 %v158
  %v423 = vunpack.c.l.b16 %v159
  %v424 = vunpack.c.l.b16 %v160
  %v425 = vunpack.c.l.b16 %v161
  %v426 = vunpack.c.l.b16 %v162
  %v427 = vunpack.c.l.b16 %v163
  %v428 = vunpack.c.l.b16 %v164
  %v429 = vunpack.c.l.b16 %v165
  %v430 = vunpack.c.l.b16 %v166
  %v431 = vunpack.c.l.b16 %v167
  %v432 = vunpack.c.l.b16 %v168
  %v433 = vunpack.c.l.b16 %v169
  %v434 = vunpack.c.l.b16 %v170
  %v435 = vunpack.c.l.b16 %v171
  %v436 = vunpack.c.l.b16 %v172
  %v437 = vpack.c.b16 %v310, %v309
  %v438 = vpack.c.b16 %v312, %v311
  %v439 = vpack.c.b16 %v314, %v313
  %v440 = vpack.c.b16 %v316, %v315
  %v441 = vpack.c.b16 %v318, %v317
  %v442 = vpack.c.b16 %v320, %v319
  %v443 = vpack.c.b16 %v322, %v321
  %v444 = vpack.c.b16 %v324, %v323
  %v445 = vpack.c.b16 %v326, %v325
  %v446 = vpack.c.b16 %v328, %v327
  %v447 = vpack.c.b16 %v330, %v329
  %v448 = vpack.c.b16 %v332, %v331
  %v449 = vpack.c.b16 %v334, %v333
  %v450 = vpack.c.b16 %v336, %v335
  %v451 = vpack.c.b16 %v338, %v337
  %v452 = vpack.c.b16 %v340, %v339
  %v453 = vpack.c.b16 %v342, %v341
  %v454 = vpack.c.b16 %v344, %v343
  %v455 = vpack.c.b16 %v346, %v345
  %v456 = vpack.c.b16 %v348, %v347
  %v457 = vpack.c.b16 %v350, %v349
  %v458 = vpack.c.b16 %v352, %v351
  %v459 = vpack.c.b16 %v354, %v353
  %v460 = vpack.c.b16 %v356, %v355
  %v461 = vpack.c.b16 %v358, %v357
  %v462 = vpack.c.b16 %v360, %v359
  %v463 = vpack.c.b16 %v362, %v361
  %v464 = vpack.c.b16 %v364, %v363
  %v465 = vpack.c.b16 %v366, %v365
  %v466 = vpack.c.b16 %v368, %v367
  %v467 = vpack.c.b16 %v370, %v369
  %v468 = vpack.c.b16 %v372, %v371
  %v469 = vpack.c.b16 %v374, %v373
  %v470 = vpack.c.b16 %v376, %v375
  %v471 = vpack.c.b16 %v378, %v377
  %v472 = vpack.c.b16 %v380, %v379
  %v473 = vpack.c.b16 %v382, %v381
  %v474 = vpack.c.b16 %v384, %v383
  %v475 = vpack.c.b16 %v386, %v385
  %v476 = vpack.c.b16 %v388, %v387
  %v477 = vpack.c.b16 %v390, %v389
  %v478 = vpack.c.b16 %v392, %v391
  %v479 = vpack.c.b16 %v394, %v393
  %v480 = vpack.c.b16 %v396, %v395
  %v481 = vpack.c.b16 %v398, %v397
  %v482 = vpack.c.b16 %v400, %v399
  %v483 = vpack.c.b16 %v402, %v401
  %v484 = vpack.c.b16 %v404, %v403
  %v485 = vpack.c.b16 %v406, %v405
  %v486 = vpack.c.b16 %v408, %v407
  %v487 = vpack.c.b16 %v410, %v409
  %v488 = vpack.c.b16 %v412, %v411
  %v489 = vpack.c.b16 %v414, %v413
  %v490 = vpack.c.b16 %v416, %v415
  %v491 = vpack.c.b16 %v418, %v417
  %v492 = vpack.c.b16 %v420, %v419
  %v493 = vpack.c.b16 %v422, %v421
  %v494 = vpack.c.b16 %v424, %v423
  %v495 = vpack.c.b16 %v426, %v425
  %v496 = vpack.c.b16 %v428, %v427
  %v497 = vpack.c.b16 %v430, %v429
  %v498 = vpack.c.b16 %v432, %v431
  %v499 = vpack.c.b16 %v434, %v433
  %v500 = vpack.c.b16 %v436, %v435
  %v509 = vunpack.c.l.b16 %v173
  %v510 = vunpack.c.l.b16 %v174
  %v511 = vunpack.c.l.b16 %v175
  %v512 = vunpack.c.l.b16 %v176
  %v513 = vunpack.c.l.b16 %v177
  %v514 = vunpack.c.l.b16 %v178
  %v515 = vunpack.c.l.b16 %v179
  %v516 = vunpack.c.l.b16 %v180
  %v517 = vpack.c.b16 %v510, %v509
  %v518 = vpack.c.b16 %v512, %v511
  %v519 = vpack.c.b16 %v514, %v513
  %v520 = vpack.c.b16 %v516, %v515
  %vm525 = vcmask 523264
  %v527 = vsel %vm525, %v437, 0
  %v530 = vsel %vm525, %v438, 0
  %v533 = vsel %vm525, %v439, 0
  %v536 = vsel %vm525, %v440, 0
  %v539 = vsel %vm525, %v441, 0
  %v542 = vsel %vm525, %v442, 0
  %v545 = vsel %vm525, %v443, 0
  %v548 = vsel %vm525, %v444, 0
  %v551 = vsel %vm525, %v445, 0
  %v554 = vsel %vm525, %v446, 0
  %v557 = vsel %vm525, %v447, 0
  %v560 = vsel %vm525, %v448, 0
  %v563 = vsel %vm525, %v449, 0
  %v566 = vsel %vm525, %v450, 0
  %v569 = vsel %vm525, %v451, 0
  %v572 = vsel %vm525, %v452, 0
  %v575 = vsel %vm525, %v453, 0
  %v578 = vsel %vm525, %v454, 0
  %v581 = vsel %vm525, %v455, 0
  %v584 = vsel %vm525, %v456, 0
  %v587 = vsel %vm525, %v457, 0
  %v590 = vsel %vm525, %v458, 0
  %v593 = vsel %vm525, %v459, 0
  %v596 = vsel %vm525, %v460, 0
  %v599 = vsel %vm525, %v461, 0
  %v602 = vsel %vm525, %v462, 0
  %v605 = vsel %vm525, %v463, 0
  %v608 = vsel %vm525, %v464, 0
  %v611 = vsel %vm525, %v465, 0
  %v614 = vsel %vm525, %v466, 0
  %v617 = vsel %vm525, %v467, 0
  %v620 = vsel %vm525, %v468, 0
  %v623 = vsel %vm525, %v469, 0
  %v626 = vsel %vm525, %v470, 0
  %v629 = vsel %vm525, %v471, 0
  %v632 = vsel %vm525, %v472, 0
  %v635 = vsel %vm525, %v473, 0
  %v638 = vsel %vm525, %v474, 0
  %v641 = vsel %vm525, %v475, 0
  %v644 = vsel %vm525, %v476, 0
  %v647 = vsel %vm525, %v477, 0
  %v650 = vsel %vm525, %v478, 0
  %v653 = vsel %vm525, %v479, 0
  %v656 = vsel %vm525, %v480, 0
  %v659 = vsel %vm525, %v481, 0
  %v662 = vsel %vm525, %v482, 0
  %v665 = vsel %vm525, %v483, 0
  %v668 = vsel %vm525, %v484, 0
  %v671 = vsel %vm525, %v485, 0
  %v674 = vsel %vm525, %v486, 0
  %v677 = vsel %vm525, %v487, 0
  %v680 = vsel %vm525, %v488, 0
  %v683 = vsel %vm525, %v489, 0
  %v686 = vsel %vm525, %v490, 0
  %v689 = vsel %vm525, %v491, 0
  %v692 = vsel %vm525, %v492, 0
  %v695 = vsel %vm525, %v493, 0
  %v698 = vsel %vm525, %v494, 0
  %v701 = vsel %vm525, %v495, 0
  %v704 = vsel %vm525, %v496, 0
  %v707 = vsel %vm525, %v497, 0
  %v710 = vsel %vm525, %v498, 0
  %v713 = vsel %vm525, %v499, 0
  %v716 = vsel %vm525, %v500, 0
  %718 = vmatpush.bf16.msra.mxu0 0
  %719 = vmatpush.bf16.msra.mxu0 0
  %720 = vmatpush.bf16.msra.mxu0 0
  %721 = vmatpush.bf16.msra.mxu0 0
  %722 = vmatpush.bf16.msra.mxu0 %v520
  %723 = vmatpush.bf16.msra.mxu0 %v519
  %724 = vmatpush.bf16.msra.mxu0 %v518
  %725 = vmatpush.bf16.msra.mxu0 %v517
  %726 = vmatmul.bf16.gmra.mxu0 %v527
  %v727 = vpop.f32.mrf.mxu0
  %v728 = vadd.f32 0.0, %v727
  %v729 = vpop.f32.mrf.mxu0
  %v730 = vadd.f32 0.0, %v729
  %731 = vmatmul.bf16.gmra.mxu0 %v530
  %v732 = vpop.f32.mrf.mxu0
  %v733 = vadd.f32 0.0, %v732
  %v734 = vpop.f32.mrf.mxu0
  %v735 = vadd.f32 0.0, %v734
  %736 = vmatmul.bf16.gmra.mxu0 %v533
  %v737 = vpop.f32.mrf.mxu0
  %v738 = vadd.f32 0.0, %v737
  %v739 = vpop.f32.mrf.mxu0
  %v740 = vadd.f32 0.0, %v739
  %741 = vmatmul.bf16.gmra.mxu0 %v536
  %v742 = vpop.f32.mrf.mxu0
  %v743 = vadd.f32 0.0, %v742
  %v744 = vpop.f32.mrf.mxu0
  %v745 = vadd.f32 0.0, %v744
  %746 = vmatmul.bf16.gmra.mxu0 %v539
  %v747 = vpop.f32.mrf.mxu0
  %v748 = vadd.f32 0.0, %v747
  %v749 = vpop.f32.mrf.mxu0
  %v750 = vadd.f32 0.0, %v749
  %751 = vmatmul.bf16.gmra.mxu0 %v542
  %v752 = vpop.f32.mrf.mxu0
  %v753 = vadd.f32 0.0, %v752
  %v754 = vpop.f32.mrf.mxu0
  %v755 = vadd.f32 0.0, %v754
  %756 = vmatmul.bf16.gmra.mxu0 %v545
  %v757 = vpop.f32.mrf.mxu0
  %v758 = vadd.f32 0.0, %v757
  %v759 = vpop.f32.mrf.mxu0
  %v760 = vadd.f32 0.0, %v759
  %761 = vmatmul.bf16.gmra.mxu0 %v548
  %v762 = vpop.f32.mrf.mxu0
  %v763 = vadd.f32 0.0, %v762
  %v764 = vpop.f32.mrf.mxu0
  %v765 = vadd.f32 0.0, %v764
  %766 = vmatmul.bf16.gmra.mxu0 %v551
  %v767 = vpop.f32.mrf.mxu0
  %v768 = vadd.f32 0.0, %v767
  %v769 = vpop.f32.mrf.mxu0
  %v770 = vadd.f32 0.0, %v769
  %771 = vmatmul.bf16.gmra.mxu0 %v554
  %v772 = vpop.f32.mrf.mxu0
  %v773 = vadd.f32 0.0, %v772
  %v774 = vpop.f32.mrf.mxu0
  %v775 = vadd.f32 0.0, %v774
  %776 = vmatmul.bf16.gmra.mxu0 %v557
  %v777 = vpop.f32.mrf.mxu0
  %v778 = vadd.f32 0.0, %v777
  %v779 = vpop.f32.mrf.mxu0
  %v780 = vadd.f32 0.0, %v779
  %781 = vmatmul.bf16.gmra.mxu0 %v560
  %v782 = vpop.f32.mrf.mxu0
  %v783 = vadd.f32 0.0, %v782
  %v784 = vpop.f32.mrf.mxu0
  %v785 = vadd.f32 0.0, %v784
  %786 = vmatmul.bf16.gmra.mxu0 %v563
  %v787 = vpop.f32.mrf.mxu0
  %v788 = vadd.f32 0.0, %v787
  %v789 = vpop.f32.mrf.mxu0
  %v790 = vadd.f32 0.0, %v789
  %791 = vmatmul.bf16.gmra.mxu0 %v566
  %v792 = vpop.f32.mrf.mxu0
  %v793 = vadd.f32 0.0, %v792
  %v794 = vpop.f32.mrf.mxu0
  %v795 = vadd.f32 0.0, %v794
  %796 = vmatmul.bf16.gmra.mxu0 %v569
  %v797 = vpop.f32.mrf.mxu0
  %v798 = vadd.f32 0.0, %v797
  %v799 = vpop.f32.mrf.mxu0
  %v800 = vadd.f32 0.0, %v799
  %801 = vmatmul.bf16.gmra.mxu0 %v572
  %v802 = vpop.f32.mrf.mxu0
  %v803 = vadd.f32 0.0, %v802
  %v804 = vpop.f32.mrf.mxu0
  %v805 = vadd.f32 0.0, %v804
  %806 = vmatmul.bf16.gmra.mxu0 %v575
  %v807 = vpop.f32.mrf.mxu0
  %v808 = vadd.f32 0.0, %v807
  %v809 = vpop.f32.mrf.mxu0
  %v810 = vadd.f32 0.0, %v809
  %811 = vmatmul.bf16.gmra.mxu0 %v578
  %v812 = vpop.f32.mrf.mxu0
  %v813 = vadd.f32 0.0, %v812
  %v814 = vpop.f32.mrf.mxu0
  %v815 = vadd.f32 0.0, %v814
  %816 = vmatmul.bf16.gmra.mxu0 %v581
  %v817 = vpop.f32.mrf.mxu0
  %v818 = vadd.f32 0.0, %v817
  %v819 = vpop.f32.mrf.mxu0
  %v820 = vadd.f32 0.0, %v819
  %821 = vmatmul.bf16.gmra.mxu0 %v584
  %v822 = vpop.f32.mrf.mxu0
  %v823 = vadd.f32 0.0, %v822
  %v824 = vpop.f32.mrf.mxu0
  %v825 = vadd.f32 0.0, %v824
  %826 = vmatmul.bf16.gmra.mxu0 %v587
  %v827 = vpop.f32.mrf.mxu0
  %v828 = vadd.f32 0.0, %v827
  %v829 = vpop.f32.mrf.mxu0
  %v830 = vadd.f32 0.0, %v829
  %831 = vmatmul.bf16.gmra.mxu0 %v590
  %v832 = vpop.f32.mrf.mxu0
  %v833 = vadd.f32 0.0, %v832
  %v834 = vpop.f32.mrf.mxu0
  %v835 = vadd.f32 0.0, %v834
  %836 = vmatmul.bf16.gmra.mxu0 %v593
  %v837 = vpop.f32.mrf.mxu0
  %v838 = vadd.f32 0.0, %v837
  %v839 = vpop.f32.mrf.mxu0
  %v840 = vadd.f32 0.0, %v839
  %841 = vmatmul.bf16.gmra.mxu0 %v596
  %v842 = vpop.f32.mrf.mxu0
  %v843 = vadd.f32 0.0, %v842
  %v844 = vpop.f32.mrf.mxu0
  %v845 = vadd.f32 0.0, %v844
  %846 = vmatmul.bf16.gmra.mxu0 %v599
  %v847 = vpop.f32.mrf.mxu0
  %v848 = vadd.f32 0.0, %v847
  %v849 = vpop.f32.mrf.mxu0
  %v850 = vadd.f32 0.0, %v849
  %851 = vmatmul.bf16.gmra.mxu0 %v602
  %v852 = vpop.f32.mrf.mxu0
  %v853 = vadd.f32 0.0, %v852
  %v854 = vpop.f32.mrf.mxu0
  %v855 = vadd.f32 0.0, %v854
  %856 = vmatmul.bf16.gmra.mxu0 %v605
  %v857 = vpop.f32.mrf.mxu0
  %v858 = vadd.f32 0.0, %v857
  %v859 = vpop.f32.mrf.mxu0
  %v860 = vadd.f32 0.0, %v859
  %861 = vmatmul.bf16.gmra.mxu0 %v608
  %v862 = vpop.f32.mrf.mxu0
  %v863 = vadd.f32 0.0, %v862
  %v864 = vpop.f32.mrf.mxu0
  %v865 = vadd.f32 0.0, %v864
  %866 = vmatmul.bf16.gmra.mxu0 %v611
  %v867 = vpop.f32.mrf.mxu0
  %v868 = vadd.f32 0.0, %v867
  %v869 = vpop.f32.mrf.mxu0
  %v870 = vadd.f32 0.0, %v869
  %871 = vmatmul.bf16.gmra.mxu0 %v614
  %v872 = vpop.f32.mrf.mxu0
  %v873 = vadd.f32 0.0, %v872
  %v874 = vpop.f32.mrf.mxu0
  %v875 = vadd.f32 0.0, %v874
  %876 = vmatmul.bf16.gmra.mxu0 %v617
  %v877 = vpop.f32.mrf.mxu0
  %v878 = vadd.f32 0.0, %v877
  %v879 = vpop.f32.mrf.mxu0
  %v880 = vadd.f32 0.0, %v879
  %881 = vmatmul.bf16.gmra.mxu0 %v620
  %v882 = vpop.f32.mrf.mxu0
  %v883 = vadd.f32 0.0, %v882
  %v884 = vpop.f32.mrf.mxu0
  %v885 = vadd.f32 0.0, %v884
  %886 = vmatmul.bf16.gmra.mxu0 %v623
  %v887 = vpop.f32.mrf.mxu0
  %v888 = vadd.f32 0.0, %v887
  %v889 = vpop.f32.mrf.mxu0
  %v890 = vadd.f32 0.0, %v889
  %891 = vmatmul.bf16.gmra.mxu0 %v626
  %v892 = vpop.f32.mrf.mxu0
  %v893 = vadd.f32 0.0, %v892
  %v894 = vpop.f32.mrf.mxu0
  %v895 = vadd.f32 0.0, %v894
  %896 = vmatmul.bf16.gmra.mxu0 %v629
  %v897 = vpop.f32.mrf.mxu0
  %v898 = vadd.f32 0.0, %v897
  %v899 = vpop.f32.mrf.mxu0
  %v900 = vadd.f32 0.0, %v899
  %901 = vmatmul.bf16.gmra.mxu0 %v632
  %v902 = vpop.f32.mrf.mxu0
  %v903 = vadd.f32 0.0, %v902
  %v904 = vpop.f32.mrf.mxu0
  %v905 = vadd.f32 0.0, %v904
  %906 = vmatmul.bf16.gmra.mxu0 %v635
  %v907 = vpop.f32.mrf.mxu0
  %v908 = vadd.f32 0.0, %v907
  %v909 = vpop.f32.mrf.mxu0
  %v910 = vadd.f32 0.0, %v909
  %911 = vmatmul.bf16.gmra.mxu0 %v638
  %v912 = vpop.f32.mrf.mxu0
  %v913 = vadd.f32 0.0, %v912
  %v914 = vpop.f32.mrf.mxu0
  %v915 = vadd.f32 0.0, %v914
  %916 = vmatmul.bf16.gmra.mxu0 %v641
  %v917 = vpop.f32.mrf.mxu0
  %v918 = vadd.f32 0.0, %v917
  %v919 = vpop.f32.mrf.mxu0
  %v920 = vadd.f32 0.0, %v919
  %921 = vmatmul.bf16.gmra.mxu0 %v644
  %v922 = vpop.f32.mrf.mxu0
  %v923 = vadd.f32 0.0, %v922
  %v924 = vpop.f32.mrf.mxu0
  %v925 = vadd.f32 0.0, %v924
  %926 = vmatmul.bf16.gmra.mxu0 %v647
  %v927 = vpop.f32.mrf.mxu0
  %v928 = vadd.f32 0.0, %v927
  %v929 = vpop.f32.mrf.mxu0
  %v930 = vadd.f32 0.0, %v929
  %931 = vmatmul.bf16.gmra.mxu0 %v650
  %v932 = vpop.f32.mrf.mxu0
  %v933 = vadd.f32 0.0, %v932
  %v934 = vpop.f32.mrf.mxu0
  %v935 = vadd.f32 0.0, %v934
  %936 = vmatmul.bf16.gmra.mxu0 %v653
  %v937 = vpop.f32.mrf.mxu0
  %v938 = vadd.f32 0.0, %v937
  %v939 = vpop.f32.mrf.mxu0
  %v940 = vadd.f32 0.0, %v939
  %941 = vmatmul.bf16.gmra.mxu0 %v656
  %v942 = vpop.f32.mrf.mxu0
  %v943 = vadd.f32 0.0, %v942
  %v944 = vpop.f32.mrf.mxu0
  %v945 = vadd.f32 0.0, %v944
  %946 = vmatmul.bf16.gmra.mxu0 %v659
  %v947 = vpop.f32.mrf.mxu0
  %v948 = vadd.f32 0.0, %v947
  %v949 = vpop.f32.mrf.mxu0
  %v950 = vadd.f32 0.0, %v949
  %951 = vmatmul.bf16.gmra.mxu0 %v662
  %v952 = vpop.f32.mrf.mxu0
  %v953 = vadd.f32 0.0, %v952
  %v954 = vpop.f32.mrf.mxu0
  %v955 = vadd.f32 0.0, %v954
  %956 = vmatmul.bf16.gmra.mxu0 %v665
  %v957 = vpop.f32.mrf.mxu0
  %v958 = vadd.f32 0.0, %v957
  %v959 = vpop.f32.mrf.mxu0
  %v960 = vadd.f32 0.0, %v959
  %961 = vmatmul.bf16.gmra.mxu0 %v668
  %v962 = vpop.f32.mrf.mxu0
  %v963 = vadd.f32 0.0, %v962
  %v964 = vpop.f32.mrf.mxu0
  %v965 = vadd.f32 0.0, %v964
  %966 = vmatmul.bf16.gmra.mxu0 %v671
  %v967 = vpop.f32.mrf.mxu0
  %v968 = vadd.f32 0.0, %v967
  %v969 = vpop.f32.mrf.mxu0
  %v970 = vadd.f32 0.0, %v969
  %971 = vmatmul.bf16.gmra.mxu0 %v674
  %v972 = vpop.f32.mrf.mxu0
  %v973 = vadd.f32 0.0, %v972
  %v974 = vpop.f32.mrf.mxu0
  %v975 = vadd.f32 0.0, %v974
  %976 = vmatmul.bf16.gmra.mxu0 %v677
  %v977 = vpop.f32.mrf.mxu0
  %v978 = vadd.f32 0.0, %v977
  %v979 = vpop.f32.mrf.mxu0
  %v980 = vadd.f32 0.0, %v979
  %981 = vmatmul.bf16.gmra.mxu0 %v680
  %v982 = vpop.f32.mrf.mxu0
  %v983 = vadd.f32 0.0, %v982
  %v984 = vpop.f32.mrf.mxu0
  %v985 = vadd.f32 0.0, %v984
  %986 = vmatmul.bf16.gmra.mxu0 %v683
  %v987 = vpop.f32.mrf.mxu0
  %v988 = vadd.f32 0.0, %v987
  %v989 = vpop.f32.mrf.mxu0
  %v990 = vadd.f32 0.0, %v989
  %991 = vmatmul.bf16.gmra.mxu0 %v686
  %v992 = vpop.f32.mrf.mxu0
  %v993 = vadd.f32 0.0, %v992
  %v994 = vpop.f32.mrf.mxu0
  %v995 = vadd.f32 0.0, %v994
  %996 = vmatmul.bf16.gmra.mxu0 %v689
  %v997 = vpop.f32.mrf.mxu0
  %v998 = vadd.f32 0.0, %v997
  %v999 = vpop.f32.mrf.mxu0
  %v1000 = vadd.f32 0.0, %v999
  %1001 = vmatmul.bf16.gmra.mxu0 %v692
  %v1002 = vpop.f32.mrf.mxu0
  %v1003 = vadd.f32 0.0, %v1002
  %v1004 = vpop.f32.mrf.mxu0
  %v1005 = vadd.f32 0.0, %v1004
  %1006 = vmatmul.bf16.gmra.mxu0 %v695
  %v1007 = vpop.f32.mrf.mxu0
  %v1008 = vadd.f32 0.0, %v1007
  %v1009 = vpop.f32.mrf.mxu0
  %v1010 = vadd.f32 0.0, %v1009
  %1011 = vmatmul.bf16.gmra.mxu0 %v698
  %v1012 = vpop.f32.mrf.mxu0
  %v1013 = vadd.f32 0.0, %v1012
  %v1014 = vpop.f32.mrf.mxu0
  %v1015 = vadd.f32 0.0, %v1014
  %1016 = vmatmul.bf16.gmra.mxu0 %v701
  %v1017 = vpop.f32.mrf.mxu0
  %v1018 = vadd.f32 0.0, %v1017
  %v1019 = vpop.f32.mrf.mxu0
  %v1020 = vadd.f32 0.0, %v1019
  %1021 = vmatmul.bf16.gmra.mxu0 %v704
  %v1022 = vpop.f32.mrf.mxu0
  %v1023 = vadd.f32 0.0, %v1022
  %v1024 = vpop.f32.mrf.mxu0
  %v1025 = vadd.f32 0.0, %v1024
  %1026 = vmatmul.bf16.gmra.mxu0 %v707
  %v1027 = vpop.f32.mrf.mxu0
  %v1028 = vadd.f32 0.0, %v1027
  %v1029 = vpop.f32.mrf.mxu0
  %v1030 = vadd.f32 0.0, %v1029
  %1031 = vmatmul.bf16.gmra.mxu0 %v710
  %v1032 = vpop.f32.mrf.mxu0
  %v1033 = vadd.f32 0.0, %v1032
  %v1034 = vpop.f32.mrf.mxu0
  %v1035 = vadd.f32 0.0, %v1034
  %1036 = vmatmul.bf16.gmra.mxu0 %v713
  %v1037 = vpop.f32.mrf.mxu0
  %v1038 = vadd.f32 0.0, %v1037
  %v1039 = vpop.f32.mrf.mxu0
  %v1040 = vadd.f32 0.0, %v1039
  %1041 = vmatmul.bf16.gmra.mxu0 %v716
  %v1042 = vpop.f32.mrf.mxu0
  %v1043 = vadd.f32 0.0, %v1042
  %v1044 = vpop.f32.mrf.mxu0
  %v1045 = vadd.f32 0.0, %v1044
  %1046 = vdwg.mxu0
  %v1047 = vld [vmem:[%s4] sm:$0x1]
  %v1049 = vperm.slane %v1047, 0
  %v1051 = vmul.f32 %v728, %v1049
  %v1052 = vmul.f32 %v730, %v1049
  %v1053 = vmul.f32 %v733, %v1049
  %v1054 = vmul.f32 %v735, %v1049
  %v1055 = vmul.f32 %v738, %v1049
  %v1056 = vmul.f32 %v740, %v1049
  %v1057 = vmul.f32 %v743, %v1049
  %v1058 = vmul.f32 %v745, %v1049
  %v1059 = vmul.f32 %v748, %v1049
  %v1060 = vmul.f32 %v750, %v1049
  %v1061 = vmul.f32 %v753, %v1049
  %v1062 = vmul.f32 %v755, %v1049
  %v1063 = vmul.f32 %v758, %v1049
  %v1064 = vmul.f32 %v760, %v1049
  %v1065 = vmul.f32 %v763, %v1049
  %v1066 = vmul.f32 %v765, %v1049
  %v1067 = vmul.f32 %v768, %v1049
  %v1068 = vmul.f32 %v770, %v1049
  %v1069 = vmul.f32 %v773, %v1049
  %v1070 = vmul.f32 %v775, %v1049
  %v1071 = vmul.f32 %v778, %v1049
  %v1072 = vmul.f32 %v780, %v1049
  %v1073 = vmul.f32 %v783, %v1049
  %v1074 = vmul.f32 %v785, %v1049
  %v1075 = vmul.f32 %v788, %v1049
  %v1076 = vmul.f32 %v790, %v1049
  %v1077 = vmul.f32 %v793, %v1049
  %v1078 = vmul.f32 %v795, %v1049
  %v1079 = vmul.f32 %v798, %v1049
  %v1080 = vmul.f32 %v800, %v1049
  %v1081 = vmul.f32 %v803, %v1049
  %v1082 = vmul.f32 %v805, %v1049
  %v1083 = vmul.f32 %v808, %v1049
  %v1084 = vmul.f32 %v810, %v1049
  %v1085 = vmul.f32 %v813, %v1049
  %v1086 = vmul.f32 %v815, %v1049
  %v1087 = vmul.f32 %v818, %v1049
  %v1088 = vmul.f32 %v820, %v1049
  %v1089 = vmul.f32 %v823, %v1049
  %v1090 = vmul.f32 %v825, %v1049
  %v1091 = vmul.f32 %v828, %v1049
  %v1092 = vmul.f32 %v830, %v1049
  %v1093 = vmul.f32 %v833, %v1049
  %v1094 = vmul.f32 %v835, %v1049
  %v1095 = vmul.f32 %v838, %v1049
  %v1096 = vmul.f32 %v840, %v1049
  %v1097 = vmul.f32 %v843, %v1049
  %v1098 = vmul.f32 %v845, %v1049
  %v1099 = vmul.f32 %v848, %v1049
  %v1100 = vmul.f32 %v850, %v1049
  %v1101 = vmul.f32 %v853, %v1049
  %v1102 = vmul.f32 %v855, %v1049
  %v1103 = vmul.f32 %v858, %v1049
  %v1104 = vmul.f32 %v860, %v1049
  %v1105 = vmul.f32 %v863, %v1049
  %v1106 = vmul.f32 %v865, %v1049
  %v1107 = vmul.f32 %v868, %v1049
  %v1108 = vmul.f32 %v870, %v1049
  %v1109 = vmul.f32 %v873, %v1049
  %v1110 = vmul.f32 %v875, %v1049
  %v1111 = vmul.f32 %v878, %v1049
  %v1112 = vmul.f32 %v880, %v1049
  %v1113 = vmul.f32 %v883, %v1049
  %v1114 = vmul.f32 %v885, %v1049
  %v1115 = vmul.f32 %v888, %v1049
  %v1116 = vmul.f32 %v890, %v1049
  %v1117 = vmul.f32 %v893, %v1049
  %v1118 = vmul.f32 %v895, %v1049
  %v1119 = vmul.f32 %v898, %v1049
  %v1120 = vmul.f32 %v900, %v1049
  %v1121 = vmul.f32 %v903, %v1049
  %v1122 = vmul.f32 %v905, %v1049
  %v1123 = vmul.f32 %v908, %v1049
  %v1124 = vmul.f32 %v910, %v1049
  %v1125 = vmul.f32 %v913, %v1049
  %v1126 = vmul.f32 %v915, %v1049
  %v1127 = vmul.f32 %v918, %v1049
  %v1128 = vmul.f32 %v920, %v1049
  %v1129 = vmul.f32 %v923, %v1049
  %v1130 = vmul.f32 %v925, %v1049
  %v1131 = vmul.f32 %v928, %v1049
  %v1132 = vmul.f32 %v930, %v1049
  %v1133 = vmul.f32 %v933, %v1049
  %v1134 = vmul.f32 %v935, %v1049
  %v1135 = vmul.f32 %v938, %v1049
  %v1136 = vmul.f32 %v940, %v1049
  %v1137 = vmul.f32 %v943, %v1049
  %v1138 = vmul.f32 %v945, %v1049
  %v1139 = vmul.f32 %v948, %v1049
  %v1140 = vmul.f32 %v950, %v1049
  %v1141 = vmul.f32 %v953, %v1049
  %v1142 = vmul.f32 %v955, %v1049
  %v1143 = vmul.f32 %v958, %v1049
  %v1144 = vmul.f32 %v960, %v1049
  %v1145 = vmul.f32 %v963, %v1049
  %v1146 = vmul.f32 %v965, %v1049
  %v1147 = vmul.f32 %v968, %v1049
  %v1148 = vmul.f32 %v970, %v1049
  %v1149 = vmul.f32 %v973, %v1049
  %v1150 = vmul.f32 %v975, %v1049
  %v1151 = vmul.f32 %v978, %v1049
  %v1152 = vmul.f32 %v980, %v1049
  %v1153 = vmul.f32 %v983, %v1049
  %v1154 = vmul.f32 %v985, %v1049
  %v1155 = vmul.f32 %v988, %v1049
  %v1156 = vmul.f32 %v990, %v1049
  %v1157 = vmul.f32 %v993, %v1049
  %v1158 = vmul.f32 %v995, %v1049
  %v1159 = vmul.f32 %v998, %v1049
  %v1160 = vmul.f32 %v1000, %v1049
  %v1161 = vmul.f32 %v1003, %v1049
  %v1162 = vmul.f32 %v1005, %v1049
  %v1163 = vmul.f32 %v1008, %v1049
  %v1164 = vmul.f32 %v1010, %v1049
  %v1165 = vmul.f32 %v1013, %v1049
  %v1166 = vmul.f32 %v1015, %v1049
  %v1167 = vmul.f32 %v1018, %v1049
  %v1168 = vmul.f32 %v1020, %v1049
  %v1169 = vmul.f32 %v1023, %v1049
  %v1170 = vmul.f32 %v1025, %v1049
  %v1171 = vmul.f32 %v1028, %v1049
  %v1172 = vmul.f32 %v1030, %v1049
  %v1173 = vmul.f32 %v1033, %v1049
  %v1174 = vmul.f32 %v1035, %v1049
  %v1175 = vmul.f32 %v1038, %v1049
  %v1176 = vmul.f32 %v1040, %v1049
  %v1177 = vmul.f32 %v1043, %v1049
  %v1178 = vmul.f32 %v1045, %v1049
  %v1179 = vld [vmem:[%s5] sm:$0x1]
  %v1181 = vperm.slane %v1179, 0
  %v1183 = vadd.f32 %v1051, %v1181
  %v1184 = vadd.f32 %v1052, %v1181
  %v1185 = vadd.f32 %v1053, %v1181
  %v1186 = vadd.f32 %v1054, %v1181
  %v1187 = vadd.f32 %v1055, %v1181
  %v1188 = vadd.f32 %v1056, %v1181
  %v1189 = vadd.f32 %v1057, %v1181
  %v1190 = vadd.f32 %v1058, %v1181
  %v1191 = vadd.f32 %v1059, %v1181
  %v1192 = vadd.f32 %v1060, %v1181
  %v1193 = vadd.f32 %v1061, %v1181
  %v1194 = vadd.f32 %v1062, %v1181
  %v1195 = vadd.f32 %v1063, %v1181
  %v1196 = vadd.f32 %v1064, %v1181
  %v1197 = vadd.f32 %v1065, %v1181
  %v1198 = vadd.f32 %v1066, %v1181
  %v1199 = vadd.f32 %v1067, %v1181
  %v1200 = vadd.f32 %v1068, %v1181
  %v1201 = vadd.f32 %v1069, %v1181
  %v1202 = vadd.f32 %v1070, %v1181
  %v1203 = vadd.f32 %v1071, %v1181
  %v1204 = vadd.f32 %v1072, %v1181
  %v1205 = vadd.f32 %v1073, %v1181
  %v1206 = vadd.f32 %v1074, %v1181
  %v1207 = vadd.f32 %v1075, %v1181
  %v1208 = vadd.f32 %v1076, %v1181
  %v1209 = vadd.f32 %v1077, %v1181
  %v1210 = vadd.f32 %v1078, %v1181
  %v1211 = vadd.f32 %v1079, %v1181
  %v1212 = vadd.f32 %v1080, %v1181
  %v1213 = vadd.f32 %v1081, %v1181
  %v1214 = vadd.f32 %v1082, %v1181
  %v1215 = vadd.f32 %v1083, %v1181
  %v1216 = vadd.f32 %v1084, %v1181
  %v1217 = vadd.f32 %v1085, %v1181
  %v1218 = vadd.f32 %v1086, %v1181
  %v1219 = vadd.f32 %v1087, %v1181
  %v1220 = vadd.f32 %v1088, %v1181
  %v1221 = vadd.f32 %v1089, %v1181
  %v1222 = vadd.f32 %v1090, %v1181
  %v1223 = vadd.f32 %v1091, %v1181
  %v1224 = vadd.f32 %v1092, %v1181
  %v1225 = vadd.f32 %v1093, %v1181
  %v1226 = vadd.f32 %v1094, %v1181
  %v1227 = vadd.f32 %v1095, %v1181
  %v1228 = vadd.f32 %v1096, %v1181
  %v1229 = vadd.f32 %v1097, %v1181
  %v1230 = vadd.f32 %v1098, %v1181
  %v1231 = vadd.f32 %v1099, %v1181
  %v1232 = vadd.f32 %v1100, %v1181
  %v1233 = vadd.f32 %v1101, %v1181
  %v1234 = vadd.f32 %v1102, %v1181
  %v1235 = vadd.f32 %v1103, %v1181
  %v1236 = vadd.f32 %v1104, %v1181
  %v1237 = vadd.f32 %v1105, %v1181
  %v1238 = vadd.f32 %v1106, %v1181
  %v1239 = vadd.f32 %v1107, %v1181
  %v1240 = vadd.f32 %v1108, %v1181
  %v1241 = vadd.f32 %v1109, %v1181
  %v1242 = vadd.f32 %v1110, %v1181
  %v1243 = vadd.f32 %v1111, %v1181
  %v1244 = vadd.f32 %v1112, %v1181
  %v1245 = vadd.f32 %v1113, %v1181
  %v1246 = vadd.f32 %v1114, %v1181
  %v1247 = vadd.f32 %v1115, %v1181
  %v1248 = vadd.f32 %v1116, %v1181
  %v1249 = vadd.f32 %v1117, %v1181
  %v1250 = vadd.f32 %v1118, %v1181
  %v1251 = vadd.f32 %v1119, %v1181
  %v1252 = vadd.f32 %v1120, %v1181
  %v1253 = vadd.f32 %v1121, %v1181
  %v1254 = vadd.f32 %v1122, %v1181
  %v1255 = vadd.f32 %v1123, %v1181
  %v1256 = vadd.f32 %v1124, %v1181
  %v1257 = vadd.f32 %v1125, %v1181
  %v1258 = vadd.f32 %v1126, %v1181
  %v1259 = vadd.f32 %v1127, %v1181
  %v1260 = vadd.f32 %v1128, %v1181
  %v1261 = vadd.f32 %v1129, %v1181
  %v1262 = vadd.f32 %v1130, %v1181
  %v1263 = vadd.f32 %v1131, %v1181
  %v1264 = vadd.f32 %v1132, %v1181
  %v1265 = vadd.f32 %v1133, %v1181
  %v1266 = vadd.f32 %v1134, %v1181
  %v1267 = vadd.f32 %v1135, %v1181
  %v1268 = vadd.f32 %v1136, %v1181
  %v1269 = vadd.f32 %v1137, %v1181
  %v1270 = vadd.f32 %v1138, %v1181
  %v1271 = vadd.f32 %v1139, %v1181
  %v1272 = vadd.f32 %v1140, %v1181
  %v1273 = vadd.f32 %v1141, %v1181
  %v1274 = vadd.f32 %v1142, %v1181
  %v1275 = vadd.f32 %v1143, %v1181
  %v1276 = vadd.f32 %v1144, %v1181
  %v1277 = vadd.f32 %v1145, %v1181
  %v1278 = vadd.f32 %v1146, %v1181
  %v1279 = vadd.f32 %v1147, %v1181
  %v1280 = vadd.f32 %v1148, %v1181
  %v1281 = vadd.f32 %v1149, %v1181
  %v1282 = vadd.f32 %v1150, %v1181
  %v1283 = vadd.f32 %v1151, %v1181
  %v1284 = vadd.f32 %v1152, %v1181
  %v1285 = vadd.f32 %v1153, %v1181
  %v1286 = vadd.f32 %v1154, %v1181
  %v1287 = vadd.f32 %v1155, %v1181
  %v1288 = vadd.f32 %v1156, %v1181
  %v1289 = vadd.f32 %v1157, %v1181
  %v1290 = vadd.f32 %v1158, %v1181
  %v1291 = vadd.f32 %v1159, %v1181
  %v1292 = vadd.f32 %v1160, %v1181
  %v1293 = vadd.f32 %v1161, %v1181
  %v1294 = vadd.f32 %v1162, %v1181
  %v1295 = vadd.f32 %v1163, %v1181
  %v1296 = vadd.f32 %v1164, %v1181
  %v1297 = vadd.f32 %v1165, %v1181
  %v1298 = vadd.f32 %v1166, %v1181
  %v1299 = vadd.f32 %v1167, %v1181
  %v1300 = vadd.f32 %v1168, %v1181
  %v1301 = vadd.f32 %v1169, %v1181
  %v1302 = vadd.f32 %v1170, %v1181
  %v1303 = vadd.f32 %v1171, %v1181
  %v1304 = vadd.f32 %v1172, %v1181
  %v1305 = vadd.f32 %v1173, %v1181
  %v1306 = vadd.f32 %v1174, %v1181
  %v1307 = vadd.f32 %v1175, %v1181
  %v1308 = vadd.f32 %v1176, %v1181
  %v1309 = vadd.f32 %v1177, %v1181
  %v1310 = vadd.f32 %v1178, %v1181
  %v1311 = vmax.f32 %v1183, 0.0
  %v1312 = vmax.f32 %v1184, 0.0
  %v1313 = vmax.f32 %v1185, 0.0
  %v1314 = vmax.f32 %v1186, 0.0
  %v1315 = vmax.f32 %v1187, 0.0
  %v1316 = vmax.f32 %v1188, 0.0
  %v1317 = vmax.f32 %v1189, 0.0
  %v1318 = vmax.f32 %v1190, 0.0
  %v1319 = vmax.f32 %v1191, 0.0
  %v1320 = vmax.f32 %v1192, 0.0
  %v1321 = vmax.f32 %v1193, 0.0
  %v1322 = vmax.f32 %v1194, 0.0
  %v1323 = vmax.f32 %v1195, 0.0
  %v1324 = vmax.f32 %v1196, 0.0
  %v1325 = vmax.f32 %v1197, 0.0
  %v1326 = vmax.f32 %v1198, 0.0
  %v1327 = vmax.f32 %v1199, 0.0
  %v1328 = vmax.f32 %v1200, 0.0
  %v1329 = vmax.f32 %v1201, 0.0
  %v1330 = vmax.f32 %v1202, 0.0
  %v1331 = vmax.f32 %v1203, 0.0
  %v1332 = vmax.f32 %v1204, 0.0
  %v1333 = vmax.f32 %v1205, 0.0
  %v1334 = vmax.f32 %v1206, 0.0
  %v1335 = vmax.f32 %v1207, 0.0
  %v1336 = vmax.f32 %v1208, 0.0
  %v1337 = vmax.f32 %v1209, 0.0
  %v1338 = vmax.f32 %v1210, 0.0
  %v1339 = vmax.f32 %v1211, 0.0
  %v1340 = vmax.f32 %v1212, 0.0
  %v1341 = vmax.f32 %v1213, 0.0
  %v1342 = vmax.f32 %v1214, 0.0
  %v1343 = vmax.f32 %v1215, 0.0
  %v1344 = vmax.f32 %v1216, 0.0
  %v1345 = vmax.f32 %v1217, 0.0
  %v1346 = vmax.f32 %v1218, 0.0
  %v1347 = vmax.f32 %v1219, 0.0
  %v1348 = vmax.f32 %v1220, 0.0
  %v1349 = vmax.f32 %v1221, 0.0
  %v1350 = vmax.f32 %v1222, 0.0
  %v1351 = vmax.f32 %v1223, 0.0
  %v1352 = vmax.f32 %v1224, 0.0
  %v1353 = vmax.f32 %v1225, 0.0
  %v1354 = vmax.f32 %v1226, 0.0
  %v1355 = vmax.f32 %v1227, 0.0
  %v1356 = vmax.f32 %v1228, 0.0
  %v1357 = vmax.f32 %v1229, 0.0
  %v1358 = vmax.f32 %v1230, 0.0
  %v1359 = vmax.f32 %v1231, 0.0
  %v1360 = vmax.f32 %v1232, 0.0
  %v1361 = vmax.f32 %v1233, 0.0
  %v1362 = vmax.f32 %v1234, 0.0
  %v1363 = vmax.f32 %v1235, 0.0
  %v1364 = vmax.f32 %v1236, 0.0
  %v1365 = vmax.f32 %v1237, 0.0
  %v1366 = vmax.f32 %v1238, 0.0
  %v1367 = vmax.f32 %v1239, 0.0
  %v1368 = vmax.f32 %v1240, 0.0
  %v1369 = vmax.f32 %v1241, 0.0
  %v1370 = vmax.f32 %v1242, 0.0
  %v1371 = vmax.f32 %v1243, 0.0
  %v1372 = vmax.f32 %v1244, 0.0
  %v1373 = vmax.f32 %v1245, 0.0
  %v1374 = vmax.f32 %v1246, 0.0
  %v1375 = vmax.f32 %v1247, 0.0
  %v1376 = vmax.f32 %v1248, 0.0
  %v1377 = vmax.f32 %v1249, 0.0
  %v1378 = vmax.f32 %v1250, 0.0
  %v1379 = vmax.f32 %v1251, 0.0
  %v1380 = vmax.f32 %v1252, 0.0
  %v1381 = vmax.f32 %v1253, 0.0
  %v1382 = vmax.f32 %v1254, 0.0
  %v1383 = vmax.f32 %v1255, 0.0
  %v1384 = vmax.f32 %v1256, 0.0
  %v1385 = vmax.f32 %v1257, 0.0
  %v1386 = vmax.f32 %v1258, 0.0
  %v1387 = vmax.f32 %v1259, 0.0
  %v1388 = vmax.f32 %v1260, 0.0
  %v1389 = vmax.f32 %v1261, 0.0
  %v1390 = vmax.f32 %v1262, 0.0
  %v1391 = vmax.f32 %v1263, 0.0
  %v1392 = vmax.f32 %v1264, 0.0
  %v1393 = vmax.f32 %v1265, 0.0
  %v1394 = vmax.f32 %v1266, 0.0
  %v1395 = vmax.f32 %v1267, 0.0
  %v1396 = vmax.f32 %v1268, 0.0
  %v1397 = vmax.f32 %v1269, 0.0
  %v1398 = vmax.f32 %v1270, 0.0
  %v1399 = vmax.f32 %v1271, 0.0
  %v1400 = vmax.f32 %v1272, 0.0
  %v1401 = vmax.f32 %v1273, 0.0
  %v1402 = vmax.f32 %v1274, 0.0
  %v1403 = vmax.f32 %v1275, 0.0
  %v1404 = vmax.f32 %v1276, 0.0
  %v1405 = vmax.f32 %v1277, 0.0
  %v1406 = vmax.f32 %v1278, 0.0
  %v1407 = vmax.f32 %v1279, 0.0
  %v1408 = vmax.f32 %v1280, 0.0
  %v1409 = vmax.f32 %v1281, 0.0
  %v1410 = vmax.f32 %v1282, 0.0
  %v1411 = vmax.f32 %v1283, 0.0
  %v1412 = vmax.f32 %v1284, 0.0
  %v1413 = vmax.f32 %v1285, 0.0
  %v1414 = vmax.f32 %v1286, 0.0
  %v1415 = vmax.f32 %v1287, 0.0
  %v1416 = vmax.f32 %v1288, 0.0
  %v1417 = vmax.f32 %v1289, 0.0
  %v1418 = vmax.f32 %v1290, 0.0
  %v1419 = vmax.f32 %v1291, 0.0
  %v1420 = vmax.f32 %v1292, 0.0
  %v1421 = vmax.f32 %v1293, 0.0
  %v1422 = vmax.f32 %v1294, 0.0
  %v1423 = vmax.f32 %v1295, 0.0
  %v1424 = vmax.f32 %v1296, 0.0
  %v1425 = vmax.f32 %v1297, 0.0
  %v1426 = vmax.f32 %v1298, 0.0
  %v1427 = vmax.f32 %v1299, 0.0
  %v1428 = vmax.f32 %v1300, 0.0
  %v1429 = vmax.f32 %v1301, 0.0
  %v1430 = vmax.f32 %v1302, 0.0
  %v1431 = vmax.f32 %v1303, 0.0
  %v1432 = vmax.f32 %v1304, 0.0
  %v1433 = vmax.f32 %v1305, 0.0
  %v1434 = vmax.f32 %v1306, 0.0
  %v1435 = vmax.f32 %v1307, 0.0
  %v1436 = vmax.f32 %v1308, 0.0
  %v1437 = vmax.f32 %v1309, 0.0
  %v1438 = vmax.f32 %v1310, 0.0
  %v1439 = vmax.f32 %v1311, %v1312
  %v1440 = vmax.f32 %v1439, %v1313
  %v1441 = vmax.f32 %v1440, %v1314
  %v1442 = vmax.f32 %v1441, %v1315
  %v1443 = vmax.f32 %v1442, %v1316
  %v1444 = vmax.f32 %v1443, %v1317
  %v1445 = vmax.f32 %v1444, %v1318
  %v1446 = vmax.f32 %v1445, %v1319
  %v1447 = vmax.f32 %v1446, %v1320
  %v1448 = vmax.f32 %v1447, %v1321
  %v1449 = vmax.f32 %v1448, %v1322
  %v1450 = vmax.f32 %v1449, %v1323
  %v1451 = vmax.f32 %v1450, %v1324
  %v1452 = vmax.f32 %v1451, %v1325
  %v1453 = vmax.f32 %v1452, %v1326
  %v1454 = vrot.slane %v1453, 4
  %v1455 = vmax.f32 %v1453, %v1454
  %v1456 = vrot.slane %v1455, 2
  %v1457 = vmax.f32 %v1455, %v1456
  %v1458 = vrot.slane %v1457, 1
  %v1459 = vmax.f32 %v1457, %v1458
  %v1460 = vmax.f32 %v1327, %v1328
  %v1461 = vmax.f32 %v1460, %v1329
  %v1462 = vmax.f32 %v1461, %v1330
  %v1463 = vmax.f32 %v1462, %v1331
  %v1464 = vmax.f32 %v1463, %v1332
  %v1465 = vmax.f32 %v1464, %v1333
  %v1466 = vmax.f32 %v1465, %v1334
  %v1467 = vmax.f32 %v1466, %v1335
  %v1468 = vmax.f32 %v1467, %v1336
  %v1469 = vmax.f32 %v1468, %v1337
  %v1470 = vmax.f32 %v1469, %v1338
  %v1471 = vmax.f32 %v1470, %v1339
  %v1472 = vmax.f32 %v1471, %v1340
  %v1473 = vmax.f32 %v1472, %v1341
  %v1474 = vmax.f32 %v1473, %v1342
  %v1475 = vrot.slane %v1474, 4
  %v1476 = vmax.f32 %v1474, %v1475
  %v1477 = vrot.slane %v1476, 2
  %v1478 = vmax.f32 %v1476, %v1477
  %v1479 = vrot.slane %v1478, 1
  %v1480 = vmax.f32 %v1478, %v1479
  %v1481 = vmax.f32 %v1343, %v1344
  %v1482 = vmax.f32 %v1481, %v1345
  %v1483 = vmax.f32 %v1482, %v1346
  %v1484 = vmax.f32 %v1483, %v1347
  %v1485 = vmax.f32 %v1484, %v1348
  %v1486 = vmax.f32 %v1485, %v1349
  %v1487 = vmax.f32 %v1486, %v1350
  %v1488 = vmax.f32 %v1487, %v1351
  %v1489 = vmax.f32 %v1488, %v1352
  %v1490 = vmax.f32 %v1489, %v1353
  %v1491 = vmax.f32 %v1490, %v1354
  %v1492 = vmax.f32 %v1491, %v1355
  %v1493 = vmax.f32 %v1492, %v1356
  %v1494 = vmax.f32 %v1493, %v1357
  %v1495 = vmax.f32 %v1494, %v1358
  %v1496 = vrot.slane %v1495, 4
  %v1497 = vmax.f32 %v1495, %v1496
  %v1498 = vrot.slane %v1497, 2
  %v1499 = vmax.f32 %v1497, %v1498
  %v1500 = vrot.slane %v1499, 1
  %v1501 = vmax.f32 %v1499, %v1500
  %v1502 = vmax.f32 %v1359, %v1360
  %v1503 = vmax.f32 %v1502, %v1361
  %v1504 = vmax.f32 %v1503, %v1362
  %v1505 = vmax.f32 %v1504, %v1363
  %v1506 = vmax.f32 %v1505, %v1364
  %v1507 = vmax.f32 %v1506, %v1365
  %v1508 = vmax.f32 %v1507, %v1366
  %v1509 = vmax.f32 %v1508, %v1367
  %v1510 = vmax.f32 %v1509, %v1368
  %v1511 = vmax.f32 %v1510, %v1369
  %v1512 = vmax.f32 %v1511, %v1370
  %v1513 = vmax.f32 %v1512, %v1371
  %v1514 = vmax.f32 %v1513, %v1372
  %v1515 = vmax.f32 %v1514, %v1373
  %v1516 = vmax.f32 %v1515, %v1374
  %v1517 = vrot.slane %v1516, 4
  %v1518 = vmax.f32 %v1516, %v1517
  %v1519 = vrot.slane %v1518, 2
  %v1520 = vmax.f32 %v1518, %v1519
  %v1521 = vrot.slane %v1520, 1
  %v1522 = vmax.f32 %v1520, %v1521
  %v1523 = vmax.f32 %v1375, %v1376
  %v1524 = vmax.f32 %v1523, %v1377
  %v1525 = vmax.f32 %v1524, %v1378
  %v1526 = vmax.f32 %v1525, %v1379
  %v1527 = vmax.f32 %v1526, %v1380
  %v1528 = vmax.f32 %v1527, %v1381
  %v1529 = vmax.f32 %v1528, %v1382
  %v1530 = vmax.f32 %v1529, %v1383
  %v1531 = vmax.f32 %v1530, %v1384
  %v1532 = vmax.f32 %v1531, %v1385
  %v1533 = vmax.f32 %v1532, %v1386
  %v1534 = vmax.f32 %v1533, %v1387
  %v1535 = vmax.f32 %v1534, %v1388
  %v1536 = vmax.f32 %v1535, %v1389
  %v1537 = vmax.f32 %v1536, %v1390
  %v1538 = vrot.slane %v1537, 4
  %v1539 = vmax.f32 %v1537, %v1538
  %v1540 = vrot.slane %v1539, 2
  %v1541 = vmax.f32 %v1539, %v1540
  %v1542 = vrot.slane %v1541, 1
  %v1543 = vmax.f32 %v1541, %v1542
  %v1544 = vmax.f32 %v1391, %v1392
  %v1545 = vmax.f32 %v1544, %v1393
  %v1546 = vmax.f32 %v1545, %v1394
  %v1547 = vmax.f32 %v1546, %v1395
  %v1548 = vmax.f32 %v1547, %v1396
  %v1549 = vmax.f32 %v1548, %v1397
  %v1550 = vmax.f32 %v1549, %v1398
  %v1551 = vmax.f32 %v1550, %v1399
  %v1552 = vmax.f32 %v1551, %v1400
  %v1553 = vmax.f32 %v1552, %v1401
  %v1554 = vmax.f32 %v1553, %v1402
  %v1555 = vmax.f32 %v1554, %v1403
  %v1556 = vmax.f32 %v1555, %v1404
  %v1557 = vmax.f32 %v1556, %v1405
  %v1558 = vmax.f32 %v1557, %v1406
  %v1559 = vrot.slane %v1558, 4
  %v1560 = vmax.f32 %v1558, %v1559
  %v1561 = vrot.slane %v1560, 2
  %v1562 = vmax.f32 %v1560, %v1561
  %v1563 = vrot.slane %v1562, 1
  %v1564 = vmax.f32 %v1562, %v1563
  %v1565 = vmax.f32 %v1407, %v1408
  %v1566 = vmax.f32 %v1565, %v1409
  %v1567 = vmax.f32 %v1566, %v1410
  %v1568 = vmax.f32 %v1567, %v1411
  %v1569 = vmax.f32 %v1568, %v1412
  %v1570 = vmax.f32 %v1569, %v1413
  %v1571 = vmax.f32 %v1570, %v1414
  %v1572 = vmax.f32 %v1571, %v1415
  %v1573 = vmax.f32 %v1572, %v1416
  %v1574 = vmax.f32 %v1573, %v1417
  %v1575 = vmax.f32 %v1574, %v1418
  %v1576 = vmax.f32 %v1575, %v1419
  %v1577 = vmax.f32 %v1576, %v1420
  %v1578 = vmax.f32 %v1577, %v1421
  %v1579 = vmax.f32 %v1578, %v1422
  %v1580 = vrot.slane %v1579, 4
  %v1581 = vmax.f32 %v1579, %v1580
  %v1582 = vrot.slane %v1581, 2
  %v1583 = vmax.f32 %v1581, %v1582
  %v1584 = vrot.slane %v1583, 1
  %v1585 = vmax.f32 %v1583, %v1584
  %v1586 = vmax.f32 %v1423, %v1424
  %v1587 = vmax.f32 %v1586, %v1425
  %v1588 = vmax.f32 %v1587, %v1426
  %v1589 = vmax.f32 %v1588, %v1427
  %v1590 = vmax.f32 %v1589, %v1428
  %v1591 = vmax.f32 %v1590, %v1429
  %v1592 = vmax.f32 %v1591, %v1430
  %v1593 = vmax.f32 %v1592, %v1431
  %v1594 = vmax.f32 %v1593, %v1432
  %v1595 = vmax.f32 %v1594, %v1433
  %v1596 = vmax.f32 %v1595, %v1434
  %v1597 = vmax.f32 %v1596, %v1435
  %v1598 = vmax.f32 %v1597, %v1436
  %v1599 = vmax.f32 %v1598, %v1437
  %v1600 = vmax.f32 %v1599, %v1438
  %v1601 = vrot.slane %v1600, 4
  %v1602 = vmax.f32 %v1600, %v1601
  %v1603 = vrot.slane %v1602, 2
  %v1604 = vmax.f32 %v1602, %v1603
  %v1605 = vrot.slane %v1604, 1
  %v1606 = vmax.f32 %v1604, %v1605
  %v1607 = vld [vmem:[%s2] sm:$0xf]
  %v1608 = vld [vmem:[%s2 + $0x4] sm:$0xf]
  %v1609 = vld [vmem:[%s2 + $0x8] sm:$0xf]
  %v1610 = vld [vmem:[%s2 + $0xc] sm:$0xf]
  %v1611 = vld [vmem:[%s2 + $0x10] sm:$0xf]
  %v1612 = vld [vmem:[%s2 + $0x14] sm:$0xf]
  %v1613 = vld [vmem:[%s2 + $0x18] sm:$0xf]
  %v1614 = vld [vmem:[%s2 + $0x1c] sm:$0xf]
  %v1615 = vld [vmem:[%s6] sm:$0xf]
  %v1616 = vld [vmem:[%s6 + $0x4] sm:$0xf]
  %v1617 = vld [vmem:[%s6 + $0x8] sm:$0xf]
  %v1618 = vld [vmem:[%s6 + $0xc] sm:$0xf]
  %v1619 = vld [vmem:[%s6 + $0x10] sm:$0xf]
  %v1620 = vld [vmem:[%s6 + $0x14] sm:$0xf]
  %v1621 = vld [vmem:[%s6 + $0x18] sm:$0xf]
  %v1622 = vld [vmem:[%s6 + $0x1c] sm:$0xf]
  %v1631 = vunpack.c.l.b16 %v1607
  %v1632 = vunpack.c.l.b16 %v1608
  %v1633 = vunpack.c.l.b16 %v1609
  %v1634 = vunpack.c.l.b16 %v1610
  %v1635 = vunpack.c.l.b16 %v1611
  %v1636 = vunpack.c.l.b16 %v1612
  %v1637 = vunpack.c.l.b16 %v1613
  %v1638 = vunpack.c.l.b16 %v1614
  %v1639 = vpack.c.b16 %v1632, %v1631
  %v1640 = vpack.c.b16 %v1634, %v1633
  %v1641 = vpack.c.b16 %v1636, %v1635
  %v1642 = vpack.c.b16 %v1638, %v1637
  %v1651 = vunpack.c.l.b16 %v1615
  %v1652 = vunpack.c.l.b16 %v1616
  %v1653 = vunpack.c.l.b16 %v1617
  %v1654 = vunpack.c.l.b16 %v1618
  %v1655 = vunpack.c.l.b16 %v1619
  %v1656 = vunpack.c.l.b16 %v1620
  %v1657 = vunpack.c.l.b16 %v1621
  %v1658 = vunpack.c.l.b16 %v1622
  %v1659 = vpack.c.b16 %v1652, %v1651
  %v1660 = vpack.c.b16 %v1654, %v1653
  %v1661 = vpack.c.b16 %v1656, %v1655
  %v1662 = vpack.c.b16 %v1658, %v1657
  %v1668 = vsel %vm525, %v1639, 0
  %v1671 = vsel %vm525, %v1640, 0
  %v1674 = vsel %vm525, %v1641, 0
  %v1677 = vsel %vm525, %v1642, 0
  %1679 = vmatpush.bf16.msra.mxu0 0
  %1680 = vmatpush.bf16.msra.mxu0 0
  %1681 = vmatpush.bf16.msra.mxu0 0
  %1682 = vmatpush.bf16.msra.mxu0 0
  %1683 = vmatpush.bf16.msra.mxu0 %v1662
  %1684 = vmatpush.bf16.msra.mxu0 %v1661
  %1685 = vmatpush.bf16.msra.mxu0 %v1660
  %1686 = vmatpush.bf16.msra.mxu0 %v1659
  %1687 = vmatmul.bf16.gmra.mxu0 %v1668
  %v1688 = vpop.f32.mrf.mxu0
  %v1689 = vadd.f32 0.0, %v1688
  %v1690 = vpop.f32.mrf.mxu0
  %v1691 = vadd.f32 0.0, %v1690
  %1692 = vmatmul.bf16.gmra.mxu0 %v1671
  %v1693 = vpop.f32.mrf.mxu0
  %v1694 = vadd.f32 0.0, %v1693
  %v1695 = vpop.f32.mrf.mxu0
  %v1696 = vadd.f32 0.0, %v1695
  %1697 = vmatmul.bf16.gmra.mxu0 %v1674
  %v1698 = vpop.f32.mrf.mxu0
  %v1699 = vadd.f32 0.0, %v1698
  %v1700 = vpop.f32.mrf.mxu0
  %v1701 = vadd.f32 0.0, %v1700
  %1702 = vmatmul.bf16.gmra.mxu0 %v1677
  %v1703 = vpop.f32.mrf.mxu0
  %v1704 = vadd.f32 0.0, %v1703
  %v1705 = vpop.f32.mrf.mxu0
  %v1706 = vadd.f32 0.0, %v1705
  %1707 = vdwg.mxu0
  %v1708 = vld [vmem:[%s7] sm:$0x1]
  %v1710 = vperm.slane %v1708, 0
  %v1712 = vmul.f32 %v1689, %v1710
  %v1713 = vmul.f32 %v1691, %v1710
  %v1714 = vmul.f32 %v1694, %v1710
  %v1715 = vmul.f32 %v1696, %v1710
  %v1716 = vmul.f32 %v1699, %v1710
  %v1717 = vmul.f32 %v1701, %v1710
  %v1718 = vmul.f32 %v1704, %v1710
  %v1719 = vmul.f32 %v1706, %v1710
  %v1720 = vld [vmem:[%s8] sm:$0x1]
  %v1722 = vperm.slane %v1720, 0
  %v1724 = vadd.f32 %v1712, %v1722
  %v1725 = vadd.f32 %v1713, %v1722
  %v1726 = vadd.f32 %v1714, %v1722
  %v1727 = vadd.f32 %v1715, %v1722
  %v1728 = vadd.f32 %v1716, %v1722
  %v1729 = vadd.f32 %v1717, %v1722
  %v1730 = vadd.f32 %v1718, %v1722
  %v1731 = vadd.f32 %v1719, %v1722
  %v1732 = vmax.f32 %v1724, 0.0
  %v1733 = vmax.f32 %v1725, 0.0
  %v1734 = vmax.f32 %v1726, 0.0
  %v1735 = vmax.f32 %v1727, 0.0
  %v1736 = vmax.f32 %v1728, 0.0
  %v1737 = vmax.f32 %v1729, 0.0
  %v1738 = vmax.f32 %v1730, 0.0
  %v1739 = vmax.f32 %v1731, 0.0
  %v1740 = vrot.slane %v1732, 4
  %v1741 = vmax.f32 %v1732, %v1740
  %v1742 = vrot.slane %v1741, 2
  %v1743 = vmax.f32 %v1741, %v1742
  %v1744 = vrot.slane %v1743, 1
  %v1745 = vmax.f32 %v1743, %v1744
  %v1746 = vrot.slane %v1733, 4
  %v1747 = vmax.f32 %v1733, %v1746
  %v1748 = vrot.slane %v1747, 2
  %v1749 = vmax.f32 %v1747, %v1748
  %v1750 = vrot.slane %v1749, 1
  %v1751 = vmax.f32 %v1749, %v1750
  %v1752 = vrot.slane %v1734, 4
  %v1753 = vmax.f32 %v1734, %v1752
  %v1754 = vrot.slane %v1753, 2
  %v1755 = vmax.f32 %v1753, %v1754
  %v1756 = vrot.slane %v1755, 1
  %v1757 = vmax.f32 %v1755, %v1756
  %v1758 = vrot.slane %v1735, 4
  %v1759 = vmax.f32 %v1735, %v1758
  %v1760 = vrot.slane %v1759, 2
  %v1761 = vmax.f32 %v1759, %v1760
  %v1762 = vrot.slane %v1761, 1
  %v1763 = vmax.f32 %v1761, %v1762
  %v1764 = vrot.slane %v1736, 4
  %v1765 = vmax.f32 %v1736, %v1764
  %v1766 = vrot.slane %v1765, 2
  %v1767 = vmax.f32 %v1765, %v1766
  %v1768 = vrot.slane %v1767, 1
  %v1769 = vmax.f32 %v1767, %v1768
  %v1770 = vrot.slane %v1737, 4
  %v1771 = vmax.f32 %v1737, %v1770
  %v1772 = vrot.slane %v1771, 2
  %v1773 = vmax.f32 %v1771, %v1772
  %v1774 = vrot.slane %v1773, 1
  %v1775 = vmax.f32 %v1773, %v1774
  %v1776 = vrot.slane %v1738, 4
  %v1777 = vmax.f32 %v1738, %v1776
  %v1778 = vrot.slane %v1777, 2
  %v1779 = vmax.f32 %v1777, %v1778
  %v1780 = vrot.slane %v1779, 1
  %v1781 = vmax.f32 %v1779, %v1780
  %v1782 = vrot.slane %v1739, 4
  %v1783 = vmax.f32 %v1739, %v1782
  %v1784 = vrot.slane %v1783, 2
  %v1785 = vmax.f32 %v1783, %v1784
  %v1786 = vrot.slane %v1785, 1
  %v1787 = vmax.f32 %v1785, %v1786
  %v1788 = vld [vmem:[%s0] sm:$0xff]
  %v1789 = vpack.c.bf16 %v1788, %v1788
  %1790 = vst [vmem:[#allocation2] sm:$0xf] %v1789
  %v1791 = vpack.c.bf16 %v1459, %v1459
  %v1792 = vpack.c.bf16 %v1480, %v1480
  %v1793 = vpack.c.bf16 %v1501, %v1501
  %v1794 = vpack.c.bf16 %v1522, %v1522
  %v1795 = vpack.c.bf16 %v1543, %v1543
  %v1796 = vpack.c.bf16 %v1564, %v1564
  %v1797 = vpack.c.bf16 %v1585, %v1585
  %v1798 = vpack.c.bf16 %v1606, %v1606
  %v1807 = vunpack.c.l.b16 %v1791
  %v1808 = vunpack.c.l.b16 %v1792
  %v1809 = vunpack.c.l.b16 %v1793
  %v1810 = vunpack.c.l.b16 %v1794
  %v1811 = vunpack.c.l.b16 %v1795
  %v1812 = vunpack.c.l.b16 %v1796
  %v1813 = vunpack.c.l.b16 %v1797
  %v1814 = vunpack.c.l.b16 %v1798
  %vm1815 = vcmask 1041409
  %v1816 = vsel %vm1815, %v1808, %v1807
  %vm1817 = vcmask 1042434
  %v1818 = vsel %vm1817, %v1809, %v1816
  %vm1819 = vcmask 1043459
  %v1820 = vsel %vm1819, %v1810, %v1818
  %vm1821 = vcmask 1044484
  %v1822 = vsel %vm1821, %v1811, %v1820
  %vm1823 = vcmask 1045509
  %v1824 = vsel %vm1823, %v1812, %v1822
  %vm1825 = vcmask 1046534
  %v1826 = vsel %vm1825, %v1813, %v1824
  %vm1827 = vcmask 1047559
  %v1828 = vsel %vm1827, %v1814, %v1826
  %v1829 = vpack.c.b16 %v1828, %v1828
  %1831 = vst [vmem:[#allocation2 + $0x4] sm:$0xf] %v1829
  %v1832 = vpack.c.bf16 %v1745, %v1745
  %v1833 = vpack.c.bf16 %v1751, %v1751
  %v1834 = vpack.c.bf16 %v1757, %v1757
  %v1835 = vpack.c.bf16 %v1763, %v1763
  %v1836 = vpack.c.bf16 %v1769, %v1769
  %v1837 = vpack.c.bf16 %v1775, %v1775
  %v1838 = vpack.c.bf16 %v1781, %v1781
  %v1839 = vpack.c.bf16 %v1787, %v1787
  %v1848 = vunpack.c.l.b16 %v1832
  %v1849 = vunpack.c.l.b16 %v1833
  %v1850 = vunpack.c.l.b16 %v1834
  %v1851 = vunpack.c.l.b16 %v1835
  %v1852 = vunpack.c.l.b16 %v1836
  %v1853 = vunpack.c.l.b16 %v1837
  %v1854 = vunpack.c.l.b16 %v1838
  %v1855 = vunpack.c.l.b16 %v1839
  %v1856 = vsel %vm1815, %v1849, %v1848
  %v1857 = vsel %vm1817, %v1850, %v1856
  %v1858 = vsel %vm1819, %v1851, %v1857
  %v1859 = vsel %vm1821, %v1852, %v1858
  %v1860 = vsel %vm1823, %v1853, %v1859
  %v1861 = vsel %vm1825, %v1854, %v1860
  %v1862 = vsel %vm1827, %v1855, %v1861
  %v1863 = vpack.c.b16 %v1862, %v1862
  %1865 = vst [vmem:[#allocation2 + $0x8] sm:$0xf] %v1863
  %v1866 = vld [vmem:[#allocation2] sm:$0xff]
  %v1867 = vld [vmem:[#allocation2 + $0x8] sm:$0xf]
  %v1868 = vld [vmem:[%s9] sm:$0xff]
  %v1869 = vld [vmem:[%s9 + $0x8] sm:$0xf]
  %v1870 = vld [vmem:[%s9 + $0xc] sm:$0xff]
  %v1871 = vld [vmem:[%s9 + $0x14] sm:$0xf]
  %v1872 = vld [vmem:[%s9 + $0x18] sm:$0xff]
  %v1873 = vld [vmem:[%s9 + $0x20] sm:$0xf]
  %v1874 = vld [vmem:[%s9 + $0x24] sm:$0xff]
  %v1875 = vld [vmem:[%s9 + $0x2c] sm:$0xf]
  %v1876 = vld [vmem:[%s9 + $0x30] sm:$0xff]
  %v1877 = vld [vmem:[%s9 + $0x38] sm:$0xf]
  %v1878 = vld [vmem:[%s9 + $0x3c] sm:$0xff]
  %v1879 = vld [vmem:[%s9 + $0x44] sm:$0xf]
  %v1880 = vld [vmem:[%s9 + $0x48] sm:$0xff]
  %v1881 = vld [vmem:[%s9 + $0x50] sm:$0xf]
  %v1882 = vld [vmem:[%s9 + $0x54] sm:$0xff]
  %v1883 = vld [vmem:[%s9 + $0x5c] sm:$0xf]
  %v1884 = vld [vmem:[%s9 + $0x60] sm:$0xff]
  %v1885 = vld [vmem:[%s9 + $0x68] sm:$0xf]
  %v1886 = vld [vmem:[%s9 + $0x6c] sm:$0xff]
  %v1887 = vld [vmem:[%s9 + $0x74] sm:$0xf]
  %v1888 = vld [vmem:[%s9 + $0x78] sm:$0xff]
  %v1889 = vld [vmem:[%s9 + $0x80] sm:$0xf]
  %v1890 = vld [vmem:[%s9 + $0x84] sm:$0xff]
  %v1891 = vld [vmem:[%s9 + $0x8c] sm:$0xf]
  %v1892 = vld [vmem:[%s9 + $0x90] sm:$0xff]
  %v1893 = vld [vmem:[%s9 + $0x98] sm:$0xf]
  %v1894 = vld [vmem:[%s9 + $0x9c] sm:$0xff]
  %v1895 = vld [vmem:[%s9 + $0xa4] sm:$0xf]
  %v1896 = vld [vmem:[%s9 + $0xa8] sm:$0xff]
  %v1897 = vld [vmem:[%s9 + $0xb0] sm:$0xf]
  %v1898 = vld [vmem:[%s9 + $0xb4] sm:$0xff]
  %v1899 = vld [vmem:[%s9 + $0xbc] sm:$0xf]
  %v1900 = vld [vmem:[%s9 + $0xc0] sm:$0xff]
  %v1901 = vld [vmem:[%s9 + $0xc8] sm:$0xf]
  %v1902 = vld [vmem:[%s9 + $0xcc] sm:$0xff]
  %v1903 = vld [vmem:[%s9 + $0xd4] sm:$0xf]
  %v1904 = vld [vmem:[%s9 + $0xd8] sm:$0xff]
  %v1905 = vld [vmem:[%s9 + $0xe0] sm:$0xf]
  %v1906 = vld [vmem:[%s9 + $0xe4] sm:$0xff]
  %v1907 = vld [vmem:[%s9 + $0xec] sm:$0xf]
  %v1908 = vld [vmem:[%s9 + $0xf0] sm:$0xff]
  %v1909 = vld [vmem:[%s9 + $0xf8] sm:$0xf]
  %v1910 = vld [vmem:[%s9 + $0xfc] sm:$0xff]
  %v1911 = vld [vmem:[%s9 + $0x104] sm:$0xf]
  %v1912 = vld [vmem:[%s9 + $0x108] sm:$0xff]
  %v1913 = vld [vmem:[%s9 + $0x110] sm:$0xf]
  %v1914 = vld [vmem:[%s9 + $0x114] sm:$0xff]
  %v1915 = vld [vmem:[%s9 + $0x11c] sm:$0xf]
  %v1916 = vld [vmem:[%s9 + $0x120] sm:$0xff]
  %v1917 = vld [vmem:[%s9 + $0x128] sm:$0xf]
  %v1918 = vld [vmem:[%s9 + $0x12c] sm:$0xff]
  %v1919 = vld [vmem:[%s9 + $0x134] sm:$0xf]
  %v1920 = vld [vmem:[%s9 + $0x138] sm:$0xff]
  %v1921 = vld [vmem:[%s9 + $0x140] sm:$0xf]
  %v1922 = vld [vmem:[%s9 + $0x144] sm:$0xff]
  %v1923 = vld [vmem:[%s9 + $0x14c] sm:$0xf]
  %v1924 = vld [vmem:[%s9 + $0x150] sm:$0xff]
  %v1925 = vld [vmem:[%s9 + $0x158] sm:$0xf]
  %v1926 = vld [vmem:[%s9 + $0x15c] sm:$0xff]
  %v1927 = vld [vmem:[%s9 + $0x164] sm:$0xf]
  %v1928 = vld [vmem:[%s9 + $0x168] sm:$0xff]
  %v1929 = vld [vmem:[%s9 + $0x170] sm:$0xf]
  %v1930 = vld [vmem:[%s9 + $0x174] sm:$0xff]
  %v1931 = vld [vmem:[%s9 + $0x17c] sm:$0xf]
  %v1932 = vld [vmem:[%s9 + $0x180] sm:$0xff]
  %v1933 = vld [vmem:[%s9 + $0x188] sm:$0xf]
  %v1934 = vld [vmem:[%s9 + $0x18c] sm:$0xff]
  %v1935 = vld [vmem:[%s9 + $0x194] sm:$0xf]
  %v1936 = vld [vmem:[%s9 + $0x198] sm:$0xff]
  %v1937 = vld [vmem:[%s9 + $0x1a0] sm:$0xf]
  %v1938 = vld [vmem:[%s9 + $0x1a4] sm:$0xff]
  %v1939 = vld [vmem:[%s9 + $0x1ac] sm:$0xf]
  %v1940 = vld [vmem:[%s9 + $0x1b0] sm:$0xff]
  %v1941 = vld [vmem:[%s9 + $0x1b8] sm:$0xf]
  %v1942 = vld [vmem:[%s9 + $0x1bc] sm:$0xff]
  %v1943 = vld [vmem:[%s9 + $0x1c4] sm:$0xf]
  %v1944 = vld [vmem:[%s9 + $0x1c8] sm:$0xff]
  %v1945 = vld [vmem:[%s9 + $0x1d0] sm:$0xf]
  %v1946 = vld [vmem:[%s9 + $0x1d4] sm:$0xff]
  %v1947 = vld [vmem:[%s9 + $0x1dc] sm:$0xf]
  %v1948 = vld [vmem:[%s9 + $0x1e0] sm:$0xff]
  %v1949 = vld [vmem:[%s9 + $0x1e8] sm:$0xf]
  %v1950 = vld [vmem:[%s9 + $0x1ec] sm:$0xff]
  %v1951 = vld [vmem:[%s9 + $0x1f4] sm:$0xf]
  %v1952 = vld [vmem:[%s9 + $0x1f8] sm:$0xff]
  %v1953 = vld [vmem:[%s9 + $0x200] sm:$0xf]
  %v1954 = vld [vmem:[%s9 + $0x204] sm:$0xff]
  %v1955 = vld [vmem:[%s9 + $0x20c] sm:$0xf]
  %v1956 = vld [vmem:[%s9 + $0x210] sm:$0xff]
  %v1957 = vld [vmem:[%s9 + $0x218] sm:$0xf]
  %v1958 = vld [vmem:[%s9 + $0x21c] sm:$0xff]
  %v1959 = vld [vmem:[%s9 + $0x224] sm:$0xf]
  %v1960 = vld [vmem:[%s9 + $0x228] sm:$0xff]
  %v1961 = vld [vmem:[%s9 + $0x230] sm:$0xf]
  %v1962 = vld [vmem:[%s9 + $0x234] sm:$0xff]
  %v1963 = vld [vmem:[%s9 + $0x23c] sm:$0xf]
  %v1964 = vld [vmem:[%s10] sm:$0x7]
  %v1966 = vperm.slane %v1964, 0
  %v1967 = vperm.slane %v1964, 1
  %v1968 = vperm.slane %v1964, 2
  %v1974 = vunpack.c.l.b16 %v1866
  %v1975 = vunpack.c.h.b16 %v1866
  %v1976 = vunpack.c.l.b16 %v1867
  %v1977 = vpack.c.b16 %v1974, %v1974
  %v1978 = vpack.c.b16 %v1975, %v1975
  %v1979 = vpack.c.b16 %v1976, %v1976
  %v2079 = vunpack.c.l.b16 %v1868
  %v2080 = vunpack.c.h.b16 %v1868
  %v2081 = vunpack.c.l.b16 %v1869
  %v2082 = vunpack.c.l.b16 %v1870
  %v2083 = vunpack.c.h.b16 %v1870
  %v2084 = vunpack.c.l.b16 %v1871
  %v2085 = vunpack.c.l.b16 %v1872
  %v2086 = vunpack.c.h.b16 %v1872
  %v2087 = vunpack.c.l.b16 %v1873
  %v2088 = vunpack.c.l.b16 %v1874
  %v2089 = vunpack.c.h.b16 %v1874
  %v2090 = vunpack.c.l.b16 %v1875
  %v2091 = vunpack.c.l.b16 %v1876
  %v2092 = vunpack.c.h.b16 %v1876
  %v2093 = vunpack.c.l.b16 %v1877
  %v2094 = vunpack.c.l.b16 %v1878
  %v2095 = vunpack.c.h.b16 %v1878
  %v2096 = vunpack.c.l.b16 %v1879
  %v2097 = vunpack.c.l.b16 %v1880
  %v2098 = vunpack.c.h.b16 %v1880
  %v2099 = vunpack.c.l.b16 %v1881
  %v2100 = vunpack.c.l.b16 %v1882
  %v2101 = vunpack.c.h.b16 %v1882
  %v2102 = vunpack.c.l.b16 %v1883
  %v2103 = vunpack.c.l.b16 %v1884
  %v2104 = vunpack.c.h.b16 %v1884
  %v2105 = vunpack.c.l.b16 %v1885
  %v2106 = vunpack.c.l.b16 %v1886
  %v2107 = vunpack.c.h.b16 %v1886
  %v2108 = vunpack.c.l.b16 %v1887
  %v2109 = vunpack.c.l.b16 %v1888
  %v2110 = vunpack.c.h.b16 %v1888
  %v2111 = vunpack.c.l.b16 %v1889
  %v2112 = vunpack.c.l.b16 %v1890
  %v2113 = vunpack.c.h.b16 %v1890
  %v2114 = vunpack.c.l.b16 %v1891
  %v2115 = vunpack.c.l.b16 %v1892
  %v2116 = vunpack.c.h.b16 %v1892
  %v2117 = vunpack.c.l.b16 %v1893
  %v2118 = vunpack.c.l.b16 %v1894
  %v2119 = vunpack.c.h.b16 %v1894
  %v2120 = vunpack.c.l.b16 %v1895
  %v2121 = vunpack.c.l.b16 %v1896
  %v2122 = vunpack.c.h.b16 %v1896
  %v2123 = vunpack.c.l.b16 %v1897
  %v2124 = vunpack.c.l.b16 %v1898
  %v2125 = vunpack.c.h.b16 %v1898
  %v2126 = vunpack.c.l.b16 %v1899
  %v2127 = vunpack.c.l.b16 %v1900
  %v2128 = vunpack.c.h.b16 %v1900
  %v2129 = vunpack.c.l.b16 %v1901
  %v2130 = vunpack.c.l.b16 %v1902
  %v2131 = vunpack.c.h.b16 %v1902
  %v2132 = vunpack.c.l.b16 %v1903
  %v2133 = vunpack.c.l.b16 %v1904
  %v2134 = vunpack.c.h.b16 %v1904
  %v2135 = vunpack.c.l.b16 %v1905
  %v2136 = vunpack.c.l.b16 %v1906
  %v2137 = vunpack.c.h.b16 %v1906
  %v2138 = vunpack.c.l.b16 %v1907
  %v2139 = vunpack.c.l.b16 %v1908
  %v2140 = vunpack.c.h.b16 %v1908
  %v2141 = vunpack.c.l.b16 %v1909
  %v2142 = vunpack.c.l.b16 %v1910
  %v2143 = vunpack.c.h.b16 %v1910
  %v2144 = vunpack.c.l.b16 %v1911
  %v2145 = vunpack.c.l.b16 %v1912
  %v2146 = vunpack.c.h.b16 %v1912
  %v2147 = vunpack.c.l.b16 %v1913
  %v2148 = vunpack.c.l.b16 %v1914
  %v2149 = vunpack.c.h.b16 %v1914
  %v2150 = vunpack.c.l.b16 %v1915
  %v2151 = vunpack.c.l.b16 %v1916
  %v2152 = vunpack.c.h.b16 %v1916
  %v2153 = vunpack.c.l.b16 %v1917
  %v2154 = vunpack.c.l.b16 %v1918
  %v2155 = vunpack.c.h.b16 %v1918
  %v2156 = vunpack.c.l.b16 %v1919
  %v2157 = vunpack.c.l.b16 %v1920
  %v2158 = vunpack.c.h.b16 %v1920
  %v2159 = vunpack.c.l.b16 %v1921
  %v2160 = vunpack.c.l.b16 %v1922
  %v2161 = vunpack.c.h.b16 %v1922
  %v2162 = vunpack.c.l.b16 %v1923
  %v2163 = vunpack.c.l.b16 %v1924
  %v2164 = vunpack.c.h.b16 %v1924
  %v2165 = vunpack.c.l.b16 %v1925
  %v2166 = vunpack.c.l.b16 %v1926
  %v2167 = vunpack.c.h.b16 %v1926
  %v2168 = vunpack.c.l.b16 %v1927
  %v2169 = vunpack.c.l.b16 %v1928
  %v2170 = vunpack.c.h.b16 %v1928
  %v2171 = vunpack.c.l.b16 %v1929
  %v2172 = vunpack.c.l.b16 %v1930
  %v2173 = vunpack.c.h.b16 %v1930
  %v2174 = vunpack.c.l.b16 %v1931
  %v2175 = vunpack.c.l.b16 %v1932
  %v2176 = vunpack.c.h.b16 %v1932
  %v2177 = vunpack.c.l.b16 %v1933
  %v2178 = vunpack.c.l.b16 %v1934
  %v2179 = vunpack.c.h.b16 %v1934
  %v2180 = vunpack.c.l.b16 %v1935
  %v2181 = vunpack.c.l.b16 %v1936
  %v2182 = vunpack.c.h.b16 %v1936
  %v2183 = vunpack.c.l.b16 %v1937
  %v2184 = vunpack.c.l.b16 %v1938
  %v2185 = vunpack.c.h.b16 %v1938
  %v2186 = vunpack.c.l.b16 %v1939
  %v2187 = vunpack.c.l.b16 %v1940
  %v2188 = vunpack.c.h.b16 %v1940
  %v2189 = vunpack.c.l.b16 %v1941
  %v2190 = vunpack.c.l.b16 %v1942
  %v2191 = vunpack.c.h.b16 %v1942
  %v2192 = vunpack.c.l.b16 %v1943
  %v2193 = vunpack.c.l.b16 %v1944
  %v2194 = vunpack.c.h.b16 %v1944
  %v2195 = vunpack.c.l.b16 %v1945
  %v2196 = vunpack.c.l.b16 %v1946
  %v2197 = vunpack.c.h.b16 %v1946
  %v2198 = vunpack.c.l.b16 %v1947
  %v2199 = vunpack.c.l.b16 %v1948
  %v2200 = vunpack.c.h.b16 %v1948
  %v2201 = vunpack.c.l.b16 %v1949
  %v2202 = vunpack.c.l.b16 %v1950
  %v2203 = vunpack.c.h.b16 %v1950
  %v2204 = vunpack.c.l.b16 %v1951
  %v2205 = vunpack.c.l.b16 %v1952
  %v2206 = vunpack.c.h.b16 %v1952
  %v2207 = vunpack.c.l.b16 %v1953
  %v2208 = vunpack.c.l.b16 %v1954
  %v2209 = vunpack.c.h.b16 %v1954
  %v2210 = vunpack.c.l.b16 %v1955
  %v2211 = vunpack.c.l.b16 %v1956
  %v2212 = vunpack.c.h.b16 %v1956
  %v2213 = vunpack.c.l.b16 %v1957
  %v2214 = vunpack.c.l.b16 %v1958
  %v2215 = vunpack.c.h.b16 %v1958
  %v2216 = vunpack.c.l.b16 %v1959
  %v2217 = vunpack.c.l.b16 %v1960
  %v2218 = vunpack.c.h.b16 %v1960
  %v2219 = vunpack.c.l.b16 %v1961
  %v2220 = vunpack.c.l.b16 %v1962
  %v2221 = vunpack.c.h.b16 %v1962
  %v2222 = vunpack.c.l.b16 %v1963
  %v2223 = vpack.c.b16 %v2082, %v2079
  %v2224 = vpack.c.b16 %v2083, %v2080
  %v2225 = vpack.c.b16 %v2084, %v2081
  %v2226 = vpack.c.b16 %v2088, %v2085
  %v2227 = vpack.c.b16 %v2089, %v2086
  %v2228 = vpack.c.b16 %v2090, %v2087
  %v2229 = vpack.c.b16 %v2094, %v2091
  %v2230 = vpack.c.b16 %v2095, %v2092
  %v2231 = vpack.c.b16 %v2096, %v2093
  %v2232 = vpack.c.b16 %v2100, %v2097
  %v2233 = vpack.c.b16 %v2101, %v2098
  %v2234 = vpack.c.b16 %v2102, %v2099
  %v2235 = vpack.c.b16 %v2106, %v2103
  %v2236 = vpack.c.b16 %v2107, %v2104
  %v2237 = vpack.c.b16 %v2108, %v2105
  %v2238 = vpack.c.b16 %v2112, %v2109
  %v2239 = vpack.c.b16 %v2113, %v2110
  %v2240 = vpack.c.b16 %v2114, %v2111
  %v2241 = vpack.c.b16 %v2118, %v2115
  %v2242 = vpack.c.b16 %v2119, %v2116
  %v2243 = vpack.c.b16 %v2120, %v2117
  %v2244 = vpack.c.b16 %v2124, %v2121
  %v2245 = vpack.c.b16 %v2125, %v2122
  %v2246 = vpack.c.b16 %v2126, %v2123
  %v2247 = vpack.c.b16 %v2130, %v2127
  %v2248 = vpack.c.b16 %v2131, %v2128
  %v2249 = vpack.c.b16 %v2132, %v2129
  %v2250 = vpack.c.b16 %v2136, %v2133
  %v2251 = vpack.c.b16 %v2137, %v2134
  %v2252 = vpack.c.b16 %v2138, %v2135
  %v2253 = vpack.c.b16 %v2142, %v2139
  %v2254 = vpack.c.b16 %v2143, %v2140
  %v2255 = vpack.c.b16 %v2144, %v2141
  %v2256 = vpack.c.b16 %v2148, %v2145
  %v2257 = vpack.c.b16 %v2149, %v2146
  %v2258 = vpack.c.b16 %v2150, %v2147
  %v2259 = vpack.c.b16 %v2154, %v2151
  %v2260 = vpack.c.b16 %v2155, %v2152
  %v2261 = vpack.c.b16 %v2156, %v2153
  %v2262 = vpack.c.b16 %v2160, %v2157
  %v2263 = vpack.c.b16 %v2161, %v2158
  %v2264 = vpack.c.b16 %v2162, %v2159
  %v2265 = vpack.c.b16 %v2166, %v2163
  %v2266 = vpack.c.b16 %v2167, %v2164
  %v2267 = vpack.c.b16 %v2168, %v2165
  %v2268 = vpack.c.b16 %v2172, %v2169
  %v2269 = vpack.c.b16 %v2173, %v2170
  %v2270 = vpack.c.b16 %v2174, %v2171
  %v2271 = vpack.c.b16 %v2178, %v2175
  %v2272 = vpack.c.b16 %v2179, %v2176
  %v2273 = vpack.c.b16 %v2180, %v2177
  %v2274 = vpack.c.b16 %v2184, %v2181
  %v2275 = vpack.c.b16 %v2185, %v2182
  %v2276 = vpack.c.b16 %v2186, %v2183
  %v2277 = vpack.c.b16 %v2190, %v2187
  %v2278 = vpack.c.b16 %v2191, %v2188
  %v2279 = vpack.c.b16 %v2192, %v2189
  %v2280 = vpack.c.b16 %v2196, %v2193
  %v2281 = vpack.c.b16 %v2197, %v2194
  %v2282 = vpack.c.b16 %v2198, %v2195
  %v2283 = vpack.c.b16 %v2202, %v2199
  %v2284 = vpack.c.b16 %v2203, %v2200
  %v2285 = vpack.c.b16 %v2204, %v2201
  %v2286 = vpack.c.b16 %v2208, %v2205
  %v2287 = vpack.c.b16 %v2209, %v2206
  %v2288 = vpack.c.b16 %v2210, %v2207
  %v2289 = vpack.c.b16 %v2214, %v2211
  %v2290 = vpack.c.b16 %v2215, %v2212
  %v2291 = vpack.c.b16 %v2216, %v2213
  %v2292 = vpack.c.b16 %v2220, %v2217
  %v2293 = vpack.c.b16 %v2221, %v2218
  %v2294 = vpack.c.b16 %v2222, %v2219
  %2367 = vmatpush.bf16.msra.mxu0 %v2244
  %2368 = vmatpush.bf16.msra.mxu0 %v2241
  %2369 = vmatpush.bf16.msra.mxu0 %v2238
  %2370 = vmatpush.bf16.msra.mxu0 %v2235
  %2371 = vmatpush.bf16.msra.mxu0 %v2232
  %2372 = vmatpush.bf16.msra.mxu0 %v2229
  %2373 = vmatpush.bf16.msra.mxu0 %v2226
  %2374 = vmatpush.bf16.msra.mxu0 %v2223
  %2375 = vmatmul.bf16.gmra.mxu0 %v1977
  %v2376 = vpop.f32.mrf.mxu0
  %v2377 = vadd.f32 %v1966, %v2376
  %v2378 = vpop.f32.mrf.mxu0
  %2379 = vdwg.mxu0
  %2380 = vmatpush.bf16.msra.mxu0 %v2268
  %2381 = vmatpush.bf16.msra.mxu0 %v2265
  %2382 = vmatpush.bf16.msra.mxu0 %v2262
  %2383 = vmatpush.bf16.msra.mxu0 %v2259
  %2384 = vmatpush.bf16.msra.mxu0 %v2256
  %2385 = vmatpush.bf16.msra.mxu0 %v2253
  %2386 = vmatpush.bf16.msra.mxu0 %v2250
  %2387 = vmatpush.bf16.msra.mxu0 %v2247
  %2388 = vmatmul.bf16.gmra.mxu0 %v1978
  %v2389 = vpop.f32.mrf.mxu0
  %v2390 = vadd.f32 %v2377, %v2389
  %v2391 = vpop.f32.mrf.mxu0
  %2392 = vdwg.mxu0
  %2393 = vmatpush.bf16.msra.mxu0 %v2292
  %2394 = vmatpush.bf16.msra.mxu0 %v2289
  %2395 = vmatpush.bf16.msra.mxu0 %v2286
  %2396 = vmatpush.bf16.msra.mxu0 %v2283
  %2397 = vmatpush.bf16.msra.mxu0 %v2280
  %2398 = vmatpush.bf16.msra.mxu0 %v2277
  %2399 = vmatpush.bf16.msra.mxu0 %v2274
  %2400 = vmatpush.bf16.msra.mxu0 %v2271
  %2401 = vmatmul.bf16.gmra.mxu0 %v1979
  %v2402 = vpop.f32.mrf.mxu0
  %v2403 = vadd.f32 %v2390, %v2402
  %v2404 = vpop.f32.mrf.mxu0
  %2405 = vdwg.mxu0
  %2406 = vmatpush.bf16.msra.mxu0 %v2245
  %2407 = vmatpush.bf16.msra.mxu0 %v2242
  %2408 = vmatpush.bf16.msra.mxu0 %v2239
  %2409 = vmatpush.bf16.msra.mxu0 %v2236
  %2410 = vmatpush.bf16.msra.mxu0 %v2233
  %2411 = vmatpush.bf16.msra.mxu0 %v2230
  %2412 = vmatpush.bf16.msra.mxu0 %v2227
  %2413 = vmatpush.bf16.msra.mxu0 %v2224
  %2414 = vmatmul.bf16.gmra.mxu0 %v1977
  %v2415 = vpop.f32.mrf.mxu0
  %v2416 = vadd.f32 %v1967, %v2415
  %v2417 = vpop.f32.mrf.mxu0
  %2418 = vdwg.mxu0
  %2419 = vmatpush.bf16.msra.mxu0 %v2269
  %2420 = vmatpush.bf16.msra.mxu0 %v2266
  %2421 = vmatpush.bf16.msra.mxu0 %v2263
  %2422 = vmatpush.bf16.msra.mxu0 %v2260
  %2423 = vmatpush.bf16.msra.mxu0 %v2257
  %2424 = vmatpush.bf16.msra.mxu0 %v2254
  %2425 = vmatpush.bf16.msra.mxu0 %v2251
  %2426 = vmatpush.bf16.msra.mxu0 %v2248
  %2427 = vmatmul.bf16.gmra.mxu0 %v1978
  %v2428 = vpop.f32.mrf.mxu0
  %v2429 = vadd.f32 %v2416, %v2428
  %v2430 = vpop.f32.mrf.mxu0
  %2431 = vdwg.mxu0
  %2432 = vmatpush.bf16.msra.mxu0 %v2293
  %2433 = vmatpush.bf16.msra.mxu0 %v2290
  %2434 = vmatpush.bf16.msra.mxu0 %v2287
  %2435 = vmatpush.bf16.msra.mxu0 %v2284
  %2436 = vmatpush.bf16.msra.mxu0 %v2281
  %2437 = vmatpush.bf16.msra.mxu0 %v2278
  %2438 = vmatpush.bf16.msra.mxu0 %v2275
  %2439 = vmatpush.bf16.msra.mxu0 %v2272
  %2440 = vmatmul.bf16.gmra.mxu0 %v1979
  %v2441 = vpop.f32.mrf.mxu0
  %v2442 = vadd.f32 %v2429, %v2441
  %v2443 = vpop.f32.mrf.mxu0
  %2444 = vdwg.mxu0
  %2445 = vmatpush.bf16.msra.mxu0 %v2246
  %2446 = vmatpush.bf16.msra.mxu0 %v2243
  %2447 = vmatpush.bf16.msra.mxu0 %v2240
  %2448 = vmatpush.bf16.msra.mxu0 %v2237
  %2449 = vmatpush.bf16.msra.mxu0 %v2234
  %2450 = vmatpush.bf16.msra.mxu0 %v2231
  %2451 = vmatpush.bf16.msra.mxu0 %v2228
  %2452 = vmatpush.bf16.msra.mxu0 %v2225
  %2453 = vmatmul.bf16.gmra.mxu0 %v1977
  %v2454 = vpop.f32.mrf.mxu0
  %v2455 = vadd.f32 %v1968, %v2454
  %v2456 = vpop.f32.mrf.mxu0
  %2457 = vdwg.mxu0
  %2458 = vmatpush.bf16.msra.mxu0 %v2270
  %2459 = vmatpush.bf16.msra.mxu0 %v2267
  %2460 = vmatpush.bf16.msra.mxu0 %v2264
  %2461 = vmatpush.bf16.msra.mxu0 %v2261
  %2462 = vmatpush.bf16.msra.mxu0 %v2258
  %2463 = vmatpush.bf16.msra.mxu0 %v2255
  %2464 = vmatpush.bf16.msra.mxu0 %v2252
  %2465 = vmatpush.bf16.msra.mxu0 %v2249
  %2466 = vmatmul.bf16.gmra.mxu0 %v1978
  %v2467 = vpop.f32.mrf.mxu0
  %v2468 = vadd.f32 %v2455, %v2467
  %v2469 = vpop.f32.mrf.mxu0
  %2470 = vdwg.mxu0
  %2471 = vmatpush.bf16.msra.mxu0 %v2294
  %2472 = vmatpush.bf16.msra.mxu0 %v2291
  %2473 = vmatpush.bf16.msra.mxu0 %v2288
  %2474 = vmatpush.bf16.msra.mxu0 %v2285
  %2475 = vmatpush.bf16.msra.mxu0 %v2282
  %2476 = vmatpush.bf16.msra.mxu0 %v2279
  %2477 = vmatpush.bf16.msra.mxu0 %v2276
  %2478 = vmatpush.bf16.msra.mxu0 %v2273
  %2479 = vmatmul.bf16.gmra.mxu0 %v1979
  %v2480 = vpop.f32.mrf.mxu0
  %v2481 = vadd.f32 %v2468, %v2480
  %v2482 = vpop.f32.mrf.mxu0
  %2483 = vdwg.mxu0
  %v2484 = vmax.f32 %v2403, 0.0
  %v2485 = vmax.f32 %v2442, 0.0
  %v2486 = vmax.f32 %v2481, 0.0
  %v2487 = vpack.c.bf16 %v2484, %v2484
  %v2488 = vpack.c.bf16 %v2485, %v2485
  %v2489 = vpack.c.bf16 %v2486, %v2486
  %v2490 = vld [vmem:[%s11] sm:$0xf]
  %v2491 = vld [vmem:[%s11 + $0x4] sm:$0xf]
  %v2492 = vld [vmem:[%s11 + $0x8] sm:$0xf]
  %v2493 = vld [vmem:[%s11 + $0xc] sm:$0xf]
  %v2494 = vld [vmem:[%s11 + $0x10] sm:$0xf]
  %v2495 = vld [vmem:[%s11 + $0x14] sm:$0xf]
  %v2496 = vld [vmem:[%s11 + $0x18] sm:$0xf]
  %v2497 = vld [vmem:[%s11 + $0x1c] sm:$0xf]
  %v2498 = vld [vmem:[%s11 + $0x20] sm:$0xf]
  %v2499 = vld [vmem:[%s11 + $0x24] sm:$0xf]
  %v2500 = vld [vmem:[%s11 + $0x28] sm:$0xf]
  %v2501 = vld [vmem:[%s11 + $0x2c] sm:$0xf]
  %v2502 = vld [vmem:[%s11 + $0x30] sm:$0xf]
  %v2503 = vld [vmem:[%s11 + $0x34] sm:$0xf]
  %v2504 = vld [vmem:[%s11 + $0x38] sm:$0xf]
  %v2505 = vld [vmem:[%s11 + $0x3c] sm:$0xf]
  %v2506 = vld [vmem:[%s11 + $0x40] sm:$0xf]
  %v2507 = vld [vmem:[%s11 + $0x44] sm:$0xf]
  %v2508 = vld [vmem:[%s11 + $0x48] sm:$0xf]
  %v2509 = vld [vmem:[%s11 + $0x4c] sm:$0xf]
  %v2510 = vld [vmem:[%s11 + $0x50] sm:$0xf]
  %v2511 = vld [vmem:[%s11 + $0x54] sm:$0xf]
  %v2512 = vld [vmem:[%s11 + $0x58] sm:$0xf]
  %v2513 = vld [vmem:[%s11 + $0x5c] sm:$0xf]
  %v2514 = vld [vmem:[%s11 + $0x60] sm:$0xf]
  %v2515 = vld [vmem:[%s11 + $0x64] sm:$0xf]
  %v2516 = vld [vmem:[%s11 + $0x68] sm:$0xf]
  %v2517 = vld [vmem:[%s11 + $0x6c] sm:$0xf]
  %v2518 = vld [vmem:[%s11 + $0x70] sm:$0xf]
  %v2519 = vld [vmem:[%s11 + $0x74] sm:$0xf]
  %v2520 = vld [vmem:[%s11 + $0x78] sm:$0xf]
  %v2521 = vld [vmem:[%s11 + $0x7c] sm:$0xf]
  %v2522 = vld [vmem:[%s11 + $0x80] sm:$0xf]
  %v2523 = vld [vmem:[%s11 + $0x84] sm:$0xf]
  %v2524 = vld [vmem:[%s11 + $0x88] sm:$0xf]
  %v2525 = vld [vmem:[%s11 + $0x8c] sm:$0xf]
  %v2526 = vld [vmem:[%s11 + $0x90] sm:$0xf]
  %v2527 = vld [vmem:[%s11 + $0x94] sm:$0xf]
  %v2528 = vld [vmem:[%s11 + $0x98] sm:$0xf]
  %v2529 = vld [vmem:[%s11 + $0x9c] sm:$0xf]
  %v2530 = vld [vmem:[%s11 + $0xa0] sm:$0xf]
  %v2531 = vld [vmem:[%s11 + $0xa4] sm:$0xf]
  %v2532 = vld [vmem:[%s11 + $0xa8] sm:$0xf]
  %v2533 = vld [vmem:[%s11 + $0xac] sm:$0xf]
  %v2534 = vld [vmem:[%s11 + $0xb0] sm:$0xf]
  %v2535 = vld [vmem:[%s11 + $0xb4] sm:$0xf]
  %v2536 = vld [vmem:[%s11 + $0xb8] sm:$0xf]
  %v2537 = vld [vmem:[%s11 + $0xbc] sm:$0xf]
  %v2538 = vld [vmem:[%s12] sm:$0x1]
  %v2540 = vperm.slane %v2538, 0
  %v2590 = vunpack.c.l.b16 %v2490
  %v2591 = vunpack.c.l.b16 %v2491
  %v2592 = vunpack.c.l.b16 %v2492
  %v2593 = vunpack.c.l.b16 %v2493
  %v2594 = vunpack.c.l.b16 %v2494
  %v2595 = vunpack.c.l.b16 %v2495
  %v2596 = vunpack.c.l.b16 %v2496
  %v2597 = vunpack.c.l.b16 %v2497
  %v2598 = vunpack.c.l.b16 %v2498
  %v2599 = vunpack.c.l.b16 %v2499
  %v2600 = vunpack.c.l.b16 %v2500
  %v2601 = vunpack.c.l.b16 %v2501
  %v2602 = vunpack.c.l.b16 %v2502
  %v2603 = vunpack.c.l.b16 %v2503
  %v2604 = vunpack.c.l.b16 %v2504
  %v2605 = vunpack.c.l.b16 %v2505
  %v2606 = vunpack.c.l.b16 %v2506
  %v2607 = vunpack.c.l.b16 %v2507
  %v2608 = vunpack.c.l.b16 %v2508
  %v2609 = vunpack.c.l.b16 %v2509
  %v2610 = vunpack.c.l.b16 %v2510
  %v2611 = vunpack.c.l.b16 %v2511
  %v2612 = vunpack.c.l.b16 %v2512
  %v2613 = vunpack.c.l.b16 %v2513
  %v2614 = vunpack.c.l.b16 %v2514
  %v2615 = vunpack.c.l.b16 %v2515
  %v2616 = vunpack.c.l.b16 %v2516
  %v2617 = vunpack.c.l.b16 %v2517
  %v2618 = vunpack.c.l.b16 %v2518
  %v2619 = vunpack.c.l.b16 %v2519
  %v2620 = vunpack.c.l.b16 %v2520
  %v2621 = vunpack.c.l.b16 %v2521
  %v2622 = vunpack.c.l.b16 %v2522
  %v2623 = vunpack.c.l.b16 %v2523
  %v2624 = vunpack.c.l.b16 %v2524
  %v2625 = vunpack.c.l.b16 %v2525
  %v2626 = vunpack.c.l.b16 %v2526
  %v2627 = vunpack.c.l.b16 %v2527
  %v2628 = vunpack.c.l.b16 %v2528
  %v2629 = vunpack.c.l.b16 %v2529
  %v2630 = vunpack.c.l.b16 %v2530
  %v2631 = vunpack.c.l.b16 %v2531
  %v2632 = vunpack.c.l.b16 %v2532
  %v2633 = vunpack.c.l.b16 %v2533
  %v2634 = vunpack.c.l.b16 %v2534
  %v2635 = vunpack.c.l.b16 %v2535
  %v2636 = vunpack.c.l.b16 %v2536
  %v2637 = vunpack.c.l.b16 %v2537
  %v2638 = vpack.c.b16 %v2591, %v2590
  %v2639 = vpack.c.b16 %v2593, %v2592
  %v2640 = vpack.c.b16 %v2595, %v2594
  %v2641 = vpack.c.b16 %v2597, %v2596
  %v2642 = vpack.c.b16 %v2599, %v2598
  %v2643 = vpack.c.b16 %v2601, %v2600
  %v2644 = vpack.c.b16 %v2603, %v2602
  %v2645 = vpack.c.b16 %v2605, %v2604
  %v2646 = vpack.c.b16 %v2607, %v2606
  %v2647 = vpack.c.b16 %v2609, %v2608
  %v2648 = vpack.c.b16 %v2611, %v2610
  %v2649 = vpack.c.b16 %v2613, %v2612
  %v2650 = vpack.c.b16 %v2615, %v2614
  %v2651 = vpack.c.b16 %v2617, %v2616
  %v2652 = vpack.c.b16 %v2619, %v2618
  %v2653 = vpack.c.b16 %v2621, %v2620
  %v2654 = vpack.c.b16 %v2623, %v2622
  %v2655 = vpack.c.b16 %v2625, %v2624
  %v2656 = vpack.c.b16 %v2627, %v2626
  %v2657 = vpack.c.b16 %v2629, %v2628
  %v2658 = vpack.c.b16 %v2631, %v2630
  %v2659 = vpack.c.b16 %v2633, %v2632
  %v2660 = vpack.c.b16 %v2635, %v2634
  %v2661 = vpack.c.b16 %v2637, %v2636
  %2686 = vmatpush.bf16.msra.mxu0 %v2645
  %2687 = vmatpush.bf16.msra.mxu0 %v2644
  %2688 = vmatpush.bf16.msra.mxu0 %v2643
  %2689 = vmatpush.bf16.msra.mxu0 %v2642
  %2690 = vmatpush.bf16.msra.mxu0 %v2641
  %2691 = vmatpush.bf16.msra.mxu0 %v2640
  %2692 = vmatpush.bf16.msra.mxu0 %v2639
  %2693 = vmatpush.bf16.msra.mxu0 %v2638
  %2694 = vmatmul.bf16.gmra.mxu0 %v2487
  %v2695 = vpop.f32.mrf.mxu0
  %v2696 = vadd.f32 %v2540, %v2695
  %v2697 = vpop.f32.mrf.mxu0
  %2698 = vdwg.mxu0
  %2699 = vmatpush.bf16.msra.mxu0 %v2653
  %2700 = vmatpush.bf16.msra.mxu0 %v2652
  %2701 = vmatpush.bf16.msra.mxu0 %v2651
  %2702 = vmatpush.bf16.msra.mxu0 %v2650
  %2703 = vmatpush.bf16.msra.mxu0 %v2649
  %2704 = vmatpush.bf16.msra.mxu0 %v2648
  %2705 = vmatpush.bf16.msra.mxu0 %v2647
  %2706 = vmatpush.bf16.msra.mxu0 %v2646
  %2707 = vmatmul.bf16.gmra.mxu0 %v2488
  %v2708 = vpop.f32.mrf.mxu0
  %v2709 = vadd.f32 %v2696, %v2708
  %v2710 = vpop.f32.mrf.mxu0
  %2711 = vdwg.mxu0
  %2712 = vmatpush.bf16.msra.mxu0 %v2661
  %2713 = vmatpush.bf16.msra.mxu0 %v2660
  %2714 = vmatpush.bf16.msra.mxu0 %v2659
  %2715 = vmatpush.bf16.msra.mxu0 %v2658
  %2716 = vmatpush.bf16.msra.mxu0 %v2657
  %2717 = vmatpush.bf16.msra.mxu0 %v2656
  %2718 = vmatpush.bf16.msra.mxu0 %v2655
  %2719 = vmatpush.bf16.msra.mxu0 %v2654
  %2720 = vmatmul.bf16.gmra.mxu0 %v2489
  %v2721 = vpop.f32.mrf.mxu0
  %v2722 = vadd.f32 %v2709, %v2721
  %v2723 = vpop.f32.mrf.mxu0
  %2724 = vdwg.mxu0
  %2725 = vst [vmem:[%s13] sm:$0xff] %v2722
  // Predicated region
  $region54: #{cotext_track_head_forward.3} parent=0 // pred_check
    _
  $region55: #{cotext_track_head_forward.3} parent=0 // pred_check_branch
    %2727 = sbr.rel (0) target = $region57
  $region56: #{cotext_track_head_forward.3} parent=0 // pred_region
    _
  $region57: #{cotext_track_head_forward.3} parent=0 // pred_fallthru
    _
  // Predicated region
  $region58: #{cotext_track_head_forward.3} parent=0 // pred_check
    _
  $region59: #{cotext_track_head_forward.3} parent=0 // pred_check_branch
    %2729 = sbr.rel (0) target = $region61
  $region60: #{cotext_track_head_forward.3} parent=0 // pred_region
    _
  $region61: #{cotext_track_head_forward.3} parent=0 // pred_fallthru
    _

// kernel: cotext_track_head_forward.2
$region0: #{cotext_track_head_forward.2}
  #allocation0 [shape = 'u32[]', space=smem, size = 0x4, offset = 0x4, fixed_abs, tag = 'smem constant byte address 0x4 - core index']
  #allocation1 [shape = 'u32[72,128]{1,0:T(1,128)}', space=vmem, size = 0x9000, scoped, tag = 'internal scratch']
  #allocation2 [shape = 'bf16[320,128]{1,0:T(8,128)(2,1)}', space=vmem, size = 0x14000, scoped, tag = 'scratch operand']
  %s0 = inlined_call_operand.vmem [shape: bf16[640,128], index: 0, kind: input, shape index: {}]
  %s1 = inlined_call_operand.vmem [shape: f32[288,1], index: 1, kind: input, shape index: {}]
  %s2 = inlined_call_operand.vmem [shape: bf16[3,128,384], index: 2, kind: input, shape index: {}]
  %s3 = inlined_call_operand.vmem [shape: f32[1,128], index: 3, kind: input, shape index: {}]
  %s4 = inlined_call_operand.vmem [shape: f32[1,128], index: 4, kind: input, shape index: {}]
  %s5 = inlined_call_operand.vmem [shape: bf16[3,128,384], index: 5, kind: input, shape index: {}]
  %s6 = inlined_call_operand.vmem [shape: f32[1,128], index: 6, kind: input, shape index: {}]
  %s7 = inlined_call_operand.vmem [shape: f32[1,128], index: 7, kind: input, shape index: {}]
  %s8 = inlined_call_operand.vmem [shape: f32[2,2,128], index: 8, kind: output, shape index: {}]
  %s9 = sld [smem:[#allocation0]]
  $region65: #{cotext_track_head_forward.2} parent=0
    _
  %s11 = ssub.s32 1, %s9
  %s12 = scalar_select 0, %s11, %s9
  loop: start=0, step=1, limit=4
  $region2: #{cotext_track_head_forward.2} parent=0 // loop_pre_header
    _
  $region3: #{cotext_track_head_forward.2} parent=0 // loop_header
    %s14 = sphi 0, %s18
    %p15 = scmp.ge.s32.totalorder %s14, 4
    %s24 = sphi 0, %s26
    %s27 = sphi 0, %s24
    %s28 = sphi 0, %s27
    %s44 = sphi 0, %s28
    %s48 = sphi 0, %s48
    %s50 = sphi 0, %s48
    %s51 = sphi 0, %s50
    %s65 = sphi 0, %s51
    %s69 = sphi 0, %s69
    %s71 = sphi 0, %s69
    %s72 = sphi 0, %s71
    %s86 = sphi 0, %s72
    %s90 = sphi 0, %s90
    %s92 = sphi 0, %s90
    %s93 = sphi 0, %s92
    %s107 = sphi 0, %s93
    %s111 = sphi 0, %s111
    %s113 = sphi 0, %s111
    %s114 = sphi 0, %s113
    %s128 = sphi 0, %s114
    %s132 = sphi 0, %s132
    %s134 = sphi 0, %s132
    %s135 = sphi 0, %s134
    %s149 = sphi 0, %s135
    %s153 = sphi 0, %s153
    %s155 = sphi 0, %s153
    %s156 = sphi 0, %s155
    %s170 = sphi 0, %s156
    %s174 = sphi 0, %s174
    %s176 = sphi 0, %s174
    %s177 = sphi 0, %s176
    %s191 = sphi 0, %s177
    %s197 = sphi 0, %s199
    %s200 = sphi 0, %s197
    %s201 = sphi 0, %s200
    %s217 = sphi 0, %s201
  $region4: #{cotext_track_head_forward.2} parent=0 // loop_header_branch
    %17 = sbr.rel (%p15) target = $region8
  $region5: #{cotext_track_head_forward.2} parent=0 // loop_body
    %s19 = ssub.s32 %s14, 1
    %s20 = ssub.s32 %s14, 2
    %s21 = sadd.s32 %s14, 1
    %s22 = ssub.s32 %s14, %s21
    %p23 = scmp.eq.s32.totalorder %s22, 0
    %s25 = sadd.s32 %s24, 1
    %s26 = scalar_select %p23, %s24, %s25
    %p29 = pneg %p23
    %p30 = scmp.eq.s32.totalorder %s14, 1
    %p31 = por %p29, %p30
    %p32 = scmp.ne.s32.totalorder %s24, %s27
    %p33 = scmp.eq.s32.totalorder %s14, 0
    %p34 = por %p32, %p33
    %p35 = scmp.ne.s32.totalorder %s24, %s27
    %p36 = scmp.eq.s32.totalorder %s19, 1
    %p37 = por %p35, %p36
    %p38 = scmp.ne.s32.totalorder %s27, %s28
    %p39 = scmp.eq.s32.totalorder %s19, 0
    %p40 = por %p38, %p39
    %p41 = scmp.ne.s32.totalorder %s27, %s28
    %p42 = scmp.eq.s32.totalorder %s20, 1
    %p43 = por %p41, %p42
    %p45 = scmp.ne.s32.totalorder %s28, %s44
    %p46 = scmp.eq.s32.totalorder %s20, 0
    %p47 = por %p45, %p46
    %s49 = sadd.s32 %s48, 1
    %p52 = scmp.eq.s32.totalorder %s14, 1
    %p53 = scmp.ne.s32.totalorder %s48, %s50
    %p54 = scmp.eq.s32.totalorder %s14, 0
    %p55 = por %p53, %p54
    %p56 = scmp.ne.s32.totalorder %s48, %s50
    %p57 = scmp.eq.s32.totalorder %s19, 1
    %p58 = por %p56, %p57
    %p59 = scmp.ne.s32.totalorder %s50, %s51
    %p60 = scmp.eq.s32.totalorder %s19, 0
    %p61 = por %p59, %p60
    %p62 = scmp.ne.s32.totalorder %s50, %s51
    %p63 = scmp.eq.s32.totalorder %s20, 1
    %p64 = por %p62, %p63
    %p66 = scmp.ne.s32.totalorder %s51, %s65
    %p67 = scmp.eq.s32.totalorder %s20, 0
    %p68 = por %p66, %p67
    %s70 = sadd.s32 %s69, 1
    %p73 = scmp.eq.s32.totalorder %s14, 1
    %p74 = scmp.ne.s32.totalorder %s69, %s71
    %p75 = scmp.eq.s32.totalorder %s14, 0
    %p76 = por %p74, %p75
    %p77 = scmp.ne.s32.totalorder %s69, %s71
    %p78 = scmp.eq.s32.totalorder %s19, 1
    %p79 = por %p77, %p78
    %p80 = scmp.ne.s32.totalorder %s71, %s72
    %p81 = scmp.eq.s32.totalorder %s19, 0
    %p82 = por %p80, %p81
    %p83 = scmp.ne.s32.totalorder %s71, %s72
    %p84 = scmp.eq.s32.totalorder %s20, 1
    %p85 = por %p83, %p84
    %p87 = scmp.ne.s32.totalorder %s72, %s86
    %p88 = scmp.eq.s32.totalorder %s20, 0
    %p89 = por %p87, %p88
    %s91 = sadd.s32 %s90, 1
    %p94 = scmp.eq.s32.totalorder %s14, 1
    %p95 = scmp.ne.s32.totalorder %s90, %s92
    %p96 = scmp.eq.s32.totalorder %s14, 0
    %p97 = por %p95, %p96
    %p98 = scmp.ne.s32.totalorder %s90, %s92
    %p99 = scmp.eq.s32.totalorder %s19, 1
    %p100 = por %p98, %p99
    %p101 = scmp.ne.s32.totalorder %s92, %s93
    %p102 = scmp.eq.s32.totalorder %s19, 0
    %p103 = por %p101, %p102
    %p104 = scmp.ne.s32.totalorder %s92, %s93
    %p105 = scmp.eq.s32.totalorder %s20, 1
    %p106 = por %p104, %p105
    %p108 = scmp.ne.s32.totalorder %s93, %s107
    %p109 = scmp.eq.s32.totalorder %s20, 0
    %p110 = por %p108, %p109
    %s112 = sadd.s32 %s111, 1
    %p115 = scmp.eq.s32.totalorder %s14, 1
    %p116 = scmp.ne.s32.totalorder %s111, %s113
    %p117 = scmp.eq.s32.totalorder %s14, 0
    %p118 = por %p116, %p117
    %p119 = scmp.ne.s32.totalorder %s111, %s113
    %p120 = scmp.eq.s32.totalorder %s19, 1
    %p121 = por %p119, %p120
    %p122 = scmp.ne.s32.totalorder %s113, %s114
    %p123 = scmp.eq.s32.totalorder %s19, 0
    %p124 = por %p122, %p123
    %p125 = scmp.ne.s32.totalorder %s113, %s114
    %p126 = scmp.eq.s32.totalorder %s20, 1
    %p127 = por %p125, %p126
    %p129 = scmp.ne.s32.totalorder %s114, %s128
    %p130 = scmp.eq.s32.totalorder %s20, 0
    %p131 = por %p129, %p130
    %s133 = sadd.s32 %s132, 1
    %p136 = scmp.eq.s32.totalorder %s14, 1
    %p137 = scmp.ne.s32.totalorder %s132, %s134
    %p138 = scmp.eq.s32.totalorder %s14, 0
    %p139 = por %p137, %p138
    %p140 = scmp.ne.s32.totalorder %s132, %s134
    %p141 = scmp.eq.s32.totalorder %s19, 1
    %p142 = por %p140, %p141
    %p143 = scmp.ne.s32.totalorder %s134, %s135
    %p144 = scmp.eq.s32.totalorder %s19, 0
    %p145 = por %p143, %p144
    %p146 = scmp.ne.s32.totalorder %s134, %s135
    %p147 = scmp.eq.s32.totalorder %s20, 1
    %p148 = por %p146, %p147
    %p150 = scmp.ne.s32.totalorder %s135, %s149
    %p151 = scmp.eq.s32.totalorder %s20, 0
    %p152 = por %p150, %p151
    %s154 = sadd.s32 %s153, 1
    %p157 = scmp.eq.s32.totalorder %s14, 1
    %p158 = scmp.ne.s32.totalorder %s153, %s155
    %p159 = scmp.eq.s32.totalorder %s14, 0
    %p160 = por %p158, %p159
    %p161 = scmp.ne.s32.totalorder %s153, %s155
    %p162 = scmp.eq.s32.totalorder %s19, 1
    %p163 = por %p161, %p162
    %p164 = scmp.ne.s32.totalorder %s155, %s156
    %p165 = scmp.eq.s32.totalorder %s19, 0
    %p166 = por %p164, %p165
    %p167 = scmp.ne.s32.totalorder %s155, %s156
    %p168 = scmp.eq.s32.totalorder %s20, 1
    %p169 = por %p167, %p168
    %p171 = scmp.ne.s32.totalorder %s156, %s170
    %p172 = scmp.eq.s32.totalorder %s20, 0
    %p173 = por %p171, %p172
    %s175 = sadd.s32 %s174, 1
    %p178 = scmp.eq.s32.totalorder %s14, 1
    %p179 = scmp.ne.s32.totalorder %s174, %s176
    %p180 = scmp.eq.s32.totalorder %s14, 0
    %p181 = por %p179, %p180
    %p182 = scmp.ne.s32.totalorder %s174, %s176
    %p183 = scmp.eq.s32.totalorder %s19, 1
    %p184 = por %p182, %p183
    %p185 = scmp.ne.s32.totalorder %s176, %s177
    %p186 = scmp.eq.s32.totalorder %s19, 0
    %p187 = por %p185, %p186
    %p188 = scmp.ne.s32.totalorder %s176, %s177
    %p189 = scmp.eq.s32.totalorder %s20, 1
    %p190 = por %p188, %p189
    %p192 = scmp.ne.s32.totalorder %s177, %s191
    %p193 = scmp.eq.s32.totalorder %s20, 0
    %p194 = por %p192, %p193
    %s195 = ssub.s32 %s14, %s21
    %p196 = scmp.eq.s32.totalorder %s195, 0
    %s198 = sadd.s32 %s197, 1
    %s199 = scalar_select %p196, %s197, %s198
    %p202 = pneg %p196
    %p203 = scmp.eq.s32.totalorder %s14, 1
    %p204 = por %p202, %p203
    %p205 = scmp.ne.s32.totalorder %s197, %s200
    %p206 = scmp.eq.s32.totalorder %s14, 0
    %p207 = por %p205, %p206
    %p208 = scmp.ne.s32.totalorder %s197, %s200
    %p209 = scmp.eq.s32.totalorder %s19, 1
    %p210 = por %p208, %p209
    %p211 = scmp.ne.s32.totalorder %s200, %s201
    %p212 = scmp.eq.s32.totalorder %s19, 0
    %p213 = por %p211, %p212
    %p214 = scmp.ne.s32.totalorder %s200, %s201
    %p215 = scmp.eq.s32.totalorder %s20, 1
    %p216 = por %p214, %p215
    %p218 = scmp.ne.s32.totalorder %s201, %s217
    %p219 = scmp.eq.s32.totalorder %s20, 0
    %p220 = por %p218, %p219
    %p221 = scmp.le.s32.totalorder 1, %s14
    %p222 = scmp.lt.s32.totalorder %s14, 3
    %p223 = pnand %p221, %p222
    %p224 = pneg %p223
    // Predicated region
    $region9: #{cotext_track_head_forward.2} parent=5 // pred_check
      _
    $region10: #{cotext_track_head_forward.2} parent=5 // pred_check_branch
      %226 = sbr.rel (%p223) target = $region12
    $region11: #{cotext_track_head_forward.2} parent=5 // pred_region
      %s227 = ssub.s32 %s14, 1
      // Predicated region
      $region13: #{cotext_track_head_forward.2} parent=11 // pred_check
        %p228 = pneg %p61
      $region14: #{cotext_track_head_forward.2} parent=11 // pred_check_branch
        %230 = sbr.rel (%p228) target = $region16
      $region15: #{cotext_track_head_forward.2} parent=11 // pred_region
        _
      $region16: #{cotext_track_head_forward.2} parent=11 // pred_fallthru
        _
      // Predicated region
      $region17: #{cotext_track_head_forward.2} parent=11 // pred_check
        %p231 = pneg %p82
      $region18: #{cotext_track_head_forward.2} parent=11 // pred_check_branch
        %233 = sbr.rel (%p231) target = $region20
      $region19: #{cotext_track_head_forward.2} parent=11 // pred_region
        _
      $region20: #{cotext_track_head_forward.2} parent=11 // pred_fallthru
        _
      // Predicated region
      $region21: #{cotext_track_head_forward.2} parent=11 // pred_check
        %p234 = pneg %p103
      $region22: #{cotext_track_head_forward.2} parent=11 // pred_check_branch
        %236 = sbr.rel (%p234) target = $region24
      $region23: #{cotext_track_head_forward.2} parent=11 // pred_region
        _
      $region24: #{cotext_track_head_forward.2} parent=11 // pred_fallthru
        _
      // Predicated region
      $region25: #{cotext_track_head_forward.2} parent=11 // pred_check
        %p237 = pneg %p124
      $region26: #{cotext_track_head_forward.2} parent=11 // pred_check_branch
        %239 = sbr.rel (%p237) target = $region28
      $region27: #{cotext_track_head_forward.2} parent=11 // pred_region
        _
      $region28: #{cotext_track_head_forward.2} parent=11 // pred_fallthru
        _
      // Predicated region
      $region29: #{cotext_track_head_forward.2} parent=11 // pred_check
        %p240 = pneg %p145
      $region30: #{cotext_track_head_forward.2} parent=11 // pred_check_branch
        %242 = sbr.rel (%p240) target = $region32
      $region31: #{cotext_track_head_forward.2} parent=11 // pred_region
        _
      $region32: #{cotext_track_head_forward.2} parent=11 // pred_fallthru
        _
      // Predicated region
      $region33: #{cotext_track_head_forward.2} parent=11 // pred_check
        %p243 = pneg %p166
      $region34: #{cotext_track_head_forward.2} parent=11 // pred_check_branch
        %245 = sbr.rel (%p243) target = $region36
      $region35: #{cotext_track_head_forward.2} parent=11 // pred_region
        _
      $region36: #{cotext_track_head_forward.2} parent=11 // pred_fallthru
        _
      // Predicated region
      $region37: #{cotext_track_head_forward.2} parent=11 // pred_check
        %p246 = pneg %p187
      $region38: #{cotext_track_head_forward.2} parent=11 // pred_check_branch
        %248 = sbr.rel (%p246) target = $region40
      $region39: #{cotext_track_head_forward.2} parent=11 // pred_region
        _
      $region40: #{cotext_track_head_forward.2} parent=11 // pred_fallthru
        _
    $region12: #{cotext_track_head_forward.2} parent=5 // pred_fallthru
      _
    %p249 = scmp.lt.s32.totalorder %s14, 2
    // Predicated region
    $region41: #{cotext_track_head_forward.2} parent=5 // pred_check
      %p250 = pneg %p249
    $region42: #{cotext_track_head_forward.2} parent=5 // pred_check_branch
      %252 = sbr.rel (%p250) target = $region44
    $region43: #{cotext_track_head_forward.2} parent=5 // pred_region
      // Predicated region
      $region45: #{cotext_track_head_forward.2} parent=43 // pred_check
        %p253 = pneg %p34
      $region46: #{cotext_track_head_forward.2} parent=43 // pred_check_branch
        %255 = sbr.rel (%p253) target = $region48
      $region47: #{cotext_track_head_forward.2} parent=43 // pred_region
        %s256 = smul.u32 40, %s14
        %p257 = scmp.lt.s32.totalorder %s256, 79
        %s258 = scalar_select %p257, %s256, 79
        %s259 = smul.addr %s258, 4
        %s260 = scalar_lea.vmem %s0, %s259
        %s261 = smul.u32 40, %s14
      $region48: #{cotext_track_head_forward.2} parent=43 // pred_fallthru
        _
    $region44: #{cotext_track_head_forward.2} parent=5 // pred_fallthru
      _
    %p262 = scmp.le.s32.totalorder 1, %s14
    %p263 = scmp.lt.s32.totalorder %s14, 3
    %p264 = pnand %p262, %p263
    %p265 = pneg %p264
    // Predicated region
    $region49: #{cotext_track_head_forward.2} parent=5 // pred_check
      _
    $region50: #{cotext_track_head_forward.2} parent=5 // pred_check_branch
      %267 = sbr.rel (%p264) target = $region52
    $region51: #{cotext_track_head_forward.2} parent=5 // pred_region
      %s268 = ssub.s32 %s14, 1
      %s269 = smul.u32 40, %s19
      %p270 = scmp.lt.s32.totalorder %s269, 79
      %s271 = scalar_select %p270, %s269, 79
      %s272 = smul.addr %s271, 4
      %s273 = scalar_lea.vmem %s0, %s272
      %p274 = pneg %p40
      %p275 = pneg %p37
      %p276 = pneg %p61
      %p277 = pneg %p58
      %p278 = pneg %p82
      %p279 = pneg %p79
      %p280 = pneg %p103
      %p281 = pneg %p100
      %p282 = pneg %p124
      %p283 = pneg %p121
      %p284 = pneg %p145
      %p285 = pneg %p142
      %p286 = pneg %p166
      %p287 = pneg %p163
      %p288 = pneg %p187
      %p289 = pneg %p184
      %p290 = pneg %p213
      %p291 = pneg %p210
      %p292 = scmp.lt.s32.totalorder %s19, 1
      %s293 = scalar_select %p292, %s19, 1
      %s294 = smul.addr %s293, 2
      %s295 = scalar_lea.vmem %s8, %s294
      %s296 = smul.u32 40, %s19
      %p297 = scmp.lt.s32.totalorder %s296, 79
      %s298 = scalar_select %p297, %s296, 79
      %s299 = smul.addr %s298, 4
      %s300 = scalar_lea.vmem %s0, %s299
      %s301 = smul.u32 40, %s19
      %p302 = scmp.lt.s32.totalorder %s19, 1
      %s303 = scalar_select %p302, %s19, 1
      %s304 = smul.addr %s303, 2
      %s305 = scalar_lea.vmem %s8, %s304
      %v307 = vld [vmem:[%s1] sm:$0xff]
      %v308 = vld [vmem:[%s1 + $0x8] sm:$0xff]
      %v309 = vld [vmem:[%s1 + $0x10] sm:$0xff]
      %v310 = vld [vmem:[%s1 + $0x18] sm:$0xff]
      %v311 = vld [vmem:[%s1 + $0x20] sm:$0xff]
      %v312 = vld [vmem:[%s1 + $0x28] sm:$0xff]
      %v313 = vld [vmem:[%s1 + $0x30] sm:$0xff]
      %v314 = vld [vmem:[%s1 + $0x38] sm:$0xff]
      %v315 = vld [vmem:[%s1 + $0x40] sm:$0xff]
      %v316 = vld [vmem:[%s1 + $0x48] sm:$0xff]
      %v317 = vld [vmem:[%s1 + $0x50] sm:$0xff]
      %v318 = vld [vmem:[%s1 + $0x58] sm:$0xff]
      %v319 = vld [vmem:[%s1 + $0x60] sm:$0xff]
      %v320 = vld [vmem:[%s1 + $0x68] sm:$0xff]
      %v321 = vld [vmem:[%s1 + $0x70] sm:$0xff]
      %v322 = vld [vmem:[%s1 + $0x78] sm:$0xff]
      %v323 = vld [vmem:[%s1 + $0x80] sm:$0xff]
      %v324 = vld [vmem:[%s1 + $0x88] sm:$0xff]
      %v325 = vld [vmem:[%s1 + $0x90] sm:$0xff]
      %v326 = vld [vmem:[%s1 + $0x98] sm:$0xff]
      %v327 = vld [vmem:[%s1 + $0xa0] sm:$0xff]
      %v328 = vld [vmem:[%s1 + $0xa8] sm:$0xff]
      %v329 = vld [vmem:[%s1 + $0xb0] sm:$0xff]
      %v330 = vld [vmem:[%s1 + $0xb8] sm:$0xff]
      %v331 = vld [vmem:[%s1 + $0xc0] sm:$0xff]
      %v332 = vld [vmem:[%s1 + $0xc8] sm:$0xff]
      %v333 = vld [vmem:[%s1 + $0xd0] sm:$0xff]
      %v334 = vld [vmem:[%s1 + $0xd8] sm:$0xff]
      %v335 = vld [vmem:[%s1 + $0xe0] sm:$0xff]
      %v336 = vld [vmem:[%s1 + $0xe8] sm:$0xff]
      %v337 = vld [vmem:[%s1 + $0xf0] sm:$0xff]
      %v338 = vld [vmem:[%s1 + $0xf8] sm:$0xff]
      %v339 = vld [vmem:[%s1 + $0x100] sm:$0xff]
      %v340 = vld [vmem:[%s1 + $0x108] sm:$0xff]
      %v341 = vld [vmem:[%s1 + $0x110] sm:$0xff]
      %v342 = vld [vmem:[%s1 + $0x118] sm:$0xff]
      %343 = vst [vmem:[#allocation2] sm:$0xf] 0
      %344 = vst [vmem:[#allocation2 + $0x4] sm:$0xf] 0
      %345 = vst [vmem:[#allocation2 + $0x98] sm:$0xf] 0
      %346 = vst [vmem:[#allocation2 + $0x9c] sm:$0xf] 0
      %v347 = vld [vmem:[%s300] sm:$0xf]
      %v348 = vld [vmem:[%s300 + $0x4] sm:$0xf]
      %v349 = vld [vmem:[%s300 + $0x8] sm:$0xf]
      %v350 = vld [vmem:[%s300 + $0xc] sm:$0xf]
      %v351 = vld [vmem:[%s300 + $0x10] sm:$0xf]
      %v352 = vld [vmem:[%s300 + $0x14] sm:$0xf]
      %v353 = vld [vmem:[%s300 + $0x18] sm:$0xf]
      %v354 = vld [vmem:[%s300 + $0x1c] sm:$0xf]
      %v355 = vld [vmem:[%s300 + $0x20] sm:$0xf]
      %v356 = vld [vmem:[%s300 + $0x24] sm:$0xf]
      %v357 = vld [vmem:[%s300 + $0x28] sm:$0xf]
      %v358 = vld [vmem:[%s300 + $0x2c] sm:$0xf]
      %v359 = vld [vmem:[%s300 + $0x30] sm:$0xf]
      %v360 = vld [vmem:[%s300 + $0x34] sm:$0xf]
      %v361 = vld [vmem:[%s300 + $0x38] sm:$0xf]
      %v362 = vld [vmem:[%s300 + $0x3c] sm:$0xf]
      %v363 = vld [vmem:[%s300 + $0x40] sm:$0xf]
      %v364 = vld [vmem:[%s300 + $0x44] sm:$0xf]
      %v365 = vld [vmem:[%s300 + $0x48] sm:$0xf]
      %v366 = vld [vmem:[%s300 + $0x4c] sm:$0xf]
      %v367 = vld [vmem:[%s300 + $0x50] sm:$0xf]
      %v368 = vld [vmem:[%s300 + $0x54] sm:$0xf]
      %v369 = vld [vmem:[%s300 + $0x58] sm:$0xf]
      %v370 = vld [vmem:[%s300 + $0x5c] sm:$0xf]
      %v371 = vld [vmem:[%s300 + $0x60] sm:$0xf]
      %v372 = vld [vmem:[%s300 + $0x64] sm:$0xf]
      %v373 = vld [vmem:[%s300 + $0x68] sm:$0xf]
      %v374 = vld [vmem:[%s300 + $0x6c] sm:$0xf]
      %v375 = vld [vmem:[%s300 + $0x70] sm:$0xf]
      %v376 = vld [vmem:[%s300 + $0x74] sm:$0xf]
      %v377 = vld [vmem:[%s300 + $0x78] sm:$0xf]
      %v378 = vld [vmem:[%s300 + $0x7c] sm:$0xf]
      %v379 = vld [vmem:[%s300 + $0x80] sm:$0xf]
      %v380 = vld [vmem:[%s300 + $0x84] sm:$0xf]
      %v381 = vld [vmem:[%s300 + $0x88] sm:$0xf]
      %v382 = vld [vmem:[%s300 + $0x8c] sm:$0xf]
      %v383 = vld [vmem:[%s2] sm:$0xff]
      %v384 = vld [vmem:[%s2 + $0x8] sm:$0xf]
      %v385 = vld [vmem:[%s2 + $0xc] sm:$0xff]
      %v386 = vld [vmem:[%s2 + $0x14] sm:$0xf]
      %v387 = vld [vmem:[%s2 + $0x18] sm:$0xff]
      %v388 = vld [vmem:[%s2 + $0x20] sm:$0xf]
      %v389 = vld [vmem:[%s2 + $0x24] sm:$0xff]
      %v390 = vld [vmem:[%s2 + $0x2c] sm:$0xf]
      %v391 = vld [vmem:[%s2 + $0x30] sm:$0xff]
      %v392 = vld [vmem:[%s2 + $0x38] sm:$0xf]
      %v393 = vld [vmem:[%s2 + $0x3c] sm:$0xff]
      %v394 = vld [vmem:[%s2 + $0x44] sm:$0xf]
      %v395 = vld [vmem:[%s2 + $0x48] sm:$0xff]
      %v396 = vld [vmem:[%s2 + $0x50] sm:$0xf]
      %v397 = vld [vmem:[%s2 + $0x54] sm:$0xff]
      %v398 = vld [vmem:[%s2 + $0x5c] sm:$0xf]
      %v399 = vld [vmem:[%s2 + $0x60] sm:$0xff]
      %v400 = vld [vmem:[%s2 + $0x68] sm:$0xf]
      %v401 = vld [vmem:[%s2 + $0x6c] sm:$0xff]
      %v402 = vld [vmem:[%s2 + $0x74] sm:$0xf]
      %v403 = vld [vmem:[%s2 + $0x78] sm:$0xff]
      %v404 = vld [vmem:[%s2 + $0x80] sm:$0xf]
      %v405 = vld [vmem:[%s2 + $0x84] sm:$0xff]
      %v406 = vld [vmem:[%s2 + $0x8c] sm:$0xf]
      %v407 = vld [vmem:[%s2 + $0x90] sm:$0xff]
      %v408 = vld [vmem:[%s2 + $0x98] sm:$0xf]
      %v409 = vld [vmem:[%s2 + $0x9c] sm:$0xff]
      %v410 = vld [vmem:[%s2 + $0xa4] sm:$0xf]
      %v411 = vld [vmem:[%s2 + $0xa8] sm:$0xff]
      %v412 = vld [vmem:[%s2 + $0xb0] sm:$0xf]
      %v413 = vld [vmem:[%s2 + $0xb4] sm:$0xff]
      %v414 = vld [vmem:[%s2 + $0xbc] sm:$0xf]
      %v451 = vunpack.c.l.b16 %v347
      %v452 = vunpack.c.l.b16 %v348
      %v453 = vunpack.c.l.b16 %v349
      %v454 = vunpack.c.l.b16 %v350
      %v455 = vunpack.c.l.b16 %v351
      %v456 = vunpack.c.l.b16 %v352
      %v457 = vunpack.c.l.b16 %v353
      %v458 = vunpack.c.l.b16 %v354
      %v459 = vunpack.c.l.b16 %v355
      %v460 = vunpack.c.l.b16 %v356
      %v461 = vunpack.c.l.b16 %v357
      %v462 = vunpack.c.l.b16 %v358
      %v463 = vunpack.c.l.b16 %v359
      %v464 = vunpack.c.l.b16 %v360
      %v465 = vunpack.c.l.b16 %v361
      %v466 = vunpack.c.l.b16 %v362
      %v467 = vunpack.c.l.b16 %v363
      %v468 = vunpack.c.l.b16 %v364
      %v469 = vunpack.c.l.b16 %v365
      %v470 = vunpack.c.l.b16 %v366
      %v471 = vunpack.c.l.b16 %v367
      %v472 = vunpack.c.l.b16 %v368
      %v473 = vunpack.c.l.b16 %v369
      %v474 = vunpack.c.l.b16 %v370
      %v475 = vunpack.c.l.b16 %v371
      %v476 = vunpack.c.l.b16 %v372
      %v477 = vunpack.c.l.b16 %v373
      %v478 = vunpack.c.l.b16 %v374
      %v479 = vunpack.c.l.b16 %v375
      %v480 = vunpack.c.l.b16 %v376
      %v481 = vunpack.c.l.b16 %v377
      %v482 = vunpack.c.l.b16 %v378
      %v483 = vunpack.c.l.b16 %v379
      %v484 = vunpack.c.l.b16 %v380
      %v485 = vunpack.c.l.b16 %v381
      %v486 = vunpack.c.l.b16 %v382
      %v487 = vpack.c.b16 %v452, %v451
      %v488 = vpack.c.b16 %v454, %v453
      %v489 = vpack.c.b16 %v456, %v455
      %v490 = vpack.c.b16 %v458, %v457
      %v491 = vpack.c.b16 %v460, %v459
      %v492 = vpack.c.b16 %v462, %v461
      %v493 = vpack.c.b16 %v464, %v463
      %v494 = vpack.c.b16 %v466, %v465
      %v495 = vpack.c.b16 %v468, %v467
      %v496 = vpack.c.b16 %v470, %v469
      %v497 = vpack.c.b16 %v472, %v471
      %v498 = vpack.c.b16 %v474, %v473
      %v499 = vpack.c.b16 %v476, %v475
      %v500 = vpack.c.b16 %v478, %v477
      %v501 = vpack.c.b16 %v480, %v479
      %v502 = vpack.c.b16 %v482, %v481
      %v503 = vpack.c.b16 %v484, %v483
      %v504 = vpack.c.b16 %v486, %v485
      %v555 = vunpack.c.l.b16 %v383
      %v556 = vunpack.c.h.b16 %v383
      %v557 = vunpack.c.l.b16 %v384
      %v558 = vunpack.c.l.b16 %v385
      %v559 = vunpack.c.h.b16 %v385
      %v560 = vunpack.c.l.b16 %v386
      %v561 = vunpack.c.l.b16 %v387
      %v562 = vunpack.c.h.b16 %v387
      %v563 = vunpack.c.l.b16 %v388
      %v564 = vunpack.c.l.b16 %v389
      %v565 = vunpack.c.h.b16 %v389
      %v566 = vunpack.c.l.b16 %v390
      %v567 = vunpack.c.l.b16 %v391
      %v568 = vunpack.c.h.b16 %v391
      %v569 = vunpack.c.l.b16 %v392
      %v570 = vunpack.c.l.b16 %v393
      %v571 = vunpack.c.h.b16 %v393
      %v572 = vunpack.c.l.b16 %v394
      %v573 = vunpack.c.l.b16 %v395
      %v574 = vunpack.c.h.b16 %v395
      %v575 = vunpack.c.l.b16 %v396
      %v576 = vunpack.c.l.b16 %v397
      %v577 = vunpack.c.h.b16 %v397
      %v578 = vunpack.c.l.b16 %v398
      %v579 = vunpack.c.l.b16 %v399
      %v580 = vunpack.c.h.b16 %v399
      %v581 = vunpack.c.l.b16 %v400
      %v582 = vunpack.c.l.b16 %v401
      %v583 = vunpack.c.h.b16 %v401
      %v584 = vunpack.c.l.b16 %v402
      %v585 = vunpack.c.l.b16 %v403
      %v586 = vunpack.c.h.b16 %v403
      %v587 = vunpack.c.l.b16 %v404
      %v588 = vunpack.c.l.b16 %v405
      %v589 = vunpack.c.h.b16 %v405
      %v590 = vunpack.c.l.b16 %v406
      %v591 = vunpack.c.l.b16 %v407
      %v592 = vunpack.c.h.b16 %v407
      %v593 = vunpack.c.l.b16 %v408
      %v594 = vunpack.c.l.b16 %v409
      %v595 = vunpack.c.h.b16 %v409
      %v596 = vunpack.c.l.b16 %v410
      %v597 = vunpack.c.l.b16 %v411
      %v598 = vunpack.c.h.b16 %v411
      %v599 = vunpack.c.l.b16 %v412
      %v600 = vunpack.c.l.b16 %v413
      %v601 = vunpack.c.h.b16 %v413
      %v602 = vunpack.c.l.b16 %v414
      %v603 = vpack.c.b16 %v558, %v555
      %v604 = vpack.c.b16 %v559, %v556
      %v605 = vpack.c.b16 %v560, %v557
      %v606 = vpack.c.b16 %v564, %v561
      %v607 = vpack.c.b16 %v565, %v562
      %v608 = vpack.c.b16 %v566, %v563
      %v609 = vpack.c.b16 %v570, %v567
      %v610 = vpack.c.b16 %v571, %v568
      %v611 = vpack.c.b16 %v572, %v569
      %v612 = vpack.c.b16 %v576, %v573
      %v613 = vpack.c.b16 %v577, %v574
      %v614 = vpack.c.b16 %v578, %v575
      %v615 = vpack.c.b16 %v582, %v579
      %v616 = vpack.c.b16 %v583, %v580
      %v617 = vpack.c.b16 %v584, %v581
      %v618 = vpack.c.b16 %v588, %v585
      %v619 = vpack.c.b16 %v589, %v586
      %v620 = vpack.c.b16 %v590, %v587
      %v621 = vpack.c.b16 %v594, %v591
      %v622 = vpack.c.b16 %v595, %v592
      %v623 = vpack.c.b16 %v596, %v593
      %v624 = vpack.c.b16 %v600, %v597
      %v625 = vpack.c.b16 %v601, %v598
      %v626 = vpack.c.b16 %v602, %v599
      %651 = vmatpush.bf16.msra.mxu0 %v624
      %652 = vmatpush.bf16.msra.mxu0 %v621
      %653 = vmatpush.bf16.msra.mxu0 %v618
      %654 = vmatpush.bf16.msra.mxu0 %v615
      %655 = vmatpush.bf16.msra.mxu0 %v612
      %656 = vmatpush.bf16.msra.mxu0 %v609
      %657 = vmatpush.bf16.msra.mxu0 %v606
      %658 = vmatpush.bf16.msra.mxu0 %v603
      %659 = vmatmul.bf16.gmra.mxu0 %v487
      %v660 = vpop.f32.mrf.mxu0
      %v661 = vadd.f32 0.0, %v660
      %v662 = vpop.f32.mrf.mxu0
      %v663 = vadd.f32 0.0, %v662
      %664 = vmatmul.bf16.gmra.mxu0 %v488
      %v665 = vpop.f32.mrf.mxu0
      %v666 = vadd.f32 0.0, %v665
      %v667 = vpop.f32.mrf.mxu0
      %v668 = vadd.f32 0.0, %v667
      %669 = vmatmul.bf16.gmra.mxu0 %v489
      %v670 = vpop.f32.mrf.mxu0
      %v671 = vadd.f32 0.0, %v670
      %v672 = vpop.f32.mrf.mxu0
      %v673 = vadd.f32 0.0, %v672
      %674 = vmatmul.bf16.gmra.mxu0 %v490
      %v675 = vpop.f32.mrf.mxu0
      %v676 = vadd.f32 0.0, %v675
      %v677 = vpop.f32.mrf.mxu0
      %v678 = vadd.f32 0.0, %v677
      %679 = vmatmul.bf16.gmra.mxu0 %v491
      %v680 = vpop.f32.mrf.mxu0
      %v681 = vadd.f32 0.0, %v680
      %v682 = vpop.f32.mrf.mxu0
      %v683 = vadd.f32 0.0, %v682
      %684 = vmatmul.bf16.gmra.mxu0 %v492
      %v685 = vpop.f32.mrf.mxu0
      %v686 = vadd.f32 0.0, %v685
      %v687 = vpop.f32.mrf.mxu0
      %v688 = vadd.f32 0.0, %v687
      %689 = vmatmul.bf16.gmra.mxu0 %v493
      %v690 = vpop.f32.mrf.mxu0
      %v691 = vadd.f32 0.0, %v690
      %v692 = vpop.f32.mrf.mxu0
      %v693 = vadd.f32 0.0, %v692
      %694 = vmatmul.bf16.gmra.mxu0 %v494
      %v695 = vpop.f32.mrf.mxu0
      %v696 = vadd.f32 0.0, %v695
      %v697 = vpop.f32.mrf.mxu0
      %v698 = vadd.f32 0.0, %v697
      %699 = vmatmul.bf16.gmra.mxu0 %v495
      %v700 = vpop.f32.mrf.mxu0
      %v701 = vadd.f32 0.0, %v700
      %v702 = vpop.f32.mrf.mxu0
      %v703 = vadd.f32 0.0, %v702
      %704 = vmatmul.bf16.gmra.mxu0 %v496
      %v705 = vpop.f32.mrf.mxu0
      %v706 = vadd.f32 0.0, %v705
      %v707 = vpop.f32.mrf.mxu0
      %v708 = vadd.f32 0.0, %v707
      %709 = vmatmul.bf16.gmra.mxu0 %v497
      %v710 = vpop.f32.mrf.mxu0
      %v711 = vadd.f32 0.0, %v710
      %v712 = vpop.f32.mrf.mxu0
      %v713 = vadd.f32 0.0, %v712
      %714 = vmatmul.bf16.gmra.mxu0 %v498
      %v715 = vpop.f32.mrf.mxu0
      %v716 = vadd.f32 0.0, %v715
      %v717 = vpop.f32.mrf.mxu0
      %v718 = vadd.f32 0.0, %v717
      %719 = vmatmul.bf16.gmra.mxu0 %v499
      %v720 = vpop.f32.mrf.mxu0
      %v721 = vadd.f32 0.0, %v720
      %v722 = vpop.f32.mrf.mxu0
      %v723 = vadd.f32 0.0, %v722
      %724 = vmatmul.bf16.gmra.mxu0 %v500
      %v725 = vpop.f32.mrf.mxu0
      %v726 = vadd.f32 0.0, %v725
      %v727 = vpop.f32.mrf.mxu0
      %v728 = vadd.f32 0.0, %v727
      %729 = vmatmul.bf16.gmra.mxu0 %v501
      %v730 = vpop.f32.mrf.mxu0
      %v731 = vadd.f32 0.0, %v730
      %v732 = vpop.f32.mrf.mxu0
      %v733 = vadd.f32 0.0, %v732
      %734 = vmatmul.bf16.gmra.mxu0 %v502
      %v735 = vpop.f32.mrf.mxu0
      %v736 = vadd.f32 0.0, %v735
      %v737 = vpop.f32.mrf.mxu0
      %v738 = vadd.f32 0.0, %v737
      %739 = vmatmul.bf16.gmra.mxu0 %v503
      %v740 = vpop.f32.mrf.mxu0
      %v741 = vadd.f32 0.0, %v740
      %v742 = vpop.f32.mrf.mxu0
      %v743 = vadd.f32 0.0, %v742
      %744 = vmatmul.bf16.gmra.mxu0 %v504
      %v745 = vpop.f32.mrf.mxu0
      %v746 = vadd.f32 0.0, %v745
      %v747 = vpop.f32.mrf.mxu0
      %v748 = vadd.f32 0.0, %v747
      %749 = vdwg.mxu0
      %750 = vmatpush.bf16.msra.mxu0 %v625
      %751 = vmatpush.bf16.msra.mxu0 %v622
      %752 = vmatpush.bf16.msra.mxu0 %v619
      %753 = vmatpush.bf16.msra.mxu0 %v616
      %754 = vmatpush.bf16.msra.mxu0 %v613
      %755 = vmatpush.bf16.msra.mxu0 %v610
      %756 = vmatpush.bf16.msra.mxu0 %v607
      %757 = vmatpush.bf16.msra.mxu0 %v604
      %758 = vmatmul.bf16.gmra.mxu0 %v487
      %v759 = vpop.f32.mrf.mxu0
      %v760 = vadd.f32 0.0, %v759
      %v761 = vpop.f32.mrf.mxu0
      %v762 = vadd.f32 0.0, %v761
      %763 = vmatmul.bf16.gmra.mxu0 %v488
      %v764 = vpop.f32.mrf.mxu0
      %v765 = vadd.f32 0.0, %v764
      %v766 = vpop.f32.mrf.mxu0
      %v767 = vadd.f32 0.0, %v766
      %768 = vmatmul.bf16.gmra.mxu0 %v489
      %v769 = vpop.f32.mrf.mxu0
      %v770 = vadd.f32 0.0, %v769
      %v771 = vpop.f32.mrf.mxu0
      %v772 = vadd.f32 0.0, %v771
      %773 = vmatmul.bf16.gmra.mxu0 %v490
      %v774 = vpop.f32.mrf.mxu0
      %v775 = vadd.f32 0.0, %v774
      %v776 = vpop.f32.mrf.mxu0
      %v777 = vadd.f32 0.0, %v776
      %778 = vmatmul.bf16.gmra.mxu0 %v491
      %v779 = vpop.f32.mrf.mxu0
      %v780 = vadd.f32 0.0, %v779
      %v781 = vpop.f32.mrf.mxu0
      %v782 = vadd.f32 0.0, %v781
      %783 = vmatmul.bf16.gmra.mxu0 %v492
      %v784 = vpop.f32.mrf.mxu0
      %v785 = vadd.f32 0.0, %v784
      %v786 = vpop.f32.mrf.mxu0
      %v787 = vadd.f32 0.0, %v786
      %788 = vmatmul.bf16.gmra.mxu0 %v493
      %v789 = vpop.f32.mrf.mxu0
      %v790 = vadd.f32 0.0, %v789
      %v791 = vpop.f32.mrf.mxu0
      %v792 = vadd.f32 0.0, %v791
      %793 = vmatmul.bf16.gmra.mxu0 %v494
      %v794 = vpop.f32.mrf.mxu0
      %v795 = vadd.f32 0.0, %v794
      %v796 = vpop.f32.mrf.mxu0
      %v797 = vadd.f32 0.0, %v796
      %798 = vmatmul.bf16.gmra.mxu0 %v495
      %v799 = vpop.f32.mrf.mxu0
      %v800 = vadd.f32 0.0, %v799
      %v801 = vpop.f32.mrf.mxu0
      %v802 = vadd.f32 0.0, %v801
      %803 = vmatmul.bf16.gmra.mxu0 %v496
      %v804 = vpop.f32.mrf.mxu0
      %v805 = vadd.f32 0.0, %v804
      %v806 = vpop.f32.mrf.mxu0
      %v807 = vadd.f32 0.0, %v806
      %808 = vmatmul.bf16.gmra.mxu0 %v497
      %v809 = vpop.f32.mrf.mxu0
      %v810 = vadd.f32 0.0, %v809
      %v811 = vpop.f32.mrf.mxu0
      %v812 = vadd.f32 0.0, %v811
      %813 = vmatmul.bf16.gmra.mxu0 %v498
      %v814 = vpop.f32.mrf.mxu0
      %v815 = vadd.f32 0.0, %v814
      %v816 = vpop.f32.mrf.mxu0
      %v817 = vadd.f32 0.0, %v816
      %818 = vmatmul.bf16.gmra.mxu0 %v499
      %v819 = vpop.f32.mrf.mxu0
      %v820 = vadd.f32 0.0, %v819
      %v821 = vpop.f32.mrf.mxu0
      %v822 = vadd.f32 0.0, %v821
      %823 = vmatmul.bf16.gmra.mxu0 %v500
      %v824 = vpop.f32.mrf.mxu0
      %v825 = vadd.f32 0.0, %v824
      %v826 = vpop.f32.mrf.mxu0
      %v827 = vadd.f32 0.0, %v826
      %828 = vmatmul.bf16.gmra.mxu0 %v501
      %v829 = vpop.f32.mrf.mxu0
      %v830 = vadd.f32 0.0, %v829
      %v831 = vpop.f32.mrf.mxu0
      %v832 = vadd.f32 0.0, %v831
      %833 = vmatmul.bf16.gmra.mxu0 %v502
      %v834 = vpop.f32.mrf.mxu0
      %v835 = vadd.f32 0.0, %v834
      %v836 = vpop.f32.mrf.mxu0
      %v837 = vadd.f32 0.0, %v836
      %838 = vmatmul.bf16.gmra.mxu0 %v503
      %v839 = vpop.f32.mrf.mxu0
      %v840 = vadd.f32 0.0, %v839
      %v841 = vpop.f32.mrf.mxu0
      %v842 = vadd.f32 0.0, %v841
      %843 = vmatmul.bf16.gmra.mxu0 %v504
      %v844 = vpop.f32.mrf.mxu0
      %v845 = vadd.f32 0.0, %v844
      %v846 = vpop.f32.mrf.mxu0
      %v847 = vadd.f32 0.0, %v846
      %848 = vdwg.mxu0
      %849 = vmatpush.bf16.msra.mxu0 %v626
      %850 = vmatpush.bf16.msra.mxu0 %v623
      %851 = vmatpush.bf16.msra.mxu0 %v620
      %852 = vmatpush.bf16.msra.mxu0 %v617
      %853 = vmatpush.bf16.msra.mxu0 %v614
      %854 = vmatpush.bf16.msra.mxu0 %v611
      %855 = vmatpush.bf16.msra.mxu0 %v608
      %856 = vmatpush.bf16.msra.mxu0 %v605
      %857 = vmatmul.bf16.gmra.mxu0 %v487
      %v858 = vpop.f32.mrf.mxu0
      %v859 = vadd.f32 0.0, %v858
      %v860 = vpop.f32.mrf.mxu0
      %v861 = vadd.f32 0.0, %v860
      %862 = vmatmul.bf16.gmra.mxu0 %v488
      %v863 = vpop.f32.mrf.mxu0
      %v864 = vadd.f32 0.0, %v863
      %v865 = vpop.f32.mrf.mxu0
      %v866 = vadd.f32 0.0, %v865
      %867 = vmatmul.bf16.gmra.mxu0 %v489
      %v868 = vpop.f32.mrf.mxu0
      %v869 = vadd.f32 0.0, %v868
      %v870 = vpop.f32.mrf.mxu0
      %v871 = vadd.f32 0.0, %v870
      %872 = vmatmul.bf16.gmra.mxu0 %v490
      %v873 = vpop.f32.mrf.mxu0
      %v874 = vadd.f32 0.0, %v873
      %v875 = vpop.f32.mrf.mxu0
      %v876 = vadd.f32 0.0, %v875
      %877 = vmatmul.bf16.gmra.mxu0 %v491
      %v878 = vpop.f32.mrf.mxu0
      %v879 = vadd.f32 0.0, %v878
      %v880 = vpop.f32.mrf.mxu0
      %v881 = vadd.f32 0.0, %v880
      %882 = vmatmul.bf16.gmra.mxu0 %v492
      %v883 = vpop.f32.mrf.mxu0
      %v884 = vadd.f32 0.0, %v883
      %v885 = vpop.f32.mrf.mxu0
      %v886 = vadd.f32 0.0, %v885
      %887 = vmatmul.bf16.gmra.mxu0 %v493
      %v888 = vpop.f32.mrf.mxu0
      %v889 = vadd.f32 0.0, %v888
      %v890 = vpop.f32.mrf.mxu0
      %v891 = vadd.f32 0.0, %v890
      %892 = vmatmul.bf16.gmra.mxu0 %v494
      %v893 = vpop.f32.mrf.mxu0
      %v894 = vadd.f32 0.0, %v893
      %v895 = vpop.f32.mrf.mxu0
      %v896 = vadd.f32 0.0, %v895
      %897 = vmatmul.bf16.gmra.mxu0 %v495
      %v898 = vpop.f32.mrf.mxu0
      %v899 = vadd.f32 0.0, %v898
      %v900 = vpop.f32.mrf.mxu0
      %v901 = vadd.f32 0.0, %v900
      %902 = vmatmul.bf16.gmra.mxu0 %v496
      %v903 = vpop.f32.mrf.mxu0
      %v904 = vadd.f32 0.0, %v903
      %v905 = vpop.f32.mrf.mxu0
      %v906 = vadd.f32 0.0, %v905
      %907 = vmatmul.bf16.gmra.mxu0 %v497
      %v908 = vpop.f32.mrf.mxu0
      %v909 = vadd.f32 0.0, %v908
      %v910 = vpop.f32.mrf.mxu0
      %v911 = vadd.f32 0.0, %v910
      %912 = vmatmul.bf16.gmra.mxu0 %v498
      %v913 = vpop.f32.mrf.mxu0
      %v914 = vadd.f32 0.0, %v913
      %v915 = vpop.f32.mrf.mxu0
      %v916 = vadd.f32 0.0, %v915
      %917 = vmatmul.bf16.gmra.mxu0 %v499
      %v918 = vpop.f32.mrf.mxu0
      %v919 = vadd.f32 0.0, %v918
      %v920 = vpop.f32.mrf.mxu0
      %v921 = vadd.f32 0.0, %v920
      %922 = vmatmul.bf16.gmra.mxu0 %v500
      %v923 = vpop.f32.mrf.mxu0
      %v924 = vadd.f32 0.0, %v923
      %v925 = vpop.f32.mrf.mxu0
      %v926 = vadd.f32 0.0, %v925
      %927 = vmatmul.bf16.gmra.mxu0 %v501
      %v928 = vpop.f32.mrf.mxu0
      %v929 = vadd.f32 0.0, %v928
      %v930 = vpop.f32.mrf.mxu0
      %v931 = vadd.f32 0.0, %v930
      %932 = vmatmul.bf16.gmra.mxu0 %v502
      %v933 = vpop.f32.mrf.mxu0
      %v934 = vadd.f32 0.0, %v933
      %v935 = vpop.f32.mrf.mxu0
      %v936 = vadd.f32 0.0, %v935
      %937 = vmatmul.bf16.gmra.mxu0 %v503
      %v938 = vpop.f32.mrf.mxu0
      %v939 = vadd.f32 0.0, %v938
      %v940 = vpop.f32.mrf.mxu0
      %v941 = vadd.f32 0.0, %v940
      %942 = vmatmul.bf16.gmra.mxu0 %v504
      %v943 = vpop.f32.mrf.mxu0
      %v944 = vadd.f32 0.0, %v943
      %v945 = vpop.f32.mrf.mxu0
      %v946 = vadd.f32 0.0, %v945
      %947 = vdwg.mxu0
      %v948 = vld [vmem:[%s300 + $0x8] sm:$0xf]
      %v949 = vld [vmem:[%s300 + $0xc] sm:$0xf]
      %v950 = vld [vmem:[%s300 + $0x10] sm:$0xf]
      %v951 = vld [vmem:[%s300 + $0x14] sm:$0xf]
      %v952 = vld [vmem:[%s300 + $0x18] sm:$0xf]
      %v953 = vld [vmem:[%s300 + $0x1c] sm:$0xf]
      %v954 = vld [vmem:[%s300 + $0x20] sm:$0xf]
      %v955 = vld [vmem:[%s300 + $0x24] sm:$0xf]
      %v956 = vld [vmem:[%s300 + $0x28] sm:$0xf]
      %v957 = vld [vmem:[%s300 + $0x2c] sm:$0xf]
      %v958 = vld [vmem:[%s300 + $0x30] sm:$0xf]
      %v959 = vld [vmem:[%s300 + $0x34] sm:$0xf]
      %v960 = vld [vmem:[%s300 + $0x38] sm:$0xf]
      %v961 = vld [vmem:[%s300 + $0x3c] sm:$0xf]
      %v962 = vld [vmem:[%s300 + $0x40] sm:$0xf]
      %v963 = vld [vmem:[%s300 + $0x44] sm:$0xf]
      %v964 = vld [vmem:[%s300 + $0x48] sm:$0xf]
      %v965 = vld [vmem:[%s300 + $0x4c] sm:$0xf]
      %v966 = vld [vmem:[%s300 + $0x50] sm:$0xf]
      %v967 = vld [vmem:[%s300 + $0x54] sm:$0xf]
      %v968 = vld [vmem:[%s300 + $0x58] sm:$0xf]
      %v969 = vld [vmem:[%s300 + $0x5c] sm:$0xf]
      %v970 = vld [vmem:[%s300 + $0x60] sm:$0xf]
      %v971 = vld [vmem:[%s300 + $0x64] sm:$0xf]
      %v972 = vld [vmem:[%s300 + $0x68] sm:$0xf]
      %v973 = vld [vmem:[%s300 + $0x6c] sm:$0xf]
      %v974 = vld [vmem:[%s300 + $0x70] sm:$0xf]
      %v975 = vld [vmem:[%s300 + $0x74] sm:$0xf]
      %v976 = vld [vmem:[%s300 + $0x78] sm:$0xf]
      %v977 = vld [vmem:[%s300 + $0x7c] sm:$0xf]
      %v978 = vld [vmem:[%s300 + $0x80] sm:$0xf]
      %v979 = vld [vmem:[%s300 + $0x84] sm:$0xf]
      %v980 = vld [vmem:[%s300 + $0x88] sm:$0xf]
      %v981 = vld [vmem:[%s300 + $0x8c] sm:$0xf]
      %v982 = vld [vmem:[%s300 + $0x90] sm:$0xf]
      %v983 = vld [vmem:[%s300 + $0x94] sm:$0xf]
      %s984 = scalar_lea.vmem %s2, 192
      %v985 = vld [vmem:[%s984] sm:$0xff]
      %v986 = vld [vmem:[%s984 + $0x8] sm:$0xf]
      %v987 = vld [vmem:[%s984 + $0xc] sm:$0xff]
      %v988 = vld [vmem:[%s984 + $0x14] sm:$0xf]
      %v989 = vld [vmem:[%s984 + $0x18] sm:$0xff]
      %v990 = vld [vmem:[%s984 + $0x20] sm:$0xf]
      %v991 = vld [vmem:[%s984 + $0x24] sm:$0xff]
      %v992 = vld [vmem:[%s984 + $0x2c] sm:$0xf]
      %v993 = vld [vmem:[%s984 + $0x30] sm:$0xff]
      %v994 = vld [vmem:[%s984 + $0x38] sm:$0xf]
      %v995 = vld [vmem:[%s984 + $0x3c] sm:$0xff]
      %v996 = vld [vmem:[%s984 + $0x44] sm:$0xf]
      %v997 = vld [vmem:[%s984 + $0x48] sm:$0xff]
      %v998 = vld [vmem:[%s984 + $0x50] sm:$0xf]
      %v999 = vld [vmem:[%s984 + $0x54] sm:$0xff]
      %v1000 = vld [vmem:[%s984 + $0x5c] sm:$0xf]
      %v1001 = vld [vmem:[%s984 + $0x60] sm:$0xff]
      %v1002 = vld [vmem:[%s984 + $0x68] sm:$0xf]
      %v1003 = vld [vmem:[%s984 + $0x6c] sm:$0xff]
      %v1004 = vld [vmem:[%s984 + $0x74] sm:$0xf]
      %v1005 = vld [vmem:[%s984 + $0x78] sm:$0xff]
      %v1006 = vld [vmem:[%s984 + $0x80] sm:$0xf]
      %v1007 = vld [vmem:[%s984 + $0x84] sm:$0xff]
      %v1008 = vld [vmem:[%s984 + $0x8c] sm:$0xf]
      %v1009 = vld [vmem:[%s984 + $0x90] sm:$0xff]
      %v1010 = vld [vmem:[%s984 + $0x98] sm:$0xf]
      %v1011 = vld [vmem:[%s984 + $0x9c] sm:$0xff]
      %v1012 = vld [vmem:[%s984 + $0xa4] sm:$0xf]
      %v1013 = vld [vmem:[%s984 + $0xa8] sm:$0xff]
      %v1014 = vld [vmem:[%s984 + $0xb0] sm:$0xf]
      %v1015 = vld [vmem:[%s984 + $0xb4] sm:$0xff]
      %v1016 = vld [vmem:[%s984 + $0xbc] sm:$0xf]
      %v1053 = vunpack.c.l.b16 %v948
      %v1054 = vunpack.c.l.b16 %v949
      %v1055 = vunpack.c.l.b16 %v950
      %v1056 = vunpack.c.l.b16 %v951
      %v1057 = vunpack.c.l.b16 %v952
      %v1058 = vunpack.c.l.b16 %v953
      %v1059 = vunpack.c.l.b16 %v954
      %v1060 = vunpack.c.l.b16 %v955
      %v1061 = vunpack.c.l.b16 %v956
      %v1062 = vunpack.c.l.b16 %v957
      %v1063 = vunpack.c.l.b16 %v958
      %v1064 = vunpack.c.l.b16 %v959
      %v1065 = vunpack.c.l.b16 %v960
      %v1066 = vunpack.c.l.b16 %v961
      %v1067 = vunpack.c.l.b16 %v962
      %v1068 = vunpack.c.l.b16 %v963
      %v1069 = vunpack.c.l.b16 %v964
      %v1070 = vunpack.c.l.b16 %v965
      %v1071 = vunpack.c.l.b16 %v966
      %v1072 = vunpack.c.l.b16 %v967
      %v1073 = vunpack.c.l.b16 %v968
      %v1074 = vunpack.c.l.b16 %v969
      %v1075 = vunpack.c.l.b16 %v970
      %v1076 = vunpack.c.l.b16 %v971
      %v1077 = vunpack.c.l.b16 %v972
      %v1078 = vunpack.c.l.b16 %v973
      %v1079 = vunpack.c.l.b16 %v974
      %v1080 = vunpack.c.l.b16 %v975
      %v1081 = vunpack.c.l.b16 %v976
      %v1082 = vunpack.c.l.b16 %v977
      %v1083 = vunpack.c.l.b16 %v978
      %v1084 = vunpack.c.l.b16 %v979
      %v1085 = vunpack.c.l.b16 %v980
      %v1086 = vunpack.c.l.b16 %v981
      %v1087 = vunpack.c.l.b16 %v982
      %v1088 = vunpack.c.l.b16 %v983
      %v1089 = vpack.c.b16 %v1054, %v1053
      %v1090 = vpack.c.b16 %v1056, %v1055
      %v1091 = vpack.c.b16 %v1058, %v1057
      %v1092 = vpack.c.b16 %v1060, %v1059
      %v1093 = vpack.c.b16 %v1062, %v1061
      %v1094 = vpack.c.b16 %v1064, %v1063
      %v1095 = vpack.c.b16 %v1066, %v1065
      %v1096 = vpack.c.b16 %v1068, %v1067
      %v1097 = vpack.c.b16 %v1070, %v1069
      %v1098 = vpack.c.b16 %v1072, %v1071
      %v1099 = vpack.c.b16 %v1074, %v1073
      %v1100 = vpack.c.b16 %v1076, %v1075
      %v1101 = vpack.c.b16 %v1078, %v1077
      %v1102 = vpack.c.b16 %v1080, %v1079
      %v1103 = vpack.c.b16 %v1082, %v1081
      %v1104 = vpack.c.b16 %v1084, %v1083
      %v1105 = vpack.c.b16 %v1086, %v1085
      %v1106 = vpack.c.b16 %v1088, %v1087
      %v1157 = vunpack.c.l.b16 %v985
      %v1158 = vunpack.c.h.b16 %v985
      %v1159 = vunpack.c.l.b16 %v986
      %v1160 = vunpack.c.l.b16 %v987
      %v1161 = vunpack.c.h.b16 %v987
      %v1162 = vunpack.c.l.b16 %v988
      %v1163 = vunpack.c.l.b16 %v989
      %v1164 = vunpack.c.h.b16 %v989
      %v1165 = vunpack.c.l.b16 %v990
      %v1166 = vunpack.c.l.b16 %v991
      %v1167 = vunpack.c.h.b16 %v991
      %v1168 = vunpack.c.l.b16 %v992
      %v1169 = vunpack.c.l.b16 %v993
      %v1170 = vunpack.c.h.b16 %v993
      %v1171 = vunpack.c.l.b16 %v994
      %v1172 = vunpack.c.l.b16 %v995
      %v1173 = vunpack.c.h.b16 %v995
      %v1174 = vunpack.c.l.b16 %v996
      %v1175 = vunpack.c.l.b16 %v997
      %v1176 = vunpack.c.h.b16 %v997
      %v1177 = vunpack.c.l.b16 %v998
      %v1178 = vunpack.c.l.b16 %v999
      %v1179 = vunpack.c.h.b16 %v999
      %v1180 = vunpack.c.l.b16 %v1000
      %v1181 = vunpack.c.l.b16 %v1001
      %v1182 = vunpack.c.h.b16 %v1001
      %v1183 = vunpack.c.l.b16 %v1002
      %v1184 = vunpack.c.l.b16 %v1003
      %v1185 = vunpack.c.h.b16 %v1003
      %v1186 = vunpack.c.l.b16 %v1004
      %v1187 = vunpack.c.l.b16 %v1005
      %v1188 = vunpack.c.h.b16 %v1005
      %v1189 = vunpack.c.l.b16 %v1006
      %v1190 = vunpack.c.l.b16 %v1007
      %v1191 = vunpack.c.h.b16 %v1007
      %v1192 = vunpack.c.l.b16 %v1008
      %v1193 = vunpack.c.l.b16 %v1009
      %v1194 = vunpack.c.h.b16 %v1009
      %v1195 = vunpack.c.l.b16 %v1010
      %v1196 = vunpack.c.l.b16 %v1011
      %v1197 = vunpack.c.h.b16 %v1011
      %v1198 = vunpack.c.l.b16 %v1012
      %v1199 = vunpack.c.l.b16 %v1013
      %v1200 = vunpack.c.h.b16 %v1013
      %v1201 = vunpack.c.l.b16 %v1014
      %v1202 = vunpack.c.l.b16 %v1015
      %v1203 = vunpack.c.h.b16 %v1015
      %v1204 = vunpack.c.l.b16 %v1016
      %v1205 = vpack.c.b16 %v1160, %v1157
      %v1206 = vpack.c.b16 %v1161, %v1158
      %v1207 = vpack.c.b16 %v1162, %v1159
      %v1208 = vpack.c.b16 %v1166, %v1163
      %v1209 = vpack.c.b16 %v1167, %v1164
      %v1210 = vpack.c.b16 %v1168, %v1165
      %v1211 = vpack.c.b16 %v1172, %v1169
      %v1212 = vpack.c.b16 %v1173, %v1170
      %v1213 = vpack.c.b16 %v1174, %v1171
      %v1214 = vpack.c.b16 %v1178, %v1175
      %v1215 = vpack.c.b16 %v1179, %v1176
      %v1216 = vpack.c.b16 %v1180, %v1177
      %v1217 = vpack.c.b16 %v1184, %v1181
      %v1218 = vpack.c.b16 %v1185, %v1182
      %v1219 = vpack.c.b16 %v1186, %v1183
      %v1220 = vpack.c.b16 %v1190, %v1187
      %v1221 = vpack.c.b16 %v1191, %v1188
      %v1222 = vpack.c.b16 %v1192, %v1189
      %v1223 = vpack.c.b16 %v1196, %v1193
      %v1224 = vpack.c.b16 %v1197, %v1194
      %v1225 = vpack.c.b16 %v1198, %v1195
      %v1226 = vpack.c.b16 %v1202, %v1199
      %v1227 = vpack.c.b16 %v1203, %v1200
      %v1228 = vpack.c.b16 %v1204, %v1201
      %1253 = vmatpush.bf16.msra.mxu0 %v1226
      %1254 = vmatpush.bf16.msra.mxu0 %v1223
      %1255 = vmatpush.bf16.msra.mxu0 %v1220
      %1256 = vmatpush.bf16.msra.mxu0 %v1217
      %1257 = vmatpush.bf16.msra.mxu0 %v1214
      %1258 = vmatpush.bf16.msra.mxu0 %v1211
      %1259 = vmatpush.bf16.msra.mxu0 %v1208
      %1260 = vmatpush.bf16.msra.mxu0 %v1205
      %1261 = vmatmul.bf16.gmra.mxu0 %v1089
      %v1262 = vpop.f32.mrf.mxu0
      %v1263 = vadd.f32 0.0, %v1262
      %v1264 = vpop.f32.mrf.mxu0
      %v1265 = vadd.f32 0.0, %v1264
      %1266 = vmatmul.bf16.gmra.mxu0 %v1090
      %v1267 = vpop.f32.mrf.mxu0
      %v1268 = vadd.f32 0.0, %v1267
      %v1269 = vpop.f32.mrf.mxu0
      %v1270 = vadd.f32 0.0, %v1269
      %1271 = vmatmul.bf16.gmra.mxu0 %v1091
      %v1272 = vpop.f32.mrf.mxu0
      %v1273 = vadd.f32 0.0, %v1272
      %v1274 = vpop.f32.mrf.mxu0
      %v1275 = vadd.f32 0.0, %v1274
      %1276 = vmatmul.bf16.gmra.mxu0 %v1092
      %v1277 = vpop.f32.mrf.mxu0
      %v1278 = vadd.f32 0.0, %v1277
      %v1279 = vpop.f32.mrf.mxu0
      %v1280 = vadd.f32 0.0, %v1279
      %1281 = vmatmul.bf16.gmra.mxu0 %v1093
      %v1282 = vpop.f32.mrf.mxu0
      %v1283 = vadd.f32 0.0, %v1282
      %v1284 = vpop.f32.mrf.mxu0
      %v1285 = vadd.f32 0.0, %v1284
      %1286 = vmatmul.bf16.gmra.mxu0 %v1094
      %v1287 = vpop.f32.mrf.mxu0
      %v1288 = vadd.f32 0.0, %v1287
      %v1289 = vpop.f32.mrf.mxu0
      %v1290 = vadd.f32 0.0, %v1289
      %1291 = vmatmul.bf16.gmra.mxu0 %v1095
      %v1292 = vpop.f32.mrf.mxu0
      %v1293 = vadd.f32 0.0, %v1292
      %v1294 = vpop.f32.mrf.mxu0
      %v1295 = vadd.f32 0.0, %v1294
      %1296 = vmatmul.bf16.gmra.mxu0 %v1096
      %v1297 = vpop.f32.mrf.mxu0
      %v1298 = vadd.f32 0.0, %v1297
      %v1299 = vpop.f32.mrf.mxu0
      %v1300 = vadd.f32 0.0, %v1299
      %1301 = vmatmul.bf16.gmra.mxu0 %v1097
      %v1302 = vpop.f32.mrf.mxu0
      %v1303 = vadd.f32 0.0, %v1302
      %v1304 = vpop.f32.mrf.mxu0
      %v1305 = vadd.f32 0.0, %v1304
      %1306 = vmatmul.bf16.gmra.mxu0 %v1098
      %v1307 = vpop.f32.mrf.mxu0
      %v1308 = vadd.f32 0.0, %v1307
      %v1309 = vpop.f32.mrf.mxu0
      %v1310 = vadd.f32 0.0, %v1309
      %1311 = vmatmul.bf16.gmra.mxu0 %v1099
      %v1312 = vpop.f32.mrf.mxu0
      %v1313 = vadd.f32 0.0, %v1312
      %v1314 = vpop.f32.mrf.mxu0
      %v1315 = vadd.f32 0.0, %v1314
      %1316 = vmatmul.bf16.gmra.mxu0 %v1100
      %v1317 = vpop.f32.mrf.mxu0
      %v1318 = vadd.f32 0.0, %v1317
      %v1319 = vpop.f32.mrf.mxu0
      %v1320 = vadd.f32 0.0, %v1319
      %1321 = vmatmul.bf16.gmra.mxu0 %v1101
      %v1322 = vpop.f32.mrf.mxu0
      %v1323 = vadd.f32 0.0, %v1322
      %v1324 = vpop.f32.mrf.mxu0
      %v1325 = vadd.f32 0.0, %v1324
      %1326 = vmatmul.bf16.gmra.mxu0 %v1102
      %v1327 = vpop.f32.mrf.mxu0
      %v1328 = vadd.f32 0.0, %v1327
      %v1329 = vpop.f32.mrf.mxu0
      %v1330 = vadd.f32 0.0, %v1329
      %1331 = vmatmul.bf16.gmra.mxu0 %v1103
      %v1332 = vpop.f32.mrf.mxu0
      %v1333 = vadd.f32 0.0, %v1332
      %v1334 = vpop.f32.mrf.mxu0
      %v1335 = vadd.f32 0.0, %v1334
      %1336 = vmatmul.bf16.gmra.mxu0 %v1104
      %v1337 = vpop.f32.mrf.mxu0
      %v1338 = vadd.f32 0.0, %v1337
      %v1339 = vpop.f32.mrf.mxu0
      %v1340 = vadd.f32 0.0, %v1339
      %1341 = vmatmul.bf16.gmra.mxu0 %v1105
      %v1342 = vpop.f32.mrf.mxu0
      %v1343 = vadd.f32 0.0, %v1342
      %v1344 = vpop.f32.mrf.mxu0
      %v1345 = vadd.f32 0.0, %v1344
      %1346 = vmatmul.bf16.gmra.mxu0 %v1106
      %v1347 = vpop.f32.mrf.mxu0
      %v1348 = vadd.f32 0.0, %v1347
      %v1349 = vpop.f32.mrf.mxu0
      %v1350 = vadd.f32 0.0, %v1349
      %1351 = vdwg.mxu0
      %1352 = vmatpush.bf16.msra.mxu0 %v1227
      %1353 = vmatpush.bf16.msra.mxu0 %v1224
      %1354 = vmatpush.bf16.msra.mxu0 %v1221
      %1355 = vmatpush.bf16.msra.mxu0 %v1218
      %1356 = vmatpush.bf16.msra.mxu0 %v1215
      %1357 = vmatpush.bf16.msra.mxu0 %v1212
      %1358 = vmatpush.bf16.msra.mxu0 %v1209
      %1359 = vmatpush.bf16.msra.mxu0 %v1206
      %1360 = vmatmul.bf16.gmra.mxu0 %v1089
      %v1361 = vpop.f32.mrf.mxu0
      %v1362 = vadd.f32 0.0, %v1361
      %v1363 = vpop.f32.mrf.mxu0
      %v1364 = vadd.f32 0.0, %v1363
      %1365 = vmatmul.bf16.gmra.mxu0 %v1090
      %v1366 = vpop.f32.mrf.mxu0
      %v1367 = vadd.f32 0.0, %v1366
      %v1368 = vpop.f32.mrf.mxu0
      %v1369 = vadd.f32 0.0, %v1368
      %1370 = vmatmul.bf16.gmra.mxu0 %v1091
      %v1371 = vpop.f32.mrf.mxu0
      %v1372 = vadd.f32 0.0, %v1371
      %v1373 = vpop.f32.mrf.mxu0
      %v1374 = vadd.f32 0.0, %v1373
      %1375 = vmatmul.bf16.gmra.mxu0 %v1092
      %v1376 = vpop.f32.mrf.mxu0
      %v1377 = vadd.f32 0.0, %v1376
      %v1378 = vpop.f32.mrf.mxu0
      %v1379 = vadd.f32 0.0, %v1378
      %1380 = vmatmul.bf16.gmra.mxu0 %v1093
      %v1381 = vpop.f32.mrf.mxu0
      %v1382 = vadd.f32 0.0, %v1381
      %v1383 = vpop.f32.mrf.mxu0
      %v1384 = vadd.f32 0.0, %v1383
      %1385 = vmatmul.bf16.gmra.mxu0 %v1094
      %v1386 = vpop.f32.mrf.mxu0
      %v1387 = vadd.f32 0.0, %v1386
      %v1388 = vpop.f32.mrf.mxu0
      %v1389 = vadd.f32 0.0, %v1388
      %1390 = vmatmul.bf16.gmra.mxu0 %v1095
      %v1391 = vpop.f32.mrf.mxu0
      %v1392 = vadd.f32 0.0, %v1391
      %v1393 = vpop.f32.mrf.mxu0
      %v1394 = vadd.f32 0.0, %v1393
      %1395 = vmatmul.bf16.gmra.mxu0 %v1096
      %v1396 = vpop.f32.mrf.mxu0
      %v1397 = vadd.f32 0.0, %v1396
      %v1398 = vpop.f32.mrf.mxu0
      %v1399 = vadd.f32 0.0, %v1398
      %1400 = vmatmul.bf16.gmra.mxu0 %v1097
      %v1401 = vpop.f32.mrf.mxu0
      %v1402 = vadd.f32 0.0, %v1401
      %v1403 = vpop.f32.mrf.mxu0
      %v1404 = vadd.f32 0.0, %v1403
      %1405 = vmatmul.bf16.gmra.mxu0 %v1098
      %v1406 = vpop.f32.mrf.mxu0
      %v1407 = vadd.f32 0.0, %v1406
      %v1408 = vpop.f32.mrf.mxu0
      %v1409 = vadd.f32 0.0, %v1408
      %1410 = vmatmul.bf16.gmra.mxu0 %v1099
      %v1411 = vpop.f32.mrf.mxu0
      %v1412 = vadd.f32 0.0, %v1411
      %v1413 = vpop.f32.mrf.mxu0
      %v1414 = vadd.f32 0.0, %v1413
      %1415 = vmatmul.bf16.gmra.mxu0 %v1100
      %v1416 = vpop.f32.mrf.mxu0
      %v1417 = vadd.f32 0.0, %v1416
      %v1418 = vpop.f32.mrf.mxu0
      %v1419 = vadd.f32 0.0, %v1418
      %1420 = vmatmul.bf16.gmra.mxu0 %v1101
      %v1421 = vpop.f32.mrf.mxu0
      %v1422 = vadd.f32 0.0, %v1421
      %v1423 = vpop.f32.mrf.mxu0
      %v1424 = vadd.f32 0.0, %v1423
      %1425 = vmatmul.bf16.gmra.mxu0 %v1102
      %v1426 = vpop.f32.mrf.mxu0
      %v1427 = vadd.f32 0.0, %v1426
      %v1428 = vpop.f32.mrf.mxu0
      %v1429 = vadd.f32 0.0, %v1428
      %1430 = vmatmul.bf16.gmra.mxu0 %v1103
      %v1431 = vpop.f32.mrf.mxu0
      %v1432 = vadd.f32 0.0, %v1431
      %v1433 = vpop.f32.mrf.mxu0
      %v1434 = vadd.f32 0.0, %v1433
      %1435 = vmatmul.bf16.gmra.mxu0 %v1104
      %v1436 = vpop.f32.mrf.mxu0
      %v1437 = vadd.f32 0.0, %v1436
      %v1438 = vpop.f32.mrf.mxu0
      %v1439 = vadd.f32 0.0, %v1438
      %1440 = vmatmul.bf16.gmra.mxu0 %v1105
      %v1441 = vpop.f32.mrf.mxu0
      %v1442 = vadd.f32 0.0, %v1441
      %v1443 = vpop.f32.mrf.mxu0
      %v1444 = vadd.f32 0.0, %v1443
      %1445 = vmatmul.bf16.gmra.mxu0 %v1106
      %v1446 = vpop.f32.mrf.mxu0
      %v1447 = vadd.f32 0.0, %v1446
      %v1448 = vpop.f32.mrf.mxu0
      %v1449 = vadd.f32 0.0, %v1448
      %1450 = vdwg.mxu0
      %1451 = vmatpush.bf16.msra.mxu0 %v1228
      %1452 = vmatpush.bf16.msra.mxu0 %v1225
      %1453 = vmatpush.bf16.msra.mxu0 %v1222
      %1454 = vmatpush.bf16.msra.mxu0 %v1219
      %1455 = vmatpush.bf16.msra.mxu0 %v1216
      %1456 = vmatpush.bf16.msra.mxu0 %v1213
      %1457 = vmatpush.bf16.msra.mxu0 %v1210
      %1458 = vmatpush.bf16.msra.mxu0 %v1207
      %1459 = vmatmul.bf16.gmra.mxu0 %v1089
      %v1460 = vpop.f32.mrf.mxu0
      %v1461 = vadd.f32 0.0, %v1460
      %v1462 = vpop.f32.mrf.mxu0
      %v1463 = vadd.f32 0.0, %v1462
      %1464 = vmatmul.bf16.gmra.mxu0 %v1090
      %v1465 = vpop.f32.mrf.mxu0
      %v1466 = vadd.f32 0.0, %v1465
      %v1467 = vpop.f32.mrf.mxu0
      %v1468 = vadd.f32 0.0, %v1467
      %1469 = vmatmul.bf16.gmra.mxu0 %v1091
      %v1470 = vpop.f32.mrf.mxu0
      %v1471 = vadd.f32 0.0, %v1470
      %v1472 = vpop.f32.mrf.mxu0
      %v1473 = vadd.f32 0.0, %v1472
      %1474 = vmatmul.bf16.gmra.mxu0 %v1092
      %v1475 = vpop.f32.mrf.mxu0
      %v1476 = vadd.f32 0.0, %v1475
      %v1477 = vpop.f32.mrf.mxu0
      %v1478 = vadd.f32 0.0, %v1477
      %1479 = vmatmul.bf16.gmra.mxu0 %v1093
      %v1480 = vpop.f32.mrf.mxu0
      %v1481 = vadd.f32 0.0, %v1480
      %v1482 = vpop.f32.mrf.mxu0
      %v1483 = vadd.f32 0.0, %v1482
      %1484 = vmatmul.bf16.gmra.mxu0 %v1094
      %v1485 = vpop.f32.mrf.mxu0
      %v1486 = vadd.f32 0.0, %v1485
      %v1487 = vpop.f32.mrf.mxu0
      %v1488 = vadd.f32 0.0, %v1487
      %1489 = vmatmul.bf16.gmra.mxu0 %v1095
      %v1490 = vpop.f32.mrf.mxu0
      %v1491 = vadd.f32 0.0, %v1490
      %v1492 = vpop.f32.mrf.mxu0
      %v1493 = vadd.f32 0.0, %v1492
      %1494 = vmatmul.bf16.gmra.mxu0 %v1096
      %v1495 = vpop.f32.mrf.mxu0
      %v1496 = vadd.f32 0.0, %v1495
      %v1497 = vpop.f32.mrf.mxu0
      %v1498 = vadd.f32 0.0, %v1497
      %1499 = vmatmul.bf16.gmra.mxu0 %v1097
      %v1500 = vpop.f32.mrf.mxu0
      %v1501 = vadd.f32 0.0, %v1500
      %v1502 = vpop.f32.mrf.mxu0
      %v1503 = vadd.f32 0.0, %v1502
      %1504 = vmatmul.bf16.gmra.mxu0 %v1098
      %v1505 = vpop.f32.mrf.mxu0
      %v1506 = vadd.f32 0.0, %v1505
      %v1507 = vpop.f32.mrf.mxu0
      %v1508 = vadd.f32 0.0, %v1507
      %1509 = vmatmul.bf16.gmra.mxu0 %v1099
      %v1510 = vpop.f32.mrf.mxu0
      %v1511 = vadd.f32 0.0, %v1510
      %v1512 = vpop.f32.mrf.mxu0
      %v1513 = vadd.f32 0.0, %v1512
      %1514 = vmatmul.bf16.gmra.mxu0 %v1100
      %v1515 = vpop.f32.mrf.mxu0
      %v1516 = vadd.f32 0.0, %v1515
      %v1517 = vpop.f32.mrf.mxu0
      %v1518 = vadd.f32 0.0, %v1517
      %1519 = vmatmul.bf16.gmra.mxu0 %v1101
      %v1520 = vpop.f32.mrf.mxu0
      %v1521 = vadd.f32 0.0, %v1520
      %v1522 = vpop.f32.mrf.mxu0
      %v1523 = vadd.f32 0.0, %v1522
      %1524 = vmatmul.bf16.gmra.mxu0 %v1102
      %v1525 = vpop.f32.mrf.mxu0
      %v1526 = vadd.f32 0.0, %v1525
      %v1527 = vpop.f32.mrf.mxu0
      %v1528 = vadd.f32 0.0, %v1527
      %1529 = vmatmul.bf16.gmra.mxu0 %v1103
      %v1530 = vpop.f32.mrf.mxu0
      %v1531 = vadd.f32 0.0, %v1530
      %v1532 = vpop.f32.mrf.mxu0
      %v1533 = vadd.f32 0.0, %v1532
      %1534 = vmatmul.bf16.gmra.mxu0 %v1104
      %v1535 = vpop.f32.mrf.mxu0
      %v1536 = vadd.f32 0.0, %v1535
      %v1537 = vpop.f32.mrf.mxu0
      %v1538 = vadd.f32 0.0, %v1537
      %1539 = vmatmul.bf16.gmra.mxu0 %v1105
      %v1540 = vpop.f32.mrf.mxu0
      %v1541 = vadd.f32 0.0, %v1540
      %v1542 = vpop.f32.mrf.mxu0
      %v1543 = vadd.f32 0.0, %v1542
      %1544 = vmatmul.bf16.gmra.mxu0 %v1106
      %v1545 = vpop.f32.mrf.mxu0
      %v1546 = vadd.f32 0.0, %v1545
      %v1547 = vpop.f32.mrf.mxu0
      %v1548 = vadd.f32 0.0, %v1547
      %1549 = vdwg.mxu0
      %v1550 = vadd.f32 %v661, %v1263
      %v1551 = vadd.f32 %v663, %v1265
      %v1552 = vadd.f32 %v666, %v1268
      %v1553 = vadd.f32 %v668, %v1270
      %v1554 = vadd.f32 %v671, %v1273
      %v1555 = vadd.f32 %v673, %v1275
      %v1556 = vadd.f32 %v676, %v1278
      %v1557 = vadd.f32 %v678, %v1280
      %v1558 = vadd.f32 %v681, %v1283
      %v1559 = vadd.f32 %v683, %v1285
      %v1560 = vadd.f32 %v686, %v1288
      %v1561 = vadd.f32 %v688, %v1290
      %v1562 = vadd.f32 %v691, %v1293
      %v1563 = vadd.f32 %v693, %v1295
      %v1564 = vadd.f32 %v696, %v1298
      %v1565 = vadd.f32 %v698, %v1300
      %v1566 = vadd.f32 %v701, %v1303
      %v1567 = vadd.f32 %v703, %v1305
      %v1568 = vadd.f32 %v706, %v1308
      %v1569 = vadd.f32 %v708, %v1310
      %v1570 = vadd.f32 %v711, %v1313
      %v1571 = vadd.f32 %v713, %v1315
      %v1572 = vadd.f32 %v716, %v1318
      %v1573 = vadd.f32 %v718, %v1320
      %v1574 = vadd.f32 %v721, %v1323
      %v1575 = vadd.f32 %v723, %v1325
      %v1576 = vadd.f32 %v726, %v1328
      %v1577 = vadd.f32 %v728, %v1330
      %v1578 = vadd.f32 %v731, %v1333
      %v1579 = vadd.f32 %v733, %v1335
      %v1580 = vadd.f32 %v736, %v1338
      %v1581 = vadd.f32 %v738, %v1340
      %v1582 = vadd.f32 %v741, %v1343
      %v1583 = vadd.f32 %v743, %v1345
      %v1584 = vadd.f32 %v746, %v1348
      %v1585 = vadd.f32 %v748, %v1350
      %v1586 = vadd.f32 %v760, %v1362
      %v1587 = vadd.f32 %v762, %v1364
      %v1588 = vadd.f32 %v765, %v1367
      %v1589 = vadd.f32 %v767, %v1369
      %v1590 = vadd.f32 %v770, %v1372
      %v1591 = vadd.f32 %v772, %v1374
      %v1592 = vadd.f32 %v775, %v1377
      %v1593 = vadd.f32 %v777, %v1379
      %v1594 = vadd.f32 %v780, %v1382
      %v1595 = vadd.f32 %v782, %v1384
      %v1596 = vadd.f32 %v785, %v1387
      %v1597 = vadd.f32 %v787, %v1389
      %v1598 = vadd.f32 %v790, %v1392
      %v1599 = vadd.f32 %v792, %v1394
      %v1600 = vadd.f32 %v795, %v1397
      %v1601 = vadd.f32 %v797, %v1399
      %v1602 = vadd.f32 %v800, %v1402
      %v1603 = vadd.f32 %v802, %v1404
      %v1604 = vadd.f32 %v805, %v1407
      %v1605 = vadd.f32 %v807, %v1409
      %v1606 = vadd.f32 %v810, %v1412
      %v1607 = vadd.f32 %v812, %v1414
      %v1608 = vadd.f32 %v815, %v1417
      %v1609 = vadd.f32 %v817, %v1419
      %v1610 = vadd.f32 %v820, %v1422
      %v1611 = vadd.f32 %v822, %v1424
      %v1612 = vadd.f32 %v825, %v1427
      %v1613 = vadd.f32 %v827, %v1429
      %v1614 = vadd.f32 %v830, %v1432
      %v1615 = vadd.f32 %v832, %v1434
      %v1616 = vadd.f32 %v835, %v1437
      %v1617 = vadd.f32 %v837, %v1439
      %v1618 = vadd.f32 %v840, %v1442
      %v1619 = vadd.f32 %v842, %v1444
      %v1620 = vadd.f32 %v845, %v1447
      %v1621 = vadd.f32 %v847, %v1449
      %v1622 = vadd.f32 %v859, %v1461
      %v1623 = vadd.f32 %v861, %v1463
      %v1624 = vadd.f32 %v864, %v1466
      %v1625 = vadd.f32 %v866, %v1468
      %v1626 = vadd.f32 %v869, %v1471
      %v1627 = vadd.f32 %v871, %v1473
      %v1628 = vadd.f32 %v874, %v1476
      %v1629 = vadd.f32 %v876, %v1478
      %v1630 = vadd.f32 %v879, %v1481
      %v1631 = vadd.f32 %v881, %v1483
      %v1632 = vadd.f32 %v884, %v1486
      %v1633 = vadd.f32 %v886, %v1488
      %v1634 = vadd.f32 %v889, %v1491
      %v1635 = vadd.f32 %v891, %v1493
      %v1636 = vadd.f32 %v894, %v1496
      %v1637 = vadd.f32 %v896, %v1498
      %v1638 = vadd.f32 %v899, %v1501
      %v1639 = vadd.f32 %v901, %v1503
      %v1640 = vadd.f32 %v904, %v1506
      %v1641 = vadd.f32 %v906, %v1508
      %v1642 = vadd.f32 %v909, %v1511
      %v1643 = vadd.f32 %v911, %v1513
      %v1644 = vadd.f32 %v914, %v1516
      %v1645 = vadd.f32 %v916, %v1518
      %v1646 = vadd.f32 %v919, %v1521
      %v1647 = vadd.f32 %v921, %v1523
      %v1648 = vadd.f32 %v924, %v1526
      %v1649 = vadd.f32 %v926, %v1528
      %v1650 = vadd.f32 %v929, %v1531
      %v1651 = vadd.f32 %v931, %v1533
      %v1652 = vadd.f32 %v934, %v1536
      %v1653 = vadd.f32 %v936, %v1538
      %v1654 = vadd.f32 %v939, %v1541
      %v1655 = vadd.f32 %v941, %v1543
      %v1656 = vadd.f32 %v944, %v1546
      %v1657 = vadd.f32 %v946, %v1548
      %v1658 = vld [vmem:[%s300 + $0x10] sm:$0xf]
      %v1659 = vld [vmem:[%s300 + $0x14] sm:$0xf]
      %v1660 = vld [vmem:[%s300 + $0x18] sm:$0xf]
      %v1661 = vld [vmem:[%s300 + $0x1c] sm:$0xf]
      %v1662 = vld [vmem:[%s300 + $0x20] sm:$0xf]
      %v1663 = vld [vmem:[%s300 + $0x24] sm:$0xf]
      %v1664 = vld [vmem:[%s300 + $0x28] sm:$0xf]
      %v1665 = vld [vmem:[%s300 + $0x2c] sm:$0xf]
      %v1666 = vld [vmem:[%s300 + $0x30] sm:$0xf]
      %v1667 = vld [vmem:[%s300 + $0x34] sm:$0xf]
      %v1668 = vld [vmem:[%s300 + $0x38] sm:$0xf]
      %v1669 = vld [vmem:[%s300 + $0x3c] sm:$0xf]
      %v1670 = vld [vmem:[%s300 + $0x40] sm:$0xf]
      %v1671 = vld [vmem:[%s300 + $0x44] sm:$0xf]
      %v1672 = vld [vmem:[%s300 + $0x48] sm:$0xf]
      %v1673 = vld [vmem:[%s300 + $0x4c] sm:$0xf]
      %v1674 = vld [vmem:[%s300 + $0x50] sm:$0xf]
      %v1675 = vld [vmem:[%s300 + $0x54] sm:$0xf]
      %v1676 = vld [vmem:[%s300 + $0x58] sm:$0xf]
      %v1677 = vld [vmem:[%s300 + $0x5c] sm:$0xf]
      %v1678 = vld [vmem:[%s300 + $0x60] sm:$0xf]
      %v1679 = vld [vmem:[%s300 + $0x64] sm:$0xf]
      %v1680 = vld [vmem:[%s300 + $0x68] sm:$0xf]
      %v1681 = vld [vmem:[%s300 + $0x6c] sm:$0xf]
      %v1682 = vld [vmem:[%s300 + $0x70] sm:$0xf]
      %v1683 = vld [vmem:[%s300 + $0x74] sm:$0xf]
      %v1684 = vld [vmem:[%s300 + $0x78] sm:$0xf]
      %v1685 = vld [vmem:[%s300 + $0x7c] sm:$0xf]
      %v1686 = vld [vmem:[%s300 + $0x80] sm:$0xf]
      %v1687 = vld [vmem:[%s300 + $0x84] sm:$0xf]
      %v1688 = vld [vmem:[%s300 + $0x88] sm:$0xf]
      %v1689 = vld [vmem:[%s300 + $0x8c] sm:$0xf]
      %v1690 = vld [vmem:[%s300 + $0x90] sm:$0xf]
      %v1691 = vld [vmem:[%s300 + $0x94] sm:$0xf]
      %v1692 = vld [vmem:[%s300 + $0x98] sm:$0xf]
      %v1693 = vld [vmem:[%s300 + $0x9c] sm:$0xf]
      %s1694 = scalar_lea.vmem %s2, 384
      %v1695 = vld [vmem:[%s1694] sm:$0xff]
      %v1696 = vld [vmem:[%s1694 + $0x8] sm:$0xf]
      %v1697 = vld [vmem:[%s1694 + $0xc] sm:$0xff]
      %v1698 = vld [vmem:[%s1694 + $0x14] sm:$0xf]
      %v1699 = vld [vmem:[%s1694 + $0x18] sm:$0xff]
      %v1700 = vld [vmem:[%s1694 + $0x20] sm:$0xf]
      %v1701 = vld [vmem:[%s1694 + $0x24] sm:$0xff]
      %v1702 = vld [vmem:[%s1694 + $0x2c] sm:$0xf]
      %v1703 = vld [vmem:[%s1694 + $0x30] sm:$0xff]
      %v1704 = vld [vmem:[%s1694 + $0x38] sm:$0xf]
      %v1705 = vld [vmem:[%s1694 + $0x3c] sm:$0xff]
      %v1706 = vld [vmem:[%s1694 + $0x44] sm:$0xf]
      %v1707 = vld [vmem:[%s1694 + $0x48] sm:$0xff]
      %v1708 = vld [vmem:[%s1694 + $0x50] sm:$0xf]
      %v1709 = vld [vmem:[%s1694 + $0x54] sm:$0xff]
      %v1710 = vld [vmem:[%s1694 + $0x5c] sm:$0xf]
      %v1711 = vld [vmem:[%s1694 + $0x60] sm:$0xff]
      %v1712 = vld [vmem:[%s1694 + $0x68] sm:$0xf]
      %v1713 = vld [vmem:[%s1694 + $0x6c] sm:$0xff]
      %v1714 = vld [vmem:[%s1694 + $0x74] sm:$0xf]
      %v1715 = vld [vmem:[%s1694 + $0x78] sm:$0xff]
      %v1716 = vld [vmem:[%s1694 + $0x80] sm:$0xf]
      %v1717 = vld [vmem:[%s1694 + $0x84] sm:$0xff]
      %v1718 = vld [vmem:[%s1694 + $0x8c] sm:$0xf]
      %v1719 = vld [vmem:[%s1694 + $0x90] sm:$0xff]
      %v1720 = vld [vmem:[%s1694 + $0x98] sm:$0xf]
      %v1721 = vld [vmem:[%s1694 + $0x9c] sm:$0xff]
      %v1722 = vld [vmem:[%s1694 + $0xa4] sm:$0xf]
      %v1723 = vld [vmem:[%s1694 + $0xa8] sm:$0xff]
      %v1724 = vld [vmem:[%s1694 + $0xb0] sm:$0xf]
      %v1725 = vld [vmem:[%s1694 + $0xb4] sm:$0xff]
      %v1726 = vld [vmem:[%s1694 + $0xbc] sm:$0xf]
      %v1763 = vunpack.c.l.b16 %v1658
      %v1764 = vunpack.c.l.b16 %v1659
      %v1765 = vunpack.c.l.b16 %v1660
      %v1766 = vunpack.c.l.b16 %v1661
      %v1767 = vunpack.c.l.b16 %v1662
      %v1768 = vunpack.c.l.b16 %v1663
      %v1769 = vunpack.c.l.b16 %v1664
      %v1770 = vunpack.c.l.b16 %v1665
      %v1771 = vunpack.c.l.b16 %v1666
      %v1772 = vunpack.c.l.b16 %v1667
      %v1773 = vunpack.c.l.b16 %v1668
      %v1774 = vunpack.c.l.b16 %v1669
      %v1775 = vunpack.c.l.b16 %v1670
      %v1776 = vunpack.c.l.b16 %v1671
      %v1777 = vunpack.c.l.b16 %v1672
      %v1778 = vunpack.c.l.b16 %v1673
      %v1779 = vunpack.c.l.b16 %v1674
      %v1780 = vunpack.c.l.b16 %v1675
      %v1781 = vunpack.c.l.b16 %v1676
      %v1782 = vunpack.c.l.b16 %v1677
      %v1783 = vunpack.c.l.b16 %v1678
      %v1784 = vunpack.c.l.b16 %v1679
      %v1785 = vunpack.c.l.b16 %v1680
      %v1786 = vunpack.c.l.b16 %v1681
      %v1787 = vunpack.c.l.b16 %v1682
      %v1788 = vunpack.c.l.b16 %v1683
      %v1789 = vunpack.c.l.b16 %v1684
      %v1790 = vunpack.c.l.b16 %v1685
      %v1791 = vunpack.c.l.b16 %v1686
      %v1792 = vunpack.c.l.b16 %v1687
      %v1793 = vunpack.c.l.b16 %v1688
      %v1794 = vunpack.c.l.b16 %v1689
      %v1795 = vunpack.c.l.b16 %v1690
      %v1796 = vunpack.c.l.b16 %v1691
      %v1797 = vunpack.c.l.b16 %v1692
      %v1798 = vunpack.c.l.b16 %v1693
      %v1799 = vpack.c.b16 %v1764, %v1763
      %v1800 = vpack.c.b16 %v1766, %v1765
      %v1801 = vpack.c.b16 %v1768, %v1767
      %v1802 = vpack.c.b16 %v1770, %v1769
      %v1803 = vpack.c.b16 %v1772, %v1771
      %v1804 = vpack.c.b16 %v1774, %v1773
      %v1805 = vpack.c.b16 %v1776, %v1775
      %v1806 = vpack.c.b16 %v1778, %v1777
      %v1807 = vpack.c.b16 %v1780, %v1779
      %v1808 = vpack.c.b16 %v1782, %v1781
      %v1809 = vpack.c.b16 %v1784, %v1783
      %v1810 = vpack.c.b16 %v1786, %v1785
      %v1811 = vpack.c.b16 %v1788, %v1787
      %v1812 = vpack.c.b16 %v1790, %v1789
      %v1813 = vpack.c.b16 %v1792, %v1791
      %v1814 = vpack.c.b16 %v1794, %v1793
      %v1815 = vpack.c.b16 %v1796, %v1795
      %v1816 = vpack.c.b16 %v1798, %v1797
      %v1867 = vunpack.c.l.b16 %v1695
      %v1868 = vunpack.c.h.b16 %v1695
      %v1869 = vunpack.c.l.b16 %v1696
      %v1870 = vunpack.c.l.b16 %v1697
      %v1871 = vunpack.c.h.b16 %v1697
      %v1872 = vunpack.c.l.b16 %v1698
      %v1873 = vunpack.c.l.b16 %v1699
      %v1874 = vunpack.c.h.b16 %v1699
      %v1875 = vunpack.c.l.b16 %v1700
      %v1876 = vunpack.c.l.b16 %v1701
      %v1877 = vunpack.c.h.b16 %v1701
      %v1878 = vunpack.c.l.b16 %v1702
      %v1879 = vunpack.c.l.b16 %v1703
      %v1880 = vunpack.c.h.b16 %v1703
      %v1881 = vunpack.c.l.b16 %v1704
      %v1882 = vunpack.c.l.b16 %v1705
      %v1883 = vunpack.c.h.b16 %v1705
      %v1884 = vunpack.c.l.b16 %v1706
      %v1885 = vunpack.c.l.b16 %v1707
      %v1886 = vunpack.c.h.b16 %v1707
      %v1887 = vunpack.c.l.b16 %v1708
      %v1888 = vunpack.c.l.b16 %v1709
      %v1889 = vunpack.c.h.b16 %v1709
      %v1890 = vunpack.c.l.b16 %v1710
      %v1891 = vunpack.c.l.b16 %v1711
      %v1892 = vunpack.c.h.b16 %v1711
      %v1893 = vunpack.c.l.b16 %v1712
      %v1894 = vunpack.c.l.b16 %v1713
      %v1895 = vunpack.c.h.b16 %v1713
      %v1896 = vunpack.c.l.b16 %v1714
      %v1897 = vunpack.c.l.b16 %v1715
      %v1898 = vunpack.c.h.b16 %v1715
      %v1899 = vunpack.c.l.b16 %v1716
      %v1900 = vunpack.c.l.b16 %v1717
      %v1901 = vunpack.c.h.b16 %v1717
      %v1902 = vunpack.c.l.b16 %v1718
      %v1903 = vunpack.c.l.b16 %v1719
      %v1904 = vunpack.c.h.b16 %v1719
      %v1905 = vunpack.c.l.b16 %v1720
      %v1906 = vunpack.c.l.b16 %v1721
      %v1907 = vunpack.c.h.b16 %v1721
      %v1908 = vunpack.c.l.b16 %v1722
      %v1909 = vunpack.c.l.b16 %v1723
      %v1910 = vunpack.c.h.b16 %v1723
      %v1911 = vunpack.c.l.b16 %v1724
      %v1912 = vunpack.c.l.b16 %v1725
      %v1913 = vunpack.c.h.b16 %v1725
      %v1914 = vunpack.c.l.b16 %v1726
      %v1915 = vpack.c.b16 %v1870, %v1867
      %v1916 = vpack.c.b16 %v1871, %v1868
      %v1917 = vpack.c.b16 %v1872, %v1869
      %v1918 = vpack.c.b16 %v1876, %v1873
      %v1919 = vpack.c.b16 %v1877, %v1874
      %v1920 = vpack.c.b16 %v1878, %v1875
      %v1921 = vpack.c.b16 %v1882, %v1879
      %v1922 = vpack.c.b16 %v1883, %v1880
      %v1923 = vpack.c.b16 %v1884, %v1881
      %v1924 = vpack.c.b16 %v1888, %v1885
      %v1925 = vpack.c.b16 %v1889, %v1886
      %v1926 = vpack.c.b16 %v1890, %v1887
      %v1927 = vpack.c.b16 %v1894, %v1891
      %v1928 = vpack.c.b16 %v1895, %v1892
      %v1929 = vpack.c.b16 %v1896, %v1893
      %v1930 = vpack.c.b16 %v1900, %v1897
      %v1931 = vpack.c.b16 %v1901, %v1898
      %v1932 = vpack.c.b16 %v1902, %v1899
      %v1933 = vpack.c.b16 %v1906, %v1903
      %v1934 = vpack.c.b16 %v1907, %v1904
      %v1935 = vpack.c.b16 %v1908, %v1905
      %v1936 = vpack.c.b16 %v1912, %v1909
      %v1937 = vpack.c.b16 %v1913, %v1910
      %v1938 = vpack.c.b16 %v1914, %v1911
      %1963 = vmatpush.bf16.msra.mxu0 %v1936
      %1964 = vmatpush.bf16.msra.mxu0 %v1933
      %1965 = vmatpush.bf16.msra.mxu0 %v1930
      %1966 = vmatpush.bf16.msra.mxu0 %v1927
      %1967 = vmatpush.bf16.msra.mxu0 %v1924
      %1968 = vmatpush.bf16.msra.mxu0 %v1921
      %1969 = vmatpush.bf16.msra.mxu0 %v1918
      %1970 = vmatpush.bf16.msra.mxu0 %v1915
      %1971 = vmatmul.bf16.gmra.mxu0 %v1799
      %v1972 = vpop.f32.mrf.mxu0
      %v1973 = vadd.f32 0.0, %v1972
      %v1974 = vpop.f32.mrf.mxu0
      %v1975 = vadd.f32 0.0, %v1974
      %1976 = vmatmul.bf16.gmra.mxu0 %v1800
      %v1977 = vpop.f32.mrf.mxu0
      %v1978 = vadd.f32 0.0, %v1977
      %v1979 = vpop.f32.mrf.mxu0
      %v1980 = vadd.f32 0.0, %v1979
      %1981 = vmatmul.bf16.gmra.mxu0 %v1801
      %v1982 = vpop.f32.mrf.mxu0
      %v1983 = vadd.f32 0.0, %v1982
      %v1984 = vpop.f32.mrf.mxu0
      %v1985 = vadd.f32 0.0, %v1984
      %1986 = vmatmul.bf16.gmra.mxu0 %v1802
      %v1987 = vpop.f32.mrf.mxu0
      %v1988 = vadd.f32 0.0, %v1987
      %v1989 = vpop.f32.mrf.mxu0
      %v1990 = vadd.f32 0.0, %v1989
      %1991 = vmatmul.bf16.gmra.mxu0 %v1803
      %v1992 = vpop.f32.mrf.mxu0
      %v1993 = vadd.f32 0.0, %v1992
      %v1994 = vpop.f32.mrf.mxu0
      %v1995 = vadd.f32 0.0, %v1994
      %1996 = vmatmul.bf16.gmra.mxu0 %v1804
      %v1997 = vpop.f32.mrf.mxu0
      %v1998 = vadd.f32 0.0, %v1997
      %v1999 = vpop.f32.mrf.mxu0
      %v2000 = vadd.f32 0.0, %v1999
      %2001 = vmatmul.bf16.gmra.mxu0 %v1805
      %v2002 = vpop.f32.mrf.mxu0
      %v2003 = vadd.f32 0.0, %v2002
      %v2004 = vpop.f32.mrf.mxu0
      %v2005 = vadd.f32 0.0, %v2004
      %2006 = vmatmul.bf16.gmra.mxu0 %v1806
      %v2007 = vpop.f32.mrf.mxu0
      %v2008 = vadd.f32 0.0, %v2007
      %v2009 = vpop.f32.mrf.mxu0
      %v2010 = vadd.f32 0.0, %v2009
      %2011 = vmatmul.bf16.gmra.mxu0 %v1807
      %v2012 = vpop.f32.mrf.mxu0
      %v2013 = vadd.f32 0.0, %v2012
      %v2014 = vpop.f32.mrf.mxu0
      %v2015 = vadd.f32 0.0, %v2014
      %2016 = vmatmul.bf16.gmra.mxu0 %v1808
      %v2017 = vpop.f32.mrf.mxu0
      %v2018 = vadd.f32 0.0, %v2017
      %v2019 = vpop.f32.mrf.mxu0
      %v2020 = vadd.f32 0.0, %v2019
      %2021 = vmatmul.bf16.gmra.mxu0 %v1809
      %v2022 = vpop.f32.mrf.mxu0
      %v2023 = vadd.f32 0.0, %v2022
      %v2024 = vpop.f32.mrf.mxu0
      %v2025 = vadd.f32 0.0, %v2024
      %2026 = vmatmul.bf16.gmra.mxu0 %v1810
      %v2027 = vpop.f32.mrf.mxu0
      %v2028 = vadd.f32 0.0, %v2027
      %v2029 = vpop.f32.mrf.mxu0
      %v2030 = vadd.f32 0.0, %v2029
      %2031 = vmatmul.bf16.gmra.mxu0 %v1811
      %v2032 = vpop.f32.mrf.mxu0
      %v2033 = vadd.f32 0.0, %v2032
      %v2034 = vpop.f32.mrf.mxu0
      %v2035 = vadd.f32 0.0, %v2034
      %2036 = vmatmul.bf16.gmra.mxu0 %v1812
      %v2037 = vpop.f32.mrf.mxu0
      %v2038 = vadd.f32 0.0, %v2037
      %v2039 = vpop.f32.mrf.mxu0
      %v2040 = vadd.f32 0.0, %v2039
      %2041 = vmatmul.bf16.gmra.mxu0 %v1813
      %v2042 = vpop.f32.mrf.mxu0
      %v2043 = vadd.f32 0.0, %v2042
      %v2044 = vpop.f32.mrf.mxu0
      %v2045 = vadd.f32 0.0, %v2044
      %2046 = vmatmul.bf16.gmra.mxu0 %v1814
      %v2047 = vpop.f32.mrf.mxu0
      %v2048 = vadd.f32 0.0, %v2047
      %v2049 = vpop.f32.mrf.mxu0
      %v2050 = vadd.f32 0.0, %v2049
      %2051 = vmatmul.bf16.gmra.mxu0 %v1815
      %v2052 = vpop.f32.mrf.mxu0
      %v2053 = vadd.f32 0.0, %v2052
      %v2054 = vpop.f32.mrf.mxu0
      %v2055 = vadd.f32 0.0, %v2054
      %2056 = vmatmul.bf16.gmra.mxu0 %v1816
      %v2057 = vpop.f32.mrf.mxu0
      %v2058 = vadd.f32 0.0, %v2057
      %v2059 = vpop.f32.mrf.mxu0
      %v2060 = vadd.f32 0.0, %v2059
      %2061 = vdwg.mxu0
      %2062 = vmatpush.bf16.msra.mxu0 %v1937
      %2063 = vmatpush.bf16.msra.mxu0 %v1934
      %2064 = vmatpush.bf16.msra.mxu0 %v1931
      %2065 = vmatpush.bf16.msra.mxu0 %v1928
      %2066 = vmatpush.bf16.msra.mxu0 %v1925
      %2067 = vmatpush.bf16.msra.mxu0 %v1922
      %2068 = vmatpush.bf16.msra.mxu0 %v1919
      %2069 = vmatpush.bf16.msra.mxu0 %v1916
      %2070 = vmatmul.bf16.gmra.mxu0 %v1799
      %v2071 = vpop.f32.mrf.mxu0
      %v2072 = vadd.f32 0.0, %v2071
      %v2073 = vpop.f32.mrf.mxu0
      %v2074 = vadd.f32 0.0, %v2073
      %2075 = vmatmul.bf16.gmra.mxu0 %v1800
      %v2076 = vpop.f32.mrf.mxu0
      %v2077 = vadd.f32 0.0, %v2076
      %v2078 = vpop.f32.mrf.mxu0
      %v2079 = vadd.f32 0.0, %v2078
      %2080 = vmatmul.bf16.gmra.mxu0 %v1801
      %v2081 = vpop.f32.mrf.mxu0
      %v2082 = vadd.f32 0.0, %v2081
      %v2083 = vpop.f32.mrf.mxu0
      %v2084 = vadd.f32 0.0, %v2083
      %2085 = vmatmul.bf16.gmra.mxu0 %v1802
      %v2086 = vpop.f32.mrf.mxu0
      %v2087 = vadd.f32 0.0, %v2086
      %v2088 = vpop.f32.mrf.mxu0
      %v2089 = vadd.f32 0.0, %v2088
      %2090 = vmatmul.bf16.gmra.mxu0 %v1803
      %v2091 = vpop.f32.mrf.mxu0
      %v2092 = vadd.f32 0.0, %v2091
      %v2093 = vpop.f32.mrf.mxu0
      %v2094 = vadd.f32 0.0, %v2093
      %2095 = vmatmul.bf16.gmra.mxu0 %v1804
      %v2096 = vpop.f32.mrf.mxu0
      %v2097 = vadd.f32 0.0, %v2096
      %v2098 = vpop.f32.mrf.mxu0
      %v2099 = vadd.f32 0.0, %v2098
      %2100 = vmatmul.bf16.gmra.mxu0 %v1805
      %v2101 = vpop.f32.mrf.mxu0
      %v2102 = vadd.f32 0.0, %v2101
      %v2103 = vpop.f32.mrf.mxu0
      %v2104 = vadd.f32 0.0, %v2103
      %2105 = vmatmul.bf16.gmra.mxu0 %v1806
      %v2106 = vpop.f32.mrf.mxu0
      %v2107 = vadd.f32 0.0, %v2106
      %v2108 = vpop.f32.mrf.mxu0
      %v2109 = vadd.f32 0.0, %v2108
      %2110 = vmatmul.bf16.gmra.mxu0 %v1807
      %v2111 = vpop.f32.mrf.mxu0
      %v2112 = vadd.f32 0.0, %v2111
      %v2113 = vpop.f32.mrf.mxu0
      %v2114 = vadd.f32 0.0, %v2113
      %2115 = vmatmul.bf16.gmra.mxu0 %v1808
      %v2116 = vpop.f32.mrf.mxu0
      %v2117 = vadd.f32 0.0, %v2116
      %v2118 = vpop.f32.mrf.mxu0
      %v2119 = vadd.f32 0.0, %v2118
      %2120 = vmatmul.bf16.gmra.mxu0 %v1809
      %v2121 = vpop.f32.mrf.mxu0
      %v2122 = vadd.f32 0.0, %v2121
      %v2123 = vpop.f32.mrf.mxu0
      %v2124 = vadd.f32 0.0, %v2123
      %2125 = vmatmul.bf16.gmra.mxu0 %v1810
      %v2126 = vpop.f32.mrf.mxu0
      %v2127 = vadd.f32 0.0, %v2126
      %v2128 = vpop.f32.mrf.mxu0
      %v2129 = vadd.f32 0.0, %v2128
      %2130 = vmatmul.bf16.gmra.mxu0 %v1811
      %v2131 = vpop.f32.mrf.mxu0
      %v2132 = vadd.f32 0.0, %v2131
      %v2133 = vpop.f32.mrf.mxu0
      %v2134 = vadd.f32 0.0, %v2133
      %2135 = vmatmul.bf16.gmra.mxu0 %v1812
      %v2136 = vpop.f32.mrf.mxu0
      %v2137 = vadd.f32 0.0, %v2136
      %v2138 = vpop.f32.mrf.mxu0
      %v2139 = vadd.f32 0.0, %v2138
      %2140 = vmatmul.bf16.gmra.mxu0 %v1813
      %v2141 = vpop.f32.mrf.mxu0
      %v2142 = vadd.f32 0.0, %v2141
      %v2143 = vpop.f32.mrf.mxu0
      %v2144 = vadd.f32 0.0, %v2143
      %2145 = vmatmul.bf16.gmra.mxu0 %v1814
      %v2146 = vpop.f32.mrf.mxu0
      %v2147 = vadd.f32 0.0, %v2146
      %v2148 = vpop.f32.mrf.mxu0
      %v2149 = vadd.f32 0.0, %v2148
      %2150 = vmatmul.bf16.gmra.mxu0 %v1815
      %v2151 = vpop.f32.mrf.mxu0
      %v2152 = vadd.f32 0.0, %v2151
      %v2153 = vpop.f32.mrf.mxu0
      %v2154 = vadd.f32 0.0, %v2153
      %2155 = vmatmul.bf16.gmra.mxu0 %v1816
      %v2156 = vpop.f32.mrf.mxu0
      %v2157 = vadd.f32 0.0, %v2156
      %v2158 = vpop.f32.mrf.mxu0
      %v2159 = vadd.f32 0.0, %v2158
      %2160 = vdwg.mxu0
      %2161 = vmatpush.bf16.msra.mxu0 %v1938
      %2162 = vmatpush.bf16.msra.mxu0 %v1935
      %2163 = vmatpush.bf16.msra.mxu0 %v1932
      %2164 = vmatpush.bf16.msra.mxu0 %v1929
      %2165 = vmatpush.bf16.msra.mxu0 %v1926
      %2166 = vmatpush.bf16.msra.mxu0 %v1923
      %2167 = vmatpush.bf16.msra.mxu0 %v1920
      %2168 = vmatpush.bf16.msra.mxu0 %v1917
      %2169 = vmatmul.bf16.gmra.mxu0 %v1799
      %v2170 = vpop.f32.mrf.mxu0
      %v2171 = vadd.f32 0.0, %v2170
      %v2172 = vpop.f32.mrf.mxu0
      %v2173 = vadd.f32 0.0, %v2172
      %2174 = vmatmul.bf16.gmra.mxu0 %v1800
      %v2175 = vpop.f32.mrf.mxu0
      %v2176 = vadd.f32 0.0, %v2175
      %v2177 = vpop.f32.mrf.mxu0
      %v2178 = vadd.f32 0.0, %v2177
      %2179 = vmatmul.bf16.gmra.mxu0 %v1801
      %v2180 = vpop.f32.mrf.mxu0
      %v2181 = vadd.f32 0.0, %v2180
      %v2182 = vpop.f32.mrf.mxu0
      %v2183 = vadd.f32 0.0, %v2182
      %2184 = vmatmul.bf16.gmra.mxu0 %v1802
      %v2185 = vpop.f32.mrf.mxu0
      %v2186 = vadd.f32 0.0, %v2185
      %v2187 = vpop.f32.mrf.mxu0
      %v2188 = vadd.f32 0.0, %v2187
      %2189 = vmatmul.bf16.gmra.mxu0 %v1803
      %v2190 = vpop.f32.mrf.mxu0
      %v2191 = vadd.f32 0.0, %v2190
      %v2192 = vpop.f32.mrf.mxu0
      %v2193 = vadd.f32 0.0, %v2192
      %2194 = vmatmul.bf16.gmra.mxu0 %v1804
      %v2195 = vpop.f32.mrf.mxu0
      %v2196 = vadd.f32 0.0, %v2195
      %v2197 = vpop.f32.mrf.mxu0
      %v2198 = vadd.f32 0.0, %v2197
      %2199 = vmatmul.bf16.gmra.mxu0 %v1805
      %v2200 = vpop.f32.mrf.mxu0
      %v2201 = vadd.f32 0.0, %v2200
      %v2202 = vpop.f32.mrf.mxu0
      %v2203 = vadd.f32 0.0, %v2202
      %2204 = vmatmul.bf16.gmra.mxu0 %v1806
      %v2205 = vpop.f32.mrf.mxu0
      %v2206 = vadd.f32 0.0, %v2205
      %v2207 = vpop.f32.mrf.mxu0
      %v2208 = vadd.f32 0.0, %v2207
      %2209 = vmatmul.bf16.gmra.mxu0 %v1807
      %v2210 = vpop.f32.mrf.mxu0
      %v2211 = vadd.f32 0.0, %v2210
      %v2212 = vpop.f32.mrf.mxu0
      %v2213 = vadd.f32 0.0, %v2212
      %2214 = vmatmul.bf16.gmra.mxu0 %v1808
      %v2215 = vpop.f32.mrf.mxu0
      %v2216 = vadd.f32 0.0, %v2215
      %v2217 = vpop.f32.mrf.mxu0
      %v2218 = vadd.f32 0.0, %v2217
      %2219 = vmatmul.bf16.gmra.mxu0 %v1809
      %v2220 = vpop.f32.mrf.mxu0
      %v2221 = vadd.f32 0.0, %v2220
      %v2222 = vpop.f32.mrf.mxu0
      %v2223 = vadd.f32 0.0, %v2222
      %2224 = vmatmul.bf16.gmra.mxu0 %v1810
      %v2225 = vpop.f32.mrf.mxu0
      %v2226 = vadd.f32 0.0, %v2225
      %v2227 = vpop.f32.mrf.mxu0
      %v2228 = vadd.f32 0.0, %v2227
      %2229 = vmatmul.bf16.gmra.mxu0 %v1811
      %v2230 = vpop.f32.mrf.mxu0
      %v2231 = vadd.f32 0.0, %v2230
      %v2232 = vpop.f32.mrf.mxu0
      %v2233 = vadd.f32 0.0, %v2232
      %2234 = vmatmul.bf16.gmra.mxu0 %v1812
      %v2235 = vpop.f32.mrf.mxu0
      %v2236 = vadd.f32 0.0, %v2235
      %v2237 = vpop.f32.mrf.mxu0
      %v2238 = vadd.f32 0.0, %v2237
      %2239 = vmatmul.bf16.gmra.mxu0 %v1813
      %v2240 = vpop.f32.mrf.mxu0
      %v2241 = vadd.f32 0.0, %v2240
      %v2242 = vpop.f32.mrf.mxu0
      %v2243 = vadd.f32 0.0, %v2242
      %2244 = vmatmul.bf16.gmra.mxu0 %v1814
      %v2245 = vpop.f32.mrf.mxu0
      %v2246 = vadd.f32 0.0, %v2245
      %v2247 = vpop.f32.mrf.mxu0
      %v2248 = vadd.f32 0.0, %v2247
      %2249 = vmatmul.bf16.gmra.mxu0 %v1815
      %v2250 = vpop.f32.mrf.mxu0
      %v2251 = vadd.f32 0.0, %v2250
      %v2252 = vpop.f32.mrf.mxu0
      %v2253 = vadd.f32 0.0, %v2252
      %2254 = vmatmul.bf16.gmra.mxu0 %v1816
      %v2255 = vpop.f32.mrf.mxu0
      %v2256 = vadd.f32 0.0, %v2255
      %v2257 = vpop.f32.mrf.mxu0
      %v2258 = vadd.f32 0.0, %v2257
      %2259 = vdwg.mxu0
      %v2260 = vadd.f32 %v1550, %v1973
      %v2261 = vadd.f32 %v1551, %v1975
      %v2262 = vadd.f32 %v1552, %v1978
      %v2263 = vadd.f32 %v1553, %v1980
      %v2264 = vadd.f32 %v1554, %v1983
      %v2265 = vadd.f32 %v1555, %v1985
      %v2266 = vadd.f32 %v1556, %v1988
      %v2267 = vadd.f32 %v1557, %v1990
      %v2268 = vadd.f32 %v1558, %v1993
      %v2269 = vadd.f32 %v1559, %v1995
      %v2270 = vadd.f32 %v1560, %v1998
      %v2271 = vadd.f32 %v1561, %v2000
      %v2272 = vadd.f32 %v1562, %v2003
      %v2273 = vadd.f32 %v1563, %v2005
      %v2274 = vadd.f32 %v1564, %v2008
      %v2275 = vadd.f32 %v1565, %v2010
      %v2276 = vadd.f32 %v1566, %v2013
      %v2277 = vadd.f32 %v1567, %v2015
      %v2278 = vadd.f32 %v1568, %v2018
      %v2279 = vadd.f32 %v1569, %v2020
      %v2280 = vadd.f32 %v1570, %v2023
      %v2281 = vadd.f32 %v1571, %v2025
      %v2282 = vadd.f32 %v1572, %v2028
      %v2283 = vadd.f32 %v1573, %v2030
      %v2284 = vadd.f32 %v1574, %v2033
      %v2285 = vadd.f32 %v1575, %v2035
      %v2286 = vadd.f32 %v1576, %v2038
      %v2287 = vadd.f32 %v1577, %v2040
      %v2288 = vadd.f32 %v1578, %v2043
      %v2289 = vadd.f32 %v1579, %v2045
      %v2290 = vadd.f32 %v1580, %v2048
      %v2291 = vadd.f32 %v1581, %v2050
      %v2292 = vadd.f32 %v1582, %v2053
      %v2293 = vadd.f32 %v1583, %v2055
      %v2294 = vadd.f32 %v1584, %v2058
      %v2295 = vadd.f32 %v1585, %v2060
      %v2296 = vadd.f32 %v1586, %v2072
      %v2297 = vadd.f32 %v1587, %v2074
      %v2298 = vadd.f32 %v1588, %v2077
      %v2299 = vadd.f32 %v1589, %v2079
      %v2300 = vadd.f32 %v1590, %v2082
      %v2301 = vadd.f32 %v1591, %v2084
      %v2302 = vadd.f32 %v1592, %v2087
      %v2303 = vadd.f32 %v1593, %v2089
      %v2304 = vadd.f32 %v1594, %v2092
      %v2305 = vadd.f32 %v1595, %v2094
      %v2306 = vadd.f32 %v1596, %v2097
      %v2307 = vadd.f32 %v1597, %v2099
      %v2308 = vadd.f32 %v1598, %v2102
      %v2309 = vadd.f32 %v1599, %v2104
      %v2310 = vadd.f32 %v1600, %v2107
      %v2311 = vadd.f32 %v1601, %v2109
      %v2312 = vadd.f32 %v1602, %v2112
      %v2313 = vadd.f32 %v1603, %v2114
      %v2314 = vadd.f32 %v1604, %v2117
      %v2315 = vadd.f32 %v1605, %v2119
      %v2316 = vadd.f32 %v1606, %v2122
      %v2317 = vadd.f32 %v1607, %v2124
      %v2318 = vadd.f32 %v1608, %v2127
      %v2319 = vadd.f32 %v1609, %v2129
      %v2320 = vadd.f32 %v1610, %v2132
      %v2321 = vadd.f32 %v1611, %v2134
      %v2322 = vadd.f32 %v1612, %v2137
      %v2323 = vadd.f32 %v1613, %v2139
      %v2324 = vadd.f32 %v1614, %v2142
      %v2325 = vadd.f32 %v1615, %v2144
      %v2326 = vadd.f32 %v1616, %v2147
      %v2327 = vadd.f32 %v1617, %v2149
      %v2328 = vadd.f32 %v1618, %v2152
      %v2329 = vadd.f32 %v1619, %v2154
      %v2330 = vadd.f32 %v1620, %v2157
      %v2331 = vadd.f32 %v1621, %v2159
      %v2332 = vadd.f32 %v1622, %v2171
      %v2333 = vadd.f32 %v1623, %v2173
      %v2334 = vadd.f32 %v1624, %v2176
      %v2335 = vadd.f32 %v1625, %v2178
      %v2336 = vadd.f32 %v1626, %v2181
      %v2337 = vadd.f32 %v1627, %v2183
      %v2338 = vadd.f32 %v1628, %v2186
      %v2339 = vadd.f32 %v1629, %v2188
      %v2340 = vadd.f32 %v1630, %v2191
      %v2341 = vadd.f32 %v1631, %v2193
      %v2342 = vadd.f32 %v1632, %v2196
      %v2343 = vadd.f32 %v1633, %v2198
      %v2344 = vadd.f32 %v1634, %v2201
      %v2345 = vadd.f32 %v1635, %v2203
      %v2346 = vadd.f32 %v1636, %v2206
      %v2347 = vadd.f32 %v1637, %v2208
      %v2348 = vadd.f32 %v1638, %v2211
      %v2349 = vadd.f32 %v1639, %v2213
      %v2350 = vadd.f32 %v1640, %v2216
      %v2351 = vadd.f32 %v1641, %v2218
      %v2352 = vadd.f32 %v1642, %v2221
      %v2353 = vadd.f32 %v1643, %v2223
      %v2354 = vadd.f32 %v1644, %v2226
      %v2355 = vadd.f32 %v1645, %v2228
      %v2356 = vadd.f32 %v1646, %v2231
      %v2357 = vadd.f32 %v1647, %v2233
      %v2358 = vadd.f32 %v1648, %v2236
      %v2359 = vadd.f32 %v1649, %v2238
      %v2360 = vadd.f32 %v1650, %v2241
      %v2361 = vadd.f32 %v1651, %v2243
      %v2362 = vadd.f32 %v1652, %v2246
      %v2363 = vadd.f32 %v1653, %v2248
      %v2364 = vadd.f32 %v1654, %v2251
      %v2365 = vadd.f32 %v1655, %v2253
      %v2366 = vadd.f32 %v1656, %v2256
      %v2367 = vadd.f32 %v1657, %v2258
      %v2368 = vrot.slane %v2260, 7
      %v2369 = vrot.slane %v2261, 7
      %v2370 = vrot.slane %v2262, 7
      %v2371 = vrot.slane %v2263, 7
      %v2372 = vrot.slane %v2264, 7
      %v2373 = vrot.slane %v2265, 7
      %v2374 = vrot.slane %v2266, 7
      %v2375 = vrot.slane %v2267, 7
      %v2376 = vrot.slane %v2268, 7
      %v2377 = vrot.slane %v2269, 7
      %v2378 = vrot.slane %v2270, 7
      %v2379 = vrot.slane %v2271, 7
      %v2380 = vrot.slane %v2272, 7
      %v2381 = vrot.slane %v2273, 7
      %v2382 = vrot.slane %v2274, 7
      %v2383 = vrot.slane %v2275, 7
      %v2384 = vrot.slane %v2276, 7
      %v2385 = vrot.slane %v2277, 7
      %v2386 = vrot.slane %v2278, 7
      %v2387 = vrot.slane %v2279, 7
      %v2388 = vrot.slane %v2280, 7
      %v2389 = vrot.slane %v2281, 7
      %v2390 = vrot.slane %v2282, 7
      %v2391 = vrot.slane %v2283, 7
      %v2392 = vrot.slane %v2284, 7
      %v2393 = vrot.slane %v2285, 7
      %v2394 = vrot.slane %v2286, 7
      %v2395 = vrot.slane %v2287, 7
      %v2396 = vrot.slane %v2288, 7
      %v2397 = vrot.slane %v2289, 7
      %v2398 = vrot.slane %v2290, 7
      %v2399 = vrot.slane %v2291, 7
      %v2400 = vrot.slane %v2292, 7
      %v2401 = vrot.slane %v2293, 7
      %v2402 = vrot.slane %v2294, 7
      %v2403 = vrot.slane %v2295, 7
      %v2404 = vlaneseq
      %v2405 = vshrl.u32 %v2404, 7
      %vm2406 = vcmp.lt.s32.totalorder %v2405, 1
      %v2407 = vsel %vm2406, %v2402, %v2403
      %v2408 = vsel %vm2406, %v2401, %v2402
      %v2409 = vsel %vm2406, %v2400, %v2401
      %v2410 = vsel %vm2406, %v2399, %v2400
      %v2411 = vsel %vm2406, %v2398, %v2399
      %v2412 = vsel %vm2406, %v2397, %v2398
      %v2413 = vsel %vm2406, %v2396, %v2397
      %v2414 = vsel %vm2406, %v2395, %v2396
      %v2415 = vsel %vm2406, %v2394, %v2395
      %v2416 = vsel %vm2406, %v2393, %v2394
      %v2417 = vsel %vm2406, %v2392, %v2393
      %v2418 = vsel %vm2406, %v2391, %v2392
      %v2419 = vsel %vm2406, %v2390, %v2391
      %v2420 = vsel %vm2406, %v2389, %v2390
      %v2421 = vsel %vm2406, %v2388, %v2389
      %v2422 = vsel %vm2406, %v2387, %v2388
      %v2423 = vsel %vm2406, %v2386, %v2387
      %v2424 = vsel %vm2406, %v2385, %v2386
      %v2425 = vsel %vm2406, %v2384, %v2385
      %v2426 = vsel %vm2406, %v2383, %v2384
      %v2427 = vsel %vm2406, %v2382, %v2383
      %v2428 = vsel %vm2406, %v2381, %v2382
      %v2429 = vsel %vm2406, %v2380, %v2381
      %v2430 = vsel %vm2406, %v2379, %v2380
      %v2431 = vsel %vm2406, %v2378, %v2379
      %v2432 = vsel %vm2406, %v2377, %v2378
      %v2433 = vsel %vm2406, %v2376, %v2377
      %v2434 = vsel %vm2406, %v2375, %v2376
      %v2435 = vsel %vm2406, %v2374, %v2375
      %v2436 = vsel %vm2406, %v2373, %v2374
      %v2437 = vsel %vm2406, %v2372, %v2373
      %v2438 = vsel %vm2406, %v2371, %v2372
      %v2439 = vsel %vm2406, %v2370, %v2371
      %v2440 = vsel %vm2406, %v2369, %v2370
      %v2441 = vsel %vm2406, %v2368, %v2369
      %v2442 = vsel %vm2406, %v2403, %v2368
      %v2443 = vadd.f32 %v2296, %v2442
      %v2444 = vadd.f32 %v2297, %v2441
      %v2445 = vadd.f32 %v2298, %v2440
      %v2446 = vadd.f32 %v2299, %v2439
      %v2447 = vadd.f32 %v2300, %v2438
      %v2448 = vadd.f32 %v2301, %v2437
      %v2449 = vadd.f32 %v2302, %v2436
      %v2450 = vadd.f32 %v2303, %v2435
      %v2451 = vadd.f32 %v2304, %v2434
      %v2452 = vadd.f32 %v2305, %v2433
      %v2453 = vadd.f32 %v2306, %v2432
      %v2454 = vadd.f32 %v2307, %v2431
      %v2455 = vadd.f32 %v2308, %v2430
      %v2456 = vadd.f32 %v2309, %v2429
      %v2457 = vadd.f32 %v2310, %v2428
      %v2458 = vadd.f32 %v2311, %v2427
      %v2459 = vadd.f32 %v2312, %v2426
      %v2460 = vadd.f32 %v2313, %v2425
      %v2461 = vadd.f32 %v2314, %v2424
      %v2462 = vadd.f32 %v2315, %v2423
      %v2463 = vadd.f32 %v2316, %v2422
      %v2464 = vadd.f32 %v2317, %v2421
      %v2465 = vadd.f32 %v2318, %v2420
      %v2466 = vadd.f32 %v2319, %v2419
      %v2467 = vadd.f32 %v2320, %v2418
      %v2468 = vadd.f32 %v2321, %v2417
      %v2469 = vadd.f32 %v2322, %v2416
      %v2470 = vadd.f32 %v2323, %v2415
      %v2471 = vadd.f32 %v2324, %v2414
      %v2472 = vadd.f32 %v2325, %v2413
      %v2473 = vadd.f32 %v2326, %v2412
      %v2474 = vadd.f32 %v2327, %v2411
      %v2475 = vadd.f32 %v2328, %v2410
      %v2476 = vadd.f32 %v2329, %v2409
      %v2477 = vadd.f32 %v2330, %v2408
      %v2478 = vadd.f32 %v2331, %v2407
      %v2479 = vrot.slane %v2332, 1
      %v2480 = vrot.slane %v2333, 1
      %v2481 = vrot.slane %v2334, 1
      %v2482 = vrot.slane %v2335, 1
      %v2483 = vrot.slane %v2336, 1
      %v2484 = vrot.slane %v2337, 1
      %v2485 = vrot.slane %v2338, 1
      %v2486 = vrot.slane %v2339, 1
      %v2487 = vrot.slane %v2340, 1
      %v2488 = vrot.slane %v2341, 1
      %v2489 = vrot.slane %v2342, 1
      %v2490 = vrot.slane %v2343, 1
      %v2491 = vrot.slane %v2344, 1
      %v2492 = vrot.slane %v2345, 1
      %v2493 = vrot.slane %v2346, 1
      %v2494 = vrot.slane %v2347, 1
      %v2495 = vrot.slane %v2348, 1
      %v2496 = vrot.slane %v2349, 1
      %v2497 = vrot.slane %v2350, 1
      %v2498 = vrot.slane %v2351, 1
      %v2499 = vrot.slane %v2352, 1
      %v2500 = vrot.slane %v2353, 1
      %v2501 = vrot.slane %v2354, 1
      %v2502 = vrot.slane %v2355, 1
      %v2503 = vrot.slane %v2356, 1
      %v2504 = vrot.slane %v2357, 1
      %v2505 = vrot.slane %v2358, 1
      %v2506 = vrot.slane %v2359, 1
      %v2507 = vrot.slane %v2360, 1
      %v2508 = vrot.slane %v2361, 1
      %v2509 = vrot.slane %v2362, 1
      %v2510 = vrot.slane %v2363, 1
      %v2511 = vrot.slane %v2364, 1
      %v2512 = vrot.slane %v2365, 1
      %v2513 = vrot.slane %v2366, 1
      %v2514 = vrot.slane %v2367, 1
      %vm2515 = vcmp.lt.s32.totalorder %v2405, 7
      %v2516 = vsel %vm2515, %v2513, %v2514
      %v2517 = vsel %vm2515, %v2512, %v2513
      %v2518 = vsel %vm2515, %v2511, %v2512
      %v2519 = vsel %vm2515, %v2510, %v2511
      %v2520 = vsel %vm2515, %v2509, %v2510
      %v2521 = vsel %vm2515, %v2508, %v2509
      %v2522 = vsel %vm2515, %v2507, %v2508
      %v2523 = vsel %vm2515, %v2506, %v2507
      %v2524 = vsel %vm2515, %v2505, %v2506
      %v2525 = vsel %vm2515, %v2504, %v2505
      %v2526 = vsel %vm2515, %v2503, %v2504
      %v2527 = vsel %vm2515, %v2502, %v2503
      %v2528 = vsel %vm2515, %v2501, %v2502
      %v2529 = vsel %vm2515, %v2500, %v2501
      %v2530 = vsel %vm2515, %v2499, %v2500
      %v2531 = vsel %vm2515, %v2498, %v2499
      %v2532 = vsel %vm2515, %v2497, %v2498
      %v2533 = vsel %vm2515, %v2496, %v2497
      %v2534 = vsel %vm2515, %v2495, %v2496
      %v2535 = vsel %vm2515, %v2494, %v2495
      %v2536 = vsel %vm2515, %v2493, %v2494
      %v2537 = vsel %vm2515, %v2492, %v2493
      %v2538 = vsel %vm2515, %v2491, %v2492
      %v2539 = vsel %vm2515, %v2490, %v2491
      %v2540 = vsel %vm2515, %v2489, %v2490
      %v2541 = vsel %vm2515, %v2488, %v2489
      %v2542 = vsel %vm2515, %v2487, %v2488
      %v2543 = vsel %vm2515, %v2486, %v2487
      %v2544 = vsel %vm2515, %v2485, %v2486
      %v2545 = vsel %vm2515, %v2484, %v2485
      %v2546 = vsel %vm2515, %v2483, %v2484
      %v2547 = vsel %vm2515, %v2482, %v2483
      %v2548 = vsel %vm2515, %v2481, %v2482
      %v2549 = vsel %vm2515, %v2480, %v2481
      %v2550 = vsel %vm2515, %v2479, %v2480
      %v2551 = vsel %vm2515, %v2514, %v2479
      %v2552 = vadd.f32 %v2443, %v2550
      %v2553 = vadd.f32 %v2444, %v2549
      %v2554 = vadd.f32 %v2445, %v2548
      %v2555 = vadd.f32 %v2446, %v2547
      %v2556 = vadd.f32 %v2447, %v2546
      %v2557 = vadd.f32 %v2448, %v2545
      %v2558 = vadd.f32 %v2449, %v2544
      %v2559 = vadd.f32 %v2450, %v2543
      %v2560 = vadd.f32 %v2451, %v2542
      %v2561 = vadd.f32 %v2452, %v2541
      %v2562 = vadd.f32 %v2453, %v2540
      %v2563 = vadd.f32 %v2454, %v2539
      %v2564 = vadd.f32 %v2455, %v2538
      %v2565 = vadd.f32 %v2456, %v2537
      %v2566 = vadd.f32 %v2457, %v2536
      %v2567 = vadd.f32 %v2458, %v2535
      %v2568 = vadd.f32 %v2459, %v2534
      %v2569 = vadd.f32 %v2460, %v2533
      %v2570 = vadd.f32 %v2461, %v2532
      %v2571 = vadd.f32 %v2462, %v2531
      %v2572 = vadd.f32 %v2463, %v2530
      %v2573 = vadd.f32 %v2464, %v2529
      %v2574 = vadd.f32 %v2465, %v2528
      %v2575 = vadd.f32 %v2466, %v2527
      %v2576 = vadd.f32 %v2467, %v2526
      %v2577 = vadd.f32 %v2468, %v2525
      %v2578 = vadd.f32 %v2469, %v2524
      %v2579 = vadd.f32 %v2470, %v2523
      %v2580 = vadd.f32 %v2471, %v2522
      %v2581 = vadd.f32 %v2472, %v2521
      %v2582 = vadd.f32 %v2473, %v2520
      %v2583 = vadd.f32 %v2474, %v2519
      %v2584 = vadd.f32 %v2475, %v2518
      %v2585 = vadd.f32 %v2476, %v2517
      %v2586 = vadd.f32 %v2477, %v2516
      %v2587 = vadd.f32 %v2478, %v2551
      %v2588 = vld [vmem:[%s3] sm:$0x1]
      %v2590 = vperm.slane %v2588, 0
      %v2592 = vmul.f32 %v2552, %v2590
      %v2593 = vmul.f32 %v2553, %v2590
      %v2594 = vmul.f32 %v2554, %v2590
      %v2595 = vmul.f32 %v2555, %v2590
      %v2596 = vmul.f32 %v2556, %v2590
      %v2597 = vmul.f32 %v2557, %v2590
      %v2598 = vmul.f32 %v2558, %v2590
      %v2599 = vmul.f32 %v2559, %v2590
      %v2600 = vmul.f32 %v2560, %v2590
      %v2601 = vmul.f32 %v2561, %v2590
      %v2602 = vmul.f32 %v2562, %v2590
      %v2603 = vmul.f32 %v2563, %v2590
      %v2604 = vmul.f32 %v2564, %v2590
      %v2605 = vmul.f32 %v2565, %v2590
      %v2606 = vmul.f32 %v2566, %v2590
      %v2607 = vmul.f32 %v2567, %v2590
      %v2608 = vmul.f32 %v2568, %v2590
      %v2609 = vmul.f32 %v2569, %v2590
      %v2610 = vmul.f32 %v2570, %v2590
      %v2611 = vmul.f32 %v2571, %v2590
      %v2612 = vmul.f32 %v2572, %v2590
      %v2613 = vmul.f32 %v2573, %v2590
      %v2614 = vmul.f32 %v2574, %v2590
      %v2615 = vmul.f32 %v2575, %v2590
      %v2616 = vmul.f32 %v2576, %v2590
      %v2617 = vmul.f32 %v2577, %v2590
      %v2618 = vmul.f32 %v2578, %v2590
      %v2619 = vmul.f32 %v2579, %v2590
      %v2620 = vmul.f32 %v2580, %v2590
      %v2621 = vmul.f32 %v2581, %v2590
      %v2622 = vmul.f32 %v2582, %v2590
      %v2623 = vmul.f32 %v2583, %v2590
      %v2624 = vmul.f32 %v2584, %v2590
      %v2625 = vmul.f32 %v2585, %v2590
      %v2626 = vmul.f32 %v2586, %v2590
      %v2627 = vmul.f32 %v2587, %v2590
      %v2628 = vld [vmem:[%s4] sm:$0x1]
      %v2630 = vperm.slane %v2628, 0
      %v2632 = vadd.f32 %v2592, %v2630
      %v2633 = vadd.f32 %v2593, %v2630
      %v2634 = vadd.f32 %v2594, %v2630
      %v2635 = vadd.f32 %v2595, %v2630
      %v2636 = vadd.f32 %v2596, %v2630
      %v2637 = vadd.f32 %v2597, %v2630
      %v2638 = vadd.f32 %v2598, %v2630
      %v2639 = vadd.f32 %v2599, %v2630
      %v2640 = vadd.f32 %v2600, %v2630
      %v2641 = vadd.f32 %v2601, %v2630
      %v2642 = vadd.f32 %v2602, %v2630
      %v2643 = vadd.f32 %v2603, %v2630
      %v2644 = vadd.f32 %v2604, %v2630
      %v2645 = vadd.f32 %v2605, %v2630
      %v2646 = vadd.f32 %v2606, %v2630
      %v2647 = vadd.f32 %v2607, %v2630
      %v2648 = vadd.f32 %v2608, %v2630
      %v2649 = vadd.f32 %v2609, %v2630
      %v2650 = vadd.f32 %v2610, %v2630
      %v2651 = vadd.f32 %v2611, %v2630
      %v2652 = vadd.f32 %v2612, %v2630
      %v2653 = vadd.f32 %v2613, %v2630
      %v2654 = vadd.f32 %v2614, %v2630
      %v2655 = vadd.f32 %v2615, %v2630
      %v2656 = vadd.f32 %v2616, %v2630
      %v2657 = vadd.f32 %v2617, %v2630
      %v2658 = vadd.f32 %v2618, %v2630
      %v2659 = vadd.f32 %v2619, %v2630
      %v2660 = vadd.f32 %v2620, %v2630
      %v2661 = vadd.f32 %v2621, %v2630
      %v2662 = vadd.f32 %v2622, %v2630
      %v2663 = vadd.f32 %v2623, %v2630
      %v2664 = vadd.f32 %v2624, %v2630
      %v2665 = vadd.f32 %v2625, %v2630
      %v2666 = vadd.f32 %v2626, %v2630
      %v2667 = vadd.f32 %v2627, %v2630
      %v2668 = vmax.f32 %v2632, 0.0
      %v2669 = vmax.f32 %v2633, 0.0
      %v2670 = vmax.f32 %v2634, 0.0
      %v2671 = vmax.f32 %v2635, 0.0
      %v2672 = vmax.f32 %v2636, 0.0
      %v2673 = vmax.f32 %v2637, 0.0
      %v2674 = vmax.f32 %v2638, 0.0
      %v2675 = vmax.f32 %v2639, 0.0
      %v2676 = vmax.f32 %v2640, 0.0
      %v2677 = vmax.f32 %v2641, 0.0
      %v2678 = vmax.f32 %v2642, 0.0
      %v2679 = vmax.f32 %v2643, 0.0
      %v2680 = vmax.f32 %v2644, 0.0
      %v2681 = vmax.f32 %v2645, 0.0
      %v2682 = vmax.f32 %v2646, 0.0
      %v2683 = vmax.f32 %v2647, 0.0
      %v2684 = vmax.f32 %v2648, 0.0
      %v2685 = vmax.f32 %v2649, 0.0
      %v2686 = vmax.f32 %v2650, 0.0
      %v2687 = vmax.f32 %v2651, 0.0
      %v2688 = vmax.f32 %v2652, 0.0
      %v2689 = vmax.f32 %v2653, 0.0
      %v2690 = vmax.f32 %v2654, 0.0
      %v2691 = vmax.f32 %v2655, 0.0
      %v2692 = vmax.f32 %v2656, 0.0
      %v2693 = vmax.f32 %v2657, 0.0
      %v2694 = vmax.f32 %v2658, 0.0
      %v2695 = vmax.f32 %v2659, 0.0
      %v2696 = vmax.f32 %v2660, 0.0
      %v2697 = vmax.f32 %v2661, 0.0
      %v2698 = vmax.f32 %v2662, 0.0
      %v2699 = vmax.f32 %v2663, 0.0
      %v2700 = vmax.f32 %v2664, 0.0
      %v2701 = vmax.f32 %v2665, 0.0
      %v2702 = vmax.f32 %v2666, 0.0
      %v2703 = vmax.f32 %v2667, 0.0
      %2705 = vset.pattern.permute.xlu0 0
      %2706 = vperm.xlu0 %2705, %v307
      %v2707 = vpop.permute.xlu0 %2706
      %2710 = vset.pattern.permute.xlu0 0
      %2711 = vperm.xlu0 %2710, %v308
      %v2712 = vpop.permute.xlu0 %2711
      %2715 = vset.pattern.permute.xlu0 0
      %2716 = vperm.xlu0 %2715, %v309
      %v2717 = vpop.permute.xlu0 %2716
      %2720 = vset.pattern.permute.xlu0 0
      %2721 = vperm.xlu0 %2720, %v310
      %v2722 = vpop.permute.xlu0 %2721
      %2725 = vset.pattern.permute.xlu0 0
      %2726 = vperm.xlu0 %2725, %v311
      %v2727 = vpop.permute.xlu0 %2726
      %2730 = vset.pattern.permute.xlu0 0
      %2731 = vperm.xlu0 %2730, %v312
      %v2732 = vpop.permute.xlu0 %2731
      %2735 = vset.pattern.permute.xlu0 0
      %2736 = vperm.xlu0 %2735, %v313
      %v2737 = vpop.permute.xlu0 %2736
      %2740 = vset.pattern.permute.xlu0 0
      %2741 = vperm.xlu0 %2740, %v314
      %v2742 = vpop.permute.xlu0 %2741
      %2745 = vset.pattern.permute.xlu0 0
      %2746 = vperm.xlu0 %2745, %v315
      %v2747 = vpop.permute.xlu0 %2746
      %2750 = vset.pattern.permute.xlu0 0
      %2751 = vperm.xlu0 %2750, %v316
      %v2752 = vpop.permute.xlu0 %2751
      %2755 = vset.pattern.permute.xlu0 0
      %2756 = vperm.xlu0 %2755, %v317
      %v2757 = vpop.permute.xlu0 %2756
      %2760 = vset.pattern.permute.xlu0 0
      %2761 = vperm.xlu0 %2760, %v318
      %v2762 = vpop.permute.xlu0 %2761
      %2765 = vset.pattern.permute.xlu0 0
      %2766 = vperm.xlu0 %2765, %v319
      %v2767 = vpop.permute.xlu0 %2766
      %2770 = vset.pattern.permute.xlu0 0
      %2771 = vperm.xlu0 %2770, %v320
      %v2772 = vpop.permute.xlu0 %2771
      %2775 = vset.pattern.permute.xlu0 0
      %2776 = vperm.xlu0 %2775, %v321
      %v2777 = vpop.permute.xlu0 %2776
      %2780 = vset.pattern.permute.xlu0 0
      %2781 = vperm.xlu0 %2780, %v322
      %v2782 = vpop.permute.xlu0 %2781
      %2785 = vset.pattern.permute.xlu0 0
      %2786 = vperm.xlu0 %2785, %v323
      %v2787 = vpop.permute.xlu0 %2786
      %2790 = vset.pattern.permute.xlu0 0
      %2791 = vperm.xlu0 %2790, %v324
      %v2792 = vpop.permute.xlu0 %2791
      %2795 = vset.pattern.permute.xlu0 0
      %2796 = vperm.xlu0 %2795, %v325
      %v2797 = vpop.permute.xlu0 %2796
      %2800 = vset.pattern.permute.xlu0 0
      %2801 = vperm.xlu0 %2800, %v326
      %v2802 = vpop.permute.xlu0 %2801
      %2805 = vset.pattern.permute.xlu0 0
      %2806 = vperm.xlu0 %2805, %v327
      %v2807 = vpop.permute.xlu0 %2806
      %2810 = vset.pattern.permute.xlu0 0
      %2811 = vperm.xlu0 %2810, %v328
      %v2812 = vpop.permute.xlu0 %2811
      %2815 = vset.pattern.permute.xlu0 0
      %2816 = vperm.xlu0 %2815, %v329
      %v2817 = vpop.permute.xlu0 %2816
      %2820 = vset.pattern.permute.xlu0 0
      %2821 = vperm.xlu0 %2820, %v330
      %v2822 = vpop.permute.xlu0 %2821
      %2825 = vset.pattern.permute.xlu0 0
      %2826 = vperm.xlu0 %2825, %v331
      %v2827 = vpop.permute.xlu0 %2826
      %2830 = vset.pattern.permute.xlu0 0
      %2831 = vperm.xlu0 %2830, %v332
      %v2832 = vpop.permute.xlu0 %2831
      %2835 = vset.pattern.permute.xlu0 0
      %2836 = vperm.xlu0 %2835, %v333
      %v2837 = vpop.permute.xlu0 %2836
      %2840 = vset.pattern.permute.xlu0 0
      %2841 = vperm.xlu0 %2840, %v334
      %v2842 = vpop.permute.xlu0 %2841
      %2845 = vset.pattern.permute.xlu0 0
      %2846 = vperm.xlu0 %2845, %v335
      %v2847 = vpop.permute.xlu0 %2846
      %2850 = vset.pattern.permute.xlu0 0
      %2851 = vperm.xlu0 %2850, %v336
      %v2852 = vpop.permute.xlu0 %2851
      %2855 = vset.pattern.permute.xlu0 0
      %2856 = vperm.xlu0 %2855, %v337
      %v2857 = vpop.permute.xlu0 %2856
      %2860 = vset.pattern.permute.xlu0 0
      %2861 = vperm.xlu0 %2860, %v338
      %v2862 = vpop.permute.xlu0 %2861
      %2865 = vset.pattern.permute.xlu0 0
      %2866 = vperm.xlu0 %2865, %v339
      %v2867 = vpop.permute.xlu0 %2866
      %2870 = vset.pattern.permute.xlu0 0
      %2871 = vperm.xlu0 %2870, %v340
      %v2872 = vpop.permute.xlu0 %2871
      %2875 = vset.pattern.permute.xlu0 0
      %2876 = vperm.xlu0 %2875, %v341
      %v2877 = vpop.permute.xlu0 %2876
      %2880 = vset.pattern.permute.xlu0 0
      %2881 = vperm.xlu0 %2880, %v342
      %v2882 = vpop.permute.xlu0 %2881
      %v2884 = vmul.f32 %v2668, %v2707
      %v2885 = vmul.f32 %v2669, %v2712
      %v2886 = vmul.f32 %v2670, %v2717
      %v2887 = vmul.f32 %v2671, %v2722
      %v2888 = vmul.f32 %v2672, %v2727
      %v2889 = vmul.f32 %v2673, %v2732
      %v2890 = vmul.f32 %v2674, %v2737
      %v2891 = vmul.f32 %v2675, %v2742
      %v2892 = vmul.f32 %v2676, %v2747
      %v2893 = vmul.f32 %v2677, %v2752
      %v2894 = vmul.f32 %v2678, %v2757
      %v2895 = vmul.f32 %v2679, %v2762
      %v2896 = vmul.f32 %v2680, %v2767
      %v2897 = vmul.f32 %v2681, %v2772
      %v2898 = vmul.f32 %v2682, %v2777
      %v2899 = vmul.f32 %v2683, %v2782
      %v2900 = vmul.f32 %v2684, %v2787
      %v2901 = vmul.f32 %v2685, %v2792
      %v2902 = vmul.f32 %v2686, %v2797
      %v2903 = vmul.f32 %v2687, %v2802
      %v2904 = vmul.f32 %v2688, %v2807
      %v2905 = vmul.f32 %v2689, %v2812
      %v2906 = vmul.f32 %v2690, %v2817
      %v2907 = vmul.f32 %v2691, %v2822
      %v2908 = vmul.f32 %v2692, %v2827
      %v2909 = vmul.f32 %v2693, %v2832
      %v2910 = vmul.f32 %v2694, %v2837
      %v2911 = vmul.f32 %v2695, %v2842
      %v2912 = vmul.f32 %v2696, %v2847
      %v2913 = vmul.f32 %v2697, %v2852
      %v2914 = vmul.f32 %v2698, %v2857
      %v2915 = vmul.f32 %v2699, %v2862
      %v2916 = vmul.f32 %v2700, %v2867
      %v2917 = vmul.f32 %v2701, %v2872
      %v2918 = vmul.f32 %v2702, %v2877
      %v2919 = vmul.f32 %v2703, %v2882
      %v2920 = vpack.c.bf16 %v2884, %v2884
      %v2921 = vpack.c.bf16 %v2885, %v2885
      %v2922 = vpack.c.bf16 %v2886, %v2886
      %v2923 = vpack.c.bf16 %v2887, %v2887
      %v2924 = vpack.c.bf16 %v2888, %v2888
      %v2925 = vpack.c.bf16 %v2889, %v2889
      %v2926 = vpack.c.bf16 %v2890, %v2890
      %v2927 = vpack.c.bf16 %v2891, %v2891
      %v2928 = vpack.c.bf16 %v2892, %v2892
      %v2929 = vpack.c.bf16 %v2893, %v2893
      %v2930 = vpack.c.bf16 %v2894, %v2894
      %v2931 = vpack.c.bf16 %v2895, %v2895
      %v2932 = vpack.c.bf16 %v2896, %v2896
      %v2933 = vpack.c.bf16 %v2897, %v2897
      %v2934 = vpack.c.bf16 %v2898, %v2898
      %v2935 = vpack.c.bf16 %v2899, %v2899
      %v2936 = vpack.c.bf16 %v2900, %v2900
      %v2937 = vpack.c.bf16 %v2901, %v2901
      %v2938 = vpack.c.bf16 %v2902, %v2902
      %v2939 = vpack.c.bf16 %v2903, %v2903
      %v2940 = vpack.c.bf16 %v2904, %v2904
      %v2941 = vpack.c.bf16 %v2905, %v2905
      %v2942 = vpack.c.bf16 %v2906, %v2906
      %v2943 = vpack.c.bf16 %v2907, %v2907
      %v2944 = vpack.c.bf16 %v2908, %v2908
      %v2945 = vpack.c.bf16 %v2909, %v2909
      %v2946 = vpack.c.bf16 %v2910, %v2910
      %v2947 = vpack.c.bf16 %v2911, %v2911
      %v2948 = vpack.c.bf16 %v2912, %v2912
      %v2949 = vpack.c.bf16 %v2913, %v2913
      %v2950 = vpack.c.bf16 %v2914, %v2914
      %v2951 = vpack.c.bf16 %v2915, %v2915
      %v2952 = vpack.c.bf16 %v2916, %v2916
      %v2953 = vpack.c.bf16 %v2917, %v2917
      %v2954 = vpack.c.bf16 %v2918, %v2918
      %v2955 = vpack.c.bf16 %v2919, %v2919
      %2956 = vst [vmem:[#allocation2 + $0x8] sm:$0xf] %v2920
      %2957 = vst [vmem:[#allocation2 + $0xc] sm:$0xf] %v2921
      %2958 = vst [vmem:[#allocation2 + $0x10] sm:$0xf] %v2922
      %2959 = vst [vmem:[#allocation2 + $0x14] sm:$0xf] %v2923
      %2960 = vst [vmem:[#allocation2 + $0x18] sm:$0xf] %v2924
      %2961 = vst [vmem:[#allocation2 + $0x1c] sm:$0xf] %v2925
      %2962 = vst [vmem:[#allocation2 + $0x20] sm:$0xf] %v2926
      %2963 = vst [vmem:[#allocation2 + $0x24] sm:$0xf] %v2927
      %2964 = vst [vmem:[#allocation2 + $0x28] sm:$0xf] %v2928
      %2965 = vst [vmem:[#allocation2 + $0x2c] sm:$0xf] %v2929
      %2966 = vst [vmem:[#allocation2 + $0x30] sm:$0xf] %v2930
      %2967 = vst [vmem:[#allocation2 + $0x34] sm:$0xf] %v2931
      %2968 = vst [vmem:[#allocation2 + $0x38] sm:$0xf] %v2932
      %2969 = vst [vmem:[#allocation2 + $0x3c] sm:$0xf] %v2933
      %2970 = vst [vmem:[#allocation2 + $0x40] sm:$0xf] %v2934
      %2971 = vst [vmem:[#allocation2 + $0x44] sm:$0xf] %v2935
      %2972 = vst [vmem:[#allocation2 + $0x48] sm:$0xf] %v2936
      %2973 = vst [vmem:[#allocation2 + $0x4c] sm:$0xf] %v2937
      %2974 = vst [vmem:[#allocation2 + $0x50] sm:$0xf] %v2938
      %2975 = vst [vmem:[#allocation2 + $0x54] sm:$0xf] %v2939
      %2976 = vst [vmem:[#allocation2 + $0x58] sm:$0xf] %v2940
      %2977 = vst [vmem:[#allocation2 + $0x5c] sm:$0xf] %v2941
      %2978 = vst [vmem:[#allocation2 + $0x60] sm:$0xf] %v2942
      %2979 = vst [vmem:[#allocation2 + $0x64] sm:$0xf] %v2943
      %2980 = vst [vmem:[#allocation2 + $0x68] sm:$0xf] %v2944
      %2981 = vst [vmem:[#allocation2 + $0x6c] sm:$0xf] %v2945
      %2982 = vst [vmem:[#allocation2 + $0x70] sm:$0xf] %v2946
      %2983 = vst [vmem:[#allocation2 + $0x74] sm:$0xf] %v2947
      %2984 = vst [vmem:[#allocation2 + $0x78] sm:$0xf] %v2948
      %2985 = vst [vmem:[#allocation2 + $0x7c] sm:$0xf] %v2949
      %2986 = vst [vmem:[#allocation2 + $0x80] sm:$0xf] %v2950
      %2987 = vst [vmem:[#allocation2 + $0x84] sm:$0xf] %v2951
      %2988 = vst [vmem:[#allocation2 + $0x88] sm:$0xf] %v2952
      %2989 = vst [vmem:[#allocation2 + $0x8c] sm:$0xf] %v2953
      %2990 = vst [vmem:[#allocation2 + $0x90] sm:$0xf] %v2954
      %2991 = vst [vmem:[#allocation2 + $0x94] sm:$0xf] %v2955
      %v2992 = vld [vmem:[#allocation2] sm:$0xf]
      %v2993 = vld [vmem:[#allocation2 + $0x4] sm:$0xf]
      %v2994 = vld [vmem:[#allocation2 + $0x8] sm:$0xf]
      %v2995 = vld [vmem:[#allocation2 + $0xc] sm:$0xf]
      %v2996 = vld [vmem:[#allocation2 + $0x10] sm:$0xf]
      %v2997 = vld [vmem:[#allocation2 + $0x14] sm:$0xf]
      %v2998 = vld [vmem:[#allocation2 + $0x18] sm:$0xf]
      %v2999 = vld [vmem:[#allocation2 + $0x1c] sm:$0xf]
      %v3000 = vld [vmem:[#allocation2 + $0x20] sm:$0xf]
      %v3001 = vld [vmem:[#allocation2 + $0x24] sm:$0xf]
      %v3002 = vld [vmem:[#allocation2 + $0x28] sm:$0xf]
      %v3003 = vld [vmem:[#allocation2 + $0x2c] sm:$0xf]
      %v3004 = vld [vmem:[#allocation2 + $0x30] sm:$0xf]
      %v3005 = vld [vmem:[#allocation2 + $0x34] sm:$0xf]
      %v3006 = vld [vmem:[#allocation2 + $0x38] sm:$0xf]
      %v3007 = vld [vmem:[#allocation2 + $0x3c] sm:$0xf]
      %v3008 = vld [vmem:[#allocation2 + $0x40] sm:$0xf]
      %v3009 = vld [vmem:[#allocation2 + $0x44] sm:$0xf]
      %v3010 = vld [vmem:[#allocation2 + $0x48] sm:$0xf]
      %v3011 = vld [vmem:[#allocation2 + $0x4c] sm:$0xf]
      %v3012 = vld [vmem:[#allocation2 + $0x50] sm:$0xf]
      %v3013 = vld [vmem:[#allocation2 + $0x54] sm:$0xf]
      %v3014 = vld [vmem:[#allocation2 + $0x58] sm:$0xf]
      %v3015 = vld [vmem:[#allocation2 + $0x5c] sm:$0xf]
      %v3016 = vld [vmem:[#allocation2 + $0x60] sm:$0xf]
      %v3017 = vld [vmem:[#allocation2 + $0x64] sm:$0xf]
      %v3018 = vld [vmem:[#allocation2 + $0x68] sm:$0xf]
      %v3019 = vld [vmem:[#allocation2 + $0x6c] sm:$0xf]
      %v3020 = vld [vmem:[#allocation2 + $0x70] sm:$0xf]
      %v3021 = vld [vmem:[#allocation2 + $0x74] sm:$0xf]
      %v3022 = vld [vmem:[#allocation2 + $0x78] sm:$0xf]
      %v3023 = vld [vmem:[#allocation2 + $0x7c] sm:$0xf]
      %v3024 = vld [vmem:[#allocation2 + $0x80] sm:$0xf]
      %v3025 = vld [vmem:[#allocation2 + $0x84] sm:$0xf]
      %v3026 = vld [vmem:[#allocation2 + $0x88] sm:$0xf]
      %v3027 = vld [vmem:[#allocation2 + $0x8c] sm:$0xf]
      %v3028 = vld [vmem:[%s5] sm:$0xff]
      %v3029 = vld [vmem:[%s5 + $0x8] sm:$0xf]
      %v3030 = vld [vmem:[%s5 + $0xc] sm:$0xff]
      %v3031 = vld [vmem:[%s5 + $0x14] sm:$0xf]
      %v3032 = vld [vmem:[%s5 + $0x18] sm:$0xff]
      %v3033 = vld [vmem:[%s5 + $0x20] sm:$0xf]
      %v3034 = vld [vmem:[%s5 + $0x24] sm:$0xff]
      %v3035 = vld [vmem:[%s5 + $0x2c] sm:$0xf]
      %v3036 = vld [vmem:[%s5 + $0x30] sm:$0xff]
      %v3037 = vld [vmem:[%s5 + $0x38] sm:$0xf]
      %v3038 = vld [vmem:[%s5 + $0x3c] sm:$0xff]
      %v3039 = vld [vmem:[%s5 + $0x44] sm:$0xf]
      %v3040 = vld [vmem:[%s5 + $0x48] sm:$0xff]
      %v3041 = vld [vmem:[%s5 + $0x50] sm:$0xf]
      %v3042 = vld [vmem:[%s5 + $0x54] sm:$0xff]
      %v3043 = vld [vmem:[%s5 + $0x5c] sm:$0xf]
      %v3044 = vld [vmem:[%s5 + $0x60] sm:$0xff]
      %v3045 = vld [vmem:[%s5 + $0x68] sm:$0xf]
      %v3046 = vld [vmem:[%s5 + $0x6c] sm:$0xff]
      %v3047 = vld [vmem:[%s5 + $0x74] sm:$0xf]
      %v3048 = vld [vmem:[%s5 + $0x78] sm:$0xff]
      %v3049 = vld [vmem:[%s5 + $0x80] sm:$0xf]
      %v3050 = vld [vmem:[%s5 + $0x84] sm:$0xff]
      %v3051 = vld [vmem:[%s5 + $0x8c] sm:$0xf]
      %v3052 = vld [vmem:[%s5 + $0x90] sm:$0xff]
      %v3053 = vld [vmem:[%s5 + $0x98] sm:$0xf]
      %v3054 = vld [vmem:[%s5 + $0x9c] sm:$0xff]
      %v3055 = vld [vmem:[%s5 + $0xa4] sm:$0xf]
      %v3056 = vld [vmem:[%s5 + $0xa8] sm:$0xff]
      %v3057 = vld [vmem:[%s5 + $0xb0] sm:$0xf]
      %v3058 = vld [vmem:[%s5 + $0xb4] sm:$0xff]
      %v3059 = vld [vmem:[%s5 + $0xbc] sm:$0xf]
      %v3096 = vunpack.c.l.b16 %v2992
      %v3097 = vunpack.c.l.b16 %v2993
      %v3098 = vunpack.c.l.b16 %v2994
      %v3099 = vunpack.c.l.b16 %v2995
      %v3100 = vunpack.c.l.b16 %v2996
      %v3101 = vunpack.c.l.b16 %v2997
      %v3102 = vunpack.c.l.b16 %v2998
      %v3103 = vunpack.c.l.b16 %v2999
      %v3104 = vunpack.c.l.b16 %v3000
      %v3105 = vunpack.c.l.b16 %v3001
      %v3106 = vunpack.c.l.b16 %v3002
      %v3107 = vunpack.c.l.b16 %v3003
      %v3108 = vunpack.c.l.b16 %v3004
      %v3109 = vunpack.c.l.b16 %v3005
      %v3110 = vunpack.c.l.b16 %v3006
      %v3111 = vunpack.c.l.b16 %v3007
      %v3112 = vunpack.c.l.b16 %v3008
      %v3113 = vunpack.c.l.b16 %v3009
      %v3114 = vunpack.c.l.b16 %v3010
      %v3115 = vunpack.c.l.b16 %v3011
      %v3116 = vunpack.c.l.b16 %v3012
      %v3117 = vunpack.c.l.b16 %v3013
      %v3118 = vunpack.c.l.b16 %v3014
      %v3119 = vunpack.c.l.b16 %v3015
      %v3120 = vunpack.c.l.b16 %v3016
      %v3121 = vunpack.c.l.b16 %v3017
      %v3122 = vunpack.c.l.b16 %v3018
      %v3123 = vunpack.c.l.b16 %v3019
      %v3124 = vunpack.c.l.b16 %v3020
      %v3125 = vunpack.c.l.b16 %v3021
      %v3126 = vunpack.c.l.b16 %v3022
      %v3127 = vunpack.c.l.b16 %v3023
      %v3128 = vunpack.c.l.b16 %v3024
      %v3129 = vunpack.c.l.b16 %v3025
      %v3130 = vunpack.c.l.b16 %v3026
      %v3131 = vunpack.c.l.b16 %v3027
      %v3132 = vpack.c.b16 %v3097, %v3096
      %v3133 = vpack.c.b16 %v3099, %v3098
      %v3134 = vpack.c.b16 %v3101, %v3100
      %v3135 = vpack.c.b16 %v3103, %v3102
      %v3136 = vpack.c.b16 %v3105, %v3104
      %v3137 = vpack.c.b16 %v3107, %v3106
      %v3138 = vpack.c.b16 %v3109, %v3108
      %v3139 = vpack.c.b16 %v3111, %v3110
      %v3140 = vpack.c.b16 %v3113, %v3112
      %v3141 = vpack.c.b16 %v3115, %v3114
      %v3142 = vpack.c.b16 %v3117, %v3116
      %v3143 = vpack.c.b16 %v3119, %v3118
      %v3144 = vpack.c.b16 %v3121, %v3120
      %v3145 = vpack.c.b16 %v3123, %v3122
      %v3146 = vpack.c.b16 %v3125, %v3124
      %v3147 = vpack.c.b16 %v3127, %v3126
      %v3148 = vpack.c.b16 %v3129, %v3128
      %v3149 = vpack.c.b16 %v3131, %v3130
      %v3200 = vunpack.c.l.b16 %v3028
      %v3201 = vunpack.c.h.b16 %v3028
      %v3202 = vunpack.c.l.b16 %v3029
      %v3203 = vunpack.c.l.b16 %v3030
      %v3204 = vunpack.c.h.b16 %v3030
      %v3205 = vunpack.c.l.b16 %v3031
      %v3206 = vunpack.c.l.b16 %v3032
      %v3207 = vunpack.c.h.b16 %v3032
      %v3208 = vunpack.c.l.b16 %v3033
      %v3209 = vunpack.c.l.b16 %v3034
      %v3210 = vunpack.c.h.b16 %v3034
      %v3211 = vunpack.c.l.b16 %v3035
      %v3212 = vunpack.c.l.b16 %v3036
      %v3213 = vunpack.c.h.b16 %v3036
      %v3214 = vunpack.c.l.b16 %v3037
      %v3215 = vunpack.c.l.b16 %v3038
      %v3216 = vunpack.c.h.b16 %v3038
      %v3217 = vunpack.c.l.b16 %v3039
      %v3218 = vunpack.c.l.b16 %v3040
      %v3219 = vunpack.c.h.b16 %v3040
      %v3220 = vunpack.c.l.b16 %v3041
      %v3221 = vunpack.c.l.b16 %v3042
      %v3222 = vunpack.c.h.b16 %v3042
      %v3223 = vunpack.c.l.b16 %v3043
      %v3224 = vunpack.c.l.b16 %v3044
      %v3225 = vunpack.c.h.b16 %v3044
      %v3226 = vunpack.c.l.b16 %v3045
      %v3227 = vunpack.c.l.b16 %v3046
      %v3228 = vunpack.c.h.b16 %v3046
      %v3229 = vunpack.c.l.b16 %v3047
      %v3230 = vunpack.c.l.b16 %v3048
      %v3231 = vunpack.c.h.b16 %v3048
      %v3232 = vunpack.c.l.b16 %v3049
      %v3233 = vunpack.c.l.b16 %v3050
      %v3234 = vunpack.c.h.b16 %v3050
      %v3235 = vunpack.c.l.b16 %v3051
      %v3236 = vunpack.c.l.b16 %v3052
      %v3237 = vunpack.c.h.b16 %v3052
      %v3238 = vunpack.c.l.b16 %v3053
      %v3239 = vunpack.c.l.b16 %v3054
      %v3240 = vunpack.c.h.b16 %v3054
      %v3241 = vunpack.c.l.b16 %v3055
      %v3242 = vunpack.c.l.b16 %v3056
      %v3243 = vunpack.c.h.b16 %v3056
      %v3244 = vunpack.c.l.b16 %v3057
      %v3245 = vunpack.c.l.b16 %v3058
      %v3246 = vunpack.c.h.b16 %v3058
      %v3247 = vunpack.c.l.b16 %v3059
      %v3248 = vpack.c.b16 %v3203, %v3200
      %v3249 = vpack.c.b16 %v3204, %v3201
      %v3250 = vpack.c.b16 %v3205, %v3202
      %v3251 = vpack.c.b16 %v3209, %v3206
      %v3252 = vpack.c.b16 %v3210, %v3207
      %v3253 = vpack.c.b16 %v3211, %v3208
      %v3254 = vpack.c.b16 %v3215, %v3212
      %v3255 = vpack.c.b16 %v3216, %v3213
      %v3256 = vpack.c.b16 %v3217, %v3214
      %v3257 = vpack.c.b16 %v3221, %v3218
      %v3258 = vpack.c.b16 %v3222, %v3219
      %v3259 = vpack.c.b16 %v3223, %v3220
      %v3260 = vpack.c.b16 %v3227, %v3224
      %v3261 = vpack.c.b16 %v3228, %v3225
      %v3262 = vpack.c.b16 %v3229, %v3226
      %v3263 = vpack.c.b16 %v3233, %v3230
      %v3264 = vpack.c.b16 %v3234, %v3231
      %v3265 = vpack.c.b16 %v3235, %v3232
      %v3266 = vpack.c.b16 %v3239, %v3236
      %v3267 = vpack.c.b16 %v3240, %v3237
      %v3268 = vpack.c.b16 %v3241, %v3238
      %v3269 = vpack.c.b16 %v3245, %v3242
      %v3270 = vpack.c.b16 %v3246, %v3243
      %v3271 = vpack.c.b16 %v3247, %v3244
      %3296 = vmatpush.bf16.msra.mxu0 %v3269
      %3297 = vmatpush.bf16.msra.mxu0 %v3266
      %3298 = vmatpush.bf16.msra.mxu0 %v3263
      %3299 = vmatpush.bf16.msra.mxu0 %v3260
      %3300 = vmatpush.bf16.msra.mxu0 %v3257
      %3301 = vmatpush.bf16.msra.mxu0 %v3254
      %3302 = vmatpush.bf16.msra.mxu0 %v3251
      %3303 = vmatpush.bf16.msra.mxu0 %v3248
      %3304 = vmatmul.bf16.gmra.mxu0 %v3132
      %v3305 = vpop.f32.mrf.mxu0
      %v3306 = vadd.f32 0.0, %v3305
      %v3307 = vpop.f32.mrf.mxu0
      %v3308 = vadd.f32 0.0, %v3307
      %3309 = vmatmul.bf16.gmra.mxu0 %v3133
      %v3310 = vpop.f32.mrf.mxu0
      %v3311 = vadd.f32 0.0, %v3310
      %v3312 = vpop.f32.mrf.mxu0
      %v3313 = vadd.f32 0.0, %v3312
      %3314 = vmatmul.bf16.gmra.mxu0 %v3134
      %v3315 = vpop.f32.mrf.mxu0
      %v3316 = vadd.f32 0.0, %v3315
      %v3317 = vpop.f32.mrf.mxu0
      %v3318 = vadd.f32 0.0, %v3317
      %3319 = vmatmul.bf16.gmra.mxu0 %v3135
      %v3320 = vpop.f32.mrf.mxu0
      %v3321 = vadd.f32 0.0, %v3320
      %v3322 = vpop.f32.mrf.mxu0
      %v3323 = vadd.f32 0.0, %v3322
      %3324 = vmatmul.bf16.gmra.mxu0 %v3136
      %v3325 = vpop.f32.mrf.mxu0
      %v3326 = vadd.f32 0.0, %v3325
      %v3327 = vpop.f32.mrf.mxu0
      %v3328 = vadd.f32 0.0, %v3327
      %3329 = vmatmul.bf16.gmra.mxu0 %v3137
      %v3330 = vpop.f32.mrf.mxu0
      %v3331 = vadd.f32 0.0, %v3330
      %v3332 = vpop.f32.mrf.mxu0
      %v3333 = vadd.f32 0.0, %v3332
      %3334 = vmatmul.bf16.gmra.mxu0 %v3138
      %v3335 = vpop.f32.mrf.mxu0
      %v3336 = vadd.f32 0.0, %v3335
      %v3337 = vpop.f32.mrf.mxu0
      %v3338 = vadd.f32 0.0, %v3337
      %3339 = vmatmul.bf16.gmra.mxu0 %v3139
      %v3340 = vpop.f32.mrf.mxu0
      %v3341 = vadd.f32 0.0, %v3340
      %v3342 = vpop.f32.mrf.mxu0
      %v3343 = vadd.f32 0.0, %v3342
      %3344 = vmatmul.bf16.gmra.mxu0 %v3140
      %v3345 = vpop.f32.mrf.mxu0
      %v3346 = vadd.f32 0.0, %v3345
      %v3347 = vpop.f32.mrf.mxu0
      %v3348 = vadd.f32 0.0, %v3347
      %3349 = vmatmul.bf16.gmra.mxu0 %v3141
      %v3350 = vpop.f32.mrf.mxu0
      %v3351 = vadd.f32 0.0, %v3350
      %v3352 = vpop.f32.mrf.mxu0
      %v3353 = vadd.f32 0.0, %v3352
      %3354 = vmatmul.bf16.gmra.mxu0 %v3142
      %v3355 = vpop.f32.mrf.mxu0
      %v3356 = vadd.f32 0.0, %v3355
      %v3357 = vpop.f32.mrf.mxu0
      %v3358 = vadd.f32 0.0, %v3357
      %3359 = vmatmul.bf16.gmra.mxu0 %v3143
      %v3360 = vpop.f32.mrf.mxu0
      %v3361 = vadd.f32 0.0, %v3360
      %v3362 = vpop.f32.mrf.mxu0
      %v3363 = vadd.f32 0.0, %v3362
      %3364 = vmatmul.bf16.gmra.mxu0 %v3144
      %v3365 = vpop.f32.mrf.mxu0
      %v3366 = vadd.f32 0.0, %v3365
      %v3367 = vpop.f32.mrf.mxu0
      %v3368 = vadd.f32 0.0, %v3367
      %3369 = vmatmul.bf16.gmra.mxu0 %v3145
      %v3370 = vpop.f32.mrf.mxu0
      %v3371 = vadd.f32 0.0, %v3370
      %v3372 = vpop.f32.mrf.mxu0
      %v3373 = vadd.f32 0.0, %v3372
      %3374 = vmatmul.bf16.gmra.mxu0 %v3146
      %v3375 = vpop.f32.mrf.mxu0
      %v3376 = vadd.f32 0.0, %v3375
      %v3377 = vpop.f32.mrf.mxu0
      %v3378 = vadd.f32 0.0, %v3377
      %3379 = vmatmul.bf16.gmra.mxu0 %v3147
      %v3380 = vpop.f32.mrf.mxu0
      %v3381 = vadd.f32 0.0, %v3380
      %v3382 = vpop.f32.mrf.mxu0
      %v3383 = vadd.f32 0.0, %v3382
      %3384 = vmatmul.bf16.gmra.mxu0 %v3148
      %v3385 = vpop.f32.mrf.mxu0
      %v3386 = vadd.f32 0.0, %v3385
      %v3387 = vpop.f32.mrf.mxu0
      %v3388 = vadd.f32 0.0, %v3387
      %3389 = vmatmul.bf16.gmra.mxu0 %v3149
      %v3390 = vpop.f32.mrf.mxu0
      %v3391 = vadd.f32 0.0, %v3390
      %v3392 = vpop.f32.mrf.mxu0
      %v3393 = vadd.f32 0.0, %v3392
      %3394 = vdwg.mxu0
      %3395 = vmatpush.bf16.msra.mxu0 %v3270
      %3396 = vmatpush.bf16.msra.mxu0 %v3267
      %3397 = vmatpush.bf16.msra.mxu0 %v3264
      %3398 = vmatpush.bf16.msra.mxu0 %v3261
      %3399 = vmatpush.bf16.msra.mxu0 %v3258
      %3400 = vmatpush.bf16.msra.mxu0 %v3255
      %3401 = vmatpush.bf16.msra.mxu0 %v3252
      %3402 = vmatpush.bf16.msra.mxu0 %v3249
      %3403 = vmatmul.bf16.gmra.mxu0 %v3132
      %v3404 = vpop.f32.mrf.mxu0
      %v3405 = vadd.f32 0.0, %v3404
      %v3406 = vpop.f32.mrf.mxu0
      %v3407 = vadd.f32 0.0, %v3406
      %3408 = vmatmul.bf16.gmra.mxu0 %v3133
      %v3409 = vpop.f32.mrf.mxu0
      %v3410 = vadd.f32 0.0, %v3409
      %v3411 = vpop.f32.mrf.mxu0
      %v3412 = vadd.f32 0.0, %v3411
      %3413 = vmatmul.bf16.gmra.mxu0 %v3134
      %v3414 = vpop.f32.mrf.mxu0
      %v3415 = vadd.f32 0.0, %v3414
      %v3416 = vpop.f32.mrf.mxu0
      %v3417 = vadd.f32 0.0, %v3416
      %3418 = vmatmul.bf16.gmra.mxu0 %v3135
      %v3419 = vpop.f32.mrf.mxu0
      %v3420 = vadd.f32 0.0, %v3419
      %v3421 = vpop.f32.mrf.mxu0
      %v3422 = vadd.f32 0.0, %v3421
      %3423 = vmatmul.bf16.gmra.mxu0 %v3136
      %v3424 = vpop.f32.mrf.mxu0
      %v3425 = vadd.f32 0.0, %v3424
      %v3426 = vpop.f32.mrf.mxu0
      %v3427 = vadd.f32 0.0, %v3426
      %3428 = vmatmul.bf16.gmra.mxu0 %v3137
      %v3429 = vpop.f32.mrf.mxu0
      %v3430 = vadd.f32 0.0, %v3429
      %v3431 = vpop.f32.mrf.mxu0
      %v3432 = vadd.f32 0.0, %v3431
      %3433 = vmatmul.bf16.gmra.mxu0 %v3138
      %v3434 = vpop.f32.mrf.mxu0
      %v3435 = vadd.f32 0.0, %v3434
      %v3436 = vpop.f32.mrf.mxu0
      %v3437 = vadd.f32 0.0, %v3436
      %3438 = vmatmul.bf16.gmra.mxu0 %v3139
      %v3439 = vpop.f32.mrf.mxu0
      %v3440 = vadd.f32 0.0, %v3439
      %v3441 = vpop.f32.mrf.mxu0
      %v3442 = vadd.f32 0.0, %v3441
      %3443 = vmatmul.bf16.gmra.mxu0 %v3140
      %v3444 = vpop.f32.mrf.mxu0
      %v3445 = vadd.f32 0.0, %v3444
      %v3446 = vpop.f32.mrf.mxu0
      %v3447 = vadd.f32 0.0, %v3446
      %3448 = vmatmul.bf16.gmra.mxu0 %v3141
      %v3449 = vpop.f32.mrf.mxu0
      %v3450 = vadd.f32 0.0, %v3449
      %v3451 = vpop.f32.mrf.mxu0
      %v3452 = vadd.f32 0.0, %v3451
      %3453 = vmatmul.bf16.gmra.mxu0 %v3142
      %v3454 = vpop.f32.mrf.mxu0
      %v3455 = vadd.f32 0.0, %v3454
      %v3456 = vpop.f32.mrf.mxu0
      %v3457 = vadd.f32 0.0, %v3456
      %3458 = vmatmul.bf16.gmra.mxu0 %v3143
      %v3459 = vpop.f32.mrf.mxu0
      %v3460 = vadd.f32 0.0, %v3459
      %v3461 = vpop.f32.mrf.mxu0
      %v3462 = vadd.f32 0.0, %v3461
      %3463 = vmatmul.bf16.gmra.mxu0 %v3144
      %v3464 = vpop.f32.mrf.mxu0
      %v3465 = vadd.f32 0.0, %v3464
      %v3466 = vpop.f32.mrf.mxu0
      %v3467 = vadd.f32 0.0, %v3466
      %3468 = vmatmul.bf16.gmra.mxu0 %v3145
      %v3469 = vpop.f32.mrf.mxu0
      %v3470 = vadd.f32 0.0, %v3469
      %v3471 = vpop.f32.mrf.mxu0
      %v3472 = vadd.f32 0.0, %v3471
      %3473 = vmatmul.bf16.gmra.mxu0 %v3146
      %v3474 = vpop.f32.mrf.mxu0
      %v3475 = vadd.f32 0.0, %v3474
      %v3476 = vpop.f32.mrf.mxu0
      %v3477 = vadd.f32 0.0, %v3476
      %3478 = vmatmul.bf16.gmra.mxu0 %v3147
      %v3479 = vpop.f32.mrf.mxu0
      %v3480 = vadd.f32 0.0, %v3479
      %v3481 = vpop.f32.mrf.mxu0
      %v3482 = vadd.f32 0.0, %v3481
      %3483 = vmatmul.bf16.gmra.mxu0 %v3148
      %v3484 = vpop.f32.mrf.mxu0
      %v3485 = vadd.f32 0.0, %v3484
      %v3486 = vpop.f32.mrf.mxu0
      %v3487 = vadd.f32 0.0, %v3486
      %3488 = vmatmul.bf16.gmra.mxu0 %v3149
      %v3489 = vpop.f32.mrf.mxu0
      %v3490 = vadd.f32 0.0, %v3489
      %v3491 = vpop.f32.mrf.mxu0
      %v3492 = vadd.f32 0.0, %v3491
      %3493 = vdwg.mxu0
      %3494 = vmatpush.bf16.msra.mxu0 %v3271
      %3495 = vmatpush.bf16.msra.mxu0 %v3268
      %3496 = vmatpush.bf16.msra.mxu0 %v3265
      %3497 = vmatpush.bf16.msra.mxu0 %v3262
      %3498 = vmatpush.bf16.msra.mxu0 %v3259
      %3499 = vmatpush.bf16.msra.mxu0 %v3256
      %3500 = vmatpush.bf16.msra.mxu0 %v3253
      %3501 = vmatpush.bf16.msra.mxu0 %v3250
      %3502 = vmatmul.bf16.gmra.mxu0 %v3132
      %v3503 = vpop.f32.mrf.mxu0
      %v3504 = vadd.f32 0.0, %v3503
      %v3505 = vpop.f32.mrf.mxu0
      %v3506 = vadd.f32 0.0, %v3505
      %3507 = vmatmul.bf16.gmra.mxu0 %v3133
      %v3508 = vpop.f32.mrf.mxu0
      %v3509 = vadd.f32 0.0, %v3508
      %v3510 = vpop.f32.mrf.mxu0
      %v3511 = vadd.f32 0.0, %v3510
      %3512 = vmatmul.bf16.gmra.mxu0 %v3134
      %v3513 = vpop.f32.mrf.mxu0
      %v3514 = vadd.f32 0.0, %v3513
      %v3515 = vpop.f32.mrf.mxu0
      %v3516 = vadd.f32 0.0, %v3515
      %3517 = vmatmul.bf16.gmra.mxu0 %v3135
      %v3518 = vpop.f32.mrf.mxu0
      %v3519 = vadd.f32 0.0, %v3518
      %v3520 = vpop.f32.mrf.mxu0
      %v3521 = vadd.f32 0.0, %v3520
      %3522 = vmatmul.bf16.gmra.mxu0 %v3136
      %v3523 = vpop.f32.mrf.mxu0
      %v3524 = vadd.f32 0.0, %v3523
      %v3525 = vpop.f32.mrf.mxu0
      %v3526 = vadd.f32 0.0, %v3525
      %3527 = vmatmul.bf16.gmra.mxu0 %v3137
      %v3528 = vpop.f32.mrf.mxu0
      %v3529 = vadd.f32 0.0, %v3528
      %v3530 = vpop.f32.mrf.mxu0
      %v3531 = vadd.f32 0.0, %v3530
      %3532 = vmatmul.bf16.gmra.mxu0 %v3138
      %v3533 = vpop.f32.mrf.mxu0
      %v3534 = vadd.f32 0.0, %v3533
      %v3535 = vpop.f32.mrf.mxu0
      %v3536 = vadd.f32 0.0, %v3535
      %3537 = vmatmul.bf16.gmra.mxu0 %v3139
      %v3538 = vpop.f32.mrf.mxu0
      %v3539 = vadd.f32 0.0, %v3538
      %v3540 = vpop.f32.mrf.mxu0
      %v3541 = vadd.f32 0.0, %v3540
      %3542 = vmatmul.bf16.gmra.mxu0 %v3140
      %v3543 = vpop.f32.mrf.mxu0
      %v3544 = vadd.f32 0.0, %v3543
      %v3545 = vpop.f32.mrf.mxu0
      %v3546 = vadd.f32 0.0, %v3545
      %3547 = vmatmul.bf16.gmra.mxu0 %v3141
      %v3548 = vpop.f32.mrf.mxu0
      %v3549 = vadd.f32 0.0, %v3548
      %v3550 = vpop.f32.mrf.mxu0
      %v3551 = vadd.f32 0.0, %v3550
      %3552 = vmatmul.bf16.gmra.mxu0 %v3142
      %v3553 = vpop.f32.mrf.mxu0
      %v3554 = vadd.f32 0.0, %v3553
      %v3555 = vpop.f32.mrf.mxu0
      %v3556 = vadd.f32 0.0, %v3555
      %3557 = vmatmul.bf16.gmra.mxu0 %v3143
      %v3558 = vpop.f32.mrf.mxu0
      %v3559 = vadd.f32 0.0, %v3558
      %v3560 = vpop.f32.mrf.mxu0
      %v3561 = vadd.f32 0.0, %v3560
      %3562 = vmatmul.bf16.gmra.mxu0 %v3144
      %v3563 = vpop.f32.mrf.mxu0
      %v3564 = vadd.f32 0.0, %v3563
      %v3565 = vpop.f32.mrf.mxu0
      %v3566 = vadd.f32 0.0, %v3565
      %3567 = vmatmul.bf16.gmra.mxu0 %v3145
      %v3568 = vpop.f32.mrf.mxu0
      %v3569 = vadd.f32 0.0, %v3568
      %v3570 = vpop.f32.mrf.mxu0
      %v3571 = vadd.f32 0.0, %v3570
      %3572 = vmatmul.bf16.gmra.mxu0 %v3146
      %v3573 = vpop.f32.mrf.mxu0
      %v3574 = vadd.f32 0.0, %v3573
      %v3575 = vpop.f32.mrf.mxu0
      %v3576 = vadd.f32 0.0, %v3575
      %3577 = vmatmul.bf16.gmra.mxu0 %v3147
      %v3578 = vpop.f32.mrf.mxu0
      %v3579 = vadd.f32 0.0, %v3578
      %v3580 = vpop.f32.mrf.mxu0
      %v3581 = vadd.f32 0.0, %v3580
      %3582 = vmatmul.bf16.gmra.mxu0 %v3148
      %v3583 = vpop.f32.mrf.mxu0
      %v3584 = vadd.f32 0.0, %v3583
      %v3585 = vpop.f32.mrf.mxu0
      %v3586 = vadd.f32 0.0, %v3585
      %3587 = vmatmul.bf16.gmra.mxu0 %v3149
      %v3588 = vpop.f32.mrf.mxu0
      %v3589 = vadd.f32 0.0, %v3588
      %v3590 = vpop.f32.mrf.mxu0
      %v3591 = vadd.f32 0.0, %v3590
      %3592 = vdwg.mxu0
      %v3593 = vld [vmem:[#allocation2 + $0x8] sm:$0xf]
      %v3594 = vld [vmem:[#allocation2 + $0xc] sm:$0xf]
      %v3595 = vld [vmem:[#allocation2 + $0x10] sm:$0xf]
      %v3596 = vld [vmem:[#allocation2 + $0x14] sm:$0xf]
      %v3597 = vld [vmem:[#allocation2 + $0x18] sm:$0xf]
      %v3598 = vld [vmem:[#allocation2 + $0x1c] sm:$0xf]
      %v3599 = vld [vmem:[#allocation2 + $0x20] sm:$0xf]
      %v3600 = vld [vmem:[#allocation2 + $0x24] sm:$0xf]
      %v3601 = vld [vmem:[#allocation2 + $0x28] sm:$0xf]
      %v3602 = vld [vmem:[#allocation2 + $0x2c] sm:$0xf]
      %v3603 = vld [vmem:[#allocation2 + $0x30] sm:$0xf]
      %v3604 = vld [vmem:[#allocation2 + $0x34] sm:$0xf]
      %v3605 = vld [vmem:[#allocation2 + $0x38] sm:$0xf]
      %v3606 = vld [vmem:[#allocation2 + $0x3c] sm:$0xf]
      %v3607 = vld [vmem:[#allocation2 + $0x40] sm:$0xf]
      %v3608 = vld [vmem:[#allocation2 + $0x44] sm:$0xf]
      %v3609 = vld [vmem:[#allocation2 + $0x48] sm:$0xf]
      %v3610 = vld [vmem:[#allocation2 + $0x4c] sm:$0xf]
      %v3611 = vld [vmem:[#allocation2 + $0x50] sm:$0xf]
      %v3612 = vld [vmem:[#allocation2 + $0x54] sm:$0xf]
      %v3613 = vld [vmem:[#allocation2 + $0x58] sm:$0xf]
      %v3614 = vld [vmem:[#allocation2 + $0x5c] sm:$0xf]
      %v3615 = vld [vmem:[#allocation2 + $0x60] sm:$0xf]
      %v3616 = vld [vmem:[#allocation2 + $0x64] sm:$0xf]
      %v3617 = vld [vmem:[#allocation2 + $0x68] sm:$0xf]
      %v3618 = vld [vmem:[#allocation2 + $0x6c] sm:$0xf]
      %v3619 = vld [vmem:[#allocation2 + $0x70] sm:$0xf]
      %v3620 = vld [vmem:[#allocation2 + $0x74] sm:$0xf]
      %v3621 = vld [vmem:[#allocation2 + $0x78] sm:$0xf]
      %v3622 = vld [vmem:[#allocation2 + $0x7c] sm:$0xf]
      %v3623 = vld [vmem:[#allocation2 + $0x80] sm:$0xf]
      %v3624 = vld [vmem:[#allocation2 + $0x84] sm:$0xf]
      %v3625 = vld [vmem:[#allocation2 + $0x88] sm:$0xf]
      %v3626 = vld [vmem:[#allocation2 + $0x8c] sm:$0xf]
      %v3627 = vld [vmem:[#allocation2 + $0x90] sm:$0xf]
      %v3628 = vld [vmem:[#allocation2 + $0x94] sm:$0xf]
      %s3629 = scalar_lea.vmem %s5, 192
      %v3630 = vld [vmem:[%s3629] sm:$0xff]
      %v3631 = vld [vmem:[%s3629 + $0x8] sm:$0xf]
      %v3632 = vld [vmem:[%s3629 + $0xc] sm:$0xff]
      %v3633 = vld [vmem:[%s3629 + $0x14] sm:$0xf]
      %v3634 = vld [vmem:[%s3629 + $0x18] sm:$0xff]
      %v3635 = vld [vmem:[%s3629 + $0x20] sm:$0xf]
      %v3636 = vld [vmem:[%s3629 + $0x24] sm:$0xff]
      %v3637 = vld [vmem:[%s3629 + $0x2c] sm:$0xf]
      %v3638 = vld [vmem:[%s3629 + $0x30] sm:$0xff]
      %v3639 = vld [vmem:[%s3629 + $0x38] sm:$0xf]
      %v3640 = vld [vmem:[%s3629 + $0x3c] sm:$0xff]
      %v3641 = vld [vmem:[%s3629 + $0x44] sm:$0xf]
      %v3642 = vld [vmem:[%s3629 + $0x48] sm:$0xff]
      %v3643 = vld [vmem:[%s3629 + $0x50] sm:$0xf]
      %v3644 = vld [vmem:[%s3629 + $0x54] sm:$0xff]
      %v3645 = vld [vmem:[%s3629 + $0x5c] sm:$0xf]
      %v3646 = vld [vmem:[%s3629 + $0x60] sm:$0xff]
      %v3647 = vld [vmem:[%s3629 + $0x68] sm:$0xf]
      %v3648 = vld [vmem:[%s3629 + $0x6c] sm:$0xff]
      %v3649 = vld [vmem:[%s3629 + $0x74] sm:$0xf]
      %v3650 = vld [vmem:[%s3629 + $0x78] sm:$0xff]
      %v3651 = vld [vmem:[%s3629 + $0x80] sm:$0xf]
      %v3652 = vld [vmem:[%s3629 + $0x84] sm:$0xff]
      %v3653 = vld [vmem:[%s3629 + $0x8c] sm:$0xf]
      %v3654 = vld [vmem:[%s3629 + $0x90] sm:$0xff]
      %v3655 = vld [vmem:[%s3629 + $0x98] sm:$0xf]
      %v3656 = vld [vmem:[%s3629 + $0x9c] sm:$0xff]
      %v3657 = vld [vmem:[%s3629 + $0xa4] sm:$0xf]
      %v3658 = vld [vmem:[%s3629 + $0xa8] sm:$0xff]
      %v3659 = vld [vmem:[%s3629 + $0xb0] sm:$0xf]
      %v3660 = vld [vmem:[%s3629 + $0xb4] sm:$0xff]
      %v3661 = vld [vmem:[%s3629 + $0xbc] sm:$0xf]
      %v3698 = vunpack.c.l.b16 %v3593
      %v3699 = vunpack.c.l.b16 %v3594
      %v3700 = vunpack.c.l.b16 %v3595
      %v3701 = vunpack.c.l.b16 %v3596
      %v3702 = vunpack.c.l.b16 %v3597
      %v3703 = vunpack.c.l.b16 %v3598
      %v3704 = vunpack.c.l.b16 %v3599
      %v3705 = vunpack.c.l.b16 %v3600
      %v3706 = vunpack.c.l.b16 %v3601
      %v3707 = vunpack.c.l.b16 %v3602
      %v3708 = vunpack.c.l.b16 %v3603
      %v3709 = vunpack.c.l.b16 %v3604
      %v3710 = vunpack.c.l.b16 %v3605
      %v3711 = vunpack.c.l.b16 %v3606
      %v3712 = vunpack.c.l.b16 %v3607
      %v3713 = vunpack.c.l.b16 %v3608
      %v3714 = vunpack.c.l.b16 %v3609
      %v3715 = vunpack.c.l.b16 %v3610
      %v3716 = vunpack.c.l.b16 %v3611
      %v3717 = vunpack.c.l.b16 %v3612
      %v3718 = vunpack.c.l.b16 %v3613
      %v3719 = vunpack.c.l.b16 %v3614
      %v3720 = vunpack.c.l.b16 %v3615
      %v3721 = vunpack.c.l.b16 %v3616
      %v3722 = vunpack.c.l.b16 %v3617
      %v3723 = vunpack.c.l.b16 %v3618
      %v3724 = vunpack.c.l.b16 %v3619
      %v3725 = vunpack.c.l.b16 %v3620
      %v3726 = vunpack.c.l.b16 %v3621
      %v3727 = vunpack.c.l.b16 %v3622
      %v3728 = vunpack.c.l.b16 %v3623
      %v3729 = vunpack.c.l.b16 %v3624
      %v3730 = vunpack.c.l.b16 %v3625
      %v3731 = vunpack.c.l.b16 %v3626
      %v3732 = vunpack.c.l.b16 %v3627
      %v3733 = vunpack.c.l.b16 %v3628
      %v3734 = vpack.c.b16 %v3699, %v3698
      %v3735 = vpack.c.b16 %v3701, %v3700
      %v3736 = vpack.c.b16 %v3703, %v3702
      %v3737 = vpack.c.b16 %v3705, %v3704
      %v3738 = vpack.c.b16 %v3707, %v3706
      %v3739 = vpack.c.b16 %v3709, %v3708
      %v3740 = vpack.c.b16 %v3711, %v3710
      %v3741 = vpack.c.b16 %v3713, %v3712
      %v3742 = vpack.c.b16 %v3715, %v3714
      %v3743 = vpack.c.b16 %v3717, %v3716
      %v3744 = vpack.c.b16 %v3719, %v3718
      %v3745 = vpack.c.b16 %v3721, %v3720
      %v3746 = vpack.c.b16 %v3723, %v3722
      %v3747 = vpack.c.b16 %v3725, %v3724
      %v3748 = vpack.c.b16 %v3727, %v3726
      %v3749 = vpack.c.b16 %v3729, %v3728
      %v3750 = vpack.c.b16 %v3731, %v3730
      %v3751 = vpack.c.b16 %v3733, %v3732
      %v3802 = vunpack.c.l.b16 %v3630
      %v3803 = vunpack.c.h.b16 %v3630
      %v3804 = vunpack.c.l.b16 %v3631
      %v3805 = vunpack.c.l.b16 %v3632
      %v3806 = vunpack.c.h.b16 %v3632
      %v3807 = vunpack.c.l.b16 %v3633
      %v3808 = vunpack.c.l.b16 %v3634
      %v3809 = vunpack.c.h.b16 %v3634
      %v3810 = vunpack.c.l.b16 %v3635
      %v3811 = vunpack.c.l.b16 %v3636
      %v3812 = vunpack.c.h.b16 %v3636
      %v3813 = vunpack.c.l.b16 %v3637
      %v3814 = vunpack.c.l.b16 %v3638
      %v3815 = vunpack.c.h.b16 %v3638
      %v3816 = vunpack.c.l.b16 %v3639
      %v3817 = vunpack.c.l.b16 %v3640
      %v3818 = vunpack.c.h.b16 %v3640
      %v3819 = vunpack.c.l.b16 %v3641
      %v3820 = vunpack.c.l.b16 %v3642
      %v3821 = vunpack.c.h.b16 %v3642
      %v3822 = vunpack.c.l.b16 %v3643
      %v3823 = vunpack.c.l.b16 %v3644
      %v3824 = vunpack.c.h.b16 %v3644
      %v3825 = vunpack.c.l.b16 %v3645
      %v3826 = vunpack.c.l.b16 %v3646
      %v3827 = vunpack.c.h.b16 %v3646
      %v3828 = vunpack.c.l.b16 %v3647
      %v3829 = vunpack.c.l.b16 %v3648
      %v3830 = vunpack.c.h.b16 %v3648
      %v3831 = vunpack.c.l.b16 %v3649
      %v3832 = vunpack.c.l.b16 %v3650
      %v3833 = vunpack.c.h.b16 %v3650
      %v3834 = vunpack.c.l.b16 %v3651
      %v3835 = vunpack.c.l.b16 %v3652
      %v3836 = vunpack.c.h.b16 %v3652
      %v3837 = vunpack.c.l.b16 %v3653
      %v3838 = vunpack.c.l.b16 %v3654
      %v3839 = vunpack.c.h.b16 %v3654
      %v3840 = vunpack.c.l.b16 %v3655
      %v3841 = vunpack.c.l.b16 %v3656
      %v3842 = vunpack.c.h.b16 %v3656
      %v3843 = vunpack.c.l.b16 %v3657
      %v3844 = vunpack.c.l.b16 %v3658
      %v3845 = vunpack.c.h.b16 %v3658
      %v3846 = vunpack.c.l.b16 %v3659
      %v3847 = vunpack.c.l.b16 %v3660
      %v3848 = vunpack.c.h.b16 %v3660
      %v3849 = vunpack.c.l.b16 %v3661
      %v3850 = vpack.c.b16 %v3805, %v3802
      %v3851 = vpack.c.b16 %v3806, %v3803
      %v3852 = vpack.c.b16 %v3807, %v3804
      %v3853 = vpack.c.b16 %v3811, %v3808
      %v3854 = vpack.c.b16 %v3812, %v3809
      %v3855 = vpack.c.b16 %v3813, %v3810
      %v3856 = vpack.c.b16 %v3817, %v3814
      %v3857 = vpack.c.b16 %v3818, %v3815
      %v3858 = vpack.c.b16 %v3819, %v3816
      %v3859 = vpack.c.b16 %v3823, %v3820
      %v3860 = vpack.c.b16 %v3824, %v3821
      %v3861 = vpack.c.b16 %v3825, %v3822
      %v3862 = vpack.c.b16 %v3829, %v3826
      %v3863 = vpack.c.b16 %v3830, %v3827
      %v3864 = vpack.c.b16 %v3831, %v3828
      %v3865 = vpack.c.b16 %v3835, %v3832
      %v3866 = vpack.c.b16 %v3836, %v3833
      %v3867 = vpack.c.b16 %v3837, %v3834
      %v3868 = vpack.c.b16 %v3841, %v3838
      %v3869 = vpack.c.b16 %v3842, %v3839
      %v3870 = vpack.c.b16 %v3843, %v3840
      %v3871 = vpack.c.b16 %v3847, %v3844
      %v3872 = vpack.c.b16 %v3848, %v3845
      %v3873 = vpack.c.b16 %v3849, %v3846
      %3898 = vmatpush.bf16.msra.mxu0 %v3871
      %3899 = vmatpush.bf16.msra.mxu0 %v3868
      %3900 = vmatpush.bf16.msra.mxu0 %v3865
      %3901 = vmatpush.bf16.msra.mxu0 %v3862
      %3902 = vmatpush.bf16.msra.mxu0 %v3859
      %3903 = vmatpush.bf16.msra.mxu0 %v3856
      %3904 = vmatpush.bf16.msra.mxu0 %v3853
      %3905 = vmatpush.bf16.msra.mxu0 %v3850
      %3906 = vmatmul.bf16.gmra.mxu0 %v3734
      %v3907 = vpop.f32.mrf.mxu0
      %v3908 = vadd.f32 0.0, %v3907
      %v3909 = vpop.f32.mrf.mxu0
      %v3910 = vadd.f32 0.0, %v3909
      %3911 = vmatmul.bf16.gmra.mxu0 %v3735
      %v3912 = vpop.f32.mrf.mxu0
      %v3913 = vadd.f32 0.0, %v3912
      %v3914 = vpop.f32.mrf.mxu0
      %v3915 = vadd.f32 0.0, %v3914
      %3916 = vmatmul.bf16.gmra.mxu0 %v3736
      %v3917 = vpop.f32.mrf.mxu0
      %v3918 = vadd.f32 0.0, %v3917
      %v3919 = vpop.f32.mrf.mxu0
      %v3920 = vadd.f32 0.0, %v3919
      %3921 = vmatmul.bf16.gmra.mxu0 %v3737
      %v3922 = vpop.f32.mrf.mxu0
      %v3923 = vadd.f32 0.0, %v3922
      %v3924 = vpop.f32.mrf.mxu0
      %v3925 = vadd.f32 0.0, %v3924
      %3926 = vmatmul.bf16.gmra.mxu0 %v3738
      %v3927 = vpop.f32.mrf.mxu0
      %v3928 = vadd.f32 0.0, %v3927
      %v3929 = vpop.f32.mrf.mxu0
      %v3930 = vadd.f32 0.0, %v3929
      %3931 = vmatmul.bf16.gmra.mxu0 %v3739
      %v3932 = vpop.f32.mrf.mxu0
      %v3933 = vadd.f32 0.0, %v3932
      %v3934 = vpop.f32.mrf.mxu0
      %v3935 = vadd.f32 0.0, %v3934
      %3936 = vmatmul.bf16.gmra.mxu0 %v3740
      %v3937 = vpop.f32.mrf.mxu0
      %v3938 = vadd.f32 0.0, %v3937
      %v3939 = vpop.f32.mrf.mxu0
      %v3940 = vadd.f32 0.0, %v3939
      %3941 = vmatmul.bf16.gmra.mxu0 %v3741
      %v3942 = vpop.f32.mrf.mxu0
      %v3943 = vadd.f32 0.0, %v3942
      %v3944 = vpop.f32.mrf.mxu0
      %v3945 = vadd.f32 0.0, %v3944
      %3946 = vmatmul.bf16.gmra.mxu0 %v3742
      %v3947 = vpop.f32.mrf.mxu0
      %v3948 = vadd.f32 0.0, %v3947
      %v3949 = vpop.f32.mrf.mxu0
      %v3950 = vadd.f32 0.0, %v3949
      %3951 = vmatmul.bf16.gmra.mxu0 %v3743
      %v3952 = vpop.f32.mrf.mxu0
      %v3953 = vadd.f32 0.0, %v3952
      %v3954 = vpop.f32.mrf.mxu0
      %v3955 = vadd.f32 0.0, %v3954
      %3956 = vmatmul.bf16.gmra.mxu0 %v3744
      %v3957 = vpop.f32.mrf.mxu0
      %v3958 = vadd.f32 0.0, %v3957
      %v3959 = vpop.f32.mrf.mxu0
      %v3960 = vadd.f32 0.0, %v3959
      %3961 = vmatmul.bf16.gmra.mxu0 %v3745
      %v3962 = vpop.f32.mrf.mxu0
      %v3963 = vadd.f32 0.0, %v3962
      %v3964 = vpop.f32.mrf.mxu0
      %v3965 = vadd.f32 0.0, %v3964
      %3966 = vmatmul.bf16.gmra.mxu0 %v3746
      %v3967 = vpop.f32.mrf.mxu0
      %v3968 = vadd.f32 0.0, %v3967
      %v3969 = vpop.f32.mrf.mxu0
      %v3970 = vadd.f32 0.0, %v3969
      %3971 = vmatmul.bf16.gmra.mxu0 %v3747
      %v3972 = vpop.f32.mrf.mxu0
      %v3973 = vadd.f32 0.0, %v3972
      %v3974 = vpop.f32.mrf.mxu0
      %v3975 = vadd.f32 0.0, %v3974
      %3976 = vmatmul.bf16.gmra.mxu0 %v3748
      %v3977 = vpop.f32.mrf.mxu0
      %v3978 = vadd.f32 0.0, %v3977
      %v3979 = vpop.f32.mrf.mxu0
      %v3980 = vadd.f32 0.0, %v3979
      %3981 = vmatmul.bf16.gmra.mxu0 %v3749
      %v3982 = vpop.f32.mrf.mxu0
      %v3983 = vadd.f32 0.0, %v3982
      %v3984 = vpop.f32.mrf.mxu0
      %v3985 = vadd.f32 0.0, %v3984
      %3986 = vmatmul.bf16.gmra.mxu0 %v3750
      %v3987 = vpop.f32.mrf.mxu0
      %v3988 = vadd.f32 0.0, %v3987
      %v3989 = vpop.f32.mrf.mxu0
      %v3990 = vadd.f32 0.0, %v3989
      %3991 = vmatmul.bf16.gmra.mxu0 %v3751
      %v3992 = vpop.f32.mrf.mxu0
      %v3993 = vadd.f32 0.0, %v3992
      %v3994 = vpop.f32.mrf.mxu0
      %v3995 = vadd.f32 0.0, %v3994
      %3996 = vdwg.mxu0
      %3997 = vmatpush.bf16.msra.mxu0 %v3872
      %3998 = vmatpush.bf16.msra.mxu0 %v3869
      %3999 = vmatpush.bf16.msra.mxu0 %v3866
      %4000 = vmatpush.bf16.msra.mxu0 %v3863
      %4001 = vmatpush.bf16.msra.mxu0 %v3860
      %4002 = vmatpush.bf16.msra.mxu0 %v3857
      %4003 = vmatpush.bf16.msra.mxu0 %v3854
      %4004 = vmatpush.bf16.msra.mxu0 %v3851
      %4005 = vmatmul.bf16.gmra.mxu0 %v3734
      %v4006 = vpop.f32.mrf.mxu0
      %v4007 = vadd.f32 0.0, %v4006
      %v4008 = vpop.f32.mrf.mxu0
      %v4009 = vadd.f32 0.0, %v4008
      %4010 = vmatmul.bf16.gmra.mxu0 %v3735
      %v4011 = vpop.f32.mrf.mxu0
      %v4012 = vadd.f32 0.0, %v4011
      %v4013 = vpop.f32.mrf.mxu0
      %v4014 = vadd.f32 0.0, %v4013
      %4015 = vmatmul.bf16.gmra.mxu0 %v3736
      %v4016 = vpop.f32.mrf.mxu0
      %v4017 = vadd.f32 0.0, %v4016
      %v4018 = vpop.f32.mrf.mxu0
      %v4019 = vadd.f32 0.0, %v4018
      %4020 = vmatmul.bf16.gmra.mxu0 %v3737
      %v4021 = vpop.f32.mrf.mxu0
      %v4022 = vadd.f32 0.0, %v4021
      %v4023 = vpop.f32.mrf.mxu0
      %v4024 = vadd.f32 0.0, %v4023
      %4025 = vmatmul.bf16.gmra.mxu0 %v3738
      %v4026 = vpop.f32.mrf.mxu0
      %v4027 = vadd.f32 0.0, %v4026
      %v4028 = vpop.f32.mrf.mxu0
      %v4029 = vadd.f32 0.0, %v4028
      %4030 = vmatmul.bf16.gmra.mxu0 %v3739
      %v4031 = vpop.f32.mrf.mxu0
      %v4032 = vadd.f32 0.0, %v4031
      %v4033 = vpop.f32.mrf.mxu0
      %v4034 = vadd.f32 0.0, %v4033
      %4035 = vmatmul.bf16.gmra.mxu0 %v3740
      %v4036 = vpop.f32.mrf.mxu0
      %v4037 = vadd.f32 0.0, %v4036
      %v4038 = vpop.f32.mrf.mxu0
      %v4039 = vadd.f32 0.0, %v4038
      %4040 = vmatmul.bf16.gmra.mxu0 %v3741
      %v4041 = vpop.f32.mrf.mxu0
      %v4042 = vadd.f32 0.0, %v4041
      %v4043 = vpop.f32.mrf.mxu0
      %v4044 = vadd.f32 0.0, %v4043
      %4045 = vmatmul.bf16.gmra.mxu0 %v3742
      %v4046 = vpop.f32.mrf.mxu0
      %v4047 = vadd.f32 0.0, %v4046
      %v4048 = vpop.f32.mrf.mxu0
      %v4049 = vadd.f32 0.0, %v4048
      %4050 = vmatmul.bf16.gmra.mxu0 %v3743
      %v4051 = vpop.f32.mrf.mxu0
      %v4052 = vadd.f32 0.0, %v4051
      %v4053 = vpop.f32.mrf.mxu0
      %v4054 = vadd.f32 0.0, %v4053
      %4055 = vmatmul.bf16.gmra.mxu0 %v3744
      %v4056 = vpop.f32.mrf.mxu0
      %v4057 = vadd.f32 0.0, %v4056
      %v4058 = vpop.f32.mrf.mxu0
      %v4059 = vadd.f32 0.0, %v4058
      %4060 = vmatmul.bf16.gmra.mxu0 %v3745
      %v4061 = vpop.f32.mrf.mxu0
      %v4062 = vadd.f32 0.0, %v4061
      %v4063 = vpop.f32.mrf.mxu0
      %v4064 = vadd.f32 0.0, %v4063
      %4065 = vmatmul.bf16.gmra.mxu0 %v3746
      %v4066 = vpop.f32.mrf.mxu0
      %v4067 = vadd.f32 0.0, %v4066
      %v4068 = vpop.f32.mrf.mxu0
      %v4069 = vadd.f32 0.0, %v4068
      %4070 = vmatmul.bf16.gmra.mxu0 %v3747
      %v4071 = vpop.f32.mrf.mxu0
      %v4072 = vadd.f32 0.0, %v4071
      %v4073 = vpop.f32.mrf.mxu0
      %v4074 = vadd.f32 0.0, %v4073
      %4075 = vmatmul.bf16.gmra.mxu0 %v3748
      %v4076 = vpop.f32.mrf.mxu0
      %v4077 = vadd.f32 0.0, %v4076
      %v4078 = vpop.f32.mrf.mxu0
      %v4079 = vadd.f32 0.0, %v4078
      %4080 = vmatmul.bf16.gmra.mxu0 %v3749
      %v4081 = vpop.f32.mrf.mxu0
      %v4082 = vadd.f32 0.0, %v4081
      %v4083 = vpop.f32.mrf.mxu0
      %v4084 = vadd.f32 0.0, %v4083
      %4085 = vmatmul.bf16.gmra.mxu0 %v3750
      %v4086 = vpop.f32.mrf.mxu0
      %v4087 = vadd.f32 0.0, %v4086
      %v4088 = vpop.f32.mrf.mxu0
      %v4089 = vadd.f32 0.0, %v4088
      %4090 = vmatmul.bf16.gmra.mxu0 %v3751
      %v4091 = vpop.f32.mrf.mxu0
      %v4092 = vadd.f32 0.0, %v4091
      %v4093 = vpop.f32.mrf.mxu0
      %v4094 = vadd.f32 0.0, %v4093
      %4095 = vdwg.mxu0
      %4096 = vmatpush.bf16.msra.mxu0 %v3873
      %4097 = vmatpush.bf16.msra.mxu0 %v3870
      %4098 = vmatpush.bf16.msra.mxu0 %v3867
      %4099 = vmatpush.bf16.msra.mxu0 %v3864
      %4100 = vmatpush.bf16.msra.mxu0 %v3861
      %4101 = vmatpush.bf16.msra.mxu0 %v3858
      %4102 = vmatpush.bf16.msra.mxu0 %v3855
      %4103 = vmatpush.bf16.msra.mxu0 %v3852
      %4104 = vmatmul.bf16.gmra.mxu0 %v3734
      %v4105 = vpop.f32.mrf.mxu0
      %v4106 = vadd.f32 0.0, %v4105
      %v4107 = vpop.f32.mrf.mxu0
      %v4108 = vadd.f32 0.0, %v4107
      %4109 = vmatmul.bf16.gmra.mxu0 %v3735
      %v4110 = vpop.f32.mrf.mxu0
      %v4111 = vadd.f32 0.0, %v4110
      %v4112 = vpop.f32.mrf.mxu0
      %v4113 = vadd.f32 0.0, %v4112
      %4114 = vmatmul.bf16.gmra.mxu0 %v3736
      %v4115 = vpop.f32.mrf.mxu0
      %v4116 = vadd.f32 0.0, %v4115
      %v4117 = vpop.f32.mrf.mxu0
      %v4118 = vadd.f32 0.0, %v4117
      %4119 = vmatmul.bf16.gmra.mxu0 %v3737
      %v4120 = vpop.f32.mrf.mxu0
      %v4121 = vadd.f32 0.0, %v4120
      %v4122 = vpop.f32.mrf.mxu0
      %v4123 = vadd.f32 0.0, %v4122
      %4124 = vmatmul.bf16.gmra.mxu0 %v3738
      %v4125 = vpop.f32.mrf.mxu0
      %v4126 = vadd.f32 0.0, %v4125
      %v4127 = vpop.f32.mrf.mxu0
      %v4128 = vadd.f32 0.0, %v4127
      %4129 = vmatmul.bf16.gmra.mxu0 %v3739
      %v4130 = vpop.f32.mrf.mxu0
      %v4131 = vadd.f32 0.0, %v4130
      %v4132 = vpop.f32.mrf.mxu0
      %v4133 = vadd.f32 0.0, %v4132
      %4134 = vmatmul.bf16.gmra.mxu0 %v3740
      %v4135 = vpop.f32.mrf.mxu0
      %v4136 = vadd.f32 0.0, %v4135
      %v4137 = vpop.f32.mrf.mxu0
      %v4138 = vadd.f32 0.0, %v4137
      %4139 = vmatmul.bf16.gmra.mxu0 %v3741
      %v4140 = vpop.f32.mrf.mxu0
      %v4141 = vadd.f32 0.0, %v4140
      %v4142 = vpop.f32.mrf.mxu0
      %v4143 = vadd.f32 0.0, %v4142
      %4144 = vmatmul.bf16.gmra.mxu0 %v3742
      %v4145 = vpop.f32.mrf.mxu0
      %v4146 = vadd.f32 0.0, %v4145
      %v4147 = vpop.f32.mrf.mxu0
      %v4148 = vadd.f32 0.0, %v4147
      %4149 = vmatmul.bf16.gmra.mxu0 %v3743
      %v4150 = vpop.f32.mrf.mxu0
      %v4151 = vadd.f32 0.0, %v4150
      %v4152 = vpop.f32.mrf.mxu0
      %v4153 = vadd.f32 0.0, %v4152
      %4154 = vmatmul.bf16.gmra.mxu0 %v3744
      %v4155 = vpop.f32.mrf.mxu0
      %v4156 = vadd.f32 0.0, %v4155
      %v4157 = vpop.f32.mrf.mxu0
      %v4158 = vadd.f32 0.0, %v4157
      %4159 = vmatmul.bf16.gmra.mxu0 %v3745
      %v4160 = vpop.f32.mrf.mxu0
      %v4161 = vadd.f32 0.0, %v4160
      %v4162 = vpop.f32.mrf.mxu0
      %v4163 = vadd.f32 0.0, %v4162
      %4164 = vmatmul.bf16.gmra.mxu0 %v3746
      %v4165 = vpop.f32.mrf.mxu0
      %v4166 = vadd.f32 0.0, %v4165
      %v4167 = vpop.f32.mrf.mxu0
      %v4168 = vadd.f32 0.0, %v4167
      %4169 = vmatmul.bf16.gmra.mxu0 %v3747
      %v4170 = vpop.f32.mrf.mxu0
      %v4171 = vadd.f32 0.0, %v4170
      %v4172 = vpop.f32.mrf.mxu0
      %v4173 = vadd.f32 0.0, %v4172
      %4174 = vmatmul.bf16.gmra.mxu0 %v3748
      %v4175 = vpop.f32.mrf.mxu0
      %v4176 = vadd.f32 0.0, %v4175
      %v4177 = vpop.f32.mrf.mxu0
      %v4178 = vadd.f32 0.0, %v4177
      %4179 = vmatmul.bf16.gmra.mxu0 %v3749
      %v4180 = vpop.f32.mrf.mxu0
      %v4181 = vadd.f32 0.0, %v4180
      %v4182 = vpop.f32.mrf.mxu0
      %v4183 = vadd.f32 0.0, %v4182
      %4184 = vmatmul.bf16.gmra.mxu0 %v3750
      %v4185 = vpop.f32.mrf.mxu0
      %v4186 = vadd.f32 0.0, %v4185
      %v4187 = vpop.f32.mrf.mxu0
      %v4188 = vadd.f32 0.0, %v4187
      %4189 = vmatmul.bf16.gmra.mxu0 %v3751
      %v4190 = vpop.f32.mrf.mxu0
      %v4191 = vadd.f32 0.0, %v4190
      %v4192 = vpop.f32.mrf.mxu0
      %v4193 = vadd.f32 0.0, %v4192
      %4194 = vdwg.mxu0
      %v4195 = vadd.f32 %v3306, %v3908
      %v4196 = vadd.f32 %v3308, %v3910
      %v4197 = vadd.f32 %v3311, %v3913
      %v4198 = vadd.f32 %v3313, %v3915
      %v4199 = vadd.f32 %v3316, %v3918
      %v4200 = vadd.f32 %v3318, %v3920
      %v4201 = vadd.f32 %v3321, %v3923
      %v4202 = vadd.f32 %v3323, %v3925
      %v4203 = vadd.f32 %v3326, %v3928
      %v4204 = vadd.f32 %v3328, %v3930
      %v4205 = vadd.f32 %v3331, %v3933
      %v4206 = vadd.f32 %v3333, %v3935
      %v4207 = vadd.f32 %v3336, %v3938
      %v4208 = vadd.f32 %v3338, %v3940
      %v4209 = vadd.f32 %v3341, %v3943
      %v4210 = vadd.f32 %v3343, %v3945
      %v4211 = vadd.f32 %v3346, %v3948
      %v4212 = vadd.f32 %v3348, %v3950
      %v4213 = vadd.f32 %v3351, %v3953
      %v4214 = vadd.f32 %v3353, %v3955
      %v4215 = vadd.f32 %v3356, %v3958
      %v4216 = vadd.f32 %v3358, %v3960
      %v4217 = vadd.f32 %v3361, %v3963
      %v4218 = vadd.f32 %v3363, %v3965
      %v4219 = vadd.f32 %v3366, %v3968
      %v4220 = vadd.f32 %v3368, %v3970
      %v4221 = vadd.f32 %v3371, %v3973
      %v4222 = vadd.f32 %v3373, %v3975
      %v4223 = vadd.f32 %v3376, %v3978
      %v4224 = vadd.f32 %v3378, %v3980
      %v4225 = vadd.f32 %v3381, %v3983
      %v4226 = vadd.f32 %v3383, %v3985
      %v4227 = vadd.f32 %v3386, %v3988
      %v4228 = vadd.f32 %v3388, %v3990
      %v4229 = vadd.f32 %v3391, %v3993
      %v4230 = vadd.f32 %v3393, %v3995
      %v4231 = vadd.f32 %v3405, %v4007
      %v4232 = vadd.f32 %v3407, %v4009
      %v4233 = vadd.f32 %v3410, %v4012
      %v4234 = vadd.f32 %v3412, %v4014
      %v4235 = vadd.f32 %v3415, %v4017
      %v4236 = vadd.f32 %v3417, %v4019
      %v4237 = vadd.f32 %v3420, %v4022
      %v4238 = vadd.f32 %v3422, %v4024
      %v4239 = vadd.f32 %v3425, %v4027
      %v4240 = vadd.f32 %v3427, %v4029
      %v4241 = vadd.f32 %v3430, %v4032
      %v4242 = vadd.f32 %v3432, %v4034
      %v4243 = vadd.f32 %v3435, %v4037
      %v4244 = vadd.f32 %v3437, %v4039
      %v4245 = vadd.f32 %v3440, %v4042
      %v4246 = vadd.f32 %v3442, %v4044
      %v4247 = vadd.f32 %v3445, %v4047
      %v4248 = vadd.f32 %v3447, %v4049
      %v4249 = vadd.f32 %v3450, %v4052
      %v4250 = vadd.f32 %v3452, %v4054
      %v4251 = vadd.f32 %v3455, %v4057
      %v4252 = vadd.f32 %v3457, %v4059
      %v4253 = vadd.f32 %v3460, %v4062
      %v4254 = vadd.f32 %v3462, %v4064
      %v4255 = vadd.f32 %v3465, %v4067
      %v4256 = vadd.f32 %v3467, %v4069
      %v4257 = vadd.f32 %v3470, %v4072
      %v4258 = vadd.f32 %v3472, %v4074
      %v4259 = vadd.f32 %v3475, %v4077
      %v4260 = vadd.f32 %v3477, %v4079
      %v4261 = vadd.f32 %v3480, %v4082
      %v4262 = vadd.f32 %v3482, %v4084
      %v4263 = vadd.f32 %v3485, %v4087
      %v4264 = vadd.f32 %v3487, %v4089
      %v4265 = vadd.f32 %v3490, %v4092
      %v4266 = vadd.f32 %v3492, %v4094
      %v4267 = vadd.f32 %v3504, %v4106
      %v4268 = vadd.f32 %v3506, %v4108
      %v4269 = vadd.f32 %v3509, %v4111
      %v4270 = vadd.f32 %v3511, %v4113
      %v4271 = vadd.f32 %v3514, %v4116
      %v4272 = vadd.f32 %v3516, %v4118
      %v4273 = vadd.f32 %v3519, %v4121
      %v4274 = vadd.f32 %v3521, %v4123
      %v4275 = vadd.f32 %v3524, %v4126
      %v4276 = vadd.f32 %v3526, %v4128
      %v4277 = vadd.f32 %v3529, %v4131
      %v4278 = vadd.f32 %v3531, %v4133
      %v4279 = vadd.f32 %v3534, %v4136
      %v4280 = vadd.f32 %v3536, %v4138
      %v4281 = vadd.f32 %v3539, %v4141
      %v4282 = vadd.f32 %v3541, %v4143
      %v4283 = vadd.f32 %v3544, %v4146
      %v4284 = vadd.f32 %v3546, %v4148
      %v4285 = vadd.f32 %v3549, %v4151
      %v4286 = vadd.f32 %v3551, %v4153
      %v4287 = vadd.f32 %v3554, %v4156
      %v4288 = vadd.f32 %v3556, %v4158
      %v4289 = vadd.f32 %v3559, %v4161
      %v4290 = vadd.f32 %v3561, %v4163
      %v4291 = vadd.f32 %v3564, %v4166
      %v4292 = vadd.f32 %v3566, %v4168
      %v4293 = vadd.f32 %v3569, %v4171
      %v4294 = vadd.f32 %v3571, %v4173
      %v4295 = vadd.f32 %v3574, %v4176
      %v4296 = vadd.f32 %v3576, %v4178
      %v4297 = vadd.f32 %v3579, %v4181
      %v4298 = vadd.f32 %v3581, %v4183
      %v4299 = vadd.f32 %v3584, %v4186
      %v4300 = vadd.f32 %v3586, %v4188
      %v4301 = vadd.f32 %v3589, %v4191
      %v4302 = vadd.f32 %v3591, %v4193
      %v4303 = vld [vmem:[#allocation2 + $0x10] sm:$0xf]
      %v4304 = vld [vmem:[#allocation2 + $0x14] sm:$0xf]
      %v4305 = vld [vmem:[#allocation2 + $0x18] sm:$0xf]
      %v4306 = vld [vmem:[#allocation2 + $0x1c] sm:$0xf]
      %v4307 = vld [vmem:[#allocation2 + $0x20] sm:$0xf]
      %v4308 = vld [vmem:[#allocation2 + $0x24] sm:$0xf]
      %v4309 = vld [vmem:[#allocation2 + $0x28] sm:$0xf]
      %v4310 = vld [vmem:[#allocation2 + $0x2c] sm:$0xf]
      %v4311 = vld [vmem:[#allocation2 + $0x30] sm:$0xf]
      %v4312 = vld [vmem:[#allocation2 + $0x34] sm:$0xf]
      %v4313 = vld [vmem:[#allocation2 + $0x38] sm:$0xf]
      %v4314 = vld [vmem:[#allocation2 + $0x3c] sm:$0xf]
      %v4315 = vld [vmem:[#allocation2 + $0x40] sm:$0xf]
      %v4316 = vld [vmem:[#allocation2 + $0x44] sm:$0xf]
      %v4317 = vld [vmem:[#allocation2 + $0x48] sm:$0xf]
      %v4318 = vld [vmem:[#allocation2 + $0x4c] sm:$0xf]
      %v4319 = vld [vmem:[#allocation2 + $0x50] sm:$0xf]
      %v4320 = vld [vmem:[#allocation2 + $0x54] sm:$0xf]
      %v4321 = vld [vmem:[#allocation2 + $0x58] sm:$0xf]
      %v4322 = vld [vmem:[#allocation2 + $0x5c] sm:$0xf]
      %v4323 = vld [vmem:[#allocation2 + $0x60] sm:$0xf]
      %v4324 = vld [vmem:[#allocation2 + $0x64] sm:$0xf]
      %v4325 = vld [vmem:[#allocation2 + $0x68] sm:$0xf]
      %v4326 = vld [vmem:[#allocation2 + $0x6c] sm:$0xf]
      %v4327 = vld [vmem:[#allocation2 + $0x70] sm:$0xf]
      %v4328 = vld [vmem:[#allocation2 + $0x74] sm:$0xf]
      %v4329 = vld [vmem:[#allocation2 + $0x78] sm:$0xf]
      %v4330 = vld [vmem:[#allocation2 + $0x7c] sm:$0xf]
      %v4331 = vld [vmem:[#allocation2 + $0x80] sm:$0xf]
      %v4332 = vld [vmem:[#allocation2 + $0x84] sm:$0xf]
      %v4333 = vld [vmem:[#allocation2 + $0x88] sm:$0xf]
      %v4334 = vld [vmem:[#allocation2 + $0x8c] sm:$0xf]
      %v4335 = vld [vmem:[#allocation2 + $0x90] sm:$0xf]
      %v4336 = vld [vmem:[#allocation2 + $0x94] sm:$0xf]
      %v4337 = vld [vmem:[#allocation2 + $0x98] sm:$0xf]
      %v4338 = vld [vmem:[#allocation2 + $0x9c] sm:$0xf]
      %s4339 = scalar_lea.vmem %s5, 384
      %v4340 = vld [vmem:[%s4339] sm:$0xff]
      %v4341 = vld [vmem:[%s4339 + $0x8] sm:$0xf]
      %v4342 = vld [vmem:[%s4339 + $0xc] sm:$0xff]
      %v4343 = vld [vmem:[%s4339 + $0x14] sm:$0xf]
      %v4344 = vld [vmem:[%s4339 + $0x18] sm:$0xff]
      %v4345 = vld [vmem:[%s4339 + $0x20] sm:$0xf]
      %v4346 = vld [vmem:[%s4339 + $0x24] sm:$0xff]
      %v4347 = vld [vmem:[%s4339 + $0x2c] sm:$0xf]
      %v4348 = vld [vmem:[%s4339 + $0x30] sm:$0xff]
      %v4349 = vld [vmem:[%s4339 + $0x38] sm:$0xf]
      %v4350 = vld [vmem:[%s4339 + $0x3c] sm:$0xff]
      %v4351 = vld [vmem:[%s4339 + $0x44] sm:$0xf]
      %v4352 = vld [vmem:[%s4339 + $0x48] sm:$0xff]
      %v4353 = vld [vmem:[%s4339 + $0x50] sm:$0xf]
      %v4354 = vld [vmem:[%s4339 + $0x54] sm:$0xff]
      %v4355 = vld [vmem:[%s4339 + $0x5c] sm:$0xf]
      %v4356 = vld [vmem:[%s4339 + $0x60] sm:$0xff]
      %v4357 = vld [vmem:[%s4339 + $0x68] sm:$0xf]
      %v4358 = vld [vmem:[%s4339 + $0x6c] sm:$0xff]
      %v4359 = vld [vmem:[%s4339 + $0x74] sm:$0xf]
      %v4360 = vld [vmem:[%s4339 + $0x78] sm:$0xff]
      %v4361 = vld [vmem:[%s4339 + $0x80] sm:$0xf]
      %v4362 = vld [vmem:[%s4339 + $0x84] sm:$0xff]
      %v4363 = vld [vmem:[%s4339 + $0x8c] sm:$0xf]
      %v4364 = vld [vmem:[%s4339 + $0x90] sm:$0xff]
      %v4365 = vld [vmem:[%s4339 + $0x98] sm:$0xf]
      %v4366 = vld [vmem:[%s4339 + $0x9c] sm:$0xff]
      %v4367 = vld [vmem:[%s4339 + $0xa4] sm:$0xf]
      %v4368 = vld [vmem:[%s4339 + $0xa8] sm:$0xff]
      %v4369 = vld [vmem:[%s4339 + $0xb0] sm:$0xf]
      %v4370 = vld [vmem:[%s4339 + $0xb4] sm:$0xff]
      %v4371 = vld [vmem:[%s4339 + $0xbc] sm:$0xf]
      %v4408 = vunpack.c.l.b16 %v4303
      %v4409 = vunpack.c.l.b16 %v4304
      %v4410 = vunpack.c.l.b16 %v4305
      %v4411 = vunpack.c.l.b16 %v4306
      %v4412 = vunpack.c.l.b16 %v4307
      %v4413 = vunpack.c.l.b16 %v4308
      %v4414 = vunpack.c.l.b16 %v4309
      %v4415 = vunpack.c.l.b16 %v4310
      %v4416 = vunpack.c.l.b16 %v4311
      %v4417 = vunpack.c.l.b16 %v4312
      %v4418 = vunpack.c.l.b16 %v4313
      %v4419 = vunpack.c.l.b16 %v4314
      %v4420 = vunpack.c.l.b16 %v4315
      %v4421 = vunpack.c.l.b16 %v4316
      %v4422 = vunpack.c.l.b16 %v4317
      %v4423 = vunpack.c.l.b16 %v4318
      %v4424 = vunpack.c.l.b16 %v4319
      %v4425 = vunpack.c.l.b16 %v4320
      %v4426 = vunpack.c.l.b16 %v4321
      %v4427 = vunpack.c.l.b16 %v4322
      %v4428 = vunpack.c.l.b16 %v4323
      %v4429 = vunpack.c.l.b16 %v4324
      %v4430 = vunpack.c.l.b16 %v4325
      %v4431 = vunpack.c.l.b16 %v4326
      %v4432 = vunpack.c.l.b16 %v4327
      %v4433 = vunpack.c.l.b16 %v4328
      %v4434 = vunpack.c.l.b16 %v4329
      %v4435 = vunpack.c.l.b16 %v4330
      %v4436 = vunpack.c.l.b16 %v4331
      %v4437 = vunpack.c.l.b16 %v4332
      %v4438 = vunpack.c.l.b16 %v4333
      %v4439 = vunpack.c.l.b16 %v4334
      %v4440 = vunpack.c.l.b16 %v4335
      %v4441 = vunpack.c.l.b16 %v4336
      %v4442 = vunpack.c.l.b16 %v4337
      %v4443 = vunpack.c.l.b16 %v4338
      %v4444 = vpack.c.b16 %v4409, %v4408
      %v4445 = vpack.c.b16 %v4411, %v4410
      %v4446 = vpack.c.b16 %v4413, %v4412
      %v4447 = vpack.c.b16 %v4415, %v4414
      %v4448 = vpack.c.b16 %v4417, %v4416
      %v4449 = vpack.c.b16 %v4419, %v4418
      %v4450 = vpack.c.b16 %v4421, %v4420
      %v4451 = vpack.c.b16 %v4423, %v4422
      %v4452 = vpack.c.b16 %v4425, %v4424
      %v4453 = vpack.c.b16 %v4427, %v4426
      %v4454 = vpack.c.b16 %v4429, %v4428
      %v4455 = vpack.c.b16 %v4431, %v4430
      %v4456 = vpack.c.b16 %v4433, %v4432
      %v4457 = vpack.c.b16 %v4435, %v4434
      %v4458 = vpack.c.b16 %v4437, %v4436
      %v4459 = vpack.c.b16 %v4439, %v4438
      %v4460 = vpack.c.b16 %v4441, %v4440
      %v4461 = vpack.c.b16 %v4443, %v4442
      %v4512 = vunpack.c.l.b16 %v4340
      %v4513 = vunpack.c.h.b16 %v4340
      %v4514 = vunpack.c.l.b16 %v4341
      %v4515 = vunpack.c.l.b16 %v4342
      %v4516 = vunpack.c.h.b16 %v4342
      %v4517 = vunpack.c.l.b16 %v4343
      %v4518 = vunpack.c.l.b16 %v4344
      %v4519 = vunpack.c.h.b16 %v4344
      %v4520 = vunpack.c.l.b16 %v4345
      %v4521 = vunpack.c.l.b16 %v4346
      %v4522 = vunpack.c.h.b16 %v4346
      %v4523 = vunpack.c.l.b16 %v4347
      %v4524 = vunpack.c.l.b16 %v4348
      %v4525 = vunpack.c.h.b16 %v4348
      %v4526 = vunpack.c.l.b16 %v4349
      %v4527 = vunpack.c.l.b16 %v4350
      %v4528 = vunpack.c.h.b16 %v4350
      %v4529 = vunpack.c.l.b16 %v4351
      %v4530 = vunpack.c.l.b16 %v4352
      %v4531 = vunpack.c.h.b16 %v4352
      %v4532 = vunpack.c.l.b16 %v4353
      %v4533 = vunpack.c.l.b16 %v4354
      %v4534 = vunpack.c.h.b16 %v4354
      %v4535 = vunpack.c.l.b16 %v4355
      %v4536 = vunpack.c.l.b16 %v4356
      %v4537 = vunpack.c.h.b16 %v4356
      %v4538 = vunpack.c.l.b16 %v4357
      %v4539 = vunpack.c.l.b16 %v4358
      %v4540 = vunpack.c.h.b16 %v4358
      %v4541 = vunpack.c.l.b16 %v4359
      %v4542 = vunpack.c.l.b16 %v4360
      %v4543 = vunpack.c.h.b16 %v4360
      %v4544 = vunpack.c.l.b16 %v4361
      %v4545 = vunpack.c.l.b16 %v4362
      %v4546 = vunpack.c.h.b16 %v4362
      %v4547 = vunpack.c.l.b16 %v4363
      %v4548 = vunpack.c.l.b16 %v4364
      %v4549 = vunpack.c.h.b16 %v4364
      %v4550 = vunpack.c.l.b16 %v4365
      %v4551 = vunpack.c.l.b16 %v4366
      %v4552 = vunpack.c.h.b16 %v4366
      %v4553 = vunpack.c.l.b16 %v4367
      %v4554 = vunpack.c.l.b16 %v4368
      %v4555 = vunpack.c.h.b16 %v4368
      %v4556 = vunpack.c.l.b16 %v4369
      %v4557 = vunpack.c.l.b16 %v4370
      %v4558 = vunpack.c.h.b16 %v4370
      %v4559 = vunpack.c.l.b16 %v4371
      %v4560 = vpack.c.b16 %v4515, %v4512
      %v4561 = vpack.c.b16 %v4516, %v4513
      %v4562 = vpack.c.b16 %v4517, %v4514
      %v4563 = vpack.c.b16 %v4521, %v4518
      %v4564 = vpack.c.b16 %v4522, %v4519
      %v4565 = vpack.c.b16 %v4523, %v4520
      %v4566 = vpack.c.b16 %v4527, %v4524
      %v4567 = vpack.c.b16 %v4528, %v4525
      %v4568 = vpack.c.b16 %v4529, %v4526
      %v4569 = vpack.c.b16 %v4533, %v4530
      %v4570 = vpack.c.b16 %v4534, %v4531
      %v4571 = vpack.c.b16 %v4535, %v4532
      %v4572 = vpack.c.b16 %v4539, %v4536
      %v4573 = vpack.c.b16 %v4540, %v4537
      %v4574 = vpack.c.b16 %v4541, %v4538
      %v4575 = vpack.c.b16 %v4545, %v4542
      %v4576 = vpack.c.b16 %v4546, %v4543
      %v4577 = vpack.c.b16 %v4547, %v4544
      %v4578 = vpack.c.b16 %v4551, %v4548
      %v4579 = vpack.c.b16 %v4552, %v4549
      %v4580 = vpack.c.b16 %v4553, %v4550
      %v4581 = vpack.c.b16 %v4557, %v4554
      %v4582 = vpack.c.b16 %v4558, %v4555
      %v4583 = vpack.c.b16 %v4559, %v4556
      %4608 = vmatpush.bf16.msra.mxu0 %v4581
      %4609 = vmatpush.bf16.msra.mxu0 %v4578
      %4610 = vmatpush.bf16.msra.mxu0 %v4575
      %4611 = vmatpush.bf16.msra.mxu0 %v4572
      %4612 = vmatpush.bf16.msra.mxu0 %v4569
      %4613 = vmatpush.bf16.msra.mxu0 %v4566
      %4614 = vmatpush.bf16.msra.mxu0 %v4563
      %4615 = vmatpush.bf16.msra.mxu0 %v4560
      %4616 = vmatmul.bf16.gmra.mxu0 %v4444
      %v4617 = vpop.f32.mrf.mxu0
      %v4618 = vadd.f32 0.0, %v4617
      %v4619 = vpop.f32.mrf.mxu0
      %v4620 = vadd.f32 0.0, %v4619
      %4621 = vmatmul.bf16.gmra.mxu0 %v4445
      %v4622 = vpop.f32.mrf.mxu0
      %v4623 = vadd.f32 0.0, %v4622
      %v4624 = vpop.f32.mrf.mxu0
      %v4625 = vadd.f32 0.0, %v4624
      %4626 = vmatmul.bf16.gmra.mxu0 %v4446
      %v4627 = vpop.f32.mrf.mxu0
      %v4628 = vadd.f32 0.0, %v4627
      %v4629 = vpop.f32.mrf.mxu0
      %v4630 = vadd.f32 0.0, %v4629
      %4631 = vmatmul.bf16.gmra.mxu0 %v4447
      %v4632 = vpop.f32.mrf.mxu0
      %v4633 = vadd.f32 0.0, %v4632
      %v4634 = vpop.f32.mrf.mxu0
      %v4635 = vadd.f32 0.0, %v4634
      %4636 = vmatmul.bf16.gmra.mxu0 %v4448
      %v4637 = vpop.f32.mrf.mxu0
      %v4638 = vadd.f32 0.0, %v4637
      %v4639 = vpop.f32.mrf.mxu0
      %v4640 = vadd.f32 0.0, %v4639
      %4641 = vmatmul.bf16.gmra.mxu0 %v4449
      %v4642 = vpop.f32.mrf.mxu0
      %v4643 = vadd.f32 0.0, %v4642
      %v4644 = vpop.f32.mrf.mxu0
      %v4645 = vadd.f32 0.0, %v4644
      %4646 = vmatmul.bf16.gmra.mxu0 %v4450
      %v4647 = vpop.f32.mrf.mxu0
      %v4648 = vadd.f32 0.0, %v4647
      %v4649 = vpop.f32.mrf.mxu0
      %v4650 = vadd.f32 0.0, %v4649
      %4651 = vmatmul.bf16.gmra.mxu0 %v4451
      %v4652 = vpop.f32.mrf.mxu0
      %v4653 = vadd.f32 0.0, %v4652
      %v4654 = vpop.f32.mrf.mxu0
      %v4655 = vadd.f32 0.0, %v4654
      %4656 = vmatmul.bf16.gmra.mxu0 %v4452
      %v4657 = vpop.f32.mrf.mxu0
      %v4658 = vadd.f32 0.0, %v4657
      %v4659 = vpop.f32.mrf.mxu0
      %v4660 = vadd.f32 0.0, %v4659
      %4661 = vmatmul.bf16.gmra.mxu0 %v4453
      %v4662 = vpop.f32.mrf.mxu0
      %v4663 = vadd.f32 0.0, %v4662
      %v4664 = vpop.f32.mrf.mxu0
      %v4665 = vadd.f32 0.0, %v4664
      %4666 = vmatmul.bf16.gmra.mxu0 %v4454
      %v4667 = vpop.f32.mrf.mxu0
      %v4668 = vadd.f32 0.0, %v4667
      %v4669 = vpop.f32.mrf.mxu0
      %v4670 = vadd.f32 0.0, %v4669
      %4671 = vmatmul.bf16.gmra.mxu0 %v4455
      %v4672 = vpop.f32.mrf.mxu0
      %v4673 = vadd.f32 0.0, %v4672
      %v4674 = vpop.f32.mrf.mxu0
      %v4675 = vadd.f32 0.0, %v4674
      %4676 = vmatmul.bf16.gmra.mxu0 %v4456
      %v4677 = vpop.f32.mrf.mxu0
      %v4678 = vadd.f32 0.0, %v4677
      %v4679 = vpop.f32.mrf.mxu0
      %v4680 = vadd.f32 0.0, %v4679
      %4681 = vmatmul.bf16.gmra.mxu0 %v4457
      %v4682 = vpop.f32.mrf.mxu0
      %v4683 = vadd.f32 0.0, %v4682
      %v4684 = vpop.f32.mrf.mxu0
      %v4685 = vadd.f32 0.0, %v4684
      %4686 = vmatmul.bf16.gmra.mxu0 %v4458
      %v4687 = vpop.f32.mrf.mxu0
      %v4688 = vadd.f32 0.0, %v4687
      %v4689 = vpop.f32.mrf.mxu0
      %v4690 = vadd.f32 0.0, %v4689
      %4691 = vmatmul.bf16.gmra.mxu0 %v4459
      %v4692 = vpop.f32.mrf.mxu0
      %v4693 = vadd.f32 0.0, %v4692
      %v4694 = vpop.f32.mrf.mxu0
      %v4695 = vadd.f32 0.0, %v4694
      %4696 = vmatmul.bf16.gmra.mxu0 %v4460
      %v4697 = vpop.f32.mrf.mxu0
      %v4698 = vadd.f32 0.0, %v4697
      %v4699 = vpop.f32.mrf.mxu0
      %v4700 = vadd.f32 0.0, %v4699
      %4701 = vmatmul.bf16.gmra.mxu0 %v4461
      %v4702 = vpop.f32.mrf.mxu0
      %v4703 = vadd.f32 0.0, %v4702
      %v4704 = vpop.f32.mrf.mxu0
      %v4705 = vadd.f32 0.0, %v4704
      %4706 = vdwg.mxu0
      %4707 = vmatpush.bf16.msra.mxu0 %v4582
      %4708 = vmatpush.bf16.msra.mxu0 %v4579
      %4709 = vmatpush.bf16.msra.mxu0 %v4576
      %4710 = vmatpush.bf16.msra.mxu0 %v4573
      %4711 = vmatpush.bf16.msra.mxu0 %v4570
      %4712 = vmatpush.bf16.msra.mxu0 %v4567
      %4713 = vmatpush.bf16.msra.mxu0 %v4564
      %4714 = vmatpush.bf16.msra.mxu0 %v4561
      %4715 = vmatmul.bf16.gmra.mxu0 %v4444
      %v4716 = vpop.f32.mrf.mxu0
      %v4717 = vadd.f32 0.0, %v4716
      %v4718 = vpop.f32.mrf.mxu0
      %v4719 = vadd.f32 0.0, %v4718
      %4720 = vmatmul.bf16.gmra.mxu0 %v4445
      %v4721 = vpop.f32.mrf.mxu0
      %v4722 = vadd.f32 0.0, %v4721
      %v4723 = vpop.f32.mrf.mxu0
      %v4724 = vadd.f32 0.0, %v4723
      %4725 = vmatmul.bf16.gmra.mxu0 %v4446
      %v4726 = vpop.f32.mrf.mxu0
      %v4727 = vadd.f32 0.0, %v4726
      %v4728 = vpop.f32.mrf.mxu0
      %v4729 = vadd.f32 0.0, %v4728
      %4730 = vmatmul.bf16.gmra.mxu0 %v4447
      %v4731 = vpop.f32.mrf.mxu0
      %v4732 = vadd.f32 0.0, %v4731
      %v4733 = vpop.f32.mrf.mxu0
      %v4734 = vadd.f32 0.0, %v4733
      %4735 = vmatmul.bf16.gmra.mxu0 %v4448
      %v4736 = vpop.f32.mrf.mxu0
      %v4737 = vadd.f32 0.0, %v4736
      %v4738 = vpop.f32.mrf.mxu0
      %v4739 = vadd.f32 0.0, %v4738
      %4740 = vmatmul.bf16.gmra.mxu0 %v4449
      %v4741 = vpop.f32.mrf.mxu0
      %v4742 = vadd.f32 0.0, %v4741
      %v4743 = vpop.f32.mrf.mxu0
      %v4744 = vadd.f32 0.0, %v4743
      %4745 = vmatmul.bf16.gmra.mxu0 %v4450
      %v4746 = vpop.f32.mrf.mxu0
      %v4747 = vadd.f32 0.0, %v4746
      %v4748 = vpop.f32.mrf.mxu0
      %v4749 = vadd.f32 0.0, %v4748
      %4750 = vmatmul.bf16.gmra.mxu0 %v4451
      %v4751 = vpop.f32.mrf.mxu0
      %v4752 = vadd.f32 0.0, %v4751
      %v4753 = vpop.f32.mrf.mxu0
      %v4754 = vadd.f32 0.0, %v4753
      %4755 = vmatmul.bf16.gmra.mxu0 %v4452
      %v4756 = vpop.f32.mrf.mxu0
      %v4757 = vadd.f32 0.0, %v4756
      %v4758 = vpop.f32.mrf.mxu0
      %v4759 = vadd.f32 0.0, %v4758
      %4760 = vmatmul.bf16.gmra.mxu0 %v4453
      %v4761 = vpop.f32.mrf.mxu0
      %v4762 = vadd.f32 0.0, %v4761
      %v4763 = vpop.f32.mrf.mxu0
      %v4764 = vadd.f32 0.0, %v4763
      %4765 = vmatmul.bf16.gmra.mxu0 %v4454
      %v4766 = vpop.f32.mrf.mxu0
      %v4767 = vadd.f32 0.0, %v4766
      %v4768 = vpop.f32.mrf.mxu0
      %v4769 = vadd.f32 0.0, %v4768
      %4770 = vmatmul.bf16.gmra.mxu0 %v4455
      %v4771 = vpop.f32.mrf.mxu0
      %v4772 = vadd.f32 0.0, %v4771
      %v4773 = vpop.f32.mrf.mxu0
      %v4774 = vadd.f32 0.0, %v4773
      %4775 = vmatmul.bf16.gmra.mxu0 %v4456
      %v4776 = vpop.f32.mrf.mxu0
      %v4777 = vadd.f32 0.0, %v4776
      %v4778 = vpop.f32.mrf.mxu0
      %v4779 = vadd.f32 0.0, %v4778
      %4780 = vmatmul.bf16.gmra.mxu0 %v4457
      %v4781 = vpop.f32.mrf.mxu0
      %v4782 = vadd.f32 0.0, %v4781
      %v4783 = vpop.f32.mrf.mxu0
      %v4784 = vadd.f32 0.0, %v4783
      %4785 = vmatmul.bf16.gmra.mxu0 %v4458
      %v4786 = vpop.f32.mrf.mxu0
      %v4787 = vadd.f32 0.0, %v4786
      %v4788 = vpop.f32.mrf.mxu0
      %v4789 = vadd.f32 0.0, %v4788
      %4790 = vmatmul.bf16.gmra.mxu0 %v4459
      %v4791 = vpop.f32.mrf.mxu0
      %v4792 = vadd.f32 0.0, %v4791
      %v4793 = vpop.f32.mrf.mxu0
      %v4794 = vadd.f32 0.0, %v4793
      %4795 = vmatmul.bf16.gmra.mxu0 %v4460
      %v4796 = vpop.f32.mrf.mxu0
      %v4797 = vadd.f32 0.0, %v4796
      %v4798 = vpop.f32.mrf.mxu0
      %v4799 = vadd.f32 0.0, %v4798
      %4800 = vmatmul.bf16.gmra.mxu0 %v4461
      %v4801 = vpop.f32.mrf.mxu0
      %v4802 = vadd.f32 0.0, %v4801
      %v4803 = vpop.f32.mrf.mxu0
      %v4804 = vadd.f32 0.0, %v4803
      %4805 = vdwg.mxu0
      %4806 = vmatpush.bf16.msra.mxu0 %v4583
      %4807 = vmatpush.bf16.msra.mxu0 %v4580
      %4808 = vmatpush.bf16.msra.mxu0 %v4577
      %4809 = vmatpush.bf16.msra.mxu0 %v4574
      %4810 = vmatpush.bf16.msra.mxu0 %v4571
      %4811 = vmatpush.bf16.msra.mxu0 %v4568
      %4812 = vmatpush.bf16.msra.mxu0 %v4565
      %4813 = vmatpush.bf16.msra.mxu0 %v4562
      %4814 = vmatmul.bf16.gmra.mxu0 %v4444
      %v4815 = vpop.f32.mrf.mxu0
      %v4816 = vadd.f32 0.0, %v4815
      %v4817 = vpop.f32.mrf.mxu0
      %v4818 = vadd.f32 0.0, %v4817
      %4819 = vmatmul.bf16.gmra.mxu0 %v4445
      %v4820 = vpop.f32.mrf.mxu0
      %v4821 = vadd.f32 0.0, %v4820
      %v4822 = vpop.f32.mrf.mxu0
      %v4823 = vadd.f32 0.0, %v4822
      %4824 = vmatmul.bf16.gmra.mxu0 %v4446
      %v4825 = vpop.f32.mrf.mxu0
      %v4826 = vadd.f32 0.0, %v4825
      %v4827 = vpop.f32.mrf.mxu0
      %v4828 = vadd.f32 0.0, %v4827
      %4829 = vmatmul.bf16.gmra.mxu0 %v4447
      %v4830 = vpop.f32.mrf.mxu0
      %v4831 = vadd.f32 0.0, %v4830
      %v4832 = vpop.f32.mrf.mxu0
      %v4833 = vadd.f32 0.0, %v4832
      %4834 = vmatmul.bf16.gmra.mxu0 %v4448
      %v4835 = vpop.f32.mrf.mxu0
      %v4836 = vadd.f32 0.0, %v4835
      %v4837 = vpop.f32.mrf.mxu0
      %v4838 = vadd.f32 0.0, %v4837
      %4839 = vmatmul.bf16.gmra.mxu0 %v4449
      %v4840 = vpop.f32.mrf.mxu0
      %v4841 = vadd.f32 0.0, %v4840
      %v4842 = vpop.f32.mrf.mxu0
      %v4843 = vadd.f32 0.0, %v4842
      %4844 = vmatmul.bf16.gmra.mxu0 %v4450
      %v4845 = vpop.f32.mrf.mxu0
      %v4846 = vadd.f32 0.0, %v4845
      %v4847 = vpop.f32.mrf.mxu0
      %v4848 = vadd.f32 0.0, %v4847
      %4849 = vmatmul.bf16.gmra.mxu0 %v4451
      %v4850 = vpop.f32.mrf.mxu0
      %v4851 = vadd.f32 0.0, %v4850
      %v4852 = vpop.f32.mrf.mxu0
      %v4853 = vadd.f32 0.0, %v4852
      %4854 = vmatmul.bf16.gmra.mxu0 %v4452
      %v4855 = vpop.f32.mrf.mxu0
      %v4856 = vadd.f32 0.0, %v4855
      %v4857 = vpop.f32.mrf.mxu0
      %v4858 = vadd.f32 0.0, %v4857
      %4859 = vmatmul.bf16.gmra.mxu0 %v4453
      %v4860 = vpop.f32.mrf.mxu0
      %v4861 = vadd.f32 0.0, %v4860
      %v4862 = vpop.f32.mrf.mxu0
      %v4863 = vadd.f32 0.0, %v4862
      %4864 = vmatmul.bf16.gmra.mxu0 %v4454
      %v4865 = vpop.f32.mrf.mxu0
      %v4866 = vadd.f32 0.0, %v4865
      %v4867 = vpop.f32.mrf.mxu0
      %v4868 = vadd.f32 0.0, %v4867
      %4869 = vmatmul.bf16.gmra.mxu0 %v4455
      %v4870 = vpop.f32.mrf.mxu0
      %v4871 = vadd.f32 0.0, %v4870
      %v4872 = vpop.f32.mrf.mxu0
      %v4873 = vadd.f32 0.0, %v4872
      %4874 = vmatmul.bf16.gmra.mxu0 %v4456
      %v4875 = vpop.f32.mrf.mxu0
      %v4876 = vadd.f32 0.0, %v4875
      %v4877 = vpop.f32.mrf.mxu0
      %v4878 = vadd.f32 0.0, %v4877
      %4879 = vmatmul.bf16.gmra.mxu0 %v4457
      %v4880 = vpop.f32.mrf.mxu0
      %v4881 = vadd.f32 0.0, %v4880
      %v4882 = vpop.f32.mrf.mxu0
      %v4883 = vadd.f32 0.0, %v4882
      %4884 = vmatmul.bf16.gmra.mxu0 %v4458
      %v4885 = vpop.f32.mrf.mxu0
      %v4886 = vadd.f32 0.0, %v4885
      %v4887 = vpop.f32.mrf.mxu0
      %v4888 = vadd.f32 0.0, %v4887
      %4889 = vmatmul.bf16.gmra.mxu0 %v4459
      %v4890 = vpop.f32.mrf.mxu0
      %v4891 = vadd.f32 0.0, %v4890
      %v4892 = vpop.f32.mrf.mxu0
      %v4893 = vadd.f32 0.0, %v4892
      %4894 = vmatmul.bf16.gmra.mxu0 %v4460
      %v4895 = vpop.f32.mrf.mxu0
      %v4896 = vadd.f32 0.0, %v4895
      %v4897 = vpop.f32.mrf.mxu0
      %v4898 = vadd.f32 0.0, %v4897
      %4899 = vmatmul.bf16.gmra.mxu0 %v4461
      %v4900 = vpop.f32.mrf.mxu0
      %v4901 = vadd.f32 0.0, %v4900
      %v4902 = vpop.f32.mrf.mxu0
      %v4903 = vadd.f32 0.0, %v4902
      %4904 = vdwg.mxu0
      %v4905 = vadd.f32 %v4195, %v4618
      %v4906 = vadd.f32 %v4196, %v4620
      %v4907 = vadd.f32 %v4197, %v4623
      %v4908 = vadd.f32 %v4198, %v4625
      %v4909 = vadd.f32 %v4199, %v4628
      %v4910 = vadd.f32 %v4200, %v4630
      %v4911 = vadd.f32 %v4201, %v4633
      %v4912 = vadd.f32 %v4202, %v4635
      %v4913 = vadd.f32 %v4203, %v4638
      %v4914 = vadd.f32 %v4204, %v4640
      %v4915 = vadd.f32 %v4205, %v4643
      %v4916 = vadd.f32 %v4206, %v4645
      %v4917 = vadd.f32 %v4207, %v4648
      %v4918 = vadd.f32 %v4208, %v4650
      %v4919 = vadd.f32 %v4209, %v4653
      %v4920 = vadd.f32 %v4210, %v4655
      %v4921 = vadd.f32 %v4211, %v4658
      %v4922 = vadd.f32 %v4212, %v4660
      %v4923 = vadd.f32 %v4213, %v4663
      %v4924 = vadd.f32 %v4214, %v4665
      %v4925 = vadd.f32 %v4215, %v4668
      %v4926 = vadd.f32 %v4216, %v4670
      %v4927 = vadd.f32 %v4217, %v4673
      %v4928 = vadd.f32 %v4218, %v4675
      %v4929 = vadd.f32 %v4219, %v4678
      %v4930 = vadd.f32 %v4220, %v4680
      %v4931 = vadd.f32 %v4221, %v4683
      %v4932 = vadd.f32 %v4222, %v4685
      %v4933 = vadd.f32 %v4223, %v4688
      %v4934 = vadd.f32 %v4224, %v4690
      %v4935 = vadd.f32 %v4225, %v4693
      %v4936 = vadd.f32 %v4226, %v4695
      %v4937 = vadd.f32 %v4227, %v4698
      %v4938 = vadd.f32 %v4228, %v4700
      %v4939 = vadd.f32 %v4229, %v4703
      %v4940 = vadd.f32 %v4230, %v4705
      %v4941 = vadd.f32 %v4231, %v4717
      %v4942 = vadd.f32 %v4232, %v4719
      %v4943 = vadd.f32 %v4233, %v4722
      %v4944 = vadd.f32 %v4234, %v4724
      %v4945 = vadd.f32 %v4235, %v4727
      %v4946 = vadd.f32 %v4236, %v4729
      %v4947 = vadd.f32 %v4237, %v4732
      %v4948 = vadd.f32 %v4238, %v4734
      %v4949 = vadd.f32 %v4239, %v4737
      %v4950 = vadd.f32 %v4240, %v4739
      %v4951 = vadd.f32 %v4241, %v4742
      %v4952 = vadd.f32 %v4242, %v4744
      %v4953 = vadd.f32 %v4243, %v4747
      %v4954 = vadd.f32 %v4244, %v4749
      %v4955 = vadd.f32 %v4245, %v4752
      %v4956 = vadd.f32 %v4246, %v4754
      %v4957 = vadd.f32 %v4247, %v4757
      %v4958 = vadd.f32 %v4248, %v4759
      %v4959 = vadd.f32 %v4249, %v4762
      %v4960 = vadd.f32 %v4250, %v4764
      %v4961 = vadd.f32 %v4251, %v4767
      %v4962 = vadd.f32 %v4252, %v4769
      %v4963 = vadd.f32 %v4253, %v4772
      %v4964 = vadd.f32 %v4254, %v4774
      %v4965 = vadd.f32 %v4255, %v4777
      %v4966 = vadd.f32 %v4256, %v4779
      %v4967 = vadd.f32 %v4257, %v4782
      %v4968 = vadd.f32 %v4258, %v4784
      %v4969 = vadd.f32 %v4259, %v4787
      %v4970 = vadd.f32 %v4260, %v4789
      %v4971 = vadd.f32 %v4261, %v4792
      %v4972 = vadd.f32 %v4262, %v4794
      %v4973 = vadd.f32 %v4263, %v4797
      %v4974 = vadd.f32 %v4264, %v4799
      %v4975 = vadd.f32 %v4265, %v4802
      %v4976 = vadd.f32 %v4266, %v4804
      %v4977 = vadd.f32 %v4267, %v4816
      %v4978 = vadd.f32 %v4268, %v4818
      %v4979 = vadd.f32 %v4269, %v4821
      %v4980 = vadd.f32 %v4270, %v4823
      %v4981 = vadd.f32 %v4271, %v4826
      %v4982 = vadd.f32 %v4272, %v4828
      %v4983 = vadd.f32 %v4273, %v4831
      %v4984 = vadd.f32 %v4274, %v4833
      %v4985 = vadd.f32 %v4275, %v4836
      %v4986 = vadd.f32 %v4276, %v4838
      %v4987 = vadd.f32 %v4277, %v4841
      %v4988 = vadd.f32 %v4278, %v4843
      %v4989 = vadd.f32 %v4279, %v4846
      %v4990 = vadd.f32 %v4280, %v4848
      %v4991 = vadd.f32 %v4281, %v4851
      %v4992 = vadd.f32 %v4282, %v4853
      %v4993 = vadd.f32 %v4283, %v4856
      %v4994 = vadd.f32 %v4284, %v4858
      %v4995 = vadd.f32 %v4285, %v4861
      %v4996 = vadd.f32 %v4286, %v4863
      %v4997 = vadd.f32 %v4287, %v4866
      %v4998 = vadd.f32 %v4288, %v4868
      %v4999 = vadd.f32 %v4289, %v4871
      %v5000 = vadd.f32 %v4290, %v4873
      %v5001 = vadd.f32 %v4291, %v4876
      %v5002 = vadd.f32 %v4292, %v4878
      %v5003 = vadd.f32 %v4293, %v4881
      %v5004 = vadd.f32 %v4294, %v4883
      %v5005 = vadd.f32 %v4295, %v4886
      %v5006 = vadd.f32 %v4296, %v4888
      %v5007 = vadd.f32 %v4297, %v4891
      %v5008 = vadd.f32 %v4298, %v4893
      %v5009 = vadd.f32 %v4299, %v4896
      %v5010 = vadd.f32 %v4300, %v4898
      %v5011 = vadd.f32 %v4301, %v4901
      %v5012 = vadd.f32 %v4302, %v4903
      %v5013 = vrot.slane %v4905, 7
      %v5014 = vrot.slane %v4906, 7
      %v5015 = vrot.slane %v4907, 7
      %v5016 = vrot.slane %v4908, 7
      %v5017 = vrot.slane %v4909, 7
      %v5018 = vrot.slane %v4910, 7
      %v5019 = vrot.slane %v4911, 7
      %v5020 = vrot.slane %v4912, 7
      %v5021 = vrot.slane %v4913, 7
      %v5022 = vrot.slane %v4914, 7
      %v5023 = vrot.slane %v4915, 7
      %v5024 = vrot.slane %v4916, 7
      %v5025 = vrot.slane %v4917, 7
      %v5026 = vrot.slane %v4918, 7
      %v5027 = vrot.slane %v4919, 7
      %v5028 = vrot.slane %v4920, 7
      %v5029 = vrot.slane %v4921, 7
      %v5030 = vrot.slane %v4922, 7
      %v5031 = vrot.slane %v4923, 7
      %v5032 = vrot.slane %v4924, 7
      %v5033 = vrot.slane %v4925, 7
      %v5034 = vrot.slane %v4926, 7
      %v5035 = vrot.slane %v4927, 7
      %v5036 = vrot.slane %v4928, 7
      %v5037 = vrot.slane %v4929, 7
      %v5038 = vrot.slane %v4930, 7
      %v5039 = vrot.slane %v4931, 7
      %v5040 = vrot.slane %v4932, 7
      %v5041 = vrot.slane %v4933, 7
      %v5042 = vrot.slane %v4934, 7
      %v5043 = vrot.slane %v4935, 7
      %v5044 = vrot.slane %v4936, 7
      %v5045 = vrot.slane %v4937, 7
      %v5046 = vrot.slane %v4938, 7
      %v5047 = vrot.slane %v4939, 7
      %v5048 = vrot.slane %v4940, 7
      %v5049 = vsel %vm2406, %v5047, %v5048
      %v5050 = vsel %vm2406, %v5046, %v5047
      %v5051 = vsel %vm2406, %v5045, %v5046
      %v5052 = vsel %vm2406, %v5044, %v5045
      %v5053 = vsel %vm2406, %v5043, %v5044
      %v5054 = vsel %vm2406, %v5042, %v5043
      %v5055 = vsel %vm2406, %v5041, %v5042
      %v5056 = vsel %vm2406, %v5040, %v5041
      %v5057 = vsel %vm2406, %v5039, %v5040
      %v5058 = vsel %vm2406, %v5038, %v5039
      %v5059 = vsel %vm2406, %v5037, %v5038
      %v5060 = vsel %vm2406, %v5036, %v5037
      %v5061 = vsel %vm2406, %v5035, %v5036
      %v5062 = vsel %vm2406, %v5034, %v5035
      %v5063 = vsel %vm2406, %v5033, %v5034
      %v5064 = vsel %vm2406, %v5032, %v5033
      %v5065 = vsel %vm2406, %v5031, %v5032
      %v5066 = vsel %vm2406, %v5030, %v5031
      %v5067 = vsel %vm2406, %v5029, %v5030
      %v5068 = vsel %vm2406, %v5028, %v5029
      %v5069 = vsel %vm2406, %v5027, %v5028
      %v5070 = vsel %vm2406, %v5026, %v5027
      %v5071 = vsel %vm2406, %v5025, %v5026
      %v5072 = vsel %vm2406, %v5024, %v5025
      %v5073 = vsel %vm2406, %v5023, %v5024
      %v5074 = vsel %vm2406, %v5022, %v5023
      %v5075 = vsel %vm2406, %v5021, %v5022
      %v5076 = vsel %vm2406, %v5020, %v5021
      %v5077 = vsel %vm2406, %v5019, %v5020
      %v5078 = vsel %vm2406, %v5018, %v5019
      %v5079 = vsel %vm2406, %v5017, %v5018
      %v5080 = vsel %vm2406, %v5016, %v5017
      %v5081 = vsel %vm2406, %v5015, %v5016
      %v5082 = vsel %vm2406, %v5014, %v5015
      %v5083 = vsel %vm2406, %v5013, %v5014
      %v5084 = vsel %vm2406, %v5048, %v5013
      %v5085 = vadd.f32 %v4941, %v5084
      %v5086 = vadd.f32 %v4942, %v5083
      %v5087 = vadd.f32 %v4943, %v5082
      %v5088 = vadd.f32 %v4944, %v5081
      %v5089 = vadd.f32 %v4945, %v5080
      %v5090 = vadd.f32 %v4946, %v5079
      %v5091 = vadd.f32 %v4947, %v5078
      %v5092 = vadd.f32 %v4948, %v5077
      %v5093 = vadd.f32 %v4949, %v5076
      %v5094 = vadd.f32 %v4950, %v5075
      %v5095 = vadd.f32 %v4951, %v5074
      %v5096 = vadd.f32 %v4952, %v5073
      %v5097 = vadd.f32 %v4953, %v5072
      %v5098 = vadd.f32 %v4954, %v5071
      %v5099 = vadd.f32 %v4955, %v5070
      %v5100 = vadd.f32 %v4956, %v5069
      %v5101 = vadd.f32 %v4957, %v5068
      %v5102 = vadd.f32 %v4958, %v5067
      %v5103 = vadd.f32 %v4959, %v5066
      %v5104 = vadd.f32 %v4960, %v5065
      %v5105 = vadd.f32 %v4961, %v5064
      %v5106 = vadd.f32 %v4962, %v5063
      %v5107 = vadd.f32 %v4963, %v5062
      %v5108 = vadd.f32 %v4964, %v5061
      %v5109 = vadd.f32 %v4965, %v5060
      %v5110 = vadd.f32 %v4966, %v5059
      %v5111 = vadd.f32 %v4967, %v5058
      %v5112 = vadd.f32 %v4968, %v5057
      %v5113 = vadd.f32 %v4969, %v5056
      %v5114 = vadd.f32 %v4970, %v5055
      %v5115 = vadd.f32 %v4971, %v5054
      %v5116 = vadd.f32 %v4972, %v5053
      %v5117 = vadd.f32 %v4973, %v5052
      %v5118 = vadd.f32 %v4974, %v5051
      %v5119 = vadd.f32 %v4975, %v5050
      %v5120 = vadd.f32 %v4976, %v5049
      %v5121 = vrot.slane %v4977, 1
      %v5122 = vrot.slane %v4978, 1
      %v5123 = vrot.slane %v4979, 1
      %v5124 = vrot.slane %v4980, 1
      %v5125 = vrot.slane %v4981, 1
      %v5126 = vrot.slane %v4982, 1
      %v5127 = vrot.slane %v4983, 1
      %v5128 = vrot.slane %v4984, 1
      %v5129 = vrot.slane %v4985, 1
      %v5130 = vrot.slane %v4986, 1
      %v5131 = vrot.slane %v4987, 1
      %v5132 = vrot.slane %v4988, 1
      %v5133 = vrot.slane %v4989, 1
      %v5134 = vrot.slane %v4990, 1
      %v5135 = vrot.slane %v4991, 1
      %v5136 = vrot.slane %v4992, 1
      %v5137 = vrot.slane %v4993, 1
      %v5138 = vrot.slane %v4994, 1
      %v5139 = vrot.slane %v4995, 1
      %v5140 = vrot.slane %v4996, 1
      %v5141 = vrot.slane %v4997, 1
      %v5142 = vrot.slane %v4998, 1
      %v5143 = vrot.slane %v4999, 1
      %v5144 = vrot.slane %v5000, 1
      %v5145 = vrot.slane %v5001, 1
      %v5146 = vrot.slane %v5002, 1
      %v5147 = vrot.slane %v5003, 1
      %v5148 = vrot.slane %v5004, 1
      %v5149 = vrot.slane %v5005, 1
      %v5150 = vrot.slane %v5006, 1
      %v5151 = vrot.slane %v5007, 1
      %v5152 = vrot.slane %v5008, 1
      %v5153 = vrot.slane %v5009, 1
      %v5154 = vrot.slane %v5010, 1
      %v5155 = vrot.slane %v5011, 1
      %v5156 = vrot.slane %v5012, 1
      %v5157 = vsel %vm2515, %v5155, %v5156
      %v5158 = vsel %vm2515, %v5154, %v5155
      %v5159 = vsel %vm2515, %v5153, %v5154
      %v5160 = vsel %vm2515, %v5152, %v5153
      %v5161 = vsel %vm2515, %v5151, %v5152
      %v5162 = vsel %vm2515, %v5150, %v5151
      %v5163 = vsel %vm2515, %v5149, %v5150
      %v5164 = vsel %vm2515, %v5148, %v5149
      %v5165 = vsel %vm2515, %v5147, %v5148
      %v5166 = vsel %vm2515, %v5146, %v5147
      %v5167 = vsel %vm2515, %v5145, %v5146
      %v5168 = vsel %vm2515, %v5144, %v5145
      %v5169 = vsel %vm2515, %v5143, %v5144
      %v5170 = vsel %vm2515, %v5142, %v5143
      %v5171 = vsel %vm2515, %v5141, %v5142
      %v5172 = vsel %vm2515, %v5140, %v5141
      %v5173 = vsel %vm2515, %v5139, %v5140
      %v5174 = vsel %vm2515, %v5138, %v5139
      %v5175 = vsel %vm2515, %v5137, %v5138
      %v5176 = vsel %vm2515, %v5136, %v5137
      %v5177 = vsel %vm2515, %v5135, %v5136
      %v5178 = vsel %vm2515, %v5134, %v5135
      %v5179 = vsel %vm2515, %v5133, %v5134
      %v5180 = vsel %vm2515, %v5132, %v5133
      %v5181 = vsel %vm2515, %v5131, %v5132
      %v5182 = vsel %vm2515, %v5130, %v5131
      %v5183 = vsel %vm2515, %v5129, %v5130
      %v5184 = vsel %vm2515, %v5128, %v5129
      %v5185 = vsel %vm2515, %v5127, %v5128
      %v5186 = vsel %vm2515, %v5126, %v5127
      %v5187 = vsel %vm2515, %v5125, %v5126
      %v5188 = vsel %vm2515, %v5124, %v5125
      %v5189 = vsel %vm2515, %v5123, %v5124
      %v5190 = vsel %vm2515, %v5122, %v5123
      %v5191 = vsel %vm2515, %v5121, %v5122
      %v5192 = vsel %vm2515, %v5156, %v5121
      %v5193 = vadd.f32 %v5085, %v5191
      %v5194 = vadd.f32 %v5086, %v5190
      %v5195 = vadd.f32 %v5087, %v5189
      %v5196 = vadd.f32 %v5088, %v5188
      %v5197 = vadd.f32 %v5089, %v5187
      %v5198 = vadd.f32 %v5090, %v5186
      %v5199 = vadd.f32 %v5091, %v5185
      %v5200 = vadd.f32 %v5092, %v5184
      %v5201 = vadd.f32 %v5093, %v5183
      %v5202 = vadd.f32 %v5094, %v5182
      %v5203 = vadd.f32 %v5095, %v5181
      %v5204 = vadd.f32 %v5096, %v5180
      %v5205 = vadd.f32 %v5097, %v5179
      %v5206 = vadd.f32 %v5098, %v5178
      %v5207 = vadd.f32 %v5099, %v5177
      %v5208 = vadd.f32 %v5100, %v5176
      %v5209 = vadd.f32 %v5101, %v5175
      %v5210 = vadd.f32 %v5102, %v5174
      %v5211 = vadd.f32 %v5103, %v5173
      %v5212 = vadd.f32 %v5104, %v5172
      %v5213 = vadd.f32 %v5105, %v5171
      %v5214 = vadd.f32 %v5106, %v5170
      %v5215 = vadd.f32 %v5107, %v5169
      %v5216 = vadd.f32 %v5108, %v5168
      %v5217 = vadd.f32 %v5109, %v5167
      %v5218 = vadd.f32 %v5110, %v5166
      %v5219 = vadd.f32 %v5111, %v5165
      %v5220 = vadd.f32 %v5112, %v5164
      %v5221 = vadd.f32 %v5113, %v5163
      %v5222 = vadd.f32 %v5114, %v5162
      %v5223 = vadd.f32 %v5115, %v5161
      %v5224 = vadd.f32 %v5116, %v5160
      %v5225 = vadd.f32 %v5117, %v5159
      %v5226 = vadd.f32 %v5118, %v5158
      %v5227 = vadd.f32 %v5119, %v5157
      %v5228 = vadd.f32 %v5120, %v5192
      %v5229 = vld [vmem:[%s6] sm:$0x1]
      %v5231 = vperm.slane %v5229, 0
      %v5233 = vmul.f32 %v5193, %v5231
      %v5234 = vmul.f32 %v5194, %v5231
      %v5235 = vmul.f32 %v5195, %v5231
      %v5236 = vmul.f32 %v5196, %v5231
      %v5237 = vmul.f32 %v5197, %v5231
      %v5238 = vmul.f32 %v5198, %v5231
      %v5239 = vmul.f32 %v5199, %v5231
      %v5240 = vmul.f32 %v5200, %v5231
      %v5241 = vmul.f32 %v5201, %v5231
      %v5242 = vmul.f32 %v5202, %v5231
      %v5243 = vmul.f32 %v5203, %v5231
      %v5244 = vmul.f32 %v5204, %v5231
      %v5245 = vmul.f32 %v5205, %v5231
      %v5246 = vmul.f32 %v5206, %v5231
      %v5247 = vmul.f32 %v5207, %v5231
      %v5248 = vmul.f32 %v5208, %v5231
      %v5249 = vmul.f32 %v5209, %v5231
      %v5250 = vmul.f32 %v5210, %v5231
      %v5251 = vmul.f32 %v5211, %v5231
      %v5252 = vmul.f32 %v5212, %v5231
      %v5253 = vmul.f32 %v5213, %v5231
      %v5254 = vmul.f32 %v5214, %v5231
      %v5255 = vmul.f32 %v5215, %v5231
      %v5256 = vmul.f32 %v5216, %v5231
      %v5257 = vmul.f32 %v5217, %v5231
      %v5258 = vmul.f32 %v5218, %v5231
      %v5259 = vmul.f32 %v5219, %v5231
      %v5260 = vmul.f32 %v5220, %v5231
      %v5261 = vmul.f32 %v5221, %v5231
      %v5262 = vmul.f32 %v5222, %v5231
      %v5263 = vmul.f32 %v5223, %v5231
      %v5264 = vmul.f32 %v5224, %v5231
      %v5265 = vmul.f32 %v5225, %v5231
      %v5266 = vmul.f32 %v5226, %v5231
      %v5267 = vmul.f32 %v5227, %v5231
      %v5268 = vmul.f32 %v5228, %v5231
      %v5269 = vld [vmem:[%s7] sm:$0x1]
      %v5271 = vperm.slane %v5269, 0
      %v5273 = vadd.f32 %v5233, %v5271
      %v5274 = vadd.f32 %v5234, %v5271
      %v5275 = vadd.f32 %v5235, %v5271
      %v5276 = vadd.f32 %v5236, %v5271
      %v5277 = vadd.f32 %v5237, %v5271
      %v5278 = vadd.f32 %v5238, %v5271
      %v5279 = vadd.f32 %v5239, %v5271
      %v5280 = vadd.f32 %v5240, %v5271
      %v5281 = vadd.f32 %v5241, %v5271
      %v5282 = vadd.f32 %v5242, %v5271
      %v5283 = vadd.f32 %v5243, %v5271
      %v5284 = vadd.f32 %v5244, %v5271
      %v5285 = vadd.f32 %v5245, %v5271
      %v5286 = vadd.f32 %v5246, %v5271
      %v5287 = vadd.f32 %v5247, %v5271
      %v5288 = vadd.f32 %v5248, %v5271
      %v5289 = vadd.f32 %v5249, %v5271
      %v5290 = vadd.f32 %v5250, %v5271
      %v5291 = vadd.f32 %v5251, %v5271
      %v5292 = vadd.f32 %v5252, %v5271
      %v5293 = vadd.f32 %v5253, %v5271
      %v5294 = vadd.f32 %v5254, %v5271
      %v5295 = vadd.f32 %v5255, %v5271
      %v5296 = vadd.f32 %v5256, %v5271
      %v5297 = vadd.f32 %v5257, %v5271
      %v5298 = vadd.f32 %v5258, %v5271
      %v5299 = vadd.f32 %v5259, %v5271
      %v5300 = vadd.f32 %v5260, %v5271
      %v5301 = vadd.f32 %v5261, %v5271
      %v5302 = vadd.f32 %v5262, %v5271
      %v5303 = vadd.f32 %v5263, %v5271
      %v5304 = vadd.f32 %v5264, %v5271
      %v5305 = vadd.f32 %v5265, %v5271
      %v5306 = vadd.f32 %v5266, %v5271
      %v5307 = vadd.f32 %v5267, %v5271
      %v5308 = vadd.f32 %v5268, %v5271
      %v5309 = vmax.f32 %v5273, 0.0
      %v5310 = vmax.f32 %v5274, 0.0
      %v5311 = vmax.f32 %v5275, 0.0
      %v5312 = vmax.f32 %v5276, 0.0
      %v5313 = vmax.f32 %v5277, 0.0
      %v5314 = vmax.f32 %v5278, 0.0
      %v5315 = vmax.f32 %v5279, 0.0
      %v5316 = vmax.f32 %v5280, 0.0
      %v5317 = vmax.f32 %v5281, 0.0
      %v5318 = vmax.f32 %v5282, 0.0
      %v5319 = vmax.f32 %v5283, 0.0
      %v5320 = vmax.f32 %v5284, 0.0
      %v5321 = vmax.f32 %v5285, 0.0
      %v5322 = vmax.f32 %v5286, 0.0
      %v5323 = vmax.f32 %v5287, 0.0
      %v5324 = vmax.f32 %v5288, 0.0
      %v5325 = vmax.f32 %v5289, 0.0
      %v5326 = vmax.f32 %v5290, 0.0
      %v5327 = vmax.f32 %v5291, 0.0
      %v5328 = vmax.f32 %v5292, 0.0
      %v5329 = vmax.f32 %v5293, 0.0
      %v5330 = vmax.f32 %v5294, 0.0
      %v5331 = vmax.f32 %v5295, 0.0
      %v5332 = vmax.f32 %v5296, 0.0
      %v5333 = vmax.f32 %v5297, 0.0
      %v5334 = vmax.f32 %v5298, 0.0
      %v5335 = vmax.f32 %v5299, 0.0
      %v5336 = vmax.f32 %v5300, 0.0
      %v5337 = vmax.f32 %v5301, 0.0
      %v5338 = vmax.f32 %v5302, 0.0
      %v5339 = vmax.f32 %v5303, 0.0
      %v5340 = vmax.f32 %v5304, 0.0
      %v5341 = vmax.f32 %v5305, 0.0
      %v5342 = vmax.f32 %v5306, 0.0
      %v5343 = vmax.f32 %v5307, 0.0
      %v5344 = vmax.f32 %v5308, 0.0
      %v5345 = vmul.f32 %v5309, %v2707
      %v5346 = vmul.f32 %v5310, %v2712
      %v5347 = vmul.f32 %v5311, %v2717
      %v5348 = vmul.f32 %v5312, %v2722
      %v5349 = vmul.f32 %v5313, %v2727
      %v5350 = vmul.f32 %v5314, %v2732
      %v5351 = vmul.f32 %v5315, %v2737
      %v5352 = vmul.f32 %v5316, %v2742
      %v5353 = vmul.f32 %v5317, %v2747
      %v5354 = vmul.f32 %v5318, %v2752
      %v5355 = vmul.f32 %v5319, %v2757
      %v5356 = vmul.f32 %v5320, %v2762
      %v5357 = vmul.f32 %v5321, %v2767
      %v5358 = vmul.f32 %v5322, %v2772
      %v5359 = vmul.f32 %v5323, %v2777
      %v5360 = vmul.f32 %v5324, %v2782
      %v5361 = vmul.f32 %v5325, %v2787
      %v5362 = vmul.f32 %v5326, %v2792
      %v5363 = vmul.f32 %v5327, %v2797
      %v5364 = vmul.f32 %v5328, %v2802
      %v5365 = vmul.f32 %v5329, %v2807
      %v5366 = vmul.f32 %v5330, %v2812
      %v5367 = vmul.f32 %v5331, %v2817
      %v5368 = vmul.f32 %v5332, %v2822
      %v5369 = vmul.f32 %v5333, %v2827
      %v5370 = vmul.f32 %v5334, %v2832
      %v5371 = vmul.f32 %v5335, %v2837
      %v5372 = vmul.f32 %v5336, %v2842
      %v5373 = vmul.f32 %v5337, %v2847
      %v5374 = vmul.f32 %v5338, %v2852
      %v5375 = vmul.f32 %v5339, %v2857
      %v5376 = vmul.f32 %v5340, %v2862
      %v5377 = vmul.f32 %v5341, %v2867
      %v5378 = vmul.f32 %v5342, %v2872
      %v5379 = vmul.f32 %v5343, %v2877
      %v5380 = vmul.f32 %v5344, %v2882
      %v5381 = vmax.f32 %v5345, %v5349
      %v5382 = vmax.f32 %v5346, %v5350
      %v5383 = vmax.f32 %v5347, %v5351
      %v5384 = vmax.f32 %v5348, %v5352
      %v5385 = vmax.f32 %v5381, %v5353
      %v5386 = vmax.f32 %v5382, %v5354
      %v5387 = vmax.f32 %v5383, %v5355
      %v5388 = vmax.f32 %v5384, %v5356
      %v5389 = vmax.f32 %v5385, %v5357
      %v5390 = vmax.f32 %v5386, %v5358
      %v5391 = vmax.f32 %v5387, %v5359
      %v5392 = vmax.f32 %v5388, %v5360
      %v5393 = vmax.f32 %v5389, %v5361
      %v5394 = vmax.f32 %v5390, %v5362
      %v5395 = vmax.f32 %v5391, %v5363
      %v5396 = vmax.f32 %v5392, %v5364
      %v5397 = vmax.f32 %v5393, %v5394
      %v5398 = vmax.f32 %v5395, %v5396
      %v5399 = vmax.f32 %v5397, %v5398
      %v5400 = vrot.slane %v5399, 4
      %v5401 = vmax.f32 %v5399, %v5400
      %v5402 = vrot.slane %v5401, 2
      %v5403 = vmax.f32 %v5401, %v5402
      %v5404 = vrot.slane %v5403, 1
      %v5405 = vmax.f32 %v5403, %v5404
      %v5406 = vmax.f32 %v5365, %v5369
      %v5407 = vmax.f32 %v5366, %v5370
      %v5408 = vmax.f32 %v5367, %v5371
      %v5409 = vmax.f32 %v5368, %v5372
      %v5410 = vmax.f32 %v5406, %v5373
      %v5411 = vmax.f32 %v5407, %v5374
      %v5412 = vmax.f32 %v5408, %v5375
      %v5413 = vmax.f32 %v5409, %v5376
      %v5414 = vmax.f32 %v5410, %v5377
      %v5415 = vmax.f32 %v5411, %v5378
      %v5416 = vmax.f32 %v5412, %v5379
      %v5417 = vmax.f32 %v5413, %v5380
      %v5418 = vmax.f32 %v5414, %v5415
      %v5419 = vmax.f32 %v5416, %v5417
      %v5420 = vmax.f32 %v5418, %v5419
      %v5421 = vrot.slane %v5420, 4
      %v5422 = vmax.f32 %v5420, %v5421
      %v5423 = vrot.slane %v5422, 2
      %v5424 = vmax.f32 %v5422, %v5423
      %v5425 = vrot.slane %v5424, 1
      %v5426 = vmax.f32 %v5424, %v5425
      %vm5427 = vcmask 1040384
      %v5428 = vsel %vm5427, %v5405, %v5426
      %5429 = vst [vmem:[%s305] sm:$0x3] %v5428
      %p5430 = scmp.lt.s32.totalorder %s19, 1
      %s5431 = scalar_select %p5430, %s19, 1
      %s5432 = smul.addr %s5431, 2
      %s5433 = scalar_lea.vmem %s8, %s5432
      // Predicated region
      $region53: #{cotext_track_head_forward.2} parent=51 // pred_check
        %p5434 = pneg %p210
      $region54: #{cotext_track_head_forward.2} parent=51 // pred_check_branch
        %5436 = sbr.rel (%p5434) target = $region56
      $region55: #{cotext_track_head_forward.2} parent=51 // pred_region
        _
      $region56: #{cotext_track_head_forward.2} parent=51 // pred_fallthru
        _
    $region52: #{cotext_track_head_forward.2} parent=5 // pred_fallthru
      _
    %p5437 = scmp.le.s32.totalorder 2, %s14
    // Predicated region
    $region57: #{cotext_track_head_forward.2} parent=5 // pred_check
      %p5438 = pneg %p5437
    $region58: #{cotext_track_head_forward.2} parent=5 // pred_check_branch
      %5440 = sbr.rel (%p5438) target = $region60
    $region59: #{cotext_track_head_forward.2} parent=5 // pred_region
      %s5441 = ssub.s32 %s14, 2
      // Predicated region
      $region61: #{cotext_track_head_forward.2} parent=59 // pred_check
        %p5442 = pneg %p216
      $region62: #{cotext_track_head_forward.2} parent=59 // pred_check_branch
        %5444 = sbr.rel (%p5442) target = $region64
      $region63: #{cotext_track_head_forward.2} parent=59 // pred_region
        %p5445 = scmp.lt.s32.totalorder %s20, 1
        %s5446 = scalar_select %p5445, %s20, 1
        %s5447 = smul.addr %s5446, 2
        %s5448 = scalar_lea.vmem %s8, %s5447
      $region64: #{cotext_track_head_forward.2} parent=59 // pred_fallthru
        _
    $region60: #{cotext_track_head_forward.2} parent=5 // pred_fallthru
      _
  $region6: #{cotext_track_head_forward.2} parent=0 // loop_footer
    %s18 = sadd.s32 1, %s14
  $region7: #{cotext_track_head_forward.2} parent=0 // loop_footer_branch
    %13 = sbr.rel target = $region3
  $region8: #{cotext_track_head_forward.2} parent=0 // loop_exit
    _

</llo_original>
